<compile_context>
chip_gen: v7x
topology: tpu7x:2x2x1
jax: 0.10.0
libtpu: 0.0.40
codegen_flags: <defaults>
</compile_context>

<pallas_src>
import jax
import jax.numpy as jnp
from jax.experimental import pallas as pl
from jax.experimental.pallas import tpu as pltpu


def _pick_chunk(n, candidates):
    """Largest candidate that evenly divides n, else n itself (full extent)."""
    for c in candidates:
        if n % c == 0:
            return c
    return n


# ----------------------------------------------------------------------------
# LSTM kernel: grid iterates over time CHUNKS, the recurrence runs inside the
# kernel with lax.fori_loop; (h, c) persist in VMEM scratch across chunks.
# Weights are gate-fused: wih [Fin, 4H] bf16, whh [H, 4H] bf16, b [1, 4H] f32
# with PyTorch gate order (i, f, g, o) stacked along the lane axis.
# ----------------------------------------------------------------------------
def _lstm_kernel(x_ref, wih_ref, whh_ref, b_ref, out_ref, h_scr, c_scr):
    @pl.when(pl.program_id(0) == 0)
    def _():
        h_scr[...] = jnp.zeros_like(h_scr)
        c_scr[...] = jnp.zeros_like(c_scr)

    wih = wih_ref[...]          # [Fin, 4H] bf16
    whh = whh_ref[...]          # [H,   4H] bf16
    b = b_ref[...]              # [1,   4H] f32
    H = h_scr.shape[-1]
    t_chunk = x_ref.shape[0]

    def step(s, carry):
        del carry
        x = x_ref[s]            # [B, Fin] bf16 (dynamic index on leading dim)
        h = h_scr[...]          # [B, H] f32
        c = c_scr[...]          # [B, H] f32
        gates = (jnp.dot(x, wih, preferred_element_type=jnp.float32)
                 + jnp.dot(h.astype(jnp.bfloat16), whh,
                           preferred_element_type=jnp.float32)
                 + b)           # [B, 4H] f32, single fused gate matmul pair
        i_g = jax.nn.sigmoid(gates[:, 0 * H:1 * H])
        f_g = jax.nn.sigmoid(gates[:, 1 * H:2 * H])
        g_g = jnp.tanh(gates[:, 2 * H:3 * H])
        o_g = jax.nn.sigmoid(gates[:, 3 * H:4 * H])
        c_new = f_g * c + i_g * g_g
        h_new = o_g * jnp.tanh(c_new)
        c_scr[...] = c_new
        h_scr[...] = h_new
        out_ref[s] = h_new.astype(out_ref.dtype)
        return 0

    jax.lax.fori_loop(0, t_chunk, step, 0, unroll=True)


def lstm_forward(x_tbf, w_ih, w_hh, b, *, t_chunk=None):
    """x_tbf: [T, B, Fin] (time-major, bf16). Returns hidden states [T,B,H] bf16."""
    T, B, Fin = x_tbf.shape
    H = w_hh.shape[0]
    if t_chunk is None:
        t_chunk = _pick_chunk(T, (16, 8))
    return pl.pallas_call(
        _lstm_kernel,
        out_shape=jax.ShapeDtypeStruct((T, B, H), jnp.bfloat16),
        grid_spec=pltpu.PrefetchScalarGridSpec(
            num_scalar_prefetch=0,
            grid=(T // t_chunk,),
            in_specs=[
                pl.BlockSpec((t_chunk, B, Fin), lambda t: (t, 0, 0)),
                pl.BlockSpec((Fin, 4 * H), lambda t: (0, 0)),
                pl.BlockSpec((H, 4 * H), lambda t: (0, 0)),
                pl.BlockSpec((1, 4 * H), lambda t: (0, 0)),
            ],
            out_specs=pl.BlockSpec((t_chunk, B, H), lambda t: (t, 0, 0)),
            scratch_shapes=[
                pltpu.VMEM((B, H), jnp.float32),   # h
                pltpu.VMEM((B, H), jnp.float32),   # c
            ],
        ),
        compiler_params=pltpu.CompilerParams(
            dimension_semantics=("arbitrary",)),   # recurrent -> sequential
    )(x_tbf, w_ih, w_hh, b)


# ----------------------------------------------------------------------------
# Joint network kernel, tiled over (batch, time-tile):
#   logits[t, u, :] = W2 @ tanh(W1e @ enc[t] + W1d @ dec[u] + b1) + b2
# The (Tt, U1) grid of hidden vectors is flattened into one [Tt*U1, D] matmul.
# ----------------------------------------------------------------------------
def _joint_kernel(enc_ref, dec_ref, w1e_ref, w1d_ref, b1_ref, w2_ref, b2_ref,
                  out_ref):
    enc = enc_ref[0]                                   # [Tt, He] bf16
    dec = dec_ref[0]                                   # [U1, Hd] bf16
    encp = jnp.dot(enc, w1e_ref[...],
                   preferred_element_type=jnp.float32)               # [Tt, D]
    decp = (jnp.dot(dec, w1d_ref[...],
                    preferred_element_type=jnp.float32)
            + b1_ref[...])                                           # [U1, D]
    h = jnp.tanh(encp[:, None, :] + decp[None, :, :])                # [Tt,U1,D]
    Tt, U1, D = h.shape
    V = w2_ref.shape[-1]
    h2 = h.astype(jnp.bfloat16).reshape(Tt * U1, D)
    logits = (jnp.dot(h2, w2_ref[...],
                      preferred_element_type=jnp.float32)
              + b2_ref[...])                                         # [Tt*U1,V]
    out_ref[0] = logits.reshape(Tt, U1, V)             # one dense store / tile


def joint_forward(enc, dec, w1e, w1d, b1, w2, b2, *, t_tile=None):
    """enc: [B, T, He] bf16, dec: [B, U1, Hd] bf16 -> logits [B, T, U1, V] f32."""
    B, T, He = enc.shape
    _, U1, Hd = dec.shape
    D = w1e.shape[-1]
    V = w2.shape[-1]
    if t_tile is None:
        t_tile = _pick_chunk(T, (32, 16, 8))
    return pl.pallas_call(
        _joint_kernel,
        out_shape=jax.ShapeDtypeStruct((B, T, U1, V), jnp.float32),
        grid_spec=pltpu.PrefetchScalarGridSpec(
            num_scalar_prefetch=0,
            grid=(B, T // t_tile),
            in_specs=[
                pl.BlockSpec((1, t_tile, He), lambda b, t: (b, t, 0)),
                pl.BlockSpec((1, U1, Hd), lambda b, t: (b, 0, 0)),
                pl.BlockSpec((He, D), lambda b, t: (0, 0)),
                pl.BlockSpec((Hd, D), lambda b, t: (0, 0)),
                pl.BlockSpec((1, D), lambda b, t: (0, 0)),
                pl.BlockSpec((D, V), lambda b, t: (0, 0)),
                pl.BlockSpec((1, V), lambda b, t: (0, 0)),
            ],
            out_specs=pl.BlockSpec((1, t_tile, U1, V),
                                   lambda b, t: (b, t, 0, 0)),
        ),
        compiler_params=pltpu.CompilerParams(
            dimension_semantics=("parallel", "parallel"),
            vmem_limit_bytes=48 * 1024 * 1024),
    )(enc, dec, w1e, w1d, b1, w2, b2)


# ----------------------------------------------------------------------------
# Transducer forward (glue in plain JAX, hot paths in the kernels above).
# ----------------------------------------------------------------------------
def transducer_forward(params, inputs, inputs_lengths, targets,
                       targets_lengths):
    del inputs_lengths, targets_lengths  # full padded sequences are processed
    B = targets.shape[0]
    bf16 = jnp.bfloat16

    # 1. prepend blank (id 0) to the targets
    zero = jnp.zeros((B, 1), dtype=targets.dtype)
    targets_add_blank = jnp.concatenate([zero, targets], axis=1)   # [B, U+1]

    # 2. encoder: single-layer LSTM over time (time-major inside the kernel)
    x_tbf = jnp.transpose(inputs, (1, 0, 2)).astype(bf16)          # [T, B, F]
    enc_tbh = lstm_forward(x_tbf,
                           params["enc_w_ih"].astype(bf16),
                           params["enc_w_hh"].astype(bf16),
                           params["enc_b"])
    enc_state = jnp.transpose(enc_tbh, (1, 0, 2))                  # [B, T, He]

    # 3. decoder: embedding gathered directly in time-major order + LSTM
    dec_in = params["emb"].astype(bf16)[targets_add_blank.T]       # [U1, B, E]
    dec_tbh = lstm_forward(dec_in,
                           params["dec_w_ih"].astype(bf16),
                           params["dec_w_hh"].astype(bf16),
                           params["dec_b"])
    dec_state = jnp.transpose(dec_tbh, (1, 0, 2))                  # [B, U1,Hd]

    # 4. joint network -> [B, T, U+1, V]
    logits = joint_forward(enc_state, dec_state,
                           params["joint_w1_enc"].astype(bf16),
                           params["joint_w1_dec"].astype(bf16),
                           params["joint_b1"],
                           params["joint_w2"].astype(bf16),
                           params["joint_b2"])
    return logits


# ----------------------------------------------------------------------------
# Deterministic synthetic parameter init (gate-fused LSTM weight layout).
# ----------------------------------------------------------------------------
def init_params(key, F, E, He, Hd, D, V):
    ks = jax.random.split(key, 11)
    u = lambda k, shape, bound: jax.random.uniform(
        k, shape, jnp.float32, -bound, bound)
    inv = lambda n: 1.0 / float(n) ** 0.5

    params = {
        # encoder LSTM (gate order i|f|g|o fused along the lane axis)
        "enc_w_ih": u(ks[0], (F, 4 * He), inv(He)),
        "enc_w_hh": u(ks[1], (He, 4 * He), inv(He)),
        "enc_b":    u(ks[2], (1, 4 * He), inv(He)),
        # decoder: embedding + LSTM
        "emb":      jax.random.normal(ks[3], (V, E), jnp.float32) * 0.1,
        "dec_w_ih": u(ks[4], (E, 4 * Hd), inv(Hd)),
        "dec_w_hh": u(ks[5], (Hd, 4 * Hd), inv(Hd)),
        "dec_b":    u(ks[6], (1, 4 * Hd), inv(Hd)),
    }
    # joint: Linear(He+Hd -> D) split into enc/dec halves, tanh, Linear(D -> V)
    w1 = u(ks[7], (He + Hd, D), inv(He + Hd))
    params["joint_w1_enc"] = w1[:He]
    params["joint_w1_dec"] = w1[He:]
    params["joint_b1"] = u(ks[8], (1, D), inv(He + Hd))
    params["joint_w2"] = u(ks[9], (D, V), inv(D))
    params["joint_b2"] = u(ks[10], (1, V), inv(D))
    return params


if __name__ == "__main__":
    # Hardware-aligned small shapes: lane dims (H, D, V) multiples of 128,
    # sublane dims (B, U+1) multiples of 8.
    B, T, F, U, V = 8, 16, 64, 7, 128
    He = Hd = D = E = 128

    key = jax.random.PRNGKey(0)
    k_par, k_in, k_tg = jax.random.split(key, 3)

    params = init_params(k_par, F, E, He, Hd, D, V)

    inputs = jax.random.normal(k_in, (B, T, F), jnp.float32)       # [B, T, F]
    inputs_lengths = jnp.full((B,), T, dtype=jnp.int32)
    targets = jax.random.randint(k_tg, (B, U), 1, V, dtype=jnp.int32)
    targets_lengths = jnp.full((B,), U, dtype=jnp.int32)

    fwd = jax.jit(transducer_forward)
    logits = fwd(params, inputs, inputs_lengths, targets, targets_lengths)
    logits = jax.block_until_ready(logits)

    assert logits.shape == (B, T, U + 1, V), logits.shape
    assert logits.dtype == jnp.float32
    assert bool(jnp.all(jnp.isfinite(logits)))
    print("KERNEL_OK")
</pallas_src>

<mosaic_0001>
module attributes {stable_mosaic.version = 11 : i64} {
  func.func @_lstm_kernel(%arg0: i32, %arg1: memref<8x8x128xbf16, #tpu.memory_space<vmem>>, %arg2: memref<128x512xbf16, #tpu.memory_space<vmem>>, %arg3: memref<128x512xbf16, #tpu.memory_space<vmem>>, %arg4: memref<1x512xf32, #tpu.memory_space<vmem>>, %arg5: memref<8x8x128xbf16, #tpu.memory_space<vmem>>, %arg6: memref<8x128xf32, #tpu.memory_space<vmem>>, %arg7: memref<8x128xf32, #tpu.memory_space<vmem>>) attributes {dimension_semantics = [#tpu.dimension_semantics<arbitrary>], iteration_bounds = array<i64: 1>, scalar_prefetch = 0 : i64, scratch_operands = 2 : i64, tpu.core_type = #tpu.core_type<tc>, window_params = [{transform_indices = @transform_0, window_bounds = array<i64: 8, 8, 128>}, {pipeline_mode = #tpu.pipeline_mode<synchronous>, transform_indices = @transform_1, window_bounds = array<i64: 128, 512>}, {pipeline_mode = #tpu.pipeline_mode<synchronous>, transform_indices = @transform_2, window_bounds = array<i64: 128, 512>}, {pipeline_mode = #tpu.pipeline_mode<synchronous>, transform_indices = @transform_3, window_bounds = array<i64: 1, 512>}, {transform_indices = @transform_4, window_bounds = array<i64: 8, 8, 128>}]} {
    %c0_i32 = arith.constant 0 : i32
    %0 = arith.cmpi eq, %arg0, %c0_i32 : i32
    %1 = arith.extui %0 : i1 to i32
    %c0_i32_0 = arith.constant 0 : i32
    %2 = arith.cmpi ne, %1, %c0_i32_0 : i32
    scf.if %2 {
      %cst_142 = arith.constant 0.000000e+00 : f32
      %350 = vector.broadcast %cst_142 : f32 to vector<8x128xf32>
      %c0_143 = arith.constant 0 : index
      %c0_144 = arith.constant 0 : index
      %351 = vector.load %arg6[%c0_143, %c0_144] : memref<8x128xf32, #tpu.memory_space<vmem>>, vector<8x128xf32>
      tpu.vector_store %arg6[%c0_143, %c0_144], %350 {strides = array<i32>} : memref<8x128xf32, #tpu.memory_space<vmem>>, vector<8x128xf32>,
      %cst_145 = arith.constant 0.000000e+00 : f32
      %352 = vector.broadcast %cst_145 : f32 to vector<8x128xf32>
      %c0_146 = arith.constant 0 : index
      %c0_147 = arith.constant 0 : index
      %353 = vector.load %arg7[%c0_146, %c0_147] : memref<8x128xf32, #tpu.memory_space<vmem>>, vector<8x128xf32>
      tpu.vector_store %arg7[%c0_146, %c0_147], %352 {strides = array<i32>} : memref<8x128xf32, #tpu.memory_space<vmem>>, vector<8x128xf32>,
    } else {
    }
    %c0 = arith.constant 0 : index
    %c0_1 = arith.constant 0 : index
    %3 = vector.load %arg2[%c0, %c0_1] : memref<128x512xbf16, #tpu.memory_space<vmem>>, vector<128x512xbf16>
    %c0_2 = arith.constant 0 : index
    %c0_3 = arith.constant 0 : index
    %4 = vector.load %arg3[%c0_2, %c0_3] : memref<128x512xbf16, #tpu.memory_space<vmem>>, vector<128x512xbf16>
    %c0_4 = arith.constant 0 : index
    %c0_5 = arith.constant 0 : index
    %5 = vector.load %arg4[%c0_4, %c0_5] : memref<1x512xf32, #tpu.memory_space<vmem>>, vector<1x512xf32>
    %c0_i32_6 = arith.constant 0 : i32
    %6 = arith.index_cast %c0_i32_6 : i32 to index
    %c0_7 = arith.constant 0 : index
    %c0_8 = arith.constant 0 : index
    %7 = vector.load %arg1[%6, %c0_7, %c0_8] : memref<8x8x128xbf16, #tpu.memory_space<vmem>>, vector<1x8x128xbf16>
    %8 = vector.shape_cast %7 : vector<1x8x128xbf16> to vector<8x128xbf16>
    %c0_9 = arith.constant 0 : index
    %c0_10 = arith.constant 0 : index
    %9 = vector.load %arg6[%c0_9, %c0_10] : memref<8x128xf32, #tpu.memory_space<vmem>>, vector<8x128xf32>
    %c0_11 = arith.constant 0 : index
    %c0_12 = arith.constant 0 : index
    %10 = vector.load %arg7[%c0_11, %c0_12] : memref<8x128xf32, #tpu.memory_space<vmem>>, vector<8x128xf32>
    %cst = arith.constant dense<0.000000e+00> : vector<8x512xf32>
    %11 = tpu.matmul %8, %3, %cst {dimension_numbers = #tpu.dot_dimension_numbers<[1], [0], [0], [1], [0, 0, 1, 1], [], []>} : vector<8x128xbf16>, vector<128x512xbf16>, vector<8x512xf32> -> vector<8x512xf32>
    %12 = arith.truncf %9 : vector<8x128xf32> to vector<8x128xbf16>
    %cst_13 = arith.constant dense<0.000000e+00> : vector<8x512xf32>
    %13 = tpu.matmul %12, %4, %cst_13 {dimension_numbers = #tpu.dot_dimension_numbers<[1], [0], [0], [1], [0, 0, 1, 1], [], []>} : vector<8x128xbf16>, vector<128x512xbf16>, vector<8x512xf32> -> vector<8x512xf32>
    %14 = arith.addf %11, %13 : vector<8x512xf32>
    %15 = vector.broadcast %5 : vector<1x512xf32> to vector<8x512xf32>
    %16 = arith.addf %14, %15 : vector<8x512xf32>
    %17 = vector.extract_strided_slice %16 {offsets = [0, 0], sizes = [8, 128], strides = [1, 1]} : vector<8x512xf32> to vector<8x128xf32>
    %18 = arith.negf %17 : vector<8x128xf32>
    %19 = math.exp %18 : vector<8x128xf32>
    %cst_14 = arith.constant 1.000000e+00 : f32
    %20 = vector.broadcast %cst_14 : f32 to vector<8x128xf32>
    %21 = arith.addf %20, %19 : vector<8x128xf32>
    %22 = arith.divf %20, %21 : vector<8x128xf32>
    %23 = vector.extract_strided_slice %16 {offsets = [0, 128], sizes = [8, 128], strides = [1, 1]} : vector<8x512xf32> to vector<8x128xf32>
    %24 = arith.negf %23 : vector<8x128xf32>
    %25 = math.exp %24 : vector<8x128xf32>
    %cst_15 = arith.constant 1.000000e+00 : f32
    %26 = vector.broadcast %cst_15 : f32 to vector<8x128xf32>
    %27 = arith.addf %26, %25 : vector<8x128xf32>
    %28 = arith.divf %26, %27 : vector<8x128xf32>
    %29 = vector.extract_strided_slice %16 {offsets = [0, 256], sizes = [8, 128], strides = [1, 1]} : vector<8x512xf32> to vector<8x128xf32>
    %30 = math.tanh %29 : vector<8x128xf32>
    %31 = vector.extract_strided_slice %16 {offsets = [0, 384], sizes = [8, 128], strides = [1, 1]} : vector<8x512xf32> to vector<8x128xf32>
    %32 = arith.negf %31 : vector<8x128xf32>
    %33 = math.exp %32 : vector<8x128xf32>
    %cst_16 = arith.constant 1.000000e+00 : f32
    %34 = vector.broadcast %cst_16 : f32 to vector<8x128xf32>
    %35 = arith.addf %34, %33 : vector<8x128xf32>
    %36 = arith.divf %34, %35 : vector<8x128xf32>
    %37 = arith.mulf %28, %10 : vector<8x128xf32>
    %38 = arith.mulf %22, %30 : vector<8x128xf32>
    %39 = arith.addf %37, %38 : vector<8x128xf32>
    %40 = math.tanh %39 : vector<8x128xf32>
    %41 = arith.mulf %36, %40 : vector<8x128xf32>
    %c0_17 = arith.constant 0 : index
    %c0_18 = arith.constant 0 : index
    %42 = vector.load %arg7[%c0_17, %c0_18] : memref<8x128xf32, #tpu.memory_space<vmem>>, vector<8x128xf32>
    tpu.vector_store %arg7[%c0_17, %c0_18], %39 {strides = array<i32>} : memref<8x128xf32, #tpu.memory_space<vmem>>, vector<8x128xf32>,
    %c0_19 = arith.constant 0 : index
    %c0_20 = arith.constant 0 : index
    %43 = vector.load %arg6[%c0_19, %c0_20] : memref<8x128xf32, #tpu.memory_space<vmem>>, vector<8x128xf32>
    tpu.vector_store %arg6[%c0_19, %c0_20], %41 {strides = array<i32>} : memref<8x128xf32, #tpu.memory_space<vmem>>, vector<8x128xf32>,
    %44 = arith.truncf %41 : vector<8x128xf32> to vector<8x128xbf16>
    %45 = arith.index_cast %c0_i32_6 : i32 to index
    %c0_21 = arith.constant 0 : index
    %c0_22 = arith.constant 0 : index
    %46 = vector.load %arg5[%45, %c0_21, %c0_22] : memref<8x8x128xbf16, #tpu.memory_space<vmem>>, vector<1x8x128xbf16>
    %47 = vector.shape_cast %46 : vector<1x8x128xbf16> to vector<8x128xbf16>
    %48 = vector.shape_cast %44 : vector<8x128xbf16> to vector<1x8x128xbf16>
    tpu.vector_store %arg5[%45, %c0_21, %c0_22], %48 {strides = array<i32>} : memref<8x8x128xbf16, #tpu.memory_space<vmem>>, vector<1x8x128xbf16>,
    %c1_i32 = arith.constant 1 : i32
    %49 = arith.index_cast %c1_i32 : i32 to index
    %c0_23 = arith.constant 0 : index
    %c0_24 = arith.constant 0 : index
    %50 = vector.load %arg1[%49, %c0_23, %c0_24] : memref<8x8x128xbf16, #tpu.memory_space<vmem>>, vector<1x8x128xbf16>
    %51 = vector.shape_cast %50 : vector<1x8x128xbf16> to vector<8x128xbf16>
    %c0_25 = arith.constant 0 : index
    %c0_26 = arith.constant 0 : index
    %52 = vector.load %arg6[%c0_25, %c0_26] : memref<8x128xf32, #tpu.memory_space<vmem>>, vector<8x128xf32>
    %c0_27 = arith.constant 0 : index
    %c0_28 = arith.constant 0 : index
    %53 = vector.load %arg7[%c0_27, %c0_28] : memref<8x128xf32, #tpu.memory_space<vmem>>, vector<8x128xf32>
    %cst_29 = arith.constant dense<0.000000e+00> : vector<8x512xf32>
    %54 = tpu.matmul %51, %3, %cst_29 {dimension_numbers = #tpu.dot_dimension_numbers<[1], [0], [0], [1], [0, 0, 1, 1], [], []>} : vector<8x128xbf16>, vector<128x512xbf16>, vector<8x512xf32> -> vector<8x512xf32>
    %55 = arith.truncf %52 : vector<8x128xf32> to vector<8x128xbf16>
    %cst_30 = arith.constant dense<0.000000e+00> : vector<8x512xf32>
    %56 = tpu.matmul %55, %4, %cst_30 {dimension_numbers = #tpu.dot_dimension_numbers<[1], [0], [0], [1], [0, 0, 1, 1], [], []>} : vector<8x128xbf16>, vector<128x512xbf16>, vector<8x512xf32> -> vector<8x512xf32>
    %57 = arith.addf %54, %56 : vector<8x512xf32>
    %58 = vector.broadcast %5 : vector<1x512xf32> to vector<8x512xf32>
    %59 = arith.addf %57, %58 : vector<8x512xf32>
    %60 = vector.extract_strided_slice %59 {offsets = [0, 0], sizes = [8, 128], strides = [1, 1]} : vector<8x512xf32> to vector<8x128xf32>
    %61 = arith.negf %60 : vector<8x128xf32>
    %62 = math.exp %61 : vector<8x128xf32>
    %cst_31 = arith.constant 1.000000e+00 : f32
    %63 = vector.broadcast %cst_31 : f32 to vector<8x128xf32>
    %64 = arith.addf %63, %62 : vector<8x128xf32>
    %65 = arith.divf %63, %64 : vector<8x128xf32>
    %66 = vector.extract_strided_slice %59 {offsets = [0, 128], sizes = [8, 128], strides = [1, 1]} : vector<8x512xf32> to vector<8x128xf32>
    %67 = arith.negf %66 : vector<8x128xf32>
    %68 = math.exp %67 : vector<8x128xf32>
    %cst_32 = arith.constant 1.000000e+00 : f32
    %69 = vector.broadcast %cst_32 : f32 to vector<8x128xf32>
    %70 = arith.addf %69, %68 : vector<8x128xf32>
    %71 = arith.divf %69, %70 : vector<8x128xf32>
    %72 = vector.extract_strided_slice %59 {offsets = [0, 256], sizes = [8, 128], strides = [1, 1]} : vector<8x512xf32> to vector<8x128xf32>
    %73 = math.tanh %72 : vector<8x128xf32>
    %74 = vector.extract_strided_slice %59 {offsets = [0, 384], sizes = [8, 128], strides = [1, 1]} : vector<8x512xf32> to vector<8x128xf32>
    %75 = arith.negf %74 : vector<8x128xf32>
    %76 = math.exp %75 : vector<8x128xf32>
    %cst_33 = arith.constant 1.000000e+00 : f32
    %77 = vector.broadcast %cst_33 : f32 to vector<8x128xf32>
    %78 = arith.addf %77, %76 : vector<8x128xf32>
    %79 = arith.divf %77, %78 : vector<8x128xf32>
    %80 = arith.mulf %71, %53 : vector<8x128xf32>
    %81 = arith.mulf %65, %73 : vector<8x128xf32>
    %82 = arith.addf %80, %81 : vector<8x128xf32>
    %83 = math.tanh %82 : vector<8x128xf32>
    %84 = arith.mulf %79, %83 : vector<8x128xf32>
    %c0_34 = arith.constant 0 : index
    %c0_35 = arith.constant 0 : index
    %85 = vector.load %arg7[%c0_34, %c0_35] : memref<8x128xf32, #tpu.memory_space<vmem>>, vector<8x128xf32>
    tpu.vector_store %arg7[%c0_34, %c0_35], %82 {strides = array<i32>} : memref<8x128xf32, #tpu.memory_space<vmem>>, vector<8x128xf32>,
    %c0_36 = arith.constant 0 : index
    %c0_37 = arith.constant 0 : index
    %86 = vector.load %arg6[%c0_36, %c0_37] : memref<8x128xf32, #tpu.memory_space<vmem>>, vector<8x128xf32>
    tpu.vector_store %arg6[%c0_36, %c0_37], %84 {strides = array<i32>} : memref<8x128xf32, #tpu.memory_space<vmem>>, vector<8x128xf32>,
    %87 = arith.truncf %84 : vector<8x128xf32> to vector<8x128xbf16>
    %88 = arith.index_cast %c1_i32 : i32 to index
    %c0_38 = arith.constant 0 : index
    %c0_39 = arith.constant 0 : index
    %89 = vector.load %arg5[%88, %c0_38, %c0_39] : memref<8x8x128xbf16, #tpu.memory_space<vmem>>, vector<1x8x128xbf16>
    %90 = vector.shape_cast %89 : vector<1x8x128xbf16> to vector<8x128xbf16>
    %91 = vector.shape_cast %87 : vector<8x128xbf16> to vector<1x8x128xbf16>
    tpu.vector_store %arg5[%88, %c0_38, %c0_39], %91 {strides = array<i32>} : memref<8x8x128xbf16, #tpu.memory_space<vmem>>, vector<1x8x128xbf16>,
    %c2_i32 = arith.constant 2 : i32
    %92 = arith.index_cast %c2_i32 : i32 to index
    %c0_40 = arith.constant 0 : index
    %c0_41 = arith.constant 0 : index
    %93 = vector.load %arg1[%92, %c0_40, %c0_41] : memref<8x8x128xbf16, #tpu.memory_space<vmem>>, vector<1x8x128xbf16>
    %94 = vector.shape_cast %93 : vector<1x8x128xbf16> to vector<8x128xbf16>
    %c0_42 = arith.constant 0 : index
    %c0_43 = arith.constant 0 : index
    %95 = vector.load %arg6[%c0_42, %c0_43] : memref<8x128xf32, #tpu.memory_space<vmem>>, vector<8x128xf32>
    %c0_44 = arith.constant 0 : index
    %c0_45 = arith.constant 0 : index
    %96 = vector.load %arg7[%c0_44, %c0_45] : memref<8x128xf32, #tpu.memory_space<vmem>>, vector<8x128xf32>
    %cst_46 = arith.constant dense<0.000000e+00> : vector<8x512xf32>
    %97 = tpu.matmul %94, %3, %cst_46 {dimension_numbers = #tpu.dot_dimension_numbers<[1], [0], [0], [1], [0, 0, 1, 1], [], []>} : vector<8x128xbf16>, vector<128x512xbf16>, vector<8x512xf32> -> vector<8x512xf32>
    %98 = arith.truncf %95 : vector<8x128xf32> to vector<8x128xbf16>
    %cst_47 = arith.constant dense<0.000000e+00> : vector<8x512xf32>
    %99 = tpu.matmul %98, %4, %cst_47 {dimension_numbers = #tpu.dot_dimension_numbers<[1], [0], [0], [1], [0, 0, 1, 1], [], []>} : vector<8x128xbf16>, vector<128x512xbf16>, vector<8x512xf32> -> vector<8x512xf32>
    %100 = arith.addf %97, %99 : vector<8x512xf32>
    %101 = vector.broadcast %5 : vector<1x512xf32> to vector<8x512xf32>
    %102 = arith.addf %100, %101 : vector<8x512xf32>
    %103 = vector.extract_strided_slice %102 {offsets = [0, 0], sizes = [8, 128], strides = [1, 1]} : vector<8x512xf32> to vector<8x128xf32>
    %104 = arith.negf %103 : vector<8x128xf32>
    %105 = math.exp %104 : vector<8x128xf32>
    %cst_48 = arith.constant 1.000000e+00 : f32
    %106 = vector.broadcast %cst_48 : f32 to vector<8x128xf32>
    %107 = arith.addf %106, %105 : vector<8x128xf32>
    %108 = arith.divf %106, %107 : vector<8x128xf32>
    %109 = vector.extract_strided_slice %102 {offsets = [0, 128], sizes = [8, 128], strides = [1, 1]} : vector<8x512xf32> to vector<8x128xf32>
    %110 = arith.negf %109 : vector<8x128xf32>
    %111 = math.exp %110 : vector<8x128xf32>
    %cst_49 = arith.constant 1.000000e+00 : f32
    %112 = vector.broadcast %cst_49 : f32 to vector<8x128xf32>
    %113 = arith.addf %112, %111 : vector<8x128xf32>
    %114 = arith.divf %112, %113 : vector<8x128xf32>
    %115 = vector.extract_strided_slice %102 {offsets = [0, 256], sizes = [8, 128], strides = [1, 1]} : vector<8x512xf32> to vector<8x128xf32>
    %116 = math.tanh %115 : vector<8x128xf32>
    %117 = vector.extract_strided_slice %102 {offsets = [0, 384], sizes = [8, 128], strides = [1, 1]} : vector<8x512xf32> to vector<8x128xf32>
    %118 = arith.negf %117 : vector<8x128xf32>
    %119 = math.exp %118 : vector<8x128xf32>
    %cst_50 = arith.constant 1.000000e+00 : f32
    %120 = vector.broadcast %cst_50 : f32 to vector<8x128xf32>
    %121 = arith.addf %120, %119 : vector<8x128xf32>
    %122 = arith.divf %120, %121 : vector<8x128xf32>
    %123 = arith.mulf %114, %96 : vector<8x128xf32>
    %124 = arith.mulf %108, %116 : vector<8x128xf32>
    %125 = arith.addf %123, %124 : vector<8x128xf32>
    %126 = math.tanh %125 : vector<8x128xf32>
    %127 = arith.mulf %122, %126 : vector<8x128xf32>
    %c0_51 = arith.constant 0 : index
    %c0_52 = arith.constant 0 : index
    %128 = vector.load %arg7[%c0_51, %c0_52] : memref<8x128xf32, #tpu.memory_space<vmem>>, vector<8x128xf32>
    tpu.vector_store %arg7[%c0_51, %c0_52], %125 {strides = array<i32>} : memref<8x128xf32, #tpu.memory_space<vmem>>, vector<8x128xf32>,
    %c0_53 = arith.constant 0 : index
    %c0_54 = arith.constant 0 : index
    %129 = vector.load %arg6[%c0_53, %c0_54] : memref<8x128xf32, #tpu.memory_space<vmem>>, vector<8x128xf32>
    tpu.vector_store %arg6[%c0_53, %c0_54], %127 {strides = array<i32>} : memref<8x128xf32, #tpu.memory_space<vmem>>, vector<8x128xf32>,
    %130 = arith.truncf %127 : vector<8x128xf32> to vector<8x128xbf16>
    %131 = arith.index_cast %c2_i32 : i32 to index
    %c0_55 = arith.constant 0 : index
    %c0_56 = arith.constant 0 : index
    %132 = vector.load %arg5[%131, %c0_55, %c0_56] : memref<8x8x128xbf16, #tpu.memory_space<vmem>>, vector<1x8x128xbf16>
    %133 = vector.shape_cast %132 : vector<1x8x128xbf16> to vector<8x128xbf16>
    %134 = vector.shape_cast %130 : vector<8x128xbf16> to vector<1x8x128xbf16>
    tpu.vector_store %arg5[%131, %c0_55, %c0_56], %134 {strides = array<i32>} : memref<8x8x128xbf16, #tpu.memory_space<vmem>>, vector<1x8x128xbf16>,
    %c3_i32 = arith.constant 3 : i32
    %135 = arith.index_cast %c3_i32 : i32 to index
    %c0_57 = arith.constant 0 : index
    %c0_58 = arith.constant 0 : index
    %136 = vector.load %arg1[%135, %c0_57, %c0_58] : memref<8x8x128xbf16, #tpu.memory_space<vmem>>, vector<1x8x128xbf16>
    %137 = vector.shape_cast %136 : vector<1x8x128xbf16> to vector<8x128xbf16>
    %c0_59 = arith.constant 0 : index
    %c0_60 = arith.constant 0 : index
    %138 = vector.load %arg6[%c0_59, %c0_60] : memref<8x128xf32, #tpu.memory_space<vmem>>, vector<8x128xf32>
    %c0_61 = arith.constant 0 : index
    %c0_62 = arith.constant 0 : index
    %139 = vector.load %arg7[%c0_61, %c0_62] : memref<8x128xf32, #tpu.memory_space<vmem>>, vector<8x128xf32>
    %cst_63 = arith.constant dense<0.000000e+00> : vector<8x512xf32>
    %140 = tpu.matmul %137, %3, %cst_63 {dimension_numbers = #tpu.dot_dimension_numbers<[1], [0], [0], [1], [0, 0, 1, 1], [], []>} : vector<8x128xbf16>, vector<128x512xbf16>, vector<8x512xf32> -> vector<8x512xf32>
    %141 = arith.truncf %138 : vector<8x128xf32> to vector<8x128xbf16>
    %cst_64 = arith.constant dense<0.000000e+00> : vector<8x512xf32>
    %142 = tpu.matmul %141, %4, %cst_64 {dimension_numbers = #tpu.dot_dimension_numbers<[1], [0], [0], [1], [0, 0, 1, 1], [], []>} : vector<8x128xbf16>, vector<128x512xbf16>, vector<8x512xf32> -> vector<8x512xf32>
    %143 = arith.addf %140, %142 : vector<8x512xf32>
    %144 = vector.broadcast %5 : vector<1x512xf32> to vector<8x512xf32>
    %145 = arith.addf %143, %144 : vector<8x512xf32>
    %146 = vector.extract_strided_slice %145 {offsets = [0, 0], sizes = [8, 128], strides = [1, 1]} : vector<8x512xf32> to vector<8x128xf32>
    %147 = arith.negf %146 : vector<8x128xf32>
    %148 = math.exp %147 : vector<8x128xf32>
    %cst_65 = arith.constant 1.000000e+00 : f32
    %149 = vector.broadcast %cst_65 : f32 to vector<8x128xf32>
    %150 = arith.addf %149, %148 : vector<8x128xf32>
    %151 = arith.divf %149, %150 : vector<8x128xf32>
    %152 = vector.extract_strided_slice %145 {offsets = [0, 128], sizes = [8, 128], strides = [1, 1]} : vector<8x512xf32> to vector<8x128xf32>
    %153 = arith.negf %152 : vector<8x128xf32>
    %154 = math.exp %153 : vector<8x128xf32>
    %cst_66 = arith.constant 1.000000e+00 : f32
    %155 = vector.broadcast %cst_66 : f32 to vector<8x128xf32>
    %156 = arith.addf %155, %154 : vector<8x128xf32>
    %157 = arith.divf %155, %156 : vector<8x128xf32>
    %158 = vector.extract_strided_slice %145 {offsets = [0, 256], sizes = [8, 128], strides = [1, 1]} : vector<8x512xf32> to vector<8x128xf32>
    %159 = math.tanh %158 : vector<8x128xf32>
    %160 = vector.extract_strided_slice %145 {offsets = [0, 384], sizes = [8, 128], strides = [1, 1]} : vector<8x512xf32> to vector<8x128xf32>
    %161 = arith.negf %160 : vector<8x128xf32>
    %162 = math.exp %161 : vector<8x128xf32>
    %cst_67 = arith.constant 1.000000e+00 : f32
    %163 = vector.broadcast %cst_67 : f32 to vector<8x128xf32>
    %164 = arith.addf %163, %162 : vector<8x128xf32>
    %165 = arith.divf %163, %164 : vector<8x128xf32>
    %166 = arith.mulf %157, %139 : vector<8x128xf32>
    %167 = arith.mulf %151, %159 : vector<8x128xf32>
    %168 = arith.addf %166, %167 : vector<8x128xf32>
    %169 = math.tanh %168 : vector<8x128xf32>
    %170 = arith.mulf %165, %169 : vector<8x128xf32>
    %c0_68 = arith.constant 0 : index
    %c0_69 = arith.constant 0 : index
    %171 = vector.load %arg7[%c0_68, %c0_69] : memref<8x128xf32, #tpu.memory_space<vmem>>, vector<8x128xf32>
    tpu.vector_store %arg7[%c0_68, %c0_69], %168 {strides = array<i32>} : memref<8x128xf32, #tpu.memory_space<vmem>>, vector<8x128xf32>,
    %c0_70 = arith.constant 0 : index
    %c0_71 = arith.constant 0 : index
    %172 = vector.load %arg6[%c0_70, %c0_71] : memref<8x128xf32, #tpu.memory_space<vmem>>, vector<8x128xf32>
    tpu.vector_store %arg6[%c0_70, %c0_71], %170 {strides = array<i32>} : memref<8x128xf32, #tpu.memory_space<vmem>>, vector<8x128xf32>,
    %173 = arith.truncf %170 : vector<8x128xf32> to vector<8x128xbf16>
    %174 = arith.index_cast %c3_i32 : i32 to index
    %c0_72 = arith.constant 0 : index
    %c0_73 = arith.constant 0 : index
    %175 = vector.load %arg5[%174, %c0_72, %c0_73] : memref<8x8x128xbf16, #tpu.memory_space<vmem>>, vector<1x8x128xbf16>
    %176 = vector.shape_cast %175 : vector<1x8x128xbf16> to vector<8x128xbf16>
    %177 = vector.shape_cast %173 : vector<8x128xbf16> to vector<1x8x128xbf16>
    tpu.vector_store %arg5[%174, %c0_72, %c0_73], %177 {strides = array<i32>} : memref<8x8x128xbf16, #tpu.memory_space<vmem>>, vector<1x8x128xbf16>,
    %c4_i32 = arith.constant 4 : i32
    %178 = arith.index_cast %c4_i32 : i32 to index
    %c0_74 = arith.constant 0 : index
    %c0_75 = arith.constant 0 : index
    %179 = vector.load %arg1[%178, %c0_74, %c0_75] : memref<8x8x128xbf16, #tpu.memory_space<vmem>>, vector<1x8x128xbf16>
    %180 = vector.shape_cast %179 : vector<1x8x128xbf16> to vector<8x128xbf16>
    %c0_76 = arith.constant 0 : index
    %c0_77 = arith.constant 0 : index
    %181 = vector.load %arg6[%c0_76, %c0_77] : memref<8x128xf32, #tpu.memory_space<vmem>>, vector<8x128xf32>
    %c0_78 = arith.constant 0 : index
    %c0_79 = arith.constant 0 : index
    %182 = vector.load %arg7[%c0_78, %c0_79] : memref<8x128xf32, #tpu.memory_space<vmem>>, vector<8x128xf32>
    %cst_80 = arith.constant dense<0.000000e+00> : vector<8x512xf32>
    %183 = tpu.matmul %180, %3, %cst_80 {dimension_numbers = #tpu.dot_dimension_numbers<[1], [0], [0], [1], [0, 0, 1, 1], [], []>} : vector<8x128xbf16>, vector<128x512xbf16>, vector<8x512xf32> -> vector<8x512xf32>
    %184 = arith.truncf %181 : vector<8x128xf32> to vector<8x128xbf16>
    %cst_81 = arith.constant dense<0.000000e+00> : vector<8x512xf32>
    %185 = tpu.matmul %184, %4, %cst_81 {dimension_numbers = #tpu.dot_dimension_numbers<[1], [0], [0], [1], [0, 0, 1, 1], [], []>} : vector<8x128xbf16>, vector<128x512xbf16>, vector<8x512xf32> -> vector<8x512xf32>
    %186 = arith.addf %183, %185 : vector<8x512xf32>
    %187 = vector.broadcast %5 : vector<1x512xf32> to vector<8x512xf32>
    %188 = arith.addf %186, %187 : vector<8x512xf32>
    %189 = vector.extract_strided_slice %188 {offsets = [0, 0], sizes = [8, 128], strides = [1, 1]} : vector<8x512xf32> to vector<8x128xf32>
    %190 = arith.negf %189 : vector<8x128xf32>
    %191 = math.exp %190 : vector<8x128xf32>
    %cst_82 = arith.constant 1.000000e+00 : f32
    %192 = vector.broadcast %cst_82 : f32 to vector<8x128xf32>
    %193 = arith.addf %192, %191 : vector<8x128xf32>
    %194 = arith.divf %192, %193 : vector<8x128xf32>
    %195 = vector.extract_strided_slice %188 {offsets = [0, 128], sizes = [8, 128], strides = [1, 1]} : vector<8x512xf32> to vector<8x128xf32>
    %196 = arith.negf %195 : vector<8x128xf32>
    %197 = math.exp %196 : vector<8x128xf32>
    %cst_83 = arith.constant 1.000000e+00 : f32
    %198 = vector.broadcast %cst_83 : f32 to vector<8x128xf32>
    %199 = arith.addf %198, %197 : vector<8x128xf32>
    %200 = arith.divf %198, %199 : vector<8x128xf32>
    %201 = vector.extract_strided_slice %188 {offsets = [0, 256], sizes = [8, 128], strides = [1, 1]} : vector<8x512xf32> to vector<8x128xf32>
    %202 = math.tanh %201 : vector<8x128xf32>
    %203 = vector.extract_strided_slice %188 {offsets = [0, 384], sizes = [8, 128], strides = [1, 1]} : vector<8x512xf32> to vector<8x128xf32>
    %204 = arith.negf %203 : vector<8x128xf32>
    %205 = math.exp %204 : vector<8x128xf32>
    %cst_84 = arith.constant 1.000000e+00 : f32
    %206 = vector.broadcast %cst_84 : f32 to vector<8x128xf32>
    %207 = arith.addf %206, %205 : vector<8x128xf32>
    %208 = arith.divf %206, %207 : vector<8x128xf32>
    %209 = arith.mulf %200, %182 : vector<8x128xf32>
    %210 = arith.mulf %194, %202 : vector<8x128xf32>
    %211 = arith.addf %209, %210 : vector<8x128xf32>
    %212 = math.tanh %211 : vector<8x128xf32>
    %213 = arith.mulf %208, %212 : vector<8x128xf32>
    %c0_85 = arith.constant 0 : index
    %c0_86 = arith.constant 0 : index
    %214 = vector.load %arg7[%c0_85, %c0_86] : memref<8x128xf32, #tpu.memory_space<vmem>>, vector<8x128xf32>
    tpu.vector_store %arg7[%c0_85, %c0_86], %211 {strides = array<i32>} : memref<8x128xf32, #tpu.memory_space<vmem>>, vector<8x128xf32>,
    %c0_87 = arith.constant 0 : index
    %c0_88 = arith.constant 0 : index
    %215 = vector.load %arg6[%c0_87, %c0_88] : memref<8x128xf32, #tpu.memory_space<vmem>>, vector<8x128xf32>
    tpu.vector_store %arg6[%c0_87, %c0_88], %213 {strides = array<i32>} : memref<8x128xf32, #tpu.memory_space<vmem>>, vector<8x128xf32>,
    %216 = arith.truncf %213 : vector<8x128xf32> to vector<8x128xbf16>
    %217 = arith.index_cast %c4_i32 : i32 to index
    %c0_89 = arith.constant 0 : index
    %c0_90 = arith.constant 0 : index
    %218 = vector.load %arg5[%217, %c0_89, %c0_90] : memref<8x8x128xbf16, #tpu.memory_space<vmem>>, vector<1x8x128xbf16>
    %219 = vector.shape_cast %218 : vector<1x8x128xbf16> to vector<8x128xbf16>
    %220 = vector.shape_cast %216 : vector<8x128xbf16> to vector<1x8x128xbf16>
    tpu.vector_store %arg5[%217, %c0_89, %c0_90], %220 {strides = array<i32>} : memref<8x8x128xbf16, #tpu.memory_space<vmem>>, vector<1x8x128xbf16>,
    %c5_i32 = arith.constant 5 : i32
    %221 = arith.index_cast %c5_i32 : i32 to index
    %c0_91 = arith.constant 0 : index
    %c0_92 = arith.constant 0 : index
    %222 = vector.load %arg1[%221, %c0_91, %c0_92] : memref<8x8x128xbf16, #tpu.memory_space<vmem>>, vector<1x8x128xbf16>
    %223 = vector.shape_cast %222 : vector<1x8x128xbf16> to vector<8x128xbf16>
    %c0_93 = arith.constant 0 : index
    %c0_94 = arith.constant 0 : index
    %224 = vector.load %arg6[%c0_93, %c0_94] : memref<8x128xf32, #tpu.memory_space<vmem>>, vector<8x128xf32>
    %c0_95 = arith.constant 0 : index
    %c0_96 = arith.constant 0 : index
    %225 = vector.load %arg7[%c0_95, %c0_96] : memref<8x128xf32, #tpu.memory_space<vmem>>, vector<8x128xf32>
    %cst_97 = arith.constant dense<0.000000e+00> : vector<8x512xf32>
    %226 = tpu.matmul %223, %3, %cst_97 {dimension_numbers = #tpu.dot_dimension_numbers<[1], [0], [0], [1], [0, 0, 1, 1], [], []>} : vector<8x128xbf16>, vector<128x512xbf16>, vector<8x512xf32> -> vector<8x512xf32>
    %227 = arith.truncf %224 : vector<8x128xf32> to vector<8x128xbf16>
    %cst_98 = arith.constant dense<0.000000e+00> : vector<8x512xf32>
    %228 = tpu.matmul %227, %4, %cst_98 {dimension_numbers = #tpu.dot_dimension_numbers<[1], [0], [0], [1], [0, 0, 1, 1], [], []>} : vector<8x128xbf16>, vector<128x512xbf16>, vector<8x512xf32> -> vector<8x512xf32>
    %229 = arith.addf %226, %228 : vector<8x512xf32>
    %230 = vector.broadcast %5 : vector<1x512xf32> to vector<8x512xf32>
    %231 = arith.addf %229, %230 : vector<8x512xf32>
    %232 = vector.extract_strided_slice %231 {offsets = [0, 0], sizes = [8, 128], strides = [1, 1]} : vector<8x512xf32> to vector<8x128xf32>
    %233 = arith.negf %232 : vector<8x128xf32>
    %234 = math.exp %233 : vector<8x128xf32>
    %cst_99 = arith.constant 1.000000e+00 : f32
    %235 = vector.broadcast %cst_99 : f32 to vector<8x128xf32>
    %236 = arith.addf %235, %234 : vector<8x128xf32>
    %237 = arith.divf %235, %236 : vector<8x128xf32>
    %238 = vector.extract_strided_slice %231 {offsets = [0, 128], sizes = [8, 128], strides = [1, 1]} : vector<8x512xf32> to vector<8x128xf32>
    %239 = arith.negf %238 : vector<8x128xf32>
    %240 = math.exp %239 : vector<8x128xf32>
    %cst_100 = arith.constant 1.000000e+00 : f32
    %241 = vector.broadcast %cst_100 : f32 to vector<8x128xf32>
    %242 = arith.addf %241, %240 : vector<8x128xf32>
    %243 = arith.divf %241, %242 : vector<8x128xf32>
    %244 = vector.extract_strided_slice %231 {offsets = [0, 256], sizes = [8, 128], strides = [1, 1]} : vector<8x512xf32> to vector<8x128xf32>
    %245 = math.tanh %244 : vector<8x128xf32>
    %246 = vector.extract_strided_slice %231 {offsets = [0, 384], sizes = [8, 128], strides = [1, 1]} : vector<8x512xf32> to vector<8x128xf32>
    %247 = arith.negf %246 : vector<8x128xf32>
    %248 = math.exp %247 : vector<8x128xf32>
    %cst_101 = arith.constant 1.000000e+00 : f32
    %249 = vector.broadcast %cst_101 : f32 to vector<8x128xf32>
    %250 = arith.addf %249, %248 : vector<8x128xf32>
    %251 = arith.divf %249, %250 : vector<8x128xf32>
    %252 = arith.mulf %243, %225 : vector<8x128xf32>
    %253 = arith.mulf %237, %245 : vector<8x128xf32>
    %254 = arith.addf %252, %253 : vector<8x128xf32>
    %255 = math.tanh %254 : vector<8x128xf32>
    %256 = arith.mulf %251, %255 : vector<8x128xf32>
    %c0_102 = arith.constant 0 : index
    %c0_103 = arith.constant 0 : index
    %257 = vector.load %arg7[%c0_102, %c0_103] : memref<8x128xf32, #tpu.memory_space<vmem>>, vector<8x128xf32>
    tpu.vector_store %arg7[%c0_102, %c0_103], %254 {strides = array<i32>} : memref<8x128xf32, #tpu.memory_space<vmem>>, vector<8x128xf32>,
    %c0_104 = arith.constant 0 : index
    %c0_105 = arith.constant 0 : index
    %258 = vector.load %arg6[%c0_104, %c0_105] : memref<8x128xf32, #tpu.memory_space<vmem>>, vector<8x128xf32>
    tpu.vector_store %arg6[%c0_104, %c0_105], %256 {strides = array<i32>} : memref<8x128xf32, #tpu.memory_space<vmem>>, vector<8x128xf32>,
    %259 = arith.truncf %256 : vector<8x128xf32> to vector<8x128xbf16>
    %260 = arith.index_cast %c5_i32 : i32 to index
    %c0_106 = arith.constant 0 : index
    %c0_107 = arith.constant 0 : index
    %261 = vector.load %arg5[%260, %c0_106, %c0_107] : memref<8x8x128xbf16, #tpu.memory_space<vmem>>, vector<1x8x128xbf16>
    %262 = vector.shape_cast %261 : vector<1x8x128xbf16> to vector<8x128xbf16>
    %263 = vector.shape_cast %259 : vector<8x128xbf16> to vector<1x8x128xbf16>
    tpu.vector_store %arg5[%260, %c0_106, %c0_107], %263 {strides = array<i32>} : memref<8x8x128xbf16, #tpu.memory_space<vmem>>, vector<1x8x128xbf16>,
    %c6_i32 = arith.constant 6 : i32
    %264 = arith.index_cast %c6_i32 : i32 to index
    %c0_108 = arith.constant 0 : index
    %c0_109 = arith.constant 0 : index
    %265 = vector.load %arg1[%264, %c0_108, %c0_109] : memref<8x8x128xbf16, #tpu.memory_space<vmem>>, vector<1x8x128xbf16>
    %266 = vector.shape_cast %265 : vector<1x8x128xbf16> to vector<8x128xbf16>
    %c0_110 = arith.constant 0 : index
    %c0_111 = arith.constant 0 : index
    %267 = vector.load %arg6[%c0_110, %c0_111] : memref<8x128xf32, #tpu.memory_space<vmem>>, vector<8x128xf32>
    %c0_112 = arith.constant 0 : index
    %c0_113 = arith.constant 0 : index
    %268 = vector.load %arg7[%c0_112, %c0_113] : memref<8x128xf32, #tpu.memory_space<vmem>>, vector<8x128xf32>
    %cst_114 = arith.constant dense<0.000000e+00> : vector<8x512xf32>
    %269 = tpu.matmul %266, %3, %cst_114 {dimension_numbers = #tpu.dot_dimension_numbers<[1], [0], [0], [1], [0, 0, 1, 1], [], []>} : vector<8x128xbf16>, vector<128x512xbf16>, vector<8x512xf32> -> vector<8x512xf32>
    %270 = arith.truncf %267 : vector<8x128xf32> to vector<8x128xbf16>
    %cst_115 = arith.constant dense<0.000000e+00> : vector<8x512xf32>
    %271 = tpu.matmul %270, %4, %cst_115 {dimension_numbers = #tpu.dot_dimension_numbers<[1], [0], [0], [1], [0, 0, 1, 1], [], []>} : vector<8x128xbf16>, vector<128x512xbf16>, vector<8x512xf32> -> vector<8x512xf32>
    %272 = arith.addf %269, %271 : vector<8x512xf32>
    %273 = vector.broadcast %5 : vector<1x512xf32> to vector<8x512xf32>
    %274 = arith.addf %272, %273 : vector<8x512xf32>
    %275 = vector.extract_strided_slice %274 {offsets = [0, 0], sizes = [8, 128], strides = [1, 1]} : vector<8x512xf32> to vector<8x128xf32>
    %276 = arith.negf %275 : vector<8x128xf32>
    %277 = math.exp %276 : vector<8x128xf32>
    %cst_116 = arith.constant 1.000000e+00 : f32
    %278 = vector.broadcast %cst_116 : f32 to vector<8x128xf32>
    %279 = arith.addf %278, %277 : vector<8x128xf32>
    %280 = arith.divf %278, %279 : vector<8x128xf32>
    %281 = vector.extract_strided_slice %274 {offsets = [0, 128], sizes = [8, 128], strides = [1, 1]} : vector<8x512xf32> to vector<8x128xf32>
    %282 = arith.negf %281 : vector<8x128xf32>
    %283 = math.exp %282 : vector<8x128xf32>
    %cst_117 = arith.constant 1.000000e+00 : f32
    %284 = vector.broadcast %cst_117 : f32 to vector<8x128xf32>
    %285 = arith.addf %284, %283 : vector<8x128xf32>
    %286 = arith.divf %284, %285 : vector<8x128xf32>
    %287 = vector.extract_strided_slice %274 {offsets = [0, 256], sizes = [8, 128], strides = [1, 1]} : vector<8x512xf32> to vector<8x128xf32>
    %288 = math.tanh %287 : vector<8x128xf32>
    %289 = vector.extract_strided_slice %274 {offsets = [0, 384], sizes = [8, 128], strides = [1, 1]} : vector<8x512xf32> to vector<8x128xf32>
    %290 = arith.negf %289 : vector<8x128xf32>
    %291 = math.exp %290 : vector<8x128xf32>
    %cst_118 = arith.constant 1.000000e+00 : f32
    %292 = vector.broadcast %cst_118 : f32 to vector<8x128xf32>
    %293 = arith.addf %292, %291 : vector<8x128xf32>
    %294 = arith.divf %292, %293 : vector<8x128xf32>
    %295 = arith.mulf %286, %268 : vector<8x128xf32>
    %296 = arith.mulf %280, %288 : vector<8x128xf32>
    %297 = arith.addf %295, %296 : vector<8x128xf32>
    %298 = math.tanh %297 : vector<8x128xf32>
    %299 = arith.mulf %294, %298 : vector<8x128xf32>
    %c0_119 = arith.constant 0 : index
    %c0_120 = arith.constant 0 : index
    %300 = vector.load %arg7[%c0_119, %c0_120] : memref<8x128xf32, #tpu.memory_space<vmem>>, vector<8x128xf32>
    tpu.vector_store %arg7[%c0_119, %c0_120], %297 {strides = array<i32>} : memref<8x128xf32, #tpu.memory_space<vmem>>, vector<8x128xf32>,
    %c0_121 = arith.constant 0 : index
    %c0_122 = arith.constant 0 : index
    %301 = vector.load %arg6[%c0_121, %c0_122] : memref<8x128xf32, #tpu.memory_space<vmem>>, vector<8x128xf32>
    tpu.vector_store %arg6[%c0_121, %c0_122], %299 {strides = array<i32>} : memref<8x128xf32, #tpu.memory_space<vmem>>, vector<8x128xf32>,
    %302 = arith.truncf %299 : vector<8x128xf32> to vector<8x128xbf16>
    %303 = arith.index_cast %c6_i32 : i32 to index
    %c0_123 = arith.constant 0 : index
    %c0_124 = arith.constant 0 : index
    %304 = vector.load %arg5[%303, %c0_123, %c0_124] : memref<8x8x128xbf16, #tpu.memory_space<vmem>>, vector<1x8x128xbf16>
    %305 = vector.shape_cast %304 : vector<1x8x128xbf16> to vector<8x128xbf16>
    %306 = vector.shape_cast %302 : vector<8x128xbf16> to vector<1x8x128xbf16>
    tpu.vector_store %arg5[%303, %c0_123, %c0_124], %306 {strides = array<i32>} : memref<8x8x128xbf16, #tpu.memory_space<vmem>>, vector<1x8x128xbf16>,
    %c7_i32 = arith.constant 7 : i32
    %307 = arith.index_cast %c7_i32 : i32 to index
    %c0_125 = arith.constant 0 : index
    %c0_126 = arith.constant 0 : index
    %308 = vector.load %arg1[%307, %c0_125, %c0_126] : memref<8x8x128xbf16, #tpu.memory_space<vmem>>, vector<1x8x128xbf16>
    %309 = vector.shape_cast %308 : vector<1x8x128xbf16> to vector<8x128xbf16>
    %c0_127 = arith.constant 0 : index
    %c0_128 = arith.constant 0 : index
    %310 = vector.load %arg6[%c0_127, %c0_128] : memref<8x128xf32, #tpu.memory_space<vmem>>, vector<8x128xf32>
    %c0_129 = arith.constant 0 : index
    %c0_130 = arith.constant 0 : index
    %311 = vector.load %arg7[%c0_129, %c0_130] : memref<8x128xf32, #tpu.memory_space<vmem>>, vector<8x128xf32>
    %cst_131 = arith.constant dense<0.000000e+00> : vector<8x512xf32>
    %312 = tpu.matmul %309, %3, %cst_131 {dimension_numbers = #tpu.dot_dimension_numbers<[1], [0], [0], [1], [0, 0, 1, 1], [], []>} : vector<8x128xbf16>, vector<128x512xbf16>, vector<8x512xf32> -> vector<8x512xf32>
    %313 = arith.truncf %310 : vector<8x128xf32> to vector<8x128xbf16>
    %cst_132 = arith.constant dense<0.000000e+00> : vector<8x512xf32>
    %314 = tpu.matmul %313, %4, %cst_132 {dimension_numbers = #tpu.dot_dimension_numbers<[1], [0], [0], [1], [0, 0, 1, 1], [], []>} : vector<8x128xbf16>, vector<128x512xbf16>, vector<8x512xf32> -> vector<8x512xf32>
    %315 = arith.addf %312, %314 : vector<8x512xf32>
    %316 = vector.broadcast %5 : vector<1x512xf32> to vector<8x512xf32>
    %317 = arith.addf %315, %316 : vector<8x512xf32>
    %318 = vector.extract_strided_slice %317 {offsets = [0, 0], sizes = [8, 128], strides = [1, 1]} : vector<8x512xf32> to vector<8x128xf32>
    %319 = arith.negf %318 : vector<8x128xf32>
    %320 = math.exp %319 : vector<8x128xf32>
    %cst_133 = arith.constant 1.000000e+00 : f32
    %321 = vector.broadcast %cst_133 : f32 to vector<8x128xf32>
    %322 = arith.addf %321, %320 : vector<8x128xf32>
    %323 = arith.divf %321, %322 : vector<8x128xf32>
    %324 = vector.extract_strided_slice %317 {offsets = [0, 128], sizes = [8, 128], strides = [1, 1]} : vector<8x512xf32> to vector<8x128xf32>
    %325 = arith.negf %324 : vector<8x128xf32>
    %326 = math.exp %325 : vector<8x128xf32>
    %cst_134 = arith.constant 1.000000e+00 : f32
    %327 = vector.broadcast %cst_134 : f32 to vector<8x128xf32>
    %328 = arith.addf %327, %326 : vector<8x128xf32>
    %329 = arith.divf %327, %328 : vector<8x128xf32>
    %330 = vector.extract_strided_slice %317 {offsets = [0, 256], sizes = [8, 128], strides = [1, 1]} : vector<8x512xf32> to vector<8x128xf32>
    %331 = math.tanh %330 : vector<8x128xf32>
    %332 = vector.extract_strided_slice %317 {offsets = [0, 384], sizes = [8, 128], strides = [1, 1]} : vector<8x512xf32> to vector<8x128xf32>
    %333 = arith.negf %332 : vector<8x128xf32>
    %334 = math.exp %333 : vector<8x128xf32>
    %cst_135 = arith.constant 1.000000e+00 : f32
    %335 = vector.broadcast %cst_135 : f32 to vector<8x128xf32>
    %336 = arith.addf %335, %334 : vector<8x128xf32>
    %337 = arith.divf %335, %336 : vector<8x128xf32>
    %338 = arith.mulf %329, %311 : vector<8x128xf32>
    %339 = arith.mulf %323, %331 : vector<8x128xf32>
    %340 = arith.addf %338, %339 : vector<8x128xf32>
    %341 = math.tanh %340 : vector<8x128xf32>
    %342 = arith.mulf %337, %341 : vector<8x128xf32>
    %c0_136 = arith.constant 0 : index
    %c0_137 = arith.constant 0 : index
    %343 = vector.load %arg7[%c0_136, %c0_137] : memref<8x128xf32, #tpu.memory_space<vmem>>, vector<8x128xf32>
    tpu.vector_store %arg7[%c0_136, %c0_137], %340 {strides = array<i32>} : memref<8x128xf32, #tpu.memory_space<vmem>>, vector<8x128xf32>,
    %c0_138 = arith.constant 0 : index
    %c0_139 = arith.constant 0 : index
    %344 = vector.load %arg6[%c0_138, %c0_139] : memref<8x128xf32, #tpu.memory_space<vmem>>, vector<8x128xf32>
    tpu.vector_store %arg6[%c0_138, %c0_139], %342 {strides = array<i32>} : memref<8x128xf32, #tpu.memory_space<vmem>>, vector<8x128xf32>,
    %345 = arith.truncf %342 : vector<8x128xf32> to vector<8x128xbf16>
    %346 = arith.index_cast %c7_i32 : i32 to index
    %c0_140 = arith.constant 0 : index
    %c0_141 = arith.constant 0 : index
    %347 = vector.load %arg5[%346, %c0_140, %c0_141] : memref<8x8x128xbf16, #tpu.memory_space<vmem>>, vector<1x8x128xbf16>
    %348 = vector.shape_cast %347 : vector<1x8x128xbf16> to vector<8x128xbf16>
    %349 = vector.shape_cast %345 : vector<8x128xbf16> to vector<1x8x128xbf16>
    tpu.vector_store %arg5[%346, %c0_140, %c0_141], %349 {strides = array<i32>} : memref<8x8x128xbf16, #tpu.memory_space<vmem>>, vector<1x8x128xbf16>,
    %c8_i32 = arith.constant 8 : i32
    return
  }
  func.func @transform_0(%arg0: i32) -> (i32, i32, i32) {
    %c0_i32 = arith.constant 0 : i32
    %c0_i32_0 = arith.constant 0 : i32
    %c0_i32_1 = arith.constant 0 : i32
    return %arg0, %c0_i32, %c0_i32_0 : i32, i32, i32
  }
  func.func @transform_1(%arg0: i32) -> (i32, i32) {
    %c0_i32 = arith.constant 0 : i32
    %c0_i32_0 = arith.constant 0 : i32
    %c0_i32_1 = arith.constant 0 : i32
    return %c0_i32, %c0_i32_0 : i32, i32
  }
  func.func @transform_2(%arg0: i32) -> (i32, i32) {
    %c0_i32 = arith.constant 0 : i32
    %c0_i32_0 = arith.constant 0 : i32
    %c0_i32_1 = arith.constant 0 : i32
    return %c0_i32, %c0_i32_0 : i32, i32
  }
  func.func @transform_3(%arg0: i32) -> (i32, i32) {
    %c0_i32 = arith.constant 0 : i32
    %c0_i32_0 = arith.constant 0 : i32
    %c0_i32_1 = arith.constant 0 : i32
    return %c0_i32, %c0_i32_0 : i32, i32
  }
  func.func @transform_4(%arg0: i32) -> (i32, i32, i32) {
    %c0_i32 = arith.constant 0 : i32
    %c0_i32_0 = arith.constant 0 : i32
    %c0_i32_1 = arith.constant 0 : i32
    return %arg0, %c0_i32, %c0_i32_0 : i32, i32, i32
  }
}

module attributes {stable_mosaic.version = 11 : i64} {
  func.func @_joint_kernel(%arg0: i32, %arg1: i32, %arg2: memref<1x16x128xbf16, #tpu.memory_space<vmem>>, %arg3: memref<1x8x128xbf16, #tpu.memory_space<vmem>>, %arg4: memref<128x128xbf16, #tpu.memory_space<vmem>>, %arg5: memref<128x128xbf16, #tpu.memory_space<vmem>>, %arg6: memref<1x128xf32, #tpu.memory_space<vmem>>, %arg7: memref<128x128xbf16, #tpu.memory_space<vmem>>, %arg8: memref<1x128xf32, #tpu.memory_space<vmem>>, %arg9: memref<1x16x8x128xf32, #tpu.memory_space<vmem>>) attributes {dimension_semantics = [#tpu.dimension_semantics<parallel>, #tpu.dimension_semantics<parallel>], iteration_bounds = array<i64: 8, 1>, scalar_prefetch = 0 : i64, scratch_operands = 0 : i64, tpu.core_type = #tpu.core_type<tc>, window_params = [{transform_indices = @transform_0, window_bounds = array<i64: 1, 16, 128>}, {transform_indices = @transform_1, window_bounds = array<i64: 1, 8, 128>}, {pipeline_mode = #tpu.pipeline_mode<synchronous>, transform_indices = @transform_2, window_bounds = array<i64: 128, 128>}, {pipeline_mode = #tpu.pipeline_mode<synchronous>, transform_indices = @transform_3, window_bounds = array<i64: 128, 128>}, {pipeline_mode = #tpu.pipeline_mode<synchronous>, transform_indices = @transform_4, window_bounds = array<i64: 1, 128>}, {pipeline_mode = #tpu.pipeline_mode<synchronous>, transform_indices = @transform_5, window_bounds = array<i64: 128, 128>}, {pipeline_mode = #tpu.pipeline_mode<synchronous>, transform_indices = @transform_6, window_bounds = array<i64: 1, 128>}, {transform_indices = @transform_7, window_bounds = array<i64: 1, 16, 8, 128>}]} {
    %c0 = arith.constant 0 : index
    %c0_0 = arith.constant 0 : index
    %c0_1 = arith.constant 0 : index
    %0 = vector.load %arg2[%c0, %c0_0, %c0_1] : memref<1x16x128xbf16, #tpu.memory_space<vmem>>, vector<1x16x128xbf16>
    %1 = vector.shape_cast %0 : vector<1x16x128xbf16> to vector<16x128xbf16>
    %c0_2 = arith.constant 0 : index
    %c0_3 = arith.constant 0 : index
    %c0_4 = arith.constant 0 : index
    %2 = vector.load %arg3[%c0_2, %c0_3, %c0_4] : memref<1x8x128xbf16, #tpu.memory_space<vmem>>, vector<1x8x128xbf16>
    %3 = vector.shape_cast %2 : vector<1x8x128xbf16> to vector<8x128xbf16>
    %c0_5 = arith.constant 0 : index
    %c0_6 = arith.constant 0 : index
    %4 = vector.load %arg4[%c0_5, %c0_6] : memref<128x128xbf16, #tpu.memory_space<vmem>>, vector<128x128xbf16>
    %cst = arith.constant dense<0.000000e+00> : vector<16x128xf32>
    %5 = tpu.matmul %1, %4, %cst {dimension_numbers = #tpu.dot_dimension_numbers<[1], [0], [0], [1], [0, 0, 1, 1], [], []>} : vector<16x128xbf16>, vector<128x128xbf16>, vector<16x128xf32> -> vector<16x128xf32>
    %c0_7 = arith.constant 0 : index
    %c0_8 = arith.constant 0 : index
    %6 = vector.load %arg5[%c0_7, %c0_8] : memref<128x128xbf16, #tpu.memory_space<vmem>>, vector<128x128xbf16>
    %cst_9 = arith.constant dense<0.000000e+00> : vector<8x128xf32>
    %7 = tpu.matmul %3, %6, %cst_9 {dimension_numbers = #tpu.dot_dimension_numbers<[1], [0], [0], [1], [0, 0, 1, 1], [], []>} : vector<8x128xbf16>, vector<128x128xbf16>, vector<8x128xf32> -> vector<8x128xf32>
    %c0_10 = arith.constant 0 : index
    %c0_11 = arith.constant 0 : index
    %8 = vector.load %arg6[%c0_10, %c0_11] : memref<1x128xf32, #tpu.memory_space<vmem>>, vector<1x128xf32>
    %9 = vector.broadcast %8 : vector<1x128xf32> to vector<8x128xf32>
    %10 = arith.addf %7, %9 : vector<8x128xf32>
    %11 = vector.shape_cast %5 : vector<16x128xf32> to vector<16x1x128xf32>
    %12 = vector.shape_cast %10 : vector<8x128xf32> to vector<1x8x128xf32>
    %13 = vector.broadcast %11 : vector<16x1x128xf32> to vector<16x8x128xf32>
    %14 = vector.broadcast %12 : vector<1x8x128xf32> to vector<16x8x128xf32>
    %15 = arith.addf %13, %14 : vector<16x8x128xf32>
    %16 = math.tanh %15 : vector<16x8x128xf32>
    %17 = arith.truncf %16 : vector<16x8x128xf32> to vector<16x8x128xbf16>
    %18 = vector.shape_cast %17 : vector<16x8x128xbf16> to vector<128x128xbf16>
    %c0_12 = arith.constant 0 : index
    %c0_13 = arith.constant 0 : index
    %19 = vector.load %arg7[%c0_12, %c0_13] : memref<128x128xbf16, #tpu.memory_space<vmem>>, vector<128x128xbf16>
    %cst_14 = arith.constant dense<0.000000e+00> : vector<128x128xf32>
    %20 = tpu.matmul %18, %19, %cst_14 {dimension_numbers = #tpu.dot_dimension_numbers<[1], [0], [0], [1], [0, 0, 1, 1], [], []>} : vector<128x128xbf16>, vector<128x128xbf16>, vector<128x128xf32> -> vector<128x128xf32>
    %c0_15 = arith.constant 0 : index
    %c0_16 = arith.constant 0 : index
    %21 = vector.load %arg8[%c0_15, %c0_16] : memref<1x128xf32, #tpu.memory_space<vmem>>, vector<1x128xf32>
    %22 = vector.broadcast %21 : vector<1x128xf32> to vector<128x128xf32>
    %23 = arith.addf %20, %22 : vector<128x128xf32>
    %24 = vector.shape_cast %23 : vector<128x128xf32> to vector<16x8x128xf32>
    %c0_17 = arith.constant 0 : index
    %c0_18 = arith.constant 0 : index
    %c0_19 = arith.constant 0 : index
    %c0_20 = arith.constant 0 : index
    %25 = vector.load %arg9[%c0_17, %c0_18, %c0_19, %c0_20] : memref<1x16x8x128xf32, #tpu.memory_space<vmem>>, vector<1x16x8x128xf32>
    %26 = vector.shape_cast %25 : vector<1x16x8x128xf32> to vector<16x8x128xf32>
    %27 = vector.shape_cast %24 : vector<16x8x128xf32> to vector<1x16x8x128xf32>
    tpu.vector_store %arg9[%c0_17, %c0_18, %c0_19, %c0_20], %27 {strides = array<i32>} : memref<1x16x8x128xf32, #tpu.memory_space<vmem>>, vector<1x16x8x128xf32>,
    return
  }
  func.func @transform_0(%arg0: i32, %arg1: i32) -> (i32, i32, i32) {
    %c0_i32 = arith.constant 0 : i32
    %c0_i32_0 = arith.constant 0 : i32
    return %arg0, %arg1, %c0_i32 : i32, i32, i32
  }
  func.func @transform_1(%arg0: i32, %arg1: i32) -> (i32, i32, i32) {
    %c0_i32 = arith.constant 0 : i32
    %c0_i32_0 = arith.constant 0 : i32
    %c0_i32_1 = arith.constant 0 : i32
    return %arg0, %c0_i32, %c0_i32_0 : i32, i32, i32
  }
  func.func @transform_2(%arg0: i32, %arg1: i32) -> (i32, i32) {
    %c0_i32 = arith.constant 0 : i32
    %c0_i32_0 = arith.constant 0 : i32
    %c0_i32_1 = arith.constant 0 : i32
    return %c0_i32, %c0_i32_0 : i32, i32
  }
  func.func @transform_3(%arg0: i32, %arg1: i32) -> (i32, i32) {
    %c0_i32 = arith.constant 0 : i32
    %c0_i32_0 = arith.constant 0 : i32
    %c0_i32_1 = arith.constant 0 : i32
    return %c0_i32, %c0_i32_0 : i32, i32
  }
  func.func @transform_4(%arg0: i32, %arg1: i32) -> (i32, i32) {
    %c0_i32 = arith.constant 0 : i32
    %c0_i32_0 = arith.constant 0 : i32
    %c0_i32_1 = arith.constant 0 : i32
    return %c0_i32, %c0_i32_0 : i32, i32
  }
  func.func @transform_5(%arg0: i32, %arg1: i32) -> (i32, i32) {
    %c0_i32 = arith.constant 0 : i32
    %c0_i32_0 = arith.constant 0 : i32
    %c0_i32_1 = arith.constant 0 : i32
    return %c0_i32, %c0_i32_0 : i32, i32
  }
  func.func @transform_6(%arg0: i32, %arg1: i32) -> (i32, i32) {
    %c0_i32 = arith.constant 0 : i32
    %c0_i32_0 = arith.constant 0 : i32
    %c0_i32_1 = arith.constant 0 : i32
    return %c0_i32, %c0_i32_0 : i32, i32
  }
  func.func @transform_7(%arg0: i32, %arg1: i32) -> (i32, i32, i32, i32) {
    %c0_i32 = arith.constant 0 : i32
    %c0_i32_0 = arith.constant 0 : i32
    %c0_i32_1 = arith.constant 0 : i32
    return %arg0, %arg1, %c0_i32, %c0_i32_0 : i32, i32, i32, i32
  }
}

module attributes {stable_mosaic.version = 11 : i64} {
  func.func @_lstm_kernel(%arg0: i32, %arg1: memref<16x8x64xbf16, #tpu.memory_space<vmem>>, %arg2: memref<64x512xbf16, #tpu.memory_space<vmem>>, %arg3: memref<128x512xbf16, #tpu.memory_space<vmem>>, %arg4: memref<1x512xf32, #tpu.memory_space<vmem>>, %arg5: memref<16x8x128xbf16, #tpu.memory_space<vmem>>, %arg6: memref<8x128xf32, #tpu.memory_space<vmem>>, %arg7: memref<8x128xf32, #tpu.memory_space<vmem>>) attributes {dimension_semantics = [#tpu.dimension_semantics<arbitrary>], iteration_bounds = array<i64: 1>, scalar_prefetch = 0 : i64, scratch_operands = 2 : i64, tpu.core_type = #tpu.core_type<tc>, window_params = [{transform_indices = @transform_0, window_bounds = array<i64: 16, 8, 64>}, {pipeline_mode = #tpu.pipeline_mode<synchronous>, transform_indices = @transform_1, window_bounds = array<i64: 64, 512>}, {pipeline_mode = #tpu.pipeline_mode<synchronous>, transform_indices = @transform_2, window_bounds = array<i64: 128, 512>}, {pipeline_mode = #tpu.pipeline_mode<synchronous>, transform_indices = @transform_3, window_bounds = array<i64: 1, 512>}, {transform_indices = @transform_4, window_bounds = array<i64: 16, 8, 128>}]} {
    %c0_i32 = arith.constant 0 : i32
    %0 = arith.cmpi eq, %arg0, %c0_i32 : i32
    %1 = arith.extui %0 : i1 to i32
    %c0_i32_0 = arith.constant 0 : i32
    %2 = arith.cmpi ne, %1, %c0_i32_0 : i32
    scf.if %2 {
      %cst_278 = arith.constant 0.000000e+00 : f32
      %694 = vector.broadcast %cst_278 : f32 to vector<8x128xf32>
      %c0_279 = arith.constant 0 : index
      %c0_280 = arith.constant 0 : index
      %695 = vector.load %arg6[%c0_279, %c0_280] : memref<8x128xf32, #tpu.memory_space<vmem>>, vector<8x128xf32>
      tpu.vector_store %arg6[%c0_279, %c0_280], %694 {strides = array<i32>} : memref<8x128xf32, #tpu.memory_space<vmem>>, vector<8x128xf32>,
      %cst_281 = arith.constant 0.000000e+00 : f32
      %696 = vector.broadcast %cst_281 : f32 to vector<8x128xf32>
      %c0_282 = arith.constant 0 : index
      %c0_283 = arith.constant 0 : index
      %697 = vector.load %arg7[%c0_282, %c0_283] : memref<8x128xf32, #tpu.memory_space<vmem>>, vector<8x128xf32>
      tpu.vector_store %arg7[%c0_282, %c0_283], %696 {strides = array<i32>} : memref<8x128xf32, #tpu.memory_space<vmem>>, vector<8x128xf32>,
    } else {
    }
    %c0 = arith.constant 0 : index
    %c0_1 = arith.constant 0 : index
    %3 = vector.load %arg2[%c0, %c0_1] : memref<64x512xbf16, #tpu.memory_space<vmem>>, vector<64x512xbf16>
    %c0_2 = arith.constant 0 : index
    %c0_3 = arith.constant 0 : index
    %4 = vector.load %arg3[%c0_2, %c0_3] : memref<128x512xbf16, #tpu.memory_space<vmem>>, vector<128x512xbf16>
    %c0_4 = arith.constant 0 : index
    %c0_5 = arith.constant 0 : index
    %5 = vector.load %arg4[%c0_4, %c0_5] : memref<1x512xf32, #tpu.memory_space<vmem>>, vector<1x512xf32>
    %c0_i32_6 = arith.constant 0 : i32
    %6 = arith.index_cast %c0_i32_6 : i32 to index
    %c0_7 = arith.constant 0 : index
    %c0_8 = arith.constant 0 : index
    %7 = vector.load %arg1[%6, %c0_7, %c0_8] : memref<16x8x64xbf16, #tpu.memory_space<vmem>>, vector<1x8x64xbf16>
    %8 = vector.shape_cast %7 : vector<1x8x64xbf16> to vector<8x64xbf16>
    %c0_9 = arith.constant 0 : index
    %c0_10 = arith.constant 0 : index
    %9 = vector.load %arg6[%c0_9, %c0_10] : memref<8x128xf32, #tpu.memory_space<vmem>>, vector<8x128xf32>
    %c0_11 = arith.constant 0 : index
    %c0_12 = arith.constant 0 : index
    %10 = vector.load %arg7[%c0_11, %c0_12] : memref<8x128xf32, #tpu.memory_space<vmem>>, vector<8x128xf32>
    %cst = arith.constant dense<0.000000e+00> : vector<8x512xf32>
    %11 = tpu.matmul %8, %3, %cst {dimension_numbers = #tpu.dot_dimension_numbers<[1], [0], [0], [1], [0, 0, 1, 1], [], []>} : vector<8x64xbf16>, vector<64x512xbf16>, vector<8x512xf32> -> vector<8x512xf32>
    %12 = arith.truncf %9 : vector<8x128xf32> to vector<8x128xbf16>
    %cst_13 = arith.constant dense<0.000000e+00> : vector<8x512xf32>
    %13 = tpu.matmul %12, %4, %cst_13 {dimension_numbers = #tpu.dot_dimension_numbers<[1], [0], [0], [1], [0, 0, 1, 1], [], []>} : vector<8x128xbf16>, vector<128x512xbf16>, vector<8x512xf32> -> vector<8x512xf32>
    %14 = arith.addf %11, %13 : vector<8x512xf32>
    %15 = vector.broadcast %5 : vector<1x512xf32> to vector<8x512xf32>
    %16 = arith.addf %14, %15 : vector<8x512xf32>
    %17 = vector.extract_strided_slice %16 {offsets = [0, 0], sizes = [8, 128], strides = [1, 1]} : vector<8x512xf32> to vector<8x128xf32>
    %18 = arith.negf %17 : vector<8x128xf32>
    %19 = math.exp %18 : vector<8x128xf32>
    %cst_14 = arith.constant 1.000000e+00 : f32
    %20 = vector.broadcast %cst_14 : f32 to vector<8x128xf32>
    %21 = arith.addf %20, %19 : vector<8x128xf32>
    %22 = arith.divf %20, %21 : vector<8x128xf32>
    %23 = vector.extract_strided_slice %16 {offsets = [0, 128], sizes = [8, 128], strides = [1, 1]} : vector<8x512xf32> to vector<8x128xf32>
    %24 = arith.negf %23 : vector<8x128xf32>
    %25 = math.exp %24 : vector<8x128xf32>
    %cst_15 = arith.constant 1.000000e+00 : f32
    %26 = vector.broadcast %cst_15 : f32 to vector<8x128xf32>
    %27 = arith.addf %26, %25 : vector<8x128xf32>
    %28 = arith.divf %26, %27 : vector<8x128xf32>
    %29 = vector.extract_strided_slice %16 {offsets = [0, 256], sizes = [8, 128], strides = [1, 1]} : vector<8x512xf32> to vector<8x128xf32>
    %30 = math.tanh %29 : vector<8x128xf32>
    %31 = vector.extract_strided_slice %16 {offsets = [0, 384], sizes = [8, 128], strides = [1, 1]} : vector<8x512xf32> to vector<8x128xf32>
    %32 = arith.negf %31 : vector<8x128xf32>
    %33 = math.exp %32 : vector<8x128xf32>
    %cst_16 = arith.constant 1.000000e+00 : f32
    %34 = vector.broadcast %cst_16 : f32 to vector<8x128xf32>
    %35 = arith.addf %34, %33 : vector<8x128xf32>
    %36 = arith.divf %34, %35 : vector<8x128xf32>
    %37 = arith.mulf %28, %10 : vector<8x128xf32>
    %38 = arith.mulf %22, %30 : vector<8x128xf32>
    %39 = arith.addf %37, %38 : vector<8x128xf32>
    %40 = math.tanh %39 : vector<8x128xf32>
    %41 = arith.mulf %36, %40 : vector<8x128xf32>
    %c0_17 = arith.constant 0 : index
    %c0_18 = arith.constant 0 : index
    %42 = vector.load %arg7[%c0_17, %c0_18] : memref<8x128xf32, #tpu.memory_space<vmem>>, vector<8x128xf32>
    tpu.vector_store %arg7[%c0_17, %c0_18], %39 {strides = array<i32>} : memref<8x128xf32, #tpu.memory_space<vmem>>, vector<8x128xf32>,
    %c0_19 = arith.constant 0 : index
    %c0_20 = arith.constant 0 : index
    %43 = vector.load %arg6[%c0_19, %c0_20] : memref<8x128xf32, #tpu.memory_space<vmem>>, vector<8x128xf32>
    tpu.vector_store %arg6[%c0_19, %c0_20], %41 {strides = array<i32>} : memref<8x128xf32, #tpu.memory_space<vmem>>, vector<8x128xf32>,
    %44 = arith.truncf %41 : vector<8x128xf32> to vector<8x128xbf16>
    %45 = arith.index_cast %c0_i32_6 : i32 to index
    %c0_21 = arith.constant 0 : index
    %c0_22 = arith.constant 0 : index
    %46 = vector.load %arg5[%45, %c0_21, %c0_22] : memref<16x8x128xbf16, #tpu.memory_space<vmem>>, vector<1x8x128xbf16>
    %47 = vector.shape_cast %46 : vector<1x8x128xbf16> to vector<8x128xbf16>
    %48 = vector.shape_cast %44 : vector<8x128xbf16> to vector<1x8x128xbf16>
    tpu.vector_store %arg5[%45, %c0_21, %c0_22], %48 {strides = array<i32>} : memref<16x8x128xbf16, #tpu.memory_space<vmem>>, vector<1x8x128xbf16>,
    %c1_i32 = arith.constant 1 : i32
    %49 = arith.index_cast %c1_i32 : i32 to index
    %c0_23 = arith.constant 0 : index
    %c0_24 = arith.constant 0 : index
    %50 = vector.load %arg1[%49, %c0_23, %c0_24] : memref<16x8x64xbf16, #tpu.memory_space<vmem>>, vector<1x8x64xbf16>
    %51 = vector.shape_cast %50 : vector<1x8x64xbf16> to vector<8x64xbf16>
    %c0_25 = arith.constant 0 : index
    %c0_26 = arith.constant 0 : index
    %52 = vector.load %arg6[%c0_25, %c0_26] : memref<8x128xf32, #tpu.memory_space<vmem>>, vector<8x128xf32>
    %c0_27 = arith.constant 0 : index
    %c0_28 = arith.constant 0 : index
    %53 = vector.load %arg7[%c0_27, %c0_28] : memref<8x128xf32, #tpu.memory_space<vmem>>, vector<8x128xf32>
    %cst_29 = arith.constant dense<0.000000e+00> : vector<8x512xf32>
    %54 = tpu.matmul %51, %3, %cst_29 {dimension_numbers = #tpu.dot_dimension_numbers<[1], [0], [0], [1], [0, 0, 1, 1], [], []>} : vector<8x64xbf16>, vector<64x512xbf16>, vector<8x512xf32> -> vector<8x512xf32>
    %55 = arith.truncf %52 : vector<8x128xf32> to vector<8x128xbf16>
    %cst_30 = arith.constant dense<0.000000e+00> : vector<8x512xf32>
    %56 = tpu.matmul %55, %4, %cst_30 {dimension_numbers = #tpu.dot_dimension_numbers<[1], [0], [0], [1], [0, 0, 1, 1], [], []>} : vector<8x128xbf16>, vector<128x512xbf16>, vector<8x512xf32> -> vector<8x512xf32>
    %57 = arith.addf %54, %56 : vector<8x512xf32>
    %58 = vector.broadcast %5 : vector<1x512xf32> to vector<8x512xf32>
    %59 = arith.addf %57, %58 : vector<8x512xf32>
    %60 = vector.extract_strided_slice %59 {offsets = [0, 0], sizes = [8, 128], strides = [1, 1]} : vector<8x512xf32> to vector<8x128xf32>
    %61 = arith.negf %60 : vector<8x128xf32>
    %62 = math.exp %61 : vector<8x128xf32>
    %cst_31 = arith.constant 1.000000e+00 : f32
    %63 = vector.broadcast %cst_31 : f32 to vector<8x128xf32>
    %64 = arith.addf %63, %62 : vector<8x128xf32>
    %65 = arith.divf %63, %64 : vector<8x128xf32>
    %66 = vector.extract_strided_slice %59 {offsets = [0, 128], sizes = [8, 128], strides = [1, 1]} : vector<8x512xf32> to vector<8x128xf32>
    %67 = arith.negf %66 : vector<8x128xf32>
    %68 = math.exp %67 : vector<8x128xf32>
    %cst_32 = arith.constant 1.000000e+00 : f32
    %69 = vector.broadcast %cst_32 : f32 to vector<8x128xf32>
    %70 = arith.addf %69, %68 : vector<8x128xf32>
    %71 = arith.divf %69, %70 : vector<8x128xf32>
    %72 = vector.extract_strided_slice %59 {offsets = [0, 256], sizes = [8, 128], strides = [1, 1]} : vector<8x512xf32> to vector<8x128xf32>
    %73 = math.tanh %72 : vector<8x128xf32>
    %74 = vector.extract_strided_slice %59 {offsets = [0, 384], sizes = [8, 128], strides = [1, 1]} : vector<8x512xf32> to vector<8x128xf32>
    %75 = arith.negf %74 : vector<8x128xf32>
    %76 = math.exp %75 : vector<8x128xf32>
    %cst_33 = arith.constant 1.000000e+00 : f32
    %77 = vector.broadcast %cst_33 : f32 to vector<8x128xf32>
    %78 = arith.addf %77, %76 : vector<8x128xf32>
    %79 = arith.divf %77, %78 : vector<8x128xf32>
    %80 = arith.mulf %71, %53 : vector<8x128xf32>
    %81 = arith.mulf %65, %73 : vector<8x128xf32>
    %82 = arith.addf %80, %81 : vector<8x128xf32>
    %83 = math.tanh %82 : vector<8x128xf32>
    %84 = arith.mulf %79, %83 : vector<8x128xf32>
    %c0_34 = arith.constant 0 : index
    %c0_35 = arith.constant 0 : index
    %85 = vector.load %arg7[%c0_34, %c0_35] : memref<8x128xf32, #tpu.memory_space<vmem>>, vector<8x128xf32>
    tpu.vector_store %arg7[%c0_34, %c0_35], %82 {strides = array<i32>} : memref<8x128xf32, #tpu.memory_space<vmem>>, vector<8x128xf32>,
    %c0_36 = arith.constant 0 : index
    %c0_37 = arith.constant 0 : index
    %86 = vector.load %arg6[%c0_36, %c0_37] : memref<8x128xf32, #tpu.memory_space<vmem>>, vector<8x128xf32>
    tpu.vector_store %arg6[%c0_36, %c0_37], %84 {strides = array<i32>} : memref<8x128xf32, #tpu.memory_space<vmem>>, vector<8x128xf32>,
    %87 = arith.truncf %84 : vector<8x128xf32> to vector<8x128xbf16>
    %88 = arith.index_cast %c1_i32 : i32 to index
    %c0_38 = arith.constant 0 : index
    %c0_39 = arith.constant 0 : index
    %89 = vector.load %arg5[%88, %c0_38, %c0_39] : memref<16x8x128xbf16, #tpu.memory_space<vmem>>, vector<1x8x128xbf16>
    %90 = vector.shape_cast %89 : vector<1x8x128xbf16> to vector<8x128xbf16>
    %91 = vector.shape_cast %87 : vector<8x128xbf16> to vector<1x8x128xbf16>
    tpu.vector_store %arg5[%88, %c0_38, %c0_39], %91 {strides = array<i32>} : memref<16x8x128xbf16, #tpu.memory_space<vmem>>, vector<1x8x128xbf16>,
    %c2_i32 = arith.constant 2 : i32
    %92 = arith.index_cast %c2_i32 : i32 to index
    %c0_40 = arith.constant 0 : index
    %c0_41 = arith.constant 0 : index
    %93 = vector.load %arg1[%92, %c0_40, %c0_41] : memref<16x8x64xbf16, #tpu.memory_space<vmem>>, vector<1x8x64xbf16>
    %94 = vector.shape_cast %93 : vector<1x8x64xbf16> to vector<8x64xbf16>
    %c0_42 = arith.constant 0 : index
    %c0_43 = arith.constant 0 : index
    %95 = vector.load %arg6[%c0_42, %c0_43] : memref<8x128xf32, #tpu.memory_space<vmem>>, vector<8x128xf32>
    %c0_44 = arith.constant 0 : index
    %c0_45 = arith.constant 0 : index
    %96 = vector.load %arg7[%c0_44, %c0_45] : memref<8x128xf32, #tpu.memory_space<vmem>>, vector<8x128xf32>
    %cst_46 = arith.constant dense<0.000000e+00> : vector<8x512xf32>
    %97 = tpu.matmul %94, %3, %cst_46 {dimension_numbers = #tpu.dot_dimension_numbers<[1], [0], [0], [1], [0, 0, 1, 1], [], []>} : vector<8x64xbf16>, vector<64x512xbf16>, vector<8x512xf32> -> vector<8x512xf32>
    %98 = arith.truncf %95 : vector<8x128xf32> to vector<8x128xbf16>
    %cst_47 = arith.constant dense<0.000000e+00> : vector<8x512xf32>
    %99 = tpu.matmul %98, %4, %cst_47 {dimension_numbers = #tpu.dot_dimension_numbers<[1], [0], [0], [1], [0, 0, 1, 1], [], []>} : vector<8x128xbf16>, vector<128x512xbf16>, vector<8x512xf32> -> vector<8x512xf32>
    %100 = arith.addf %97, %99 : vector<8x512xf32>
    %101 = vector.broadcast %5 : vector<1x512xf32> to vector<8x512xf32>
    %102 = arith.addf %100, %101 : vector<8x512xf32>
    %103 = vector.extract_strided_slice %102 {offsets = [0, 0], sizes = [8, 128], strides = [1, 1]} : vector<8x512xf32> to vector<8x128xf32>
    %104 = arith.negf %103 : vector<8x128xf32>
    %105 = math.exp %104 : vector<8x128xf32>
    %cst_48 = arith.constant 1.000000e+00 : f32
    %106 = vector.broadcast %cst_48 : f32 to vector<8x128xf32>
    %107 = arith.addf %106, %105 : vector<8x128xf32>
    %108 = arith.divf %106, %107 : vector<8x128xf32>
    %109 = vector.extract_strided_slice %102 {offsets = [0, 128], sizes = [8, 128], strides = [1, 1]} : vector<8x512xf32> to vector<8x128xf32>
    %110 = arith.negf %109 : vector<8x128xf32>
    %111 = math.exp %110 : vector<8x128xf32>
    %cst_49 = arith.constant 1.000000e+00 : f32
    %112 = vector.broadcast %cst_49 : f32 to vector<8x128xf32>
    %113 = arith.addf %112, %111 : vector<8x128xf32>
    %114 = arith.divf %112, %113 : vector<8x128xf32>
    %115 = vector.extract_strided_slice %102 {offsets = [0, 256], sizes = [8, 128], strides = [1, 1]} : vector<8x512xf32> to vector<8x128xf32>
    %116 = math.tanh %115 : vector<8x128xf32>
    %117 = vector.extract_strided_slice %102 {offsets = [0, 384], sizes = [8, 128], strides = [1, 1]} : vector<8x512xf32> to vector<8x128xf32>
    %118 = arith.negf %117 : vector<8x128xf32>
    %119 = math.exp %118 : vector<8x128xf32>
    %cst_50 = arith.constant 1.000000e+00 : f32
    %120 = vector.broadcast %cst_50 : f32 to vector<8x128xf32>
    %121 = arith.addf %120, %119 : vector<8x128xf32>
    %122 = arith.divf %120, %121 : vector<8x128xf32>
    %123 = arith.mulf %114, %96 : vector<8x128xf32>
    %124 = arith.mulf %108, %116 : vector<8x128xf32>
    %125 = arith.addf %123, %124 : vector<8x128xf32>
    %126 = math.tanh %125 : vector<8x128xf32>
    %127 = arith.mulf %122, %126 : vector<8x128xf32>
    %c0_51 = arith.constant 0 : index
    %c0_52 = arith.constant 0 : index
    %128 = vector.load %arg7[%c0_51, %c0_52] : memref<8x128xf32, #tpu.memory_space<vmem>>, vector<8x128xf32>
    tpu.vector_store %arg7[%c0_51, %c0_52], %125 {strides = array<i32>} : memref<8x128xf32, #tpu.memory_space<vmem>>, vector<8x128xf32>,
    %c0_53 = arith.constant 0 : index
    %c0_54 = arith.constant 0 : index
    %129 = vector.load %arg6[%c0_53, %c0_54] : memref<8x128xf32, #tpu.memory_space<vmem>>, vector<8x128xf32>
    tpu.vector_store %arg6[%c0_53, %c0_54], %127 {strides = array<i32>} : memref<8x128xf32, #tpu.memory_space<vmem>>, vector<8x128xf32>,
    %130 = arith.truncf %127 : vector<8x128xf32> to vector<8x128xbf16>
    %131 = arith.index_cast %c2_i32 : i32 to index
    %c0_55 = arith.constant 0 : index
    %c0_56 = arith.constant 0 : index
    %132 = vector.load %arg5[%131, %c0_55, %c0_56] : memref<16x8x128xbf16, #tpu.memory_space<vmem>>, vector<1x8x128xbf16>
    %133 = vector.shape_cast %132 : vector<1x8x128xbf16> to vector<8x128xbf16>
    %134 = vector.shape_cast %130 : vector<8x128xbf16> to vector<1x8x128xbf16>
    tpu.vector_store %arg5[%131, %c0_55, %c0_56], %134 {strides = array<i32>} : memref<16x8x128xbf16, #tpu.memory_space<vmem>>, vector<1x8x128xbf16>,
    %c3_i32 = arith.constant 3 : i32
    %135 = arith.index_cast %c3_i32 : i32 to index
    %c0_57 = arith.constant 0 : index
    %c0_58 = arith.constant 0 : index
    %136 = vector.load %arg1[%135, %c0_57, %c0_58] : memref<16x8x64xbf16, #tpu.memory_space<vmem>>, vector<1x8x64xbf16>
    %137 = vector.shape_cast %136 : vector<1x8x64xbf16> to vector<8x64xbf16>
    %c0_59 = arith.constant 0 : index
    %c0_60 = arith.constant 0 : index
    %138 = vector.load %arg6[%c0_59, %c0_60] : memref<8x128xf32, #tpu.memory_space<vmem>>, vector<8x128xf32>
    %c0_61 = arith.constant 0 : index
    %c0_62 = arith.constant 0 : index
    %139 = vector.load %arg7[%c0_61, %c0_62] : memref<8x128xf32, #tpu.memory_space<vmem>>, vector<8x128xf32>
    %cst_63 = arith.constant dense<0.000000e+00> : vector<8x512xf32>
    %140 = tpu.matmul %137, %3, %cst_63 {dimension_numbers = #tpu.dot_dimension_numbers<[1], [0], [0], [1], [0, 0, 1, 1], [], []>} : vector<8x64xbf16>, vector<64x512xbf16>, vector<8x512xf32> -> vector<8x512xf32>
    %141 = arith.truncf %138 : vector<8x128xf32> to vector<8x128xbf16>
    %cst_64 = arith.constant dense<0.000000e+00> : vector<8x512xf32>
    %142 = tpu.matmul %141, %4, %cst_64 {dimension_numbers = #tpu.dot_dimension_numbers<[1], [0], [0], [1], [0, 0, 1, 1], [], []>} : vector<8x128xbf16>, vector<128x512xbf16>, vector<8x512xf32> -> vector<8x512xf32>
    %143 = arith.addf %140, %142 : vector<8x512xf32>
    %144 = vector.broadcast %5 : vector<1x512xf32> to vector<8x512xf32>
    %145 = arith.addf %143, %144 : vector<8x512xf32>
    %146 = vector.extract_strided_slice %145 {offsets = [0, 0], sizes = [8, 128], strides = [1, 1]} : vector<8x512xf32> to vector<8x128xf32>
    %147 = arith.negf %146 : vector<8x128xf32>
    %148 = math.exp %147 : vector<8x128xf32>
    %cst_65 = arith.constant 1.000000e+00 : f32
    %149 = vector.broadcast %cst_65 : f32 to vector<8x128xf32>
    %150 = arith.addf %149, %148 : vector<8x128xf32>
    %151 = arith.divf %149, %150 : vector<8x128xf32>
    %152 = vector.extract_strided_slice %145 {offsets = [0, 128], sizes = [8, 128], strides = [1, 1]} : vector<8x512xf32> to vector<8x128xf32>
    %153 = arith.negf %152 : vector<8x128xf32>
    %154 = math.exp %153 : vector<8x128xf32>
    %cst_66 = arith.constant 1.000000e+00 : f32
    %155 = vector.broadcast %cst_66 : f32 to vector<8x128xf32>
    %156 = arith.addf %155, %154 : vector<8x128xf32>
    %157 = arith.divf %155, %156 : vector<8x128xf32>
    %158 = vector.extract_strided_slice %145 {offsets = [0, 256], sizes = [8, 128], strides = [1, 1]} : vector<8x512xf32> to vector<8x128xf32>
    %159 = math.tanh %158 : vector<8x128xf32>
    %160 = vector.extract_strided_slice %145 {offsets = [0, 384], sizes = [8, 128], strides = [1, 1]} : vector<8x512xf32> to vector<8x128xf32>
    %161 = arith.negf %160 : vector<8x128xf32>
    %162 = math.exp %161 : vector<8x128xf32>
    %cst_67 = arith.constant 1.000000e+00 : f32
    %163 = vector.broadcast %cst_67 : f32 to vector<8x128xf32>
    %164 = arith.addf %163, %162 : vector<8x128xf32>
    %165 = arith.divf %163, %164 : vector<8x128xf32>
    %166 = arith.mulf %157, %139 : vector<8x128xf32>
    %167 = arith.mulf %151, %159 : vector<8x128xf32>
    %168 = arith.addf %166, %167 : vector<8x128xf32>
    %169 = math.tanh %168 : vector<8x128xf32>
    %170 = arith.mulf %165, %169 : vector<8x128xf32>
    %c0_68 = arith.constant 0 : index
    %c0_69 = arith.constant 0 : index
    %171 = vector.load %arg7[%c0_68, %c0_69] : memref<8x128xf32, #tpu.memory_space<vmem>>, vector<8x128xf32>
    tpu.vector_store %arg7[%c0_68, %c0_69], %168 {strides = array<i32>} : memref<8x128xf32, #tpu.memory_space<vmem>>, vector<8x128xf32>,
    %c0_70 = arith.constant 0 : index
    %c0_71 = arith.constant 0 : index
    %172 = vector.load %arg6[%c0_70, %c0_71] : memref<8x128xf32, #tpu.memory_space<vmem>>, vector<8x128xf32>
    tpu.vector_store %arg6[%c0_70, %c0_71], %170 {strides = array<i32>} : memref<8x128xf32, #tpu.memory_space<vmem>>, vector<8x128xf32>,
    %173 = arith.truncf %170 : vector<8x128xf32> to vector<8x128xbf16>
    %174 = arith.index_cast %c3_i32 : i32 to index
    %c0_72 = arith.constant 0 : index
    %c0_73 = arith.constant 0 : index
    %175 = vector.load %arg5[%174, %c0_72, %c0_73] : memref<16x8x128xbf16, #tpu.memory_space<vmem>>, vector<1x8x128xbf16>
    %176 = vector.shape_cast %175 : vector<1x8x128xbf16> to vector<8x128xbf16>
    %177 = vector.shape_cast %173 : vector<8x128xbf16> to vector<1x8x128xbf16>
    tpu.vector_store %arg5[%174, %c0_72, %c0_73], %177 {strides = array<i32>} : memref<16x8x128xbf16, #tpu.memory_space<vmem>>, vector<1x8x128xbf16>,
    %c4_i32 = arith.constant 4 : i32
    %178 = arith.index_cast %c4_i32 : i32 to index
    %c0_74 = arith.constant 0 : index
    %c0_75 = arith.constant 0 : index
    %179 = vector.load %arg1[%178, %c0_74, %c0_75] : memref<16x8x64xbf16, #tpu.memory_space<vmem>>, vector<1x8x64xbf16>
    %180 = vector.shape_cast %179 : vector<1x8x64xbf16> to vector<8x64xbf16>
    %c0_76 = arith.constant 0 : index
    %c0_77 = arith.constant 0 : index
    %181 = vector.load %arg6[%c0_76, %c0_77] : memref<8x128xf32, #tpu.memory_space<vmem>>, vector<8x128xf32>
    %c0_78 = arith.constant 0 : index
    %c0_79 = arith.constant 0 : index
    %182 = vector.load %arg7[%c0_78, %c0_79] : memref<8x128xf32, #tpu.memory_space<vmem>>, vector<8x128xf32>
    %cst_80 = arith.constant dense<0.000000e+00> : vector<8x512xf32>
    %183 = tpu.matmul %180, %3, %cst_80 {dimension_numbers = #tpu.dot_dimension_numbers<[1], [0], [0], [1], [0, 0, 1, 1], [], []>} : vector<8x64xbf16>, vector<64x512xbf16>, vector<8x512xf32> -> vector<8x512xf32>
    %184 = arith.truncf %181 : vector<8x128xf32> to vector<8x128xbf16>
    %cst_81 = arith.constant dense<0.000000e+00> : vector<8x512xf32>
    %185 = tpu.matmul %184, %4, %cst_81 {dimension_numbers = #tpu.dot_dimension_numbers<[1], [0], [0], [1], [0, 0, 1, 1], [], []>} : vector<8x128xbf16>, vector<128x512xbf16>, vector<8x512xf32> -> vector<8x512xf32>
    %186 = arith.addf %183, %185 : vector<8x512xf32>
    %187 = vector.broadcast %5 : vector<1x512xf32> to vector<8x512xf32>
    %188 = arith.addf %186, %187 : vector<8x512xf32>
    %189 = vector.extract_strided_slice %188 {offsets = [0, 0], sizes = [8, 128], strides = [1, 1]} : vector<8x512xf32> to vector<8x128xf32>
    %190 = arith.negf %189 : vector<8x128xf32>
    %191 = math.exp %190 : vector<8x128xf32>
    %cst_82 = arith.constant 1.000000e+00 : f32
    %192 = vector.broadcast %cst_82 : f32 to vector<8x128xf32>
    %193 = arith.addf %192, %191 : vector<8x128xf32>
    %194 = arith.divf %192, %193 : vector<8x128xf32>
    %195 = vector.extract_strided_slice %188 {offsets = [0, 128], sizes = [8, 128], strides = [1, 1]} : vector<8x512xf32> to vector<8x128xf32>
    %196 = arith.negf %195 : vector<8x128xf32>
    %197 = math.exp %196 : vector<8x128xf32>
    %cst_83 = arith.constant 1.000000e+00 : f32
    %198 = vector.broadcast %cst_83 : f32 to vector<8x128xf32>
    %199 = arith.addf %198, %197 : vector<8x128xf32>
    %200 = arith.divf %198, %199 : vector<8x128xf32>
    %201 = vector.extract_strided_slice %188 {offsets = [0, 256], sizes = [8, 128], strides = [1, 1]} : vector<8x512xf32> to vector<8x128xf32>
    %202 = math.tanh %201 : vector<8x128xf32>
    %203 = vector.extract_strided_slice %188 {offsets = [0, 384], sizes = [8, 128], strides = [1, 1]} : vector<8x512xf32> to vector<8x128xf32>
    %204 = arith.negf %203 : vector<8x128xf32>
    %205 = math.exp %204 : vector<8x128xf32>
    %cst_84 = arith.constant 1.000000e+00 : f32
    %206 = vector.broadcast %cst_84 : f32 to vector<8x128xf32>
    %207 = arith.addf %206, %205 : vector<8x128xf32>
    %208 = arith.divf %206, %207 : vector<8x128xf32>
    %209 = arith.mulf %200, %182 : vector<8x128xf32>
    %210 = arith.mulf %194, %202 : vector<8x128xf32>
    %211 = arith.addf %209, %210 : vector<8x128xf32>
    %212 = math.tanh %211 : vector<8x128xf32>
    %213 = arith.mulf %208, %212 : vector<8x128xf32>
    %c0_85 = arith.constant 0 : index
    %c0_86 = arith.constant 0 : index
    %214 = vector.load %arg7[%c0_85, %c0_86] : memref<8x128xf32, #tpu.memory_space<vmem>>, vector<8x128xf32>
    tpu.vector_store %arg7[%c0_85, %c0_86], %211 {strides = array<i32>} : memref<8x128xf32, #tpu.memory_space<vmem>>, vector<8x128xf32>,
    %c0_87 = arith.constant 0 : index
    %c0_88 = arith.constant 0 : index
    %215 = vector.load %arg6[%c0_87, %c0_88] : memref<8x128xf32, #tpu.memory_space<vmem>>, vector<8x128xf32>
    tpu.vector_store %arg6[%c0_87, %c0_88], %213 {strides = array<i32>} : memref<8x128xf32, #tpu.memory_space<vmem>>, vector<8x128xf32>,
    %216 = arith.truncf %213 : vector<8x128xf32> to vector<8x128xbf16>
    %217 = arith.index_cast %c4_i32 : i32 to index
    %c0_89 = arith.constant 0 : index
    %c0_90 = arith.constant 0 : index
    %218 = vector.load %arg5[%217, %c0_89, %c0_90] : memref<16x8x128xbf16, #tpu.memory_space<vmem>>, vector<1x8x128xbf16>
    %219 = vector.shape_cast %218 : vector<1x8x128xbf16> to vector<8x128xbf16>
    %220 = vector.shape_cast %216 : vector<8x128xbf16> to vector<1x8x128xbf16>
    tpu.vector_store %arg5[%217, %c0_89, %c0_90], %220 {strides = array<i32>} : memref<16x8x128xbf16, #tpu.memory_space<vmem>>, vector<1x8x128xbf16>,
    %c5_i32 = arith.constant 5 : i32
    %221 = arith.index_cast %c5_i32 : i32 to index
    %c0_91 = arith.constant 0 : index
    %c0_92 = arith.constant 0 : index
    %222 = vector.load %arg1[%221, %c0_91, %c0_92] : memref<16x8x64xbf16, #tpu.memory_space<vmem>>, vector<1x8x64xbf16>
    %223 = vector.shape_cast %222 : vector<1x8x64xbf16> to vector<8x64xbf16>
    %c0_93 = arith.constant 0 : index
    %c0_94 = arith.constant 0 : index
    %224 = vector.load %arg6[%c0_93, %c0_94] : memref<8x128xf32, #tpu.memory_space<vmem>>, vector<8x128xf32>
    %c0_95 = arith.constant 0 : index
    %c0_96 = arith.constant 0 : index
    %225 = vector.load %arg7[%c0_95, %c0_96] : memref<8x128xf32, #tpu.memory_space<vmem>>, vector<8x128xf32>
    %cst_97 = arith.constant dense<0.000000e+00> : vector<8x512xf32>
    %226 = tpu.matmul %223, %3, %cst_97 {dimension_numbers = #tpu.dot_dimension_numbers<[1], [0], [0], [1], [0, 0, 1, 1], [], []>} : vector<8x64xbf16>, vector<64x512xbf16>, vector<8x512xf32> -> vector<8x512xf32>
    %227 = arith.truncf %224 : vector<8x128xf32> to vector<8x128xbf16>
    %cst_98 = arith.constant dense<0.000000e+00> : vector<8x512xf32>
    %228 = tpu.matmul %227, %4, %cst_98 {dimension_numbers = #tpu.dot_dimension_numbers<[1], [0], [0], [1], [0, 0, 1, 1], [], []>} : vector<8x128xbf16>, vector<128x512xbf16>, vector<8x512xf32> -> vector<8x512xf32>
    %229 = arith.addf %226, %228 : vector<8x512xf32>
    %230 = vector.broadcast %5 : vector<1x512xf32> to vector<8x512xf32>
    %231 = arith.addf %229, %230 : vector<8x512xf32>
    %232 = vector.extract_strided_slice %231 {offsets = [0, 0], sizes = [8, 128], strides = [1, 1]} : vector<8x512xf32> to vector<8x128xf32>
    %233 = arith.negf %232 : vector<8x128xf32>
    %234 = math.exp %233 : vector<8x128xf32>
    %cst_99 = arith.constant 1.000000e+00 : f32
    %235 = vector.broadcast %cst_99 : f32 to vector<8x128xf32>
    %236 = arith.addf %235, %234 : vector<8x128xf32>
    %237 = arith.divf %235, %236 : vector<8x128xf32>
    %238 = vector.extract_strided_slice %231 {offsets = [0, 128], sizes = [8, 128], strides = [1, 1]} : vector<8x512xf32> to vector<8x128xf32>
    %239 = arith.negf %238 : vector<8x128xf32>
    %240 = math.exp %239 : vector<8x128xf32>
    %cst_100 = arith.constant 1.000000e+00 : f32
    %241 = vector.broadcast %cst_100 : f32 to vector<8x128xf32>
    %242 = arith.addf %241, %240 : vector<8x128xf32>
    %243 = arith.divf %241, %242 : vector<8x128xf32>
    %244 = vector.extract_strided_slice %231 {offsets = [0, 256], sizes = [8, 128], strides = [1, 1]} : vector<8x512xf32> to vector<8x128xf32>
    %245 = math.tanh %244 : vector<8x128xf32>
    %246 = vector.extract_strided_slice %231 {offsets = [0, 384], sizes = [8, 128], strides = [1, 1]} : vector<8x512xf32> to vector<8x128xf32>
    %247 = arith.negf %246 : vector<8x128xf32>
    %248 = math.exp %247 : vector<8x128xf32>
    %cst_101 = arith.constant 1.000000e+00 : f32
    %249 = vector.broadcast %cst_101 : f32 to vector<8x128xf32>
    %250 = arith.addf %249, %248 : vector<8x128xf32>
    %251 = arith.divf %249, %250 : vector<8x128xf32>
    %252 = arith.mulf %243, %225 : vector<8x128xf32>
    %253 = arith.mulf %237, %245 : vector<8x128xf32>
    %254 = arith.addf %252, %253 : vector<8x128xf32>
    %255 = math.tanh %254 : vector<8x128xf32>
    %256 = arith.mulf %251, %255 : vector<8x128xf32>
    %c0_102 = arith.constant 0 : index
    %c0_103 = arith.constant 0 : index
    %257 = vector.load %arg7[%c0_102, %c0_103] : memref<8x128xf32, #tpu.memory_space<vmem>>, vector<8x128xf32>
    tpu.vector_store %arg7[%c0_102, %c0_103], %254 {strides = array<i32>} : memref<8x128xf32, #tpu.memory_space<vmem>>, vector<8x128xf32>,
    %c0_104 = arith.constant 0 : index
    %c0_105 = arith.constant 0 : index
    %258 = vector.load %arg6[%c0_104, %c0_105] : memref<8x128xf32, #tpu.memory_space<vmem>>, vector<8x128xf32>
    tpu.vector_store %arg6[%c0_104, %c0_105], %256 {strides = array<i32>} : memref<8x128xf32, #tpu.memory_space<vmem>>, vector<8x128xf32>,
    %259 = arith.truncf %256 : vector<8x128xf32> to vector<8x128xbf16>
    %260 = arith.index_cast %c5_i32 : i32 to index
    %c0_106 = arith.constant 0 : index
    %c0_107 = arith.constant 0 : index
    %261 = vector.load %arg5[%260, %c0_106, %c0_107] : memref<16x8x128xbf16, #tpu.memory_space<vmem>>, vector<1x8x128xbf16>
    %262 = vector.shape_cast %261 : vector<1x8x128xbf16> to vector<8x128xbf16>
    %263 = vector.shape_cast %259 : vector<8x128xbf16> to vector<1x8x128xbf16>
    tpu.vector_store %arg5[%260, %c0_106, %c0_107], %263 {strides = array<i32>} : memref<16x8x128xbf16, #tpu.memory_space<vmem>>, vector<1x8x128xbf16>,
    %c6_i32 = arith.constant 6 : i32
    %264 = arith.index_cast %c6_i32 : i32 to index
    %c0_108 = arith.constant 0 : index
    %c0_109 = arith.constant 0 : index
    %265 = vector.load %arg1[%264, %c0_108, %c0_109] : memref<16x8x64xbf16, #tpu.memory_space<vmem>>, vector<1x8x64xbf16>
    %266 = vector.shape_cast %265 : vector<1x8x64xbf16> to vector<8x64xbf16>
    %c0_110 = arith.constant 0 : index
    %c0_111 = arith.constant 0 : index
    %267 = vector.load %arg6[%c0_110, %c0_111] : memref<8x128xf32, #tpu.memory_space<vmem>>, vector<8x128xf32>
    %c0_112 = arith.constant 0 : index
    %c0_113 = arith.constant 0 : index
    %268 = vector.load %arg7[%c0_112, %c0_113] : memref<8x128xf32, #tpu.memory_space<vmem>>, vector<8x128xf32>
    %cst_114 = arith.constant dense<0.000000e+00> : vector<8x512xf32>
    %269 = tpu.matmul %266, %3, %cst_114 {dimension_numbers = #tpu.dot_dimension_numbers<[1], [0], [0], [1], [0, 0, 1, 1], [], []>} : vector<8x64xbf16>, vector<64x512xbf16>, vector<8x512xf32> -> vector<8x512xf32>
    %270 = arith.truncf %267 : vector<8x128xf32> to vector<8x128xbf16>
    %cst_115 = arith.constant dense<0.000000e+00> : vector<8x512xf32>
    %271 = tpu.matmul %270, %4, %cst_115 {dimension_numbers = #tpu.dot_dimension_numbers<[1], [0], [0], [1], [0, 0, 1, 1], [], []>} : vector<8x128xbf16>, vector<128x512xbf16>, vector<8x512xf32> -> vector<8x512xf32>
    %272 = arith.addf %269, %271 : vector<8x512xf32>
    %273 = vector.broadcast %5 : vector<1x512xf32> to vector<8x512xf32>
    %274 = arith.addf %272, %273 : vector<8x512xf32>
    %275 = vector.extract_strided_slice %274 {offsets = [0, 0], sizes = [8, 128], strides = [1, 1]} : vector<8x512xf32> to vector<8x128xf32>
    %276 = arith.negf %275 : vector<8x128xf32>
    %277 = math.exp %276 : vector<8x128xf32>
    %cst_116 = arith.constant 1.000000e+00 : f32
    %278 = vector.broadcast %cst_116 : f32 to vector<8x128xf32>
    %279 = arith.addf %278, %277 : vector<8x128xf32>
    %280 = arith.divf %278, %279 : vector<8x128xf32>
    %281 = vector.extract_strided_slice %274 {offsets = [0, 128], sizes = [8, 128], strides = [1, 1]} : vector<8x512xf32> to vector<8x128xf32>
    %282 = arith.negf %281 : vector<8x128xf32>
    %283 = math.exp %282 : vector<8x128xf32>
    %cst_117 = arith.constant 1.000000e+00 : f32
    %284 = vector.broadcast %cst_117 : f32 to vector<8x128xf32>
    %285 = arith.addf %284, %283 : vector<8x128xf32>
    %286 = arith.divf %284, %285 : vector<8x128xf32>
    %287 = vector.extract_strided_slice %274 {offsets = [0, 256], sizes = [8, 128], strides = [1, 1]} : vector<8x512xf32> to vector<8x128xf32>
    %288 = math.tanh %287 : vector<8x128xf32>
    %289 = vector.extract_strided_slice %274 {offsets = [0, 384], sizes = [8, 128], strides = [1, 1]} : vector<8x512xf32> to vector<8x128xf32>
    %290 = arith.negf %289 : vector<8x128xf32>
    %291 = math.exp %290 : vector<8x128xf32>
    %cst_118 = arith.constant 1.000000e+00 : f32
    %292 = vector.broadcast %cst_118 : f32 to vector<8x128xf32>
    %293 = arith.addf %292, %291 : vector<8x128xf32>
    %294 = arith.divf %292, %293 : vector<8x128xf32>
    %295 = arith.mulf %286, %268 : vector<8x128xf32>
    %296 = arith.mulf %280, %288 : vector<8x128xf32>
    %297 = arith.addf %295, %296 : vector<8x128xf32>
    %298 = math.tanh %297 : vector<8x128xf32>
    %299 = arith.mulf %294, %298 : vector<8x128xf32>
    %c0_119 = arith.constant 0 : index
    %c0_120 = arith.constant 0 : index
    %300 = vector.load %arg7[%c0_119, %c0_120] : memref<8x128xf32, #tpu.memory_space<vmem>>, vector<8x128xf32>
    tpu.vector_store %arg7[%c0_119, %c0_120], %297 {strides = array<i32>} : memref<8x128xf32, #tpu.memory_space<vmem>>, vector<8x128xf32>,
    %c0_121 = arith.constant 0 : index
    %c0_122 = arith.constant 0 : index
    %301 = vector.load %arg6[%c0_121, %c0_122] : memref<8x128xf32, #tpu.memory_space<vmem>>, vector<8x128xf32>
    tpu.vector_store %arg6[%c0_121, %c0_122], %299 {strides = array<i32>} : memref<8x128xf32, #tpu.memory_space<vmem>>, vector<8x128xf32>,
    %302 = arith.truncf %299 : vector<8x128xf32> to vector<8x128xbf16>
    %303 = arith.index_cast %c6_i32 : i32 to index
    %c0_123 = arith.constant 0 : index
    %c0_124 = arith.constant 0 : index
    %304 = vector.load %arg5[%303, %c0_123, %c0_124] : memref<16x8x128xbf16, #tpu.memory_space<vmem>>, vector<1x8x128xbf16>
    %305 = vector.shape_cast %304 : vector<1x8x128xbf16> to vector<8x128xbf16>
    %306 = vector.shape_cast %302 : vector<8x128xbf16> to vector<1x8x128xbf16>
    tpu.vector_store %arg5[%303, %c0_123, %c0_124], %306 {strides = array<i32>} : memref<16x8x128xbf16, #tpu.memory_space<vmem>>, vector<1x8x128xbf16>,
    %c7_i32 = arith.constant 7 : i32
    %307 = arith.index_cast %c7_i32 : i32 to index
    %c0_125 = arith.constant 0 : index
    %c0_126 = arith.constant 0 : index
    %308 = vector.load %arg1[%307, %c0_125, %c0_126] : memref<16x8x64xbf16, #tpu.memory_space<vmem>>, vector<1x8x64xbf16>
    %309 = vector.shape_cast %308 : vector<1x8x64xbf16> to vector<8x64xbf16>
    %c0_127 = arith.constant 0 : index
    %c0_128 = arith.constant 0 : index
    %310 = vector.load %arg6[%c0_127, %c0_128] : memref<8x128xf32, #tpu.memory_space<vmem>>, vector<8x128xf32>
    %c0_129 = arith.constant 0 : index
    %c0_130 = arith.constant 0 : index
    %311 = vector.load %arg7[%c0_129, %c0_130] : memref<8x128xf32, #tpu.memory_space<vmem>>, vector<8x128xf32>
    %cst_131 = arith.constant dense<0.000000e+00> : vector<8x512xf32>
    %312 = tpu.matmul %309, %3, %cst_131 {dimension_numbers = #tpu.dot_dimension_numbers<[1], [0], [0], [1], [0, 0, 1, 1], [], []>} : vector<8x64xbf16>, vector<64x512xbf16>, vector<8x512xf32> -> vector<8x512xf32>
    %313 = arith.truncf %310 : vector<8x128xf32> to vector<8x128xbf16>
    %cst_132 = arith.constant dense<0.000000e+00> : vector<8x512xf32>
    %314 = tpu.matmul %313, %4, %cst_132 {dimension_numbers = #tpu.dot_dimension_numbers<[1], [0], [0], [1], [0, 0, 1, 1], [], []>} : vector<8x128xbf16>, vector<128x512xbf16>, vector<8x512xf32> -> vector<8x512xf32>
    %315 = arith.addf %312, %314 : vector<8x512xf32>
    %316 = vector.broadcast %5 : vector<1x512xf32> to vector<8x512xf32>
    %317 = arith.addf %315, %316 : vector<8x512xf32>
    %318 = vector.extract_strided_slice %317 {offsets = [0, 0], sizes = [8, 128], strides = [1, 1]} : vector<8x512xf32> to vector<8x128xf32>
    %319 = arith.negf %318 : vector<8x128xf32>
    %320 = math.exp %319 : vector<8x128xf32>
    %cst_133 = arith.constant 1.000000e+00 : f32
    %321 = vector.broadcast %cst_133 : f32 to vector<8x128xf32>
    %322 = arith.addf %321, %320 : vector<8x128xf32>
    %323 = arith.divf %321, %322 : vector<8x128xf32>
    %324 = vector.extract_strided_slice %317 {offsets = [0, 128], sizes = [8, 128], strides = [1, 1]} : vector<8x512xf32> to vector<8x128xf32>
    %325 = arith.negf %324 : vector<8x128xf32>
    %326 = math.exp %325 : vector<8x128xf32>
    %cst_134 = arith.constant 1.000000e+00 : f32
    %327 = vector.broadcast %cst_134 : f32 to vector<8x128xf32>
    %328 = arith.addf %327, %326 : vector<8x128xf32>
    %329 = arith.divf %327, %328 : vector<8x128xf32>
    %330 = vector.extract_strided_slice %317 {offsets = [0, 256], sizes = [8, 128], strides = [1, 1]} : vector<8x512xf32> to vector<8x128xf32>
    %331 = math.tanh %330 : vector<8x128xf32>
    %332 = vector.extract_strided_slice %317 {offsets = [0, 384], sizes = [8, 128], strides = [1, 1]} : vector<8x512xf32> to vector<8x128xf32>
    %333 = arith.negf %332 : vector<8x128xf32>
    %334 = math.exp %333 : vector<8x128xf32>
    %cst_135 = arith.constant 1.000000e+00 : f32
    %335 = vector.broadcast %cst_135 : f32 to vector<8x128xf32>
    %336 = arith.addf %335, %334 : vector<8x128xf32>
    %337 = arith.divf %335, %336 : vector<8x128xf32>
    %338 = arith.mulf %329, %311 : vector<8x128xf32>
    %339 = arith.mulf %323, %331 : vector<8x128xf32>
    %340 = arith.addf %338, %339 : vector<8x128xf32>
    %341 = math.tanh %340 : vector<8x128xf32>
    %342 = arith.mulf %337, %341 : vector<8x128xf32>
    %c0_136 = arith.constant 0 : index
    %c0_137 = arith.constant 0 : index
    %343 = vector.load %arg7[%c0_136, %c0_137] : memref<8x128xf32, #tpu.memory_space<vmem>>, vector<8x128xf32>
    tpu.vector_store %arg7[%c0_136, %c0_137], %340 {strides = array<i32>} : memref<8x128xf32, #tpu.memory_space<vmem>>, vector<8x128xf32>,
    %c0_138 = arith.constant 0 : index
    %c0_139 = arith.constant 0 : index
    %344 = vector.load %arg6[%c0_138, %c0_139] : memref<8x128xf32, #tpu.memory_space<vmem>>, vector<8x128xf32>
    tpu.vector_store %arg6[%c0_138, %c0_139], %342 {strides = array<i32>} : memref<8x128xf32, #tpu.memory_space<vmem>>, vector<8x128xf32>,
    %345 = arith.truncf %342 : vector<8x128xf32> to vector<8x128xbf16>
    %346 = arith.index_cast %c7_i32 : i32 to index
    %c0_140 = arith.constant 0 : index
    %c0_141 = arith.constant 0 : index
    %347 = vector.load %arg5[%346, %c0_140, %c0_141] : memref<16x8x128xbf16, #tpu.memory_space<vmem>>, vector<1x8x128xbf16>
    %348 = vector.shape_cast %347 : vector<1x8x128xbf16> to vector<8x128xbf16>
    %349 = vector.shape_cast %345 : vector<8x128xbf16> to vector<1x8x128xbf16>
    tpu.vector_store %arg5[%346, %c0_140, %c0_141], %349 {strides = array<i32>} : memref<16x8x128xbf16, #tpu.memory_space<vmem>>, vector<1x8x128xbf16>,
    %c8_i32 = arith.constant 8 : i32
    %350 = arith.index_cast %c8_i32 : i32 to index
    %c0_142 = arith.constant 0 : index
    %c0_143 = arith.constant 0 : index
    %351 = vector.load %arg1[%350, %c0_142, %c0_143] : memref<16x8x64xbf16, #tpu.memory_space<vmem>>, vector<1x8x64xbf16>
    %352 = vector.shape_cast %351 : vector<1x8x64xbf16> to vector<8x64xbf16>
    %c0_144 = arith.constant 0 : index
    %c0_145 = arith.constant 0 : index
    %353 = vector.load %arg6[%c0_144, %c0_145] : memref<8x128xf32, #tpu.memory_space<vmem>>, vector<8x128xf32>
    %c0_146 = arith.constant 0 : index
    %c0_147 = arith.constant 0 : index
    %354 = vector.load %arg7[%c0_146, %c0_147] : memref<8x128xf32, #tpu.memory_space<vmem>>, vector<8x128xf32>
    %cst_148 = arith.constant dense<0.000000e+00> : vector<8x512xf32>
    %355 = tpu.matmul %352, %3, %cst_148 {dimension_numbers = #tpu.dot_dimension_numbers<[1], [0], [0], [1], [0, 0, 1, 1], [], []>} : vector<8x64xbf16>, vector<64x512xbf16>, vector<8x512xf32> -> vector<8x512xf32>
    %356 = arith.truncf %353 : vector<8x128xf32> to vector<8x128xbf16>
    %cst_149 = arith.constant dense<0.000000e+00> : vector<8x512xf32>
    %357 = tpu.matmul %356, %4, %cst_149 {dimension_numbers = #tpu.dot_dimension_numbers<[1], [0], [0], [1], [0, 0, 1, 1], [], []>} : vector<8x128xbf16>, vector<128x512xbf16>, vector<8x512xf32> -> vector<8x512xf32>
    %358 = arith.addf %355, %357 : vector<8x512xf32>
    %359 = vector.broadcast %5 : vector<1x512xf32> to vector<8x512xf32>
    %360 = arith.addf %358, %359 : vector<8x512xf32>
    %361 = vector.extract_strided_slice %360 {offsets = [0, 0], sizes = [8, 128], strides = [1, 1]} : vector<8x512xf32> to vector<8x128xf32>
    %362 = arith.negf %361 : vector<8x128xf32>
    %363 = math.exp %362 : vector<8x128xf32>
    %cst_150 = arith.constant 1.000000e+00 : f32
    %364 = vector.broadcast %cst_150 : f32 to vector<8x128xf32>
    %365 = arith.addf %364, %363 : vector<8x128xf32>
    %366 = arith.divf %364, %365 : vector<8x128xf32>
    %367 = vector.extract_strided_slice %360 {offsets = [0, 128], sizes = [8, 128], strides = [1, 1]} : vector<8x512xf32> to vector<8x128xf32>
    %368 = arith.negf %367 : vector<8x128xf32>
    %369 = math.exp %368 : vector<8x128xf32>
    %cst_151 = arith.constant 1.000000e+00 : f32
    %370 = vector.broadcast %cst_151 : f32 to vector<8x128xf32>
    %371 = arith.addf %370, %369 : vector<8x128xf32>
    %372 = arith.divf %370, %371 : vector<8x128xf32>
    %373 = vector.extract_strided_slice %360 {offsets = [0, 256], sizes = [8, 128], strides = [1, 1]} : vector<8x512xf32> to vector<8x128xf32>
    %374 = math.tanh %373 : vector<8x128xf32>
    %375 = vector.extract_strided_slice %360 {offsets = [0, 384], sizes = [8, 128], strides = [1, 1]} : vector<8x512xf32> to vector<8x128xf32>
    %376 = arith.negf %375 : vector<8x128xf32>
    %377 = math.exp %376 : vector<8x128xf32>
    %cst_152 = arith.constant 1.000000e+00 : f32
    %378 = vector.broadcast %cst_152 : f32 to vector<8x128xf32>
    %379 = arith.addf %378, %377 : vector<8x128xf32>
    %380 = arith.divf %378, %379 : vector<8x128xf32>
    %381 = arith.mulf %372, %354 : vector<8x128xf32>
    %382 = arith.mulf %366, %374 : vector<8x128xf32>
    %383 = arith.addf %381, %382 : vector<8x128xf32>
    %384 = math.tanh %383 : vector<8x128xf32>
    %385 = arith.mulf %380, %384 : vector<8x128xf32>
    %c0_153 = arith.constant 0 : index
    %c0_154 = arith.constant 0 : index
    %386 = vector.load %arg7[%c0_153, %c0_154] : memref<8x128xf32, #tpu.memory_space<vmem>>, vector<8x128xf32>
    tpu.vector_store %arg7[%c0_153, %c0_154], %383 {strides = array<i32>} : memref<8x128xf32, #tpu.memory_space<vmem>>, vector<8x128xf32>,
    %c0_155 = arith.constant 0 : index
    %c0_156 = arith.constant 0 : index
    %387 = vector.load %arg6[%c0_155, %c0_156] : memref<8x128xf32, #tpu.memory_space<vmem>>, vector<8x128xf32>
    tpu.vector_store %arg6[%c0_155, %c0_156], %385 {strides = array<i32>} : memref<8x128xf32, #tpu.memory_space<vmem>>, vector<8x128xf32>,
    %388 = arith.truncf %385 : vector<8x128xf32> to vector<8x128xbf16>
    %389 = arith.index_cast %c8_i32 : i32 to index
    %c0_157 = arith.constant 0 : index
    %c0_158 = arith.constant 0 : index
    %390 = vector.load %arg5[%389, %c0_157, %c0_158] : memref<16x8x128xbf16, #tpu.memory_space<vmem>>, vector<1x8x128xbf16>
    %391 = vector.shape_cast %390 : vector<1x8x128xbf16> to vector<8x128xbf16>
    %392 = vector.shape_cast %388 : vector<8x128xbf16> to vector<1x8x128xbf16>
    tpu.vector_store %arg5[%389, %c0_157, %c0_158], %392 {strides = array<i32>} : memref<16x8x128xbf16, #tpu.memory_space<vmem>>, vector<1x8x128xbf16>,
    %c9_i32 = arith.constant 9 : i32
    %393 = arith.index_cast %c9_i32 : i32 to index
    %c0_159 = arith.constant 0 : index
    %c0_160 = arith.constant 0 : index
    %394 = vector.load %arg1[%393, %c0_159, %c0_160] : memref<16x8x64xbf16, #tpu.memory_space<vmem>>, vector<1x8x64xbf16>
    %395 = vector.shape_cast %394 : vector<1x8x64xbf16> to vector<8x64xbf16>
    %c0_161 = arith.constant 0 : index
    %c0_162 = arith.constant 0 : index
    %396 = vector.load %arg6[%c0_161, %c0_162] : memref<8x128xf32, #tpu.memory_space<vmem>>, vector<8x128xf32>
    %c0_163 = arith.constant 0 : index
    %c0_164 = arith.constant 0 : index
    %397 = vector.load %arg7[%c0_163, %c0_164] : memref<8x128xf32, #tpu.memory_space<vmem>>, vector<8x128xf32>
    %cst_165 = arith.constant dense<0.000000e+00> : vector<8x512xf32>
    %398 = tpu.matmul %395, %3, %cst_165 {dimension_numbers = #tpu.dot_dimension_numbers<[1], [0], [0], [1], [0, 0, 1, 1], [], []>} : vector<8x64xbf16>, vector<64x512xbf16>, vector<8x512xf32> -> vector<8x512xf32>
    %399 = arith.truncf %396 : vector<8x128xf32> to vector<8x128xbf16>
    %cst_166 = arith.constant dense<0.000000e+00> : vector<8x512xf32>
    %400 = tpu.matmul %399, %4, %cst_166 {dimension_numbers = #tpu.dot_dimension_numbers<[1], [0], [0], [1], [0, 0, 1, 1], [], []>} : vector<8x128xbf16>, vector<128x512xbf16>, vector<8x512xf32> -> vector<8x512xf32>
    %401 = arith.addf %398, %400 : vector<8x512xf32>
    %402 = vector.broadcast %5 : vector<1x512xf32> to vector<8x512xf32>
    %403 = arith.addf %401, %402 : vector<8x512xf32>
    %404 = vector.extract_strided_slice %403 {offsets = [0, 0], sizes = [8, 128], strides = [1, 1]} : vector<8x512xf32> to vector<8x128xf32>
    %405 = arith.negf %404 : vector<8x128xf32>
    %406 = math.exp %405 : vector<8x128xf32>
    %cst_167 = arith.constant 1.000000e+00 : f32
    %407 = vector.broadcast %cst_167 : f32 to vector<8x128xf32>
    %408 = arith.addf %407, %406 : vector<8x128xf32>
    %409 = arith.divf %407, %408 : vector<8x128xf32>
    %410 = vector.extract_strided_slice %403 {offsets = [0, 128], sizes = [8, 128], strides = [1, 1]} : vector<8x512xf32> to vector<8x128xf32>
    %411 = arith.negf %410 : vector<8x128xf32>
    %412 = math.exp %411 : vector<8x128xf32>
    %cst_168 = arith.constant 1.000000e+00 : f32
    %413 = vector.broadcast %cst_168 : f32 to vector<8x128xf32>
    %414 = arith.addf %413, %412 : vector<8x128xf32>
    %415 = arith.divf %413, %414 : vector<8x128xf32>
    %416 = vector.extract_strided_slice %403 {offsets = [0, 256], sizes = [8, 128], strides = [1, 1]} : vector<8x512xf32> to vector<8x128xf32>
    %417 = math.tanh %416 : vector<8x128xf32>
    %418 = vector.extract_strided_slice %403 {offsets = [0, 384], sizes = [8, 128], strides = [1, 1]} : vector<8x512xf32> to vector<8x128xf32>
    %419 = arith.negf %418 : vector<8x128xf32>
    %420 = math.exp %419 : vector<8x128xf32>
    %cst_169 = arith.constant 1.000000e+00 : f32
    %421 = vector.broadcast %cst_169 : f32 to vector<8x128xf32>
    %422 = arith.addf %421, %420 : vector<8x128xf32>
    %423 = arith.divf %421, %422 : vector<8x128xf32>
    %424 = arith.mulf %415, %397 : vector<8x128xf32>
    %425 = arith.mulf %409, %417 : vector<8x128xf32>
    %426 = arith.addf %424, %425 : vector<8x128xf32>
    %427 = math.tanh %426 : vector<8x128xf32>
    %428 = arith.mulf %423, %427 : vector<8x128xf32>
    %c0_170 = arith.constant 0 : index
    %c0_171 = arith.constant 0 : index
    %429 = vector.load %arg7[%c0_170, %c0_171] : memref<8x128xf32, #tpu.memory_space<vmem>>, vector<8x128xf32>
    tpu.vector_store %arg7[%c0_170, %c0_171], %426 {strides = array<i32>} : memref<8x128xf32, #tpu.memory_space<vmem>>, vector<8x128xf32>,
    %c0_172 = arith.constant 0 : index
    %c0_173 = arith.constant 0 : index
    %430 = vector.load %arg6[%c0_172, %c0_173] : memref<8x128xf32, #tpu.memory_space<vmem>>, vector<8x128xf32>
    tpu.vector_store %arg6[%c0_172, %c0_173], %428 {strides = array<i32>} : memref<8x128xf32, #tpu.memory_space<vmem>>, vector<8x128xf32>,
    %431 = arith.truncf %428 : vector<8x128xf32> to vector<8x128xbf16>
    %432 = arith.index_cast %c9_i32 : i32 to index
    %c0_174 = arith.constant 0 : index
    %c0_175 = arith.constant 0 : index
    %433 = vector.load %arg5[%432, %c0_174, %c0_175] : memref<16x8x128xbf16, #tpu.memory_space<vmem>>, vector<1x8x128xbf16>
    %434 = vector.shape_cast %433 : vector<1x8x128xbf16> to vector<8x128xbf16>
    %435 = vector.shape_cast %431 : vector<8x128xbf16> to vector<1x8x128xbf16>
    tpu.vector_store %arg5[%432, %c0_174, %c0_175], %435 {strides = array<i32>} : memref<16x8x128xbf16, #tpu.memory_space<vmem>>, vector<1x8x128xbf16>,
    %c10_i32 = arith.constant 10 : i32
    %436 = arith.index_cast %c10_i32 : i32 to index
    %c0_176 = arith.constant 0 : index
    %c0_177 = arith.constant 0 : index
    %437 = vector.load %arg1[%436, %c0_176, %c0_177] : memref<16x8x64xbf16, #tpu.memory_space<vmem>>, vector<1x8x64xbf16>
    %438 = vector.shape_cast %437 : vector<1x8x64xbf16> to vector<8x64xbf16>
    %c0_178 = arith.constant 0 : index
    %c0_179 = arith.constant 0 : index
    %439 = vector.load %arg6[%c0_178, %c0_179] : memref<8x128xf32, #tpu.memory_space<vmem>>, vector<8x128xf32>
    %c0_180 = arith.constant 0 : index
    %c0_181 = arith.constant 0 : index
    %440 = vector.load %arg7[%c0_180, %c0_181] : memref<8x128xf32, #tpu.memory_space<vmem>>, vector<8x128xf32>
    %cst_182 = arith.constant dense<0.000000e+00> : vector<8x512xf32>
    %441 = tpu.matmul %438, %3, %cst_182 {dimension_numbers = #tpu.dot_dimension_numbers<[1], [0], [0], [1], [0, 0, 1, 1], [], []>} : vector<8x64xbf16>, vector<64x512xbf16>, vector<8x512xf32> -> vector<8x512xf32>
    %442 = arith.truncf %439 : vector<8x128xf32> to vector<8x128xbf16>
    %cst_183 = arith.constant dense<0.000000e+00> : vector<8x512xf32>
    %443 = tpu.matmul %442, %4, %cst_183 {dimension_numbers = #tpu.dot_dimension_numbers<[1], [0], [0], [1], [0, 0, 1, 1], [], []>} : vector<8x128xbf16>, vector<128x512xbf16>, vector<8x512xf32> -> vector<8x512xf32>
    %444 = arith.addf %441, %443 : vector<8x512xf32>
    %445 = vector.broadcast %5 : vector<1x512xf32> to vector<8x512xf32>
    %446 = arith.addf %444, %445 : vector<8x512xf32>
    %447 = vector.extract_strided_slice %446 {offsets = [0, 0], sizes = [8, 128], strides = [1, 1]} : vector<8x512xf32> to vector<8x128xf32>
    %448 = arith.negf %447 : vector<8x128xf32>
    %449 = math.exp %448 : vector<8x128xf32>
    %cst_184 = arith.constant 1.000000e+00 : f32
    %450 = vector.broadcast %cst_184 : f32 to vector<8x128xf32>
    %451 = arith.addf %450, %449 : vector<8x128xf32>
    %452 = arith.divf %450, %451 : vector<8x128xf32>
    %453 = vector.extract_strided_slice %446 {offsets = [0, 128], sizes = [8, 128], strides = [1, 1]} : vector<8x512xf32> to vector<8x128xf32>
    %454 = arith.negf %453 : vector<8x128xf32>
    %455 = math.exp %454 : vector<8x128xf32>
    %cst_185 = arith.constant 1.000000e+00 : f32
    %456 = vector.broadcast %cst_185 : f32 to vector<8x128xf32>
    %457 = arith.addf %456, %455 : vector<8x128xf32>
    %458 = arith.divf %456, %457 : vector<8x128xf32>
    %459 = vector.extract_strided_slice %446 {offsets = [0, 256], sizes = [8, 128], strides = [1, 1]} : vector<8x512xf32> to vector<8x128xf32>
    %460 = math.tanh %459 : vector<8x128xf32>
    %461 = vector.extract_strided_slice %446 {offsets = [0, 384], sizes = [8, 128], strides = [1, 1]} : vector<8x512xf32> to vector<8x128xf32>
    %462 = arith.negf %461 : vector<8x128xf32>
    %463 = math.exp %462 : vector<8x128xf32>
    %cst_186 = arith.constant 1.000000e+00 : f32
    %464 = vector.broadcast %cst_186 : f32 to vector<8x128xf32>
    %465 = arith.addf %464, %463 : vector<8x128xf32>
    %466 = arith.divf %464, %465 : vector<8x128xf32>
    %467 = arith.mulf %458, %440 : vector<8x128xf32>
    %468 = arith.mulf %452, %460 : vector<8x128xf32>
    %469 = arith.addf %467, %468 : vector<8x128xf32>
    %470 = math.tanh %469 : vector<8x128xf32>
    %471 = arith.mulf %466, %470 : vector<8x128xf32>
    %c0_187 = arith.constant 0 : index
    %c0_188 = arith.constant 0 : index
    %472 = vector.load %arg7[%c0_187, %c0_188] : memref<8x128xf32, #tpu.memory_space<vmem>>, vector<8x128xf32>
    tpu.vector_store %arg7[%c0_187, %c0_188], %469 {strides = array<i32>} : memref<8x128xf32, #tpu.memory_space<vmem>>, vector<8x128xf32>,
    %c0_189 = arith.constant 0 : index
    %c0_190 = arith.constant 0 : index
    %473 = vector.load %arg6[%c0_189, %c0_190] : memref<8x128xf32, #tpu.memory_space<vmem>>, vector<8x128xf32>
    tpu.vector_store %arg6[%c0_189, %c0_190], %471 {strides = array<i32>} : memref<8x128xf32, #tpu.memory_space<vmem>>, vector<8x128xf32>,
    %474 = arith.truncf %471 : vector<8x128xf32> to vector<8x128xbf16>
    %475 = arith.index_cast %c10_i32 : i32 to index
    %c0_191 = arith.constant 0 : index
    %c0_192 = arith.constant 0 : index
    %476 = vector.load %arg5[%475, %c0_191, %c0_192] : memref<16x8x128xbf16, #tpu.memory_space<vmem>>, vector<1x8x128xbf16>
    %477 = vector.shape_cast %476 : vector<1x8x128xbf16> to vector<8x128xbf16>
    %478 = vector.shape_cast %474 : vector<8x128xbf16> to vector<1x8x128xbf16>
    tpu.vector_store %arg5[%475, %c0_191, %c0_192], %478 {strides = array<i32>} : memref<16x8x128xbf16, #tpu.memory_space<vmem>>, vector<1x8x128xbf16>,
    %c11_i32 = arith.constant 11 : i32
    %479 = arith.index_cast %c11_i32 : i32 to index
    %c0_193 = arith.constant 0 : index
    %c0_194 = arith.constant 0 : index
    %480 = vector.load %arg1[%479, %c0_193, %c0_194] : memref<16x8x64xbf16, #tpu.memory_space<vmem>>, vector<1x8x64xbf16>
    %481 = vector.shape_cast %480 : vector<1x8x64xbf16> to vector<8x64xbf16>
    %c0_195 = arith.constant 0 : index
    %c0_196 = arith.constant 0 : index
    %482 = vector.load %arg6[%c0_195, %c0_196] : memref<8x128xf32, #tpu.memory_space<vmem>>, vector<8x128xf32>
    %c0_197 = arith.constant 0 : index
    %c0_198 = arith.constant 0 : index
    %483 = vector.load %arg7[%c0_197, %c0_198] : memref<8x128xf32, #tpu.memory_space<vmem>>, vector<8x128xf32>
    %cst_199 = arith.constant dense<0.000000e+00> : vector<8x512xf32>
    %484 = tpu.matmul %481, %3, %cst_199 {dimension_numbers = #tpu.dot_dimension_numbers<[1], [0], [0], [1], [0, 0, 1, 1], [], []>} : vector<8x64xbf16>, vector<64x512xbf16>, vector<8x512xf32> -> vector<8x512xf32>
    %485 = arith.truncf %482 : vector<8x128xf32> to vector<8x128xbf16>
    %cst_200 = arith.constant dense<0.000000e+00> : vector<8x512xf32>
    %486 = tpu.matmul %485, %4, %cst_200 {dimension_numbers = #tpu.dot_dimension_numbers<[1], [0], [0], [1], [0, 0, 1, 1], [], []>} : vector<8x128xbf16>, vector<128x512xbf16>, vector<8x512xf32> -> vector<8x512xf32>
    %487 = arith.addf %484, %486 : vector<8x512xf32>
    %488 = vector.broadcast %5 : vector<1x512xf32> to vector<8x512xf32>
    %489 = arith.addf %487, %488 : vector<8x512xf32>
    %490 = vector.extract_strided_slice %489 {offsets = [0, 0], sizes = [8, 128], strides = [1, 1]} : vector<8x512xf32> to vector<8x128xf32>
    %491 = arith.negf %490 : vector<8x128xf32>
    %492 = math.exp %491 : vector<8x128xf32>
    %cst_201 = arith.constant 1.000000e+00 : f32
    %493 = vector.broadcast %cst_201 : f32 to vector<8x128xf32>
    %494 = arith.addf %493, %492 : vector<8x128xf32>
    %495 = arith.divf %493, %494 : vector<8x128xf32>
    %496 = vector.extract_strided_slice %489 {offsets = [0, 128], sizes = [8, 128], strides = [1, 1]} : vector<8x512xf32> to vector<8x128xf32>
    %497 = arith.negf %496 : vector<8x128xf32>
    %498 = math.exp %497 : vector<8x128xf32>
    %cst_202 = arith.constant 1.000000e+00 : f32
    %499 = vector.broadcast %cst_202 : f32 to vector<8x128xf32>
    %500 = arith.addf %499, %498 : vector<8x128xf32>
    %501 = arith.divf %499, %500 : vector<8x128xf32>
    %502 = vector.extract_strided_slice %489 {offsets = [0, 256], sizes = [8, 128], strides = [1, 1]} : vector<8x512xf32> to vector<8x128xf32>
    %503 = math.tanh %502 : vector<8x128xf32>
    %504 = vector.extract_strided_slice %489 {offsets = [0, 384], sizes = [8, 128], strides = [1, 1]} : vector<8x512xf32> to vector<8x128xf32>
    %505 = arith.negf %504 : vector<8x128xf32>
    %506 = math.exp %505 : vector<8x128xf32>
    %cst_203 = arith.constant 1.000000e+00 : f32
    %507 = vector.broadcast %cst_203 : f32 to vector<8x128xf32>
    %508 = arith.addf %507, %506 : vector<8x128xf32>
    %509 = arith.divf %507, %508 : vector<8x128xf32>
    %510 = arith.mulf %501, %483 : vector<8x128xf32>
    %511 = arith.mulf %495, %503 : vector<8x128xf32>
    %512 = arith.addf %510, %511 : vector<8x128xf32>
    %513 = math.tanh %512 : vector<8x128xf32>
    %514 = arith.mulf %509, %513 : vector<8x128xf32>
    %c0_204 = arith.constant 0 : index
    %c0_205 = arith.constant 0 : index
    %515 = vector.load %arg7[%c0_204, %c0_205] : memref<8x128xf32, #tpu.memory_space<vmem>>, vector<8x128xf32>
    tpu.vector_store %arg7[%c0_204, %c0_205], %512 {strides = array<i32>} : memref<8x128xf32, #tpu.memory_space<vmem>>, vector<8x128xf32>,
    %c0_206 = arith.constant 0 : index
    %c0_207 = arith.constant 0 : index
    %516 = vector.load %arg6[%c0_206, %c0_207] : memref<8x128xf32, #tpu.memory_space<vmem>>, vector<8x128xf32>
    tpu.vector_store %arg6[%c0_206, %c0_207], %514 {strides = array<i32>} : memref<8x128xf32, #tpu.memory_space<vmem>>, vector<8x128xf32>,
    %517 = arith.truncf %514 : vector<8x128xf32> to vector<8x128xbf16>
    %518 = arith.index_cast %c11_i32 : i32 to index
    %c0_208 = arith.constant 0 : index
    %c0_209 = arith.constant 0 : index
    %519 = vector.load %arg5[%518, %c0_208, %c0_209] : memref<16x8x128xbf16, #tpu.memory_space<vmem>>, vector<1x8x128xbf16>
    %520 = vector.shape_cast %519 : vector<1x8x128xbf16> to vector<8x128xbf16>
    %521 = vector.shape_cast %517 : vector<8x128xbf16> to vector<1x8x128xbf16>
    tpu.vector_store %arg5[%518, %c0_208, %c0_209], %521 {strides = array<i32>} : memref<16x8x128xbf16, #tpu.memory_space<vmem>>, vector<1x8x128xbf16>,
    %c12_i32 = arith.constant 12 : i32
    %522 = arith.index_cast %c12_i32 : i32 to index
    %c0_210 = arith.constant 0 : index
    %c0_211 = arith.constant 0 : index
    %523 = vector.load %arg1[%522, %c0_210, %c0_211] : memref<16x8x64xbf16, #tpu.memory_space<vmem>>, vector<1x8x64xbf16>
    %524 = vector.shape_cast %523 : vector<1x8x64xbf16> to vector<8x64xbf16>
    %c0_212 = arith.constant 0 : index
    %c0_213 = arith.constant 0 : index
    %525 = vector.load %arg6[%c0_212, %c0_213] : memref<8x128xf32, #tpu.memory_space<vmem>>, vector<8x128xf32>
    %c0_214 = arith.constant 0 : index
    %c0_215 = arith.constant 0 : index
    %526 = vector.load %arg7[%c0_214, %c0_215] : memref<8x128xf32, #tpu.memory_space<vmem>>, vector<8x128xf32>
    %cst_216 = arith.constant dense<0.000000e+00> : vector<8x512xf32>
    %527 = tpu.matmul %524, %3, %cst_216 {dimension_numbers = #tpu.dot_dimension_numbers<[1], [0], [0], [1], [0, 0, 1, 1], [], []>} : vector<8x64xbf16>, vector<64x512xbf16>, vector<8x512xf32> -> vector<8x512xf32>
    %528 = arith.truncf %525 : vector<8x128xf32> to vector<8x128xbf16>
    %cst_217 = arith.constant dense<0.000000e+00> : vector<8x512xf32>
    %529 = tpu.matmul %528, %4, %cst_217 {dimension_numbers = #tpu.dot_dimension_numbers<[1], [0], [0], [1], [0, 0, 1, 1], [], []>} : vector<8x128xbf16>, vector<128x512xbf16>, vector<8x512xf32> -> vector<8x512xf32>
    %530 = arith.addf %527, %529 : vector<8x512xf32>
    %531 = vector.broadcast %5 : vector<1x512xf32> to vector<8x512xf32>
    %532 = arith.addf %530, %531 : vector<8x512xf32>
    %533 = vector.extract_strided_slice %532 {offsets = [0, 0], sizes = [8, 128], strides = [1, 1]} : vector<8x512xf32> to vector<8x128xf32>
    %534 = arith.negf %533 : vector<8x128xf32>
    %535 = math.exp %534 : vector<8x128xf32>
    %cst_218 = arith.constant 1.000000e+00 : f32
    %536 = vector.broadcast %cst_218 : f32 to vector<8x128xf32>
    %537 = arith.addf %536, %535 : vector<8x128xf32>
    %538 = arith.divf %536, %537 : vector<8x128xf32>
    %539 = vector.extract_strided_slice %532 {offsets = [0, 128], sizes = [8, 128], strides = [1, 1]} : vector<8x512xf32> to vector<8x128xf32>
    %540 = arith.negf %539 : vector<8x128xf32>
    %541 = math.exp %540 : vector<8x128xf32>
    %cst_219 = arith.constant 1.000000e+00 : f32
    %542 = vector.broadcast %cst_219 : f32 to vector<8x128xf32>
    %543 = arith.addf %542, %541 : vector<8x128xf32>
    %544 = arith.divf %542, %543 : vector<8x128xf32>
    %545 = vector.extract_strided_slice %532 {offsets = [0, 256], sizes = [8, 128], strides = [1, 1]} : vector<8x512xf32> to vector<8x128xf32>
    %546 = math.tanh %545 : vector<8x128xf32>
    %547 = vector.extract_strided_slice %532 {offsets = [0, 384], sizes = [8, 128], strides = [1, 1]} : vector<8x512xf32> to vector<8x128xf32>
    %548 = arith.negf %547 : vector<8x128xf32>
    %549 = math.exp %548 : vector<8x128xf32>
    %cst_220 = arith.constant 1.000000e+00 : f32
    %550 = vector.broadcast %cst_220 : f32 to vector<8x128xf32>
    %551 = arith.addf %550, %549 : vector<8x128xf32>
    %552 = arith.divf %550, %551 : vector<8x128xf32>
    %553 = arith.mulf %544, %526 : vector<8x128xf32>
    %554 = arith.mulf %538, %546 : vector<8x128xf32>
    %555 = arith.addf %553, %554 : vector<8x128xf32>
    %556 = math.tanh %555 : vector<8x128xf32>
    %557 = arith.mulf %552, %556 : vector<8x128xf32>
    %c0_221 = arith.constant 0 : index
    %c0_222 = arith.constant 0 : index
    %558 = vector.load %arg7[%c0_221, %c0_222] : memref<8x128xf32, #tpu.memory_space<vmem>>, vector<8x128xf32>
    tpu.vector_store %arg7[%c0_221, %c0_222], %555 {strides = array<i32>} : memref<8x128xf32, #tpu.memory_space<vmem>>, vector<8x128xf32>,
    %c0_223 = arith.constant 0 : index
    %c0_224 = arith.constant 0 : index
    %559 = vector.load %arg6[%c0_223, %c0_224] : memref<8x128xf32, #tpu.memory_space<vmem>>, vector<8x128xf32>
    tpu.vector_store %arg6[%c0_223, %c0_224], %557 {strides = array<i32>} : memref<8x128xf32, #tpu.memory_space<vmem>>, vector<8x128xf32>,
    %560 = arith.truncf %557 : vector<8x128xf32> to vector<8x128xbf16>
    %561 = arith.index_cast %c12_i32 : i32 to index
    %c0_225 = arith.constant 0 : index
    %c0_226 = arith.constant 0 : index
    %562 = vector.load %arg5[%561, %c0_225, %c0_226] : memref<16x8x128xbf16, #tpu.memory_space<vmem>>, vector<1x8x128xbf16>
    %563 = vector.shape_cast %562 : vector<1x8x128xbf16> to vector<8x128xbf16>
    %564 = vector.shape_cast %560 : vector<8x128xbf16> to vector<1x8x128xbf16>
    tpu.vector_store %arg5[%561, %c0_225, %c0_226], %564 {strides = array<i32>} : memref<16x8x128xbf16, #tpu.memory_space<vmem>>, vector<1x8x128xbf16>,
    %c13_i32 = arith.constant 13 : i32
    %565 = arith.index_cast %c13_i32 : i32 to index
    %c0_227 = arith.constant 0 : index
    %c0_228 = arith.constant 0 : index
    %566 = vector.load %arg1[%565, %c0_227, %c0_228] : memref<16x8x64xbf16, #tpu.memory_space<vmem>>, vector<1x8x64xbf16>
    %567 = vector.shape_cast %566 : vector<1x8x64xbf16> to vector<8x64xbf16>
    %c0_229 = arith.constant 0 : index
    %c0_230 = arith.constant 0 : index
    %568 = vector.load %arg6[%c0_229, %c0_230] : memref<8x128xf32, #tpu.memory_space<vmem>>, vector<8x128xf32>
    %c0_231 = arith.constant 0 : index
    %c0_232 = arith.constant 0 : index
    %569 = vector.load %arg7[%c0_231, %c0_232] : memref<8x128xf32, #tpu.memory_space<vmem>>, vector<8x128xf32>
    %cst_233 = arith.constant dense<0.000000e+00> : vector<8x512xf32>
    %570 = tpu.matmul %567, %3, %cst_233 {dimension_numbers = #tpu.dot_dimension_numbers<[1], [0], [0], [1], [0, 0, 1, 1], [], []>} : vector<8x64xbf16>, vector<64x512xbf16>, vector<8x512xf32> -> vector<8x512xf32>
    %571 = arith.truncf %568 : vector<8x128xf32> to vector<8x128xbf16>
    %cst_234 = arith.constant dense<0.000000e+00> : vector<8x512xf32>
    %572 = tpu.matmul %571, %4, %cst_234 {dimension_numbers = #tpu.dot_dimension_numbers<[1], [0], [0], [1], [0, 0, 1, 1], [], []>} : vector<8x128xbf16>, vector<128x512xbf16>, vector<8x512xf32> -> vector<8x512xf32>
    %573 = arith.addf %570, %572 : vector<8x512xf32>
    %574 = vector.broadcast %5 : vector<1x512xf32> to vector<8x512xf32>
    %575 = arith.addf %573, %574 : vector<8x512xf32>
    %576 = vector.extract_strided_slice %575 {offsets = [0, 0], sizes = [8, 128], strides = [1, 1]} : vector<8x512xf32> to vector<8x128xf32>
    %577 = arith.negf %576 : vector<8x128xf32>
    %578 = math.exp %577 : vector<8x128xf32>
    %cst_235 = arith.constant 1.000000e+00 : f32
    %579 = vector.broadcast %cst_235 : f32 to vector<8x128xf32>
    %580 = arith.addf %579, %578 : vector<8x128xf32>
    %581 = arith.divf %579, %580 : vector<8x128xf32>
    %582 = vector.extract_strided_slice %575 {offsets = [0, 128], sizes = [8, 128], strides = [1, 1]} : vector<8x512xf32> to vector<8x128xf32>
    %583 = arith.negf %582 : vector<8x128xf32>
    %584 = math.exp %583 : vector<8x128xf32>
    %cst_236 = arith.constant 1.000000e+00 : f32
    %585 = vector.broadcast %cst_236 : f32 to vector<8x128xf32>
    %586 = arith.addf %585, %584 : vector<8x128xf32>
    %587 = arith.divf %585, %586 : vector<8x128xf32>
    %588 = vector.extract_strided_slice %575 {offsets = [0, 256], sizes = [8, 128], strides = [1, 1]} : vector<8x512xf32> to vector<8x128xf32>
    %589 = math.tanh %588 : vector<8x128xf32>
    %590 = vector.extract_strided_slice %575 {offsets = [0, 384], sizes = [8, 128], strides = [1, 1]} : vector<8x512xf32> to vector<8x128xf32>
    %591 = arith.negf %590 : vector<8x128xf32>
    %592 = math.exp %591 : vector<8x128xf32>
    %cst_237 = arith.constant 1.000000e+00 : f32
    %593 = vector.broadcast %cst_237 : f32 to vector<8x128xf32>
    %594 = arith.addf %593, %592 : vector<8x128xf32>
    %595 = arith.divf %593, %594 : vector<8x128xf32>
    %596 = arith.mulf %587, %569 : vector<8x128xf32>
    %597 = arith.mulf %581, %589 : vector<8x128xf32>
    %598 = arith.addf %596, %597 : vector<8x128xf32>
    %599 = math.tanh %598 : vector<8x128xf32>
    %600 = arith.mulf %595, %599 : vector<8x128xf32>
    %c0_238 = arith.constant 0 : index
    %c0_239 = arith.constant 0 : index
    %601 = vector.load %arg7[%c0_238, %c0_239] : memref<8x128xf32, #tpu.memory_space<vmem>>, vector<8x128xf32>
    tpu.vector_store %arg7[%c0_238, %c0_239], %598 {strides = array<i32>} : memref<8x128xf32, #tpu.memory_space<vmem>>, vector<8x128xf32>,
    %c0_240 = arith.constant 0 : index
    %c0_241 = arith.constant 0 : index
    %602 = vector.load %arg6[%c0_240, %c0_241] : memref<8x128xf32, #tpu.memory_space<vmem>>, vector<8x128xf32>
    tpu.vector_store %arg6[%c0_240, %c0_241], %600 {strides = array<i32>} : memref<8x128xf32, #tpu.memory_space<vmem>>, vector<8x128xf32>,
    %603 = arith.truncf %600 : vector<8x128xf32> to vector<8x128xbf16>
    %604 = arith.index_cast %c13_i32 : i32 to index
    %c0_242 = arith.constant 0 : index
    %c0_243 = arith.constant 0 : index
    %605 = vector.load %arg5[%604, %c0_242, %c0_243] : memref<16x8x128xbf16, #tpu.memory_space<vmem>>, vector<1x8x128xbf16>
    %606 = vector.shape_cast %605 : vector<1x8x128xbf16> to vector<8x128xbf16>
    %607 = vector.shape_cast %603 : vector<8x128xbf16> to vector<1x8x128xbf16>
    tpu.vector_store %arg5[%604, %c0_242, %c0_243], %607 {strides = array<i32>} : memref<16x8x128xbf16, #tpu.memory_space<vmem>>, vector<1x8x128xbf16>,
    %c14_i32 = arith.constant 14 : i32
    %608 = arith.index_cast %c14_i32 : i32 to index
    %c0_244 = arith.constant 0 : index
    %c0_245 = arith.constant 0 : index
    %609 = vector.load %arg1[%608, %c0_244, %c0_245] : memref<16x8x64xbf16, #tpu.memory_space<vmem>>, vector<1x8x64xbf16>
    %610 = vector.shape_cast %609 : vector<1x8x64xbf16> to vector<8x64xbf16>
    %c0_246 = arith.constant 0 : index
    %c0_247 = arith.constant 0 : index
    %611 = vector.load %arg6[%c0_246, %c0_247] : memref<8x128xf32, #tpu.memory_space<vmem>>, vector<8x128xf32>
    %c0_248 = arith.constant 0 : index
    %c0_249 = arith.constant 0 : index
    %612 = vector.load %arg7[%c0_248, %c0_249] : memref<8x128xf32, #tpu.memory_space<vmem>>, vector<8x128xf32>
    %cst_250 = arith.constant dense<0.000000e+00> : vector<8x512xf32>
    %613 = tpu.matmul %610, %3, %cst_250 {dimension_numbers = #tpu.dot_dimension_numbers<[1], [0], [0], [1], [0, 0, 1, 1], [], []>} : vector<8x64xbf16>, vector<64x512xbf16>, vector<8x512xf32> -> vector<8x512xf32>
    %614 = arith.truncf %611 : vector<8x128xf32> to vector<8x128xbf16>
    %cst_251 = arith.constant dense<0.000000e+00> : vector<8x512xf32>
    %615 = tpu.matmul %614, %4, %cst_251 {dimension_numbers = #tpu.dot_dimension_numbers<[1], [0], [0], [1], [0, 0, 1, 1], [], []>} : vector<8x128xbf16>, vector<128x512xbf16>, vector<8x512xf32> -> vector<8x512xf32>
    %616 = arith.addf %613, %615 : vector<8x512xf32>
    %617 = vector.broadcast %5 : vector<1x512xf32> to vector<8x512xf32>
    %618 = arith.addf %616, %617 : vector<8x512xf32>
    %619 = vector.extract_strided_slice %618 {offsets = [0, 0], sizes = [8, 128], strides = [1, 1]} : vector<8x512xf32> to vector<8x128xf32>
    %620 = arith.negf %619 : vector<8x128xf32>
    %621 = math.exp %620 : vector<8x128xf32>
    %cst_252 = arith.constant 1.000000e+00 : f32
    %622 = vector.broadcast %cst_252 : f32 to vector<8x128xf32>
    %623 = arith.addf %622, %621 : vector<8x128xf32>
    %624 = arith.divf %622, %623 : vector<8x128xf32>
    %625 = vector.extract_strided_slice %618 {offsets = [0, 128], sizes = [8, 128], strides = [1, 1]} : vector<8x512xf32> to vector<8x128xf32>
    %626 = arith.negf %625 : vector<8x128xf32>
    %627 = math.exp %626 : vector<8x128xf32>
    %cst_253 = arith.constant 1.000000e+00 : f32
    %628 = vector.broadcast %cst_253 : f32 to vector<8x128xf32>
    %629 = arith.addf %628, %627 : vector<8x128xf32>
    %630 = arith.divf %628, %629 : vector<8x128xf32>
    %631 = vector.extract_strided_slice %618 {offsets = [0, 256], sizes = [8, 128], strides = [1, 1]} : vector<8x512xf32> to vector<8x128xf32>
    %632 = math.tanh %631 : vector<8x128xf32>
    %633 = vector.extract_strided_slice %618 {offsets = [0, 384], sizes = [8, 128], strides = [1, 1]} : vector<8x512xf32> to vector<8x128xf32>
    %634 = arith.negf %633 : vector<8x128xf32>
    %635 = math.exp %634 : vector<8x128xf32>
    %cst_254 = arith.constant 1.000000e+00 : f32
    %636 = vector.broadcast %cst_254 : f32 to vector<8x128xf32>
    %637 = arith.addf %636, %635 : vector<8x128xf32>
    %638 = arith.divf %636, %637 : vector<8x128xf32>
    %639 = arith.mulf %630, %612 : vector<8x128xf32>
    %640 = arith.mulf %624, %632 : vector<8x128xf32>
    %641 = arith.addf %639, %640 : vector<8x128xf32>
    %642 = math.tanh %641 : vector<8x128xf32>
    %643 = arith.mulf %638, %642 : vector<8x128xf32>
    %c0_255 = arith.constant 0 : index
    %c0_256 = arith.constant 0 : index
    %644 = vector.load %arg7[%c0_255, %c0_256] : memref<8x128xf32, #tpu.memory_space<vmem>>, vector<8x128xf32>
    tpu.vector_store %arg7[%c0_255, %c0_256], %641 {strides = array<i32>} : memref<8x128xf32, #tpu.memory_space<vmem>>, vector<8x128xf32>,
    %c0_257 = arith.constant 0 : index
    %c0_258 = arith.constant 0 : index
    %645 = vector.load %arg6[%c0_257, %c0_258] : memref<8x128xf32, #tpu.memory_space<vmem>>, vector<8x128xf32>
    tpu.vector_store %arg6[%c0_257, %c0_258], %643 {strides = array<i32>} : memref<8x128xf32, #tpu.memory_space<vmem>>, vector<8x128xf32>,
    %646 = arith.truncf %643 : vector<8x128xf32> to vector<8x128xbf16>
    %647 = arith.index_cast %c14_i32 : i32 to index
    %c0_259 = arith.constant 0 : index
    %c0_260 = arith.constant 0 : index
    %648 = vector.load %arg5[%647, %c0_259, %c0_260] : memref<16x8x128xbf16, #tpu.memory_space<vmem>>, vector<1x8x128xbf16>
    %649 = vector.shape_cast %648 : vector<1x8x128xbf16> to vector<8x128xbf16>
    %650 = vector.shape_cast %646 : vector<8x128xbf16> to vector<1x8x128xbf16>
    tpu.vector_store %arg5[%647, %c0_259, %c0_260], %650 {strides = array<i32>} : memref<16x8x128xbf16, #tpu.memory_space<vmem>>, vector<1x8x128xbf16>,
    %c15_i32 = arith.constant 15 : i32
    %651 = arith.index_cast %c15_i32 : i32 to index
    %c0_261 = arith.constant 0 : index
    %c0_262 = arith.constant 0 : index
    %652 = vector.load %arg1[%651, %c0_261, %c0_262] : memref<16x8x64xbf16, #tpu.memory_space<vmem>>, vector<1x8x64xbf16>
    %653 = vector.shape_cast %652 : vector<1x8x64xbf16> to vector<8x64xbf16>
    %c0_263 = arith.constant 0 : index
    %c0_264 = arith.constant 0 : index
    %654 = vector.load %arg6[%c0_263, %c0_264] : memref<8x128xf32, #tpu.memory_space<vmem>>, vector<8x128xf32>
    %c0_265 = arith.constant 0 : index
    %c0_266 = arith.constant 0 : index
    %655 = vector.load %arg7[%c0_265, %c0_266] : memref<8x128xf32, #tpu.memory_space<vmem>>, vector<8x128xf32>
    %cst_267 = arith.constant dense<0.000000e+00> : vector<8x512xf32>
    %656 = tpu.matmul %653, %3, %cst_267 {dimension_numbers = #tpu.dot_dimension_numbers<[1], [0], [0], [1], [0, 0, 1, 1], [], []>} : vector<8x64xbf16>, vector<64x512xbf16>, vector<8x512xf32> -> vector<8x512xf32>
    %657 = arith.truncf %654 : vector<8x128xf32> to vector<8x128xbf16>
    %cst_268 = arith.constant dense<0.000000e+00> : vector<8x512xf32>
    %658 = tpu.matmul %657, %4, %cst_268 {dimension_numbers = #tpu.dot_dimension_numbers<[1], [0], [0], [1], [0, 0, 1, 1], [], []>} : vector<8x128xbf16>, vector<128x512xbf16>, vector<8x512xf32> -> vector<8x512xf32>
    %659 = arith.addf %656, %658 : vector<8x512xf32>
    %660 = vector.broadcast %5 : vector<1x512xf32> to vector<8x512xf32>
    %661 = arith.addf %659, %660 : vector<8x512xf32>
    %662 = vector.extract_strided_slice %661 {offsets = [0, 0], sizes = [8, 128], strides = [1, 1]} : vector<8x512xf32> to vector<8x128xf32>
    %663 = arith.negf %662 : vector<8x128xf32>
    %664 = math.exp %663 : vector<8x128xf32>
    %cst_269 = arith.constant 1.000000e+00 : f32
    %665 = vector.broadcast %cst_269 : f32 to vector<8x128xf32>
    %666 = arith.addf %665, %664 : vector<8x128xf32>
    %667 = arith.divf %665, %666 : vector<8x128xf32>
    %668 = vector.extract_strided_slice %661 {offsets = [0, 128], sizes = [8, 128], strides = [1, 1]} : vector<8x512xf32> to vector<8x128xf32>
    %669 = arith.negf %668 : vector<8x128xf32>
    %670 = math.exp %669 : vector<8x128xf32>
    %cst_270 = arith.constant 1.000000e+00 : f32
    %671 = vector.broadcast %cst_270 : f32 to vector<8x128xf32>
    %672 = arith.addf %671, %670 : vector<8x128xf32>
    %673 = arith.divf %671, %672 : vector<8x128xf32>
    %674 = vector.extract_strided_slice %661 {offsets = [0, 256], sizes = [8, 128], strides = [1, 1]} : vector<8x512xf32> to vector<8x128xf32>
    %675 = math.tanh %674 : vector<8x128xf32>
    %676 = vector.extract_strided_slice %661 {offsets = [0, 384], sizes = [8, 128], strides = [1, 1]} : vector<8x512xf32> to vector<8x128xf32>
    %677 = arith.negf %676 : vector<8x128xf32>
    %678 = math.exp %677 : vector<8x128xf32>
    %cst_271 = arith.constant 1.000000e+00 : f32
    %679 = vector.broadcast %cst_271 : f32 to vector<8x128xf32>
    %680 = arith.addf %679, %678 : vector<8x128xf32>
    %681 = arith.divf %679, %680 : vector<8x128xf32>
    %682 = arith.mulf %673, %655 : vector<8x128xf32>
    %683 = arith.mulf %667, %675 : vector<8x128xf32>
    %684 = arith.addf %682, %683 : vector<8x128xf32>
    %685 = math.tanh %684 : vector<8x128xf32>
    %686 = arith.mulf %681, %685 : vector<8x128xf32>
    %c0_272 = arith.constant 0 : index
    %c0_273 = arith.constant 0 : index
    %687 = vector.load %arg7[%c0_272, %c0_273] : memref<8x128xf32, #tpu.memory_space<vmem>>, vector<8x128xf32>
    tpu.vector_store %arg7[%c0_272, %c0_273], %684 {strides = array<i32>} : memref<8x128xf32, #tpu.memory_space<vmem>>, vector<8x128xf32>,
    %c0_274 = arith.constant 0 : index
    %c0_275 = arith.constant 0 : index
    %688 = vector.load %arg6[%c0_274, %c0_275] : memref<8x128xf32, #tpu.memory_space<vmem>>, vector<8x128xf32>
    tpu.vector_store %arg6[%c0_274, %c0_275], %686 {strides = array<i32>} : memref<8x128xf32, #tpu.memory_space<vmem>>, vector<8x128xf32>,
    %689 = arith.truncf %686 : vector<8x128xf32> to vector<8x128xbf16>
    %690 = arith.index_cast %c15_i32 : i32 to index
    %c0_276 = arith.constant 0 : index
    %c0_277 = arith.constant 0 : index
    %691 = vector.load %arg5[%690, %c0_276, %c0_277] : memref<16x8x128xbf16, #tpu.memory_space<vmem>>, vector<1x8x128xbf16>
    %692 = vector.shape_cast %691 : vector<1x8x128xbf16> to vector<8x128xbf16>
    %693 = vector.shape_cast %689 : vector<8x128xbf16> to vector<1x8x128xbf16>
    tpu.vector_store %arg5[%690, %c0_276, %c0_277], %693 {strides = array<i32>} : memref<16x8x128xbf16, #tpu.memory_space<vmem>>, vector<1x8x128xbf16>,
    %c16_i32 = arith.constant 16 : i32
    return
  }
  func.func @transform_0(%arg0: i32) -> (i32, i32, i32) {
    %c0_i32 = arith.constant 0 : i32
    %c0_i32_0 = arith.constant 0 : i32
    %c0_i32_1 = arith.constant 0 : i32
    return %arg0, %c0_i32, %c0_i32_0 : i32, i32, i32
  }
  func.func @transform_1(%arg0: i32) -> (i32, i32) {
    %c0_i32 = arith.constant 0 : i32
    %c0_i32_0 = arith.constant 0 : i32
    %c0_i32_1 = arith.constant 0 : i32
    return %c0_i32, %c0_i32_0 : i32, i32
  }
  func.func @transform_2(%arg0: i32) -> (i32, i32) {
    %c0_i32 = arith.constant 0 : i32
    %c0_i32_0 = arith.constant 0 : i32
    %c0_i32_1 = arith.constant 0 : i32
    return %c0_i32, %c0_i32_0 : i32, i32
  }
  func.func @transform_3(%arg0: i32) -> (i32, i32) {
    %c0_i32 = arith.constant 0 : i32
    %c0_i32_0 = arith.constant 0 : i32
    %c0_i32_1 = arith.constant 0 : i32
    return %c0_i32, %c0_i32_0 : i32, i32
  }
  func.func @transform_4(%arg0: i32) -> (i32, i32, i32) {
    %c0_i32 = arith.constant 0 : i32
    %c0_i32_0 = arith.constant 0 : i32
    %c0_i32_1 = arith.constant 0 : i32
    return %arg0, %c0_i32, %c0_i32_0 : i32, i32, i32
  }
}

</mosaic_0001>

<llo_original>
// kernel: transducer_forward.5
$region0: #{transducer_forward.5}
  #allocation0 [shape = 'u32[]', space=smem, size = 0x4, offset = 0x4, fixed_abs, tag = 'smem constant byte address 0x4 - core index']
  #allocation1 [shape = 'u32[144,128]{1,0:T(1,128)}', space=vmem, size = 0x12000, scoped, tag = 'internal scratch']
  %s0 = inlined_call_operand.vmem [shape: bf16[8,16,128], index: 0, kind: input, shape index: {}]
  %s1 = inlined_call_operand.vmem [shape: bf16[8,8,128], index: 1, kind: input, shape index: {}]
  %s2 = inlined_call_operand.vmem [shape: bf16[128,128], index: 2, kind: input, shape index: {}]
  %s3 = inlined_call_operand.vmem [shape: bf16[128,128], index: 3, kind: input, shape index: {}]
  %s4 = inlined_call_operand.vmem [shape: f32[1,128], index: 4, kind: input, shape index: {}]
  %s5 = inlined_call_operand.vmem [shape: bf16[128,128], index: 5, kind: input, shape index: {}]
  %s6 = inlined_call_operand.vmem [shape: f32[1,128], index: 6, kind: input, shape index: {}]
  %s7 = inlined_call_operand.hbm [shape: f32[8,16,8,128], index: 7, kind: output, shape index: {}]
  %s8 = sld [smem:[#allocation0]]
  $region61: #{transducer_forward.5} parent=0
    _
  %s10 = ssub.s32 1, %s8
  %s11 = scalar_select 0, %s10, %s8
  $region1: #{transducer_forward.5} parent=0
    #allocation2 [shape = 'u8[131072]{0}', space=vmem, size = 0x20000, scoped, tag = 'output window, operand 0']
    #allocation3 [shape = 's32[2]{0}', space=sflag, size = 0x8, scoped, tag = 'scoped memory for transducer_forward.5']
    %12 = vsyncpa [#allocation3], 0
    %s13 = scalar_lea.sflag [#allocation3], 1
    %14 = vsyncpa %s13, 0
    loop: start=0, step=1, limit=10
    $region2: #{transducer_forward.5} parent=1 // loop_pre_header
      _
    $region3: #{transducer_forward.5} parent=1 // loop_header
      %s16 = sphi 0, %s20
      %p17 = scmp.ge.s32.totalorder %s16, 10
      %s23 = sphi 0, %s35
      %s24 = sphi 0, %s31
      %s25 = sphi 0, %s23
      %s26 = sphi 0, %s24
      %s27 = sphi 0, %s25
      %s28 = sphi 0, %s26
      %s40 = sphi 0, %s42
      %s43 = sphi 0, %s40
      %s44 = sphi 0, %s43
      %s60 = sphi 0, %s44
      %s66 = sphi 0, %s68
      %s69 = sphi 0, %s66
      %s70 = sphi 0, %s69
      %s86 = sphi 0, %s70
      %s90 = sphi 0, %s90
      %s92 = sphi 0, %s90
      %s93 = sphi 0, %s92
      %s107 = sphi 0, %s93
      %s111 = sphi 0, %s111
      %s113 = sphi 0, %s111
      %s114 = sphi 0, %s113
      %s128 = sphi 0, %s114
      %s132 = sphi 0, %s132
      %s134 = sphi 0, %s132
      %s135 = sphi 0, %s134
      %s149 = sphi 0, %s135
      %s153 = sphi 0, %s153
      %s155 = sphi 0, %s153
      %s156 = sphi 0, %s155
      %s170 = sphi 0, %s156
      %s174 = sphi 0, %s174
      %s176 = sphi 0, %s174
      %s177 = sphi 0, %s176
      %s191 = sphi 0, %s177
      %s199 = sphi 0, %s201
      %s202 = sphi 0, %s199
      %s203 = sphi 0, %s202
      %s219 = sphi 0, %s203
    $region4: #{transducer_forward.5} parent=1 // loop_header_branch
      %19 = sbr.rel (%p17) target = $region8
    $region5: #{transducer_forward.5} parent=1 // loop_body
      %s21 = ssub.s32 %s16, 1
      %s22 = ssub.s32 %s16, 2
      %s29 = sadd.s32 1, %s24
      %p30 = scmp.ge.s32.totalorder %s29, 1
      %s31 = scalar_select %p30, 0, %s29
      %s32 = sadd.s32 1, %s23
      %s33 = scalar_select %p30, %s32, %s23
      %p34 = scmp.ge.s32.totalorder %s33, 8
      %s35 = scalar_select %p34, 0, %s33
      %s36 = ssub.s32 %s23, %s35
      %s37 = ssub.s32 %s24, %s31
      %s38 = sor.u32 %s36, %s37
      %p39 = scmp.eq.s32.totalorder %s38, 0
      %s41 = sadd.s32 %s40, 1
      %s42 = scalar_select %p39, %s40, %s41
      %p45 = pneg %p39
      %p46 = scmp.eq.s32.totalorder %s16, 7
      %p47 = por %p45, %p46
      %p48 = scmp.ne.s32.totalorder %s40, %s43
      %p49 = scmp.eq.s32.totalorder %s16, 0
      %p50 = por %p48, %p49
      %p51 = scmp.ne.s32.totalorder %s40, %s43
      %p52 = scmp.eq.s32.totalorder %s21, 7
      %p53 = por %p51, %p52
      %p54 = scmp.ne.s32.totalorder %s43, %s44
      %p55 = scmp.eq.s32.totalorder %s21, 0
      %p56 = por %p54, %p55
      %p57 = scmp.ne.s32.totalorder %s43, %s44
      %p58 = scmp.eq.s32.totalorder %s22, 7
      %p59 = por %p57, %p58
      %p61 = scmp.ne.s32.totalorder %s44, %s60
      %p62 = scmp.eq.s32.totalorder %s22, 0
      %p63 = por %p61, %p62
      %s64 = ssub.s32 %s23, %s35
      %p65 = scmp.eq.s32.totalorder %s64, 0
      %s67 = sadd.s32 %s66, 1
      %s68 = scalar_select %p65, %s66, %s67
      %p71 = pneg %p65
      %p72 = scmp.eq.s32.totalorder %s16, 7
      %p73 = por %p71, %p72
      %p74 = scmp.ne.s32.totalorder %s66, %s69
      %p75 = scmp.eq.s32.totalorder %s16, 0
      %p76 = por %p74, %p75
      %p77 = scmp.ne.s32.totalorder %s66, %s69
      %p78 = scmp.eq.s32.totalorder %s21, 7
      %p79 = por %p77, %p78
      %p80 = scmp.ne.s32.totalorder %s69, %s70
      %p81 = scmp.eq.s32.totalorder %s21, 0
      %p82 = por %p80, %p81
      %p83 = scmp.ne.s32.totalorder %s69, %s70
      %p84 = scmp.eq.s32.totalorder %s22, 7
      %p85 = por %p83, %p84
      %p87 = scmp.ne.s32.totalorder %s70, %s86
      %p88 = scmp.eq.s32.totalorder %s22, 0
      %p89 = por %p87, %p88
      %s91 = sadd.s32 %s90, 1
      %p94 = scmp.eq.s32.totalorder %s16, 7
      %p95 = scmp.ne.s32.totalorder %s90, %s92
      %p96 = scmp.eq.s32.totalorder %s16, 0
      %p97 = por %p95, %p96
      %p98 = scmp.ne.s32.totalorder %s90, %s92
      %p99 = scmp.eq.s32.totalorder %s21, 7
      %p100 = por %p98, %p99
      %p101 = scmp.ne.s32.totalorder %s92, %s93
      %p102 = scmp.eq.s32.totalorder %s21, 0
      %p103 = por %p101, %p102
      %p104 = scmp.ne.s32.totalorder %s92, %s93
      %p105 = scmp.eq.s32.totalorder %s22, 7
      %p106 = por %p104, %p105
      %p108 = scmp.ne.s32.totalorder %s93, %s107
      %p109 = scmp.eq.s32.totalorder %s22, 0
      %p110 = por %p108, %p109
      %s112 = sadd.s32 %s111, 1
      %p115 = scmp.eq.s32.totalorder %s16, 7
      %p116 = scmp.ne.s32.totalorder %s111, %s113
      %p117 = scmp.eq.s32.totalorder %s16, 0
      %p118 = por %p116, %p117
      %p119 = scmp.ne.s32.totalorder %s111, %s113
      %p120 = scmp.eq.s32.totalorder %s21, 7
      %p121 = por %p119, %p120
      %p122 = scmp.ne.s32.totalorder %s113, %s114
      %p123 = scmp.eq.s32.totalorder %s21, 0
      %p124 = por %p122, %p123
      %p125 = scmp.ne.s32.totalorder %s113, %s114
      %p126 = scmp.eq.s32.totalorder %s22, 7
      %p127 = por %p125, %p126
      %p129 = scmp.ne.s32.totalorder %s114, %s128
      %p130 = scmp.eq.s32.totalorder %s22, 0
      %p131 = por %p129, %p130
      %s133 = sadd.s32 %s132, 1
      %p136 = scmp.eq.s32.totalorder %s16, 7
      %p137 = scmp.ne.s32.totalorder %s132, %s134
      %p138 = scmp.eq.s32.totalorder %s16, 0
      %p139 = por %p137, %p138
      %p140 = scmp.ne.s32.totalorder %s132, %s134
      %p141 = scmp.eq.s32.totalorder %s21, 7
      %p142 = por %p140, %p141
      %p143 = scmp.ne.s32.totalorder %s134, %s135
      %p144 = scmp.eq.s32.totalorder %s21, 0
      %p145 = por %p143, %p144
      %p146 = scmp.ne.s32.totalorder %s134, %s135
      %p147 = scmp.eq.s32.totalorder %s22, 7
      %p148 = por %p146, %p147
      %p150 = scmp.ne.s32.totalorder %s135, %s149
      %p151 = scmp.eq.s32.totalorder %s22, 0
      %p152 = por %p150, %p151
      %s154 = sadd.s32 %s153, 1
      %p157 = scmp.eq.s32.totalorder %s16, 7
      %p158 = scmp.ne.s32.totalorder %s153, %s155
      %p159 = scmp.eq.s32.totalorder %s16, 0
      %p160 = por %p158, %p159
      %p161 = scmp.ne.s32.totalorder %s153, %s155
      %p162 = scmp.eq.s32.totalorder %s21, 7
      %p163 = por %p161, %p162
      %p164 = scmp.ne.s32.totalorder %s155, %s156
      %p165 = scmp.eq.s32.totalorder %s21, 0
      %p166 = por %p164, %p165
      %p167 = scmp.ne.s32.totalorder %s155, %s156
      %p168 = scmp.eq.s32.totalorder %s22, 7
      %p169 = por %p167, %p168
      %p171 = scmp.ne.s32.totalorder %s156, %s170
      %p172 = scmp.eq.s32.totalorder %s22, 0
      %p173 = por %p171, %p172
      %s175 = sadd.s32 %s174, 1
      %p178 = scmp.eq.s32.totalorder %s16, 7
      %p179 = scmp.ne.s32.totalorder %s174, %s176
      %p180 = scmp.eq.s32.totalorder %s16, 0
      %p181 = por %p179, %p180
      %p182 = scmp.ne.s32.totalorder %s174, %s176
      %p183 = scmp.eq.s32.totalorder %s21, 7
      %p184 = por %p182, %p183
      %p185 = scmp.ne.s32.totalorder %s176, %s177
      %p186 = scmp.eq.s32.totalorder %s21, 0
      %p187 = por %p185, %p186
      %p188 = scmp.ne.s32.totalorder %s176, %s177
      %p189 = scmp.eq.s32.totalorder %s22, 7
      %p190 = por %p188, %p189
      %p192 = scmp.ne.s32.totalorder %s177, %s191
      %p193 = scmp.eq.s32.totalorder %s22, 0
      %p194 = por %p192, %p193
      %s195 = ssub.s32 %s23, %s35
      %s196 = ssub.s32 %s24, %s31
      %s197 = sor.u32 %s195, %s196
      %p198 = scmp.eq.s32.totalorder %s197, 0
      %s200 = sadd.s32 %s199, 1
      %s201 = scalar_select %p198, %s199, %s200
      %p204 = pneg %p198
      %p205 = scmp.eq.s32.totalorder %s16, 7
      %p206 = por %p204, %p205
      %p207 = scmp.ne.s32.totalorder %s199, %s202
      %p208 = scmp.eq.s32.totalorder %s16, 0
      %p209 = por %p207, %p208
      %p210 = scmp.ne.s32.totalorder %s199, %s202
      %p211 = scmp.eq.s32.totalorder %s21, 7
      %p212 = por %p210, %p211
      %p213 = scmp.ne.s32.totalorder %s202, %s203
      %p214 = scmp.eq.s32.totalorder %s21, 0
      %p215 = por %p213, %p214
      %p216 = scmp.ne.s32.totalorder %s202, %s203
      %p217 = scmp.eq.s32.totalorder %s22, 7
      %p218 = por %p216, %p217
      %p220 = scmp.ne.s32.totalorder %s203, %s219
      %p221 = scmp.eq.s32.totalorder %s22, 0
      %p222 = por %p220, %p221
      %p223 = scmp.le.s32.totalorder 1, %s16
      %p224 = scmp.lt.s32.totalorder %s16, 9
      %p225 = pnand %p223, %p224
      %p226 = pneg %p225
      // Predicated region
      $region9: #{transducer_forward.5} parent=5 // pred_check
        _
      $region10: #{transducer_forward.5} parent=5 // pred_check_branch
        %228 = sbr.rel (%p225) target = $region12
      $region11: #{transducer_forward.5} parent=5 // pred_region
        %s229 = ssub.s32 %s16, 1
        // Predicated region
        $region13: #{transducer_forward.5} parent=11 // pred_check
          %p230 = pneg %p103
        $region14: #{transducer_forward.5} parent=11 // pred_check_branch
          %232 = sbr.rel (%p230) target = $region16
        $region15: #{transducer_forward.5} parent=11 // pred_region
          _
        $region16: #{transducer_forward.5} parent=11 // pred_fallthru
          _
        // Predicated region
        $region17: #{transducer_forward.5} parent=11 // pred_check
          %p233 = pneg %p124
        $region18: #{transducer_forward.5} parent=11 // pred_check_branch
          %235 = sbr.rel (%p233) target = $region20
        $region19: #{transducer_forward.5} parent=11 // pred_region
          _
        $region20: #{transducer_forward.5} parent=11 // pred_fallthru
          _
        // Predicated region
        $region21: #{transducer_forward.5} parent=11 // pred_check
          %p236 = pneg %p145
        $region22: #{transducer_forward.5} parent=11 // pred_check_branch
          %238 = sbr.rel (%p236) target = $region24
        $region23: #{transducer_forward.5} parent=11 // pred_region
          _
        $region24: #{transducer_forward.5} parent=11 // pred_fallthru
          _
        // Predicated region
        $region25: #{transducer_forward.5} parent=11 // pred_check
          %p239 = pneg %p166
        $region26: #{transducer_forward.5} parent=11 // pred_check_branch
          %241 = sbr.rel (%p239) target = $region28
        $region27: #{transducer_forward.5} parent=11 // pred_region
          _
        $region28: #{transducer_forward.5} parent=11 // pred_fallthru
          _
        // Predicated region
        $region29: #{transducer_forward.5} parent=11 // pred_check
          %p242 = pneg %p187
        $region30: #{transducer_forward.5} parent=11 // pred_check_branch
          %244 = sbr.rel (%p242) target = $region32
        $region31: #{transducer_forward.5} parent=11 // pred_region
          _
        $region32: #{transducer_forward.5} parent=11 // pred_fallthru
          _
      $region12: #{transducer_forward.5} parent=5 // pred_fallthru
        _
      %p245 = scmp.lt.s32.totalorder %s16, 8
      // Predicated region
      $region33: #{transducer_forward.5} parent=5 // pred_check
        %p246 = pneg %p245
      $region34: #{transducer_forward.5} parent=5 // pred_check_branch
        %248 = sbr.rel (%p246) target = $region36
      $region35: #{transducer_forward.5} parent=5 // pred_region
        // Predicated region
        $region37: #{transducer_forward.5} parent=35 // pred_check
          %p249 = pneg %p50
        $region38: #{transducer_forward.5} parent=35 // pred_check_branch
          %251 = sbr.rel (%p249) target = $region40
        $region39: #{transducer_forward.5} parent=35 // pred_region
          %s252 = smul.u32 2, %s24
          %p253 = scmp.lt.s32.totalorder %s23, 7
          %s254 = scalar_select %p253, %s23, 7
          %p255 = scmp.lt.s32.totalorder %s252, 1
          %s256 = scalar_select %p255, %s252, 1
          %s257 = smul.addr %s254, 2
          %s258 = sadd.s32 %s256, %s257
          %s259 = smul.addr %s258, 4
          %s260 = scalar_lea.vmem %s0, %s259
          %s261 = smul.u32 2, %s24
        $region40: #{transducer_forward.5} parent=35 // pred_fallthru
          _
        // Predicated region
        $region41: #{transducer_forward.5} parent=35 // pred_check
          %p262 = pneg %p76
        $region42: #{transducer_forward.5} parent=35 // pred_check_branch
          %264 = sbr.rel (%p262) target = $region44
        $region43: #{transducer_forward.5} parent=35 // pred_region
          %p265 = scmp.lt.s32.totalorder %s23, 7
          %s266 = scalar_select %p265, %s23, 7
          %s267 = smul.addr %s266, 4
          %s268 = scalar_lea.vmem %s1, %s267
        $region44: #{transducer_forward.5} parent=35 // pred_fallthru
          _
      $region36: #{transducer_forward.5} parent=5 // pred_fallthru
        _
      %p269 = scmp.le.s32.totalorder 1, %s16
      %p270 = scmp.lt.s32.totalorder %s16, 9
      %p271 = pnand %p269, %p270
      %p272 = pneg %p271
      // Predicated region
      $region45: #{transducer_forward.5} parent=5 // pred_check
        _
      $region46: #{transducer_forward.5} parent=5 // pred_check_branch
        %274 = sbr.rel (%p271) target = $region48
      $region47: #{transducer_forward.5} parent=5 // pred_region
        %s275 = ssub.s32 %s16, 1
        %s276 = smul.u32 2, %s26
        %p277 = scmp.lt.s32.totalorder %s25, 7
        %s278 = scalar_select %p277, %s25, 7
        %p279 = scmp.lt.s32.totalorder %s276, 1
        %s280 = scalar_select %p279, %s276, 1
        %s281 = smul.addr %s278, 2
        %s282 = sadd.s32 %s280, %s281
        %s283 = smul.addr %s282, 4
        %s284 = scalar_lea.vmem %s0, %s283
        %p285 = pneg %p56
        %p286 = pneg %p53
        %p287 = scmp.lt.s32.totalorder %s25, 7
        %s288 = scalar_select %p287, %s25, 7
        %s289 = smul.addr %s288, 4
        %s290 = scalar_lea.vmem %s1, %s289
        %p291 = pneg %p82
        %p292 = pneg %p79
        %p293 = pneg %p103
        %p294 = pneg %p100
        %p295 = pneg %p124
        %p296 = pneg %p121
        %p297 = pneg %p145
        %p298 = pneg %p142
        %p299 = pneg %p166
        %p300 = pneg %p163
        %p301 = pneg %p187
        %p302 = pneg %p184
        %p303 = pneg %p215
        %p304 = pneg %p212
        %s305 = sand.u32 %s202, 1
        %s306 = scalar_lea.sflag [#allocation3], %s305
        %s307 = sand.u32 %s202, 1
        %s308 = smul.addr %s307, 128
        %s309 = scalar_lea.vmem [#allocation2], %s308
        %s310 = smul.u32 2, %s26
        %p311 = scmp.lt.s32.totalorder %s25, 7
        %s312 = scalar_select %p311, %s25, 7
        %p313 = scmp.lt.s32.totalorder %s310, 1
        %s314 = scalar_select %p313, %s310, 1
        %s315 = smul.addr %s312, 2
        %s316 = sadd.s32 %s314, %s315
        %s317 = smul.addr %s316, 4
        %s318 = scalar_lea.vmem %s0, %s317
        %s319 = smul.u32 2, %s26
        %p320 = scmp.lt.s32.totalorder %s25, 7
        %s321 = scalar_select %p320, %s25, 7
        %s322 = smul.addr %s321, 4
        %s323 = scalar_lea.vmem %s1, %s322
        %s324 = smul.u32 16, %s26
        %v326 = vld [vmem:[%s318] sm:$0xf]
        %v327 = vld [vmem:[%s318 + $0x4] sm:$0xf]
        %v328 = vld [vmem:[%s323] sm:$0xf]
        %v329 = vld [vmem:[%s2] sm:$0xf]
        %v330 = vld [vmem:[%s2 + $0x4] sm:$0xf]
        %v331 = vld [vmem:[%s2 + $0x8] sm:$0xf]
        %v332 = vld [vmem:[%s2 + $0xc] sm:$0xf]
        %v333 = vld [vmem:[%s2 + $0x10] sm:$0xf]
        %v334 = vld [vmem:[%s2 + $0x14] sm:$0xf]
        %v335 = vld [vmem:[%s2 + $0x18] sm:$0xf]
        %v336 = vld [vmem:[%s2 + $0x1c] sm:$0xf]
        %v337 = vld [vmem:[%s2 + $0x20] sm:$0xf]
        %v338 = vld [vmem:[%s2 + $0x24] sm:$0xf]
        %v339 = vld [vmem:[%s2 + $0x28] sm:$0xf]
        %v340 = vld [vmem:[%s2 + $0x2c] sm:$0xf]
        %v341 = vld [vmem:[%s2 + $0x30] sm:$0xf]
        %v342 = vld [vmem:[%s2 + $0x34] sm:$0xf]
        %v343 = vld [vmem:[%s2 + $0x38] sm:$0xf]
        %v344 = vld [vmem:[%s2 + $0x3c] sm:$0xf]
        %v347 = vunpack.c.l.b16 %v326
        %v348 = vunpack.c.l.b16 %v327
        %v349 = vpack.c.b16 %v348, %v347
        %v367 = vunpack.c.l.b16 %v329
        %v368 = vunpack.c.l.b16 %v330
        %v369 = vunpack.c.l.b16 %v331
        %v370 = vunpack.c.l.b16 %v332
        %v371 = vunpack.c.l.b16 %v333
        %v372 = vunpack.c.l.b16 %v334
        %v373 = vunpack.c.l.b16 %v335
        %v374 = vunpack.c.l.b16 %v336
        %v375 = vunpack.c.l.b16 %v337
        %v376 = vunpack.c.l.b16 %v338
        %v377 = vunpack.c.l.b16 %v339
        %v378 = vunpack.c.l.b16 %v340
        %v379 = vunpack.c.l.b16 %v341
        %v380 = vunpack.c.l.b16 %v342
        %v381 = vunpack.c.l.b16 %v343
        %v382 = vunpack.c.l.b16 %v344
        %v383 = vpack.c.b16 %v368, %v367
        %v384 = vpack.c.b16 %v370, %v369
        %v385 = vpack.c.b16 %v372, %v371
        %v386 = vpack.c.b16 %v374, %v373
        %v387 = vpack.c.b16 %v376, %v375
        %v388 = vpack.c.b16 %v378, %v377
        %v389 = vpack.c.b16 %v380, %v379
        %v390 = vpack.c.b16 %v382, %v381
        %399 = vmatprep.subr.bf16.mxu0 0
        %400 = vmatpush1.bf16.msra.mxu0 %v383
        %401 = vmatprep.subr.bf16.mxu0 0
        %402 = vmatpush1.bf16.msra.mxu0 %v384
        %403 = vmatprep.subr.bf16.mxu0 0
        %404 = vmatpush1.bf16.msra.mxu0 %v385
        %405 = vmatprep.subr.bf16.mxu0 0
        %406 = vmatpush1.bf16.msra.mxu0 %v386
        %407 = vmatprep.subr.bf16.mxu0 0
        %408 = vmatpush1.bf16.msra.mxu0 %v387
        %409 = vmatprep.subr.bf16.mxu0 0
        %410 = vmatpush1.bf16.msra.mxu0 %v388
        %411 = vmatprep.subr.bf16.mxu0 0
        %412 = vmatpush1.bf16.msra.mxu0 %v389
        %413 = vmatprep.subr.bf16.mxu0 0
        %414 = vmatpush1.bf16.msra.mxu0 %v390
        %415 = vmatprep.subr.bf16.mxu0 0
        %416 = vmatpush1.bf16.msra.mxu0 0
        %417 = vmatprep.subr.bf16.mxu0 0
        %418 = vmatpush1.bf16.msra.mxu0 0
        %419 = vmatprep.subr.bf16.mxu0 0
        %420 = vmatpush1.bf16.msra.mxu0 0
        %421 = vmatprep.subr.bf16.mxu0 0
        %422 = vmatpush1.bf16.msra.mxu0 0
        %423 = vmatprep.subr.bf16.mxu0 0
        %424 = vmatpush1.bf16.msra.mxu0 0
        %425 = vmatprep.subr.bf16.mxu0 0
        %426 = vmatpush1.bf16.msra.mxu0 0
        %427 = vmatprep.subr.bf16.mxu0 0
        %428 = vmatpush1.bf16.msra.mxu0 0
        %429 = vmatprep.subr.bf16.mxu0 0
        %430 = vmatpush1.bf16.msra.mxu0 0
        %431 = vmatprep.mubr.bf16.mxu0 0
        %432 = vmatmul.mubr.bf16.gmra.mrb[0].mxu0 %v349
        %v433 = vpop.f32.mrb[0].mxu0
        %v434 = vadd.f32 0.0, %v433
        %v435 = vpop.f32.mrb[0].mxu0
        %v436 = vpop.f32.mrb[0].mxu0
        %v437 = vadd.f32 0.0, %v436
        %v438 = vpop.f32.mrb[0].mxu0
        %439 = vdwg.mxu0
        %v440 = vld [vmem:[%s3] sm:$0xf]
        %v441 = vld [vmem:[%s3 + $0x4] sm:$0xf]
        %v442 = vld [vmem:[%s3 + $0x8] sm:$0xf]
        %v443 = vld [vmem:[%s3 + $0xc] sm:$0xf]
        %v444 = vld [vmem:[%s3 + $0x10] sm:$0xf]
        %v445 = vld [vmem:[%s3 + $0x14] sm:$0xf]
        %v446 = vld [vmem:[%s3 + $0x18] sm:$0xf]
        %v447 = vld [vmem:[%s3 + $0x1c] sm:$0xf]
        %v448 = vld [vmem:[%s3 + $0x20] sm:$0xf]
        %v449 = vld [vmem:[%s3 + $0x24] sm:$0xf]
        %v450 = vld [vmem:[%s3 + $0x28] sm:$0xf]
        %v451 = vld [vmem:[%s3 + $0x2c] sm:$0xf]
        %v452 = vld [vmem:[%s3 + $0x30] sm:$0xf]
        %v453 = vld [vmem:[%s3 + $0x34] sm:$0xf]
        %v454 = vld [vmem:[%s3 + $0x38] sm:$0xf]
        %v455 = vld [vmem:[%s3 + $0x3c] sm:$0xf]
        %v456 = vld [vmem:[%s4] sm:$0x1]
        %v458 = vlaneseq
        %v459 = vshrl.u32 %v458, 7
        %v460 = vsub.s32 0, %v459
        %v461 = vrot.slane %v456, %v460
        %v479 = vunpack.c.l.b16 %v440
        %v480 = vunpack.c.l.b16 %v441
        %v481 = vunpack.c.l.b16 %v442
        %v482 = vunpack.c.l.b16 %v443
        %v483 = vunpack.c.l.b16 %v444
        %v484 = vunpack.c.l.b16 %v445
        %v485 = vunpack.c.l.b16 %v446
        %v486 = vunpack.c.l.b16 %v447
        %v487 = vunpack.c.l.b16 %v448
        %v488 = vunpack.c.l.b16 %v449
        %v489 = vunpack.c.l.b16 %v450
        %v490 = vunpack.c.l.b16 %v451
        %v491 = vunpack.c.l.b16 %v452
        %v492 = vunpack.c.l.b16 %v453
        %v493 = vunpack.c.l.b16 %v454
        %v494 = vunpack.c.l.b16 %v455
        %v495 = vpack.c.b16 %v480, %v479
        %v496 = vpack.c.b16 %v482, %v481
        %v497 = vpack.c.b16 %v484, %v483
        %v498 = vpack.c.b16 %v486, %v485
        %v499 = vpack.c.b16 %v488, %v487
        %v500 = vpack.c.b16 %v490, %v489
        %v501 = vpack.c.b16 %v492, %v491
        %v502 = vpack.c.b16 %v494, %v493
        %511 = vmatprep.subr.bf16.mxu0 0
        %512 = vmatpush1.bf16.msra.mxu0 %v495
        %513 = vmatprep.subr.bf16.mxu0 0
        %514 = vmatpush1.bf16.msra.mxu0 %v496
        %515 = vmatprep.subr.bf16.mxu0 0
        %516 = vmatpush1.bf16.msra.mxu0 %v497
        %517 = vmatprep.subr.bf16.mxu0 0
        %518 = vmatpush1.bf16.msra.mxu0 %v498
        %519 = vmatprep.subr.bf16.mxu0 0
        %520 = vmatpush1.bf16.msra.mxu0 %v499
        %521 = vmatprep.subr.bf16.mxu0 0
        %522 = vmatpush1.bf16.msra.mxu0 %v500
        %523 = vmatprep.subr.bf16.mxu0 0
        %524 = vmatpush1.bf16.msra.mxu0 %v501
        %525 = vmatprep.subr.bf16.mxu0 0
        %526 = vmatpush1.bf16.msra.mxu0 %v502
        %527 = vmatprep.subr.bf16.mxu0 0
        %528 = vmatpush1.bf16.msra.mxu0 0
        %529 = vmatprep.subr.bf16.mxu0 0
        %530 = vmatpush1.bf16.msra.mxu0 0
        %531 = vmatprep.subr.bf16.mxu0 0
        %532 = vmatpush1.bf16.msra.mxu0 0
        %533 = vmatprep.subr.bf16.mxu0 0
        %534 = vmatpush1.bf16.msra.mxu0 0
        %535 = vmatprep.subr.bf16.mxu0 0
        %536 = vmatpush1.bf16.msra.mxu0 0
        %537 = vmatprep.subr.bf16.mxu0 0
        %538 = vmatpush1.bf16.msra.mxu0 0
        %539 = vmatprep.subr.bf16.mxu0 0
        %540 = vmatpush1.bf16.msra.mxu0 0
        %541 = vmatprep.subr.bf16.mxu0 0
        %542 = vmatpush1.bf16.msra.mxu0 0
        %543 = vmatprep.mubr.bf16.mxu0 0
        %544 = vmatmul.mubr.bf16.gmra.mrb[0].mxu0 %v328
        %v545 = vpop.f32.mrb[0].mxu0
        %v546 = vadd.f32 %v461, %v545
        %v547 = vpop.f32.mrb[0].mxu0
        %v548 = vpop.f32.mrb[0].mxu0
        %v549 = vpop.f32.mrb[0].mxu0
        %550 = vdwg.mxu0
        %v553 = vcombine.high %v434, %v434
        %v555 = vunpack.c.l.s4 1966171168
        %v556 = vunpack.c.0.s8 %v555
        %v557 = vlaneseq
        %v558 = vshrl.u32 %v557, 7
        %v559 = vsub.s32 %v556, %v558
        %v560 = vrot.slane %v434, %v559
        %v562 = vunpack.c.l.s4 1966171168
        %v563 = vunpack.c.0.s8 %v562
        %v564 = vlaneseq
        %v565 = vshrl.u32 %v564, 7
        %v566 = vsub.s32 %v563, %v565
        %v567 = vrot.slane %v553, %v566
        %v568 = vcombine.high %v560, %v560
        %v569 = vcombine.high %v567, %v567
        %v571 = vunpack.c.l.s4 1966171168
        %v572 = vunpack.c.0.s8 %v571
        %v573 = vlaneseq
        %v574 = vshrl.u32 %v573, 7
        %v575 = vsub.s32 %v572, %v574
        %v576 = vrot.slane %v560, %v575
        %v578 = vunpack.c.l.s4 1966171168
        %v579 = vunpack.c.0.s8 %v578
        %v580 = vlaneseq
        %v581 = vshrl.u32 %v580, 7
        %v582 = vsub.s32 %v579, %v581
        %v583 = vrot.slane %v567, %v582
        %v585 = vunpack.c.l.s4 1966171168
        %v586 = vunpack.c.0.s8 %v585
        %v587 = vlaneseq
        %v588 = vshrl.u32 %v587, 7
        %v589 = vsub.s32 %v586, %v588
        %v590 = vrot.slane %v568, %v589
        %v592 = vunpack.c.l.s4 1966171168
        %v593 = vunpack.c.0.s8 %v592
        %v594 = vlaneseq
        %v595 = vshrl.u32 %v594, 7
        %v596 = vsub.s32 %v593, %v595
        %v597 = vrot.slane %v569, %v596
        %v598 = vcombine.high %v576, %v576
        %v599 = vcombine.high %v583, %v583
        %v600 = vcombine.high %v590, %v590
        %v601 = vcombine.high %v597, %v597
        %v602 = vcombine.high %v437, %v437
        %v604 = vunpack.c.l.s4 1966171168
        %v605 = vunpack.c.0.s8 %v604
        %v606 = vlaneseq
        %v607 = vshrl.u32 %v606, 7
        %v608 = vsub.s32 %v605, %v607
        %v609 = vrot.slane %v437, %v608
        %v611 = vunpack.c.l.s4 1966171168
        %v612 = vunpack.c.0.s8 %v611
        %v613 = vlaneseq
        %v614 = vshrl.u32 %v613, 7
        %v615 = vsub.s32 %v612, %v614
        %v616 = vrot.slane %v602, %v615
        %v617 = vcombine.high %v609, %v609
        %v618 = vcombine.high %v616, %v616
        %v620 = vunpack.c.l.s4 1966171168
        %v621 = vunpack.c.0.s8 %v620
        %v622 = vlaneseq
        %v623 = vshrl.u32 %v622, 7
        %v624 = vsub.s32 %v621, %v623
        %v625 = vrot.slane %v609, %v624
        %v627 = vunpack.c.l.s4 1966171168
        %v628 = vunpack.c.0.s8 %v627
        %v629 = vlaneseq
        %v630 = vshrl.u32 %v629, 7
        %v631 = vsub.s32 %v628, %v630
        %v632 = vrot.slane %v616, %v631
        %v634 = vunpack.c.l.s4 1966171168
        %v635 = vunpack.c.0.s8 %v634
        %v636 = vlaneseq
        %v637 = vshrl.u32 %v636, 7
        %v638 = vsub.s32 %v635, %v637
        %v639 = vrot.slane %v617, %v638
        %v641 = vunpack.c.l.s4 1966171168
        %v642 = vunpack.c.0.s8 %v641
        %v643 = vlaneseq
        %v644 = vshrl.u32 %v643, 7
        %v645 = vsub.s32 %v642, %v644
        %v646 = vrot.slane %v618, %v645
        %v647 = vcombine.high %v625, %v625
        %v648 = vcombine.high %v632, %v632
        %v649 = vcombine.high %v639, %v639
        %v650 = vcombine.high %v646, %v646
        %v651 = vlaneseq
        %v652 = vshrl.u32 %v651, 7
        %v653 = vsub.s32 0, %v652
        %v654 = vrot.slane %v576, %v653
        %v655 = vlaneseq
        %v656 = vshrl.u32 %v655, 7
        %v657 = vsub.s32 0, %v656
        %v658 = vrot.slane %v590, %v657
        %v659 = vlaneseq
        %v660 = vshrl.u32 %v659, 7
        %v661 = vsub.s32 0, %v660
        %v662 = vrot.slane %v598, %v661
        %v663 = vlaneseq
        %v664 = vshrl.u32 %v663, 7
        %v665 = vsub.s32 0, %v664
        %v666 = vrot.slane %v600, %v665
        %v667 = vlaneseq
        %v668 = vshrl.u32 %v667, 7
        %v669 = vsub.s32 0, %v668
        %v670 = vrot.slane %v583, %v669
        %v671 = vlaneseq
        %v672 = vshrl.u32 %v671, 7
        %v673 = vsub.s32 0, %v672
        %v674 = vrot.slane %v597, %v673
        %v675 = vlaneseq
        %v676 = vshrl.u32 %v675, 7
        %v677 = vsub.s32 0, %v676
        %v678 = vrot.slane %v599, %v677
        %v679 = vlaneseq
        %v680 = vshrl.u32 %v679, 7
        %v681 = vsub.s32 0, %v680
        %v682 = vrot.slane %v601, %v681
        %v683 = vlaneseq
        %v684 = vshrl.u32 %v683, 7
        %v685 = vsub.s32 0, %v684
        %v686 = vrot.slane %v625, %v685
        %v687 = vlaneseq
        %v688 = vshrl.u32 %v687, 7
        %v689 = vsub.s32 0, %v688
        %v690 = vrot.slane %v639, %v689
        %v691 = vlaneseq
        %v692 = vshrl.u32 %v691, 7
        %v693 = vsub.s32 0, %v692
        %v694 = vrot.slane %v647, %v693
        %v695 = vlaneseq
        %v696 = vshrl.u32 %v695, 7
        %v697 = vsub.s32 0, %v696
        %v698 = vrot.slane %v649, %v697
        %v699 = vlaneseq
        %v700 = vshrl.u32 %v699, 7
        %v701 = vsub.s32 0, %v700
        %v702 = vrot.slane %v632, %v701
        %v703 = vlaneseq
        %v704 = vshrl.u32 %v703, 7
        %v705 = vsub.s32 0, %v704
        %v706 = vrot.slane %v646, %v705
        %v707 = vlaneseq
        %v708 = vshrl.u32 %v707, 7
        %v709 = vsub.s32 0, %v708
        %v710 = vrot.slane %v648, %v709
        %v711 = vlaneseq
        %v712 = vshrl.u32 %v711, 7
        %v713 = vsub.s32 0, %v712
        %v714 = vrot.slane %v650, %v713
        %v731 = vadd.f32 %v654, %v546
        %v732 = vadd.f32 %v658, %v546
        %v733 = vadd.f32 %v662, %v546
        %v734 = vadd.f32 %v666, %v546
        %v735 = vadd.f32 %v670, %v546
        %v736 = vadd.f32 %v674, %v546
        %v737 = vadd.f32 %v678, %v546
        %v738 = vadd.f32 %v682, %v546
        %v739 = vadd.f32 %v686, %v546
        %v740 = vadd.f32 %v690, %v546
        %v741 = vadd.f32 %v694, %v546
        %v742 = vadd.f32 %v698, %v546
        %v743 = vadd.f32 %v702, %v546
        %v744 = vadd.f32 %v706, %v546
        %v745 = vadd.f32 %v710, %v546
        %v746 = vadd.f32 %v714, %v546
        %v747 = vtanh.pop %v731
        %v748 = vtanh.pop %v732
        %v749 = vtanh.pop %v733
        %v750 = vtanh.pop %v734
        %v751 = vtanh.pop %v735
        %v752 = vtanh.pop %v736
        %v753 = vtanh.pop %v737
        %v754 = vtanh.pop %v738
        %v755 = vtanh.pop %v739
        %v756 = vtanh.pop %v740
        %v757 = vtanh.pop %v741
        %v758 = vtanh.pop %v742
        %v759 = vtanh.pop %v743
        %v760 = vtanh.pop %v744
        %v761 = vtanh.pop %v745
        %v762 = vtanh.pop %v746
        %v763 = vpack.c.bf16 %v747, %v747
        %v764 = vpack.c.bf16 %v748, %v748
        %v765 = vpack.c.bf16 %v749, %v749
        %v766 = vpack.c.bf16 %v750, %v750
        %v767 = vpack.c.bf16 %v751, %v751
        %v768 = vpack.c.bf16 %v752, %v752
        %v769 = vpack.c.bf16 %v753, %v753
        %v770 = vpack.c.bf16 %v754, %v754
        %v771 = vpack.c.bf16 %v755, %v755
        %v772 = vpack.c.bf16 %v756, %v756
        %v773 = vpack.c.bf16 %v757, %v757
        %v774 = vpack.c.bf16 %v758, %v758
        %v775 = vpack.c.bf16 %v759, %v759
        %v776 = vpack.c.bf16 %v760, %v760
        %v777 = vpack.c.bf16 %v761, %v761
        %v778 = vpack.c.bf16 %v762, %v762
        %v779 = vld [vmem:[%s5] sm:$0xf]
        %v780 = vld [vmem:[%s5 + $0x4] sm:$0xf]
        %v781 = vld [vmem:[%s5 + $0x8] sm:$0xf]
        %v782 = vld [vmem:[%s5 + $0xc] sm:$0xf]
        %v783 = vld [vmem:[%s5 + $0x10] sm:$0xf]
        %v784 = vld [vmem:[%s5 + $0x14] sm:$0xf]
        %v785 = vld [vmem:[%s5 + $0x18] sm:$0xf]
        %v786 = vld [vmem:[%s5 + $0x1c] sm:$0xf]
        %v787 = vld [vmem:[%s5 + $0x20] sm:$0xf]
        %v788 = vld [vmem:[%s5 + $0x24] sm:$0xf]
        %v789 = vld [vmem:[%s5 + $0x28] sm:$0xf]
        %v790 = vld [vmem:[%s5 + $0x2c] sm:$0xf]
        %v791 = vld [vmem:[%s5 + $0x30] sm:$0xf]
        %v792 = vld [vmem:[%s5 + $0x34] sm:$0xf]
        %v793 = vld [vmem:[%s5 + $0x38] sm:$0xf]
        %v794 = vld [vmem:[%s5 + $0x3c] sm:$0xf]
        %v795 = vld [vmem:[%s6] sm:$0x1]
        %v797 = vlaneseq
        %v798 = vshrl.u32 %v797, 7
        %v799 = vsub.s32 0, %v798
        %v800 = vrot.slane %v795, %v799
        %v818 = vunpack.c.l.b16 %v763
        %v819 = vunpack.c.l.b16 %v764
        %v820 = vunpack.c.l.b16 %v765
        %v821 = vunpack.c.l.b16 %v766
        %v822 = vunpack.c.l.b16 %v767
        %v823 = vunpack.c.l.b16 %v768
        %v824 = vunpack.c.l.b16 %v769
        %v825 = vunpack.c.l.b16 %v770
        %v826 = vunpack.c.l.b16 %v771
        %v827 = vunpack.c.l.b16 %v772
        %v828 = vunpack.c.l.b16 %v773
        %v829 = vunpack.c.l.b16 %v774
        %v830 = vunpack.c.l.b16 %v775
        %v831 = vunpack.c.l.b16 %v776
        %v832 = vunpack.c.l.b16 %v777
        %v833 = vunpack.c.l.b16 %v778
        %v834 = vpack.c.b16 %v819, %v818
        %v835 = vpack.c.b16 %v821, %v820
        %v836 = vpack.c.b16 %v823, %v822
        %v837 = vpack.c.b16 %v825, %v824
        %v838 = vpack.c.b16 %v827, %v826
        %v839 = vpack.c.b16 %v829, %v828
        %v840 = vpack.c.b16 %v831, %v830
        %v841 = vpack.c.b16 %v833, %v832
        %v866 = vunpack.c.l.b16 %v779
        %v867 = vunpack.c.l.b16 %v780
        %v868 = vunpack.c.l.b16 %v781
        %v869 = vunpack.c.l.b16 %v782
        %v870 = vunpack.c.l.b16 %v783
        %v871 = vunpack.c.l.b16 %v784
        %v872 = vunpack.c.l.b16 %v785
        %v873 = vunpack.c.l.b16 %v786
        %v874 = vunpack.c.l.b16 %v787
        %v875 = vunpack.c.l.b16 %v788
        %v876 = vunpack.c.l.b16 %v789
        %v877 = vunpack.c.l.b16 %v790
        %v878 = vunpack.c.l.b16 %v791
        %v879 = vunpack.c.l.b16 %v792
        %v880 = vunpack.c.l.b16 %v793
        %v881 = vunpack.c.l.b16 %v794
        %v882 = vpack.c.b16 %v867, %v866
        %v883 = vpack.c.b16 %v869, %v868
        %v884 = vpack.c.b16 %v871, %v870
        %v885 = vpack.c.b16 %v873, %v872
        %v886 = vpack.c.b16 %v875, %v874
        %v887 = vpack.c.b16 %v877, %v876
        %v888 = vpack.c.b16 %v879, %v878
        %v889 = vpack.c.b16 %v881, %v880
        %898 = vmatprep.subr.bf16.mxu0 0
        %899 = vmatpush1.bf16.msra.mxu0 %v882
        %900 = vmatprep.subr.bf16.mxu0 0
        %901 = vmatpush1.bf16.msra.mxu0 %v883
        %902 = vmatprep.subr.bf16.mxu0 0
        %903 = vmatpush1.bf16.msra.mxu0 %v884
        %904 = vmatprep.subr.bf16.mxu0 0
        %905 = vmatpush1.bf16.msra.mxu0 %v885
        %906 = vmatprep.subr.bf16.mxu0 0
        %907 = vmatpush1.bf16.msra.mxu0 %v886
        %908 = vmatprep.subr.bf16.mxu0 0
        %909 = vmatpush1.bf16.msra.mxu0 %v887
        %910 = vmatprep.subr.bf16.mxu0 0
        %911 = vmatpush1.bf16.msra.mxu0 %v888
        %912 = vmatprep.subr.bf16.mxu0 0
        %913 = vmatpush1.bf16.msra.mxu0 %v889
        %914 = vmatprep.subr.bf16.mxu0 0
        %915 = vmatpush1.bf16.msra.mxu0 0
        %916 = vmatprep.subr.bf16.mxu0 0
        %917 = vmatpush1.bf16.msra.mxu0 0
        %918 = vmatprep.subr.bf16.mxu0 0
        %919 = vmatpush1.bf16.msra.mxu0 0
        %920 = vmatprep.subr.bf16.mxu0 0
        %921 = vmatpush1.bf16.msra.mxu0 0
        %922 = vmatprep.subr.bf16.mxu0 0
        %923 = vmatpush1.bf16.msra.mxu0 0
        %924 = vmatprep.subr.bf16.mxu0 0
        %925 = vmatpush1.bf16.msra.mxu0 0
        %926 = vmatprep.subr.bf16.mxu0 0
        %927 = vmatpush1.bf16.msra.mxu0 0
        %928 = vmatprep.subr.bf16.mxu0 0
        %929 = vmatpush1.bf16.msra.mxu0 0
        %930 = vmatprep.mubr.bf16.mxu0 0
        %931 = vmatmul.mubr.bf16.gmra.mrb[0].mxu0 %v834
        %v932 = vpop.f32.mrb[0].mxu0
        %v933 = vadd.f32 %v800, %v932
        %v934 = vpop.f32.mrb[0].mxu0
        %v935 = vpop.f32.mrb[0].mxu0
        %v936 = vadd.f32 %v800, %v935
        %v937 = vpop.f32.mrb[0].mxu0
        %938 = vmatprep.mubr.bf16.mxu0 0
        %939 = vmatmul.mubr.bf16.gmra.mrb[0].mxu0 %v835
        %v940 = vpop.f32.mrb[0].mxu0
        %v941 = vadd.f32 %v800, %v940
        %v942 = vpop.f32.mrb[0].mxu0
        %v943 = vpop.f32.mrb[0].mxu0
        %v944 = vadd.f32 %v800, %v943
        %v945 = vpop.f32.mrb[0].mxu0
        %946 = vmatprep.mubr.bf16.mxu0 0
        %947 = vmatmul.mubr.bf16.gmra.mrb[0].mxu0 %v836
        %v948 = vpop.f32.mrb[0].mxu0
        %v949 = vadd.f32 %v800, %v948
        %v950 = vpop.f32.mrb[0].mxu0
        %v951 = vpop.f32.mrb[0].mxu0
        %v952 = vadd.f32 %v800, %v951
        %v953 = vpop.f32.mrb[0].mxu0
        %954 = vmatprep.mubr.bf16.mxu0 0
        %955 = vmatmul.mubr.bf16.gmra.mrb[0].mxu0 %v837
        %v956 = vpop.f32.mrb[0].mxu0
        %v957 = vadd.f32 %v800, %v956
        %v958 = vpop.f32.mrb[0].mxu0
        %v959 = vpop.f32.mrb[0].mxu0
        %v960 = vadd.f32 %v800, %v959
        %v961 = vpop.f32.mrb[0].mxu0
        %962 = vmatprep.mubr.bf16.mxu0 0
        %963 = vmatmul.mubr.bf16.gmra.mrb[0].mxu0 %v838
        %v964 = vpop.f32.mrb[0].mxu0
        %v965 = vadd.f32 %v800, %v964
        %v966 = vpop.f32.mrb[0].mxu0
        %v967 = vpop.f32.mrb[0].mxu0
        %v968 = vadd.f32 %v800, %v967
        %v969 = vpop.f32.mrb[0].mxu0
        %970 = vmatprep.mubr.bf16.mxu0 0
        %971 = vmatmul.mubr.bf16.gmra.mrb[0].mxu0 %v839
        %v972 = vpop.f32.mrb[0].mxu0
        %v973 = vadd.f32 %v800, %v972
        %v974 = vpop.f32.mrb[0].mxu0
        %v975 = vpop.f32.mrb[0].mxu0
        %v976 = vadd.f32 %v800, %v975
        %v977 = vpop.f32.mrb[0].mxu0
        %978 = vmatprep.mubr.bf16.mxu0 0
        %979 = vmatmul.mubr.bf16.gmra.mrb[0].mxu0 %v840
        %v980 = vpop.f32.mrb[0].mxu0
        %v981 = vadd.f32 %v800, %v980
        %v982 = vpop.f32.mrb[0].mxu0
        %v983 = vpop.f32.mrb[0].mxu0
        %v984 = vadd.f32 %v800, %v983
        %v985 = vpop.f32.mrb[0].mxu0
        %986 = vmatprep.mubr.bf16.mxu0 0
        %987 = vmatmul.mubr.bf16.gmra.mrb[0].mxu0 %v841
        %v988 = vpop.f32.mrb[0].mxu0
        %v989 = vadd.f32 %v800, %v988
        %v990 = vpop.f32.mrb[0].mxu0
        %v991 = vpop.f32.mrb[0].mxu0
        %v992 = vadd.f32 %v800, %v991
        %v993 = vpop.f32.mrb[0].mxu0
        %994 = vdwg.mxu0
        %995 = vst [vmem:[%s309] sm:$0xff] %v933
        %996 = vst [vmem:[%s309 + $0x8] sm:$0xff] %v936
        %997 = vst [vmem:[%s309 + $0x10] sm:$0xff] %v941
        %998 = vst [vmem:[%s309 + $0x18] sm:$0xff] %v944
        %999 = vst [vmem:[%s309 + $0x20] sm:$0xff] %v949
        %1000 = vst [vmem:[%s309 + $0x28] sm:$0xff] %v952
        %1001 = vst [vmem:[%s309 + $0x30] sm:$0xff] %v957
        %1002 = vst [vmem:[%s309 + $0x38] sm:$0xff] %v960
        %1003 = vst [vmem:[%s309 + $0x40] sm:$0xff] %v965
        %1004 = vst [vmem:[%s309 + $0x48] sm:$0xff] %v968
        %1005 = vst [vmem:[%s309 + $0x50] sm:$0xff] %v973
        %1006 = vst [vmem:[%s309 + $0x58] sm:$0xff] %v976
        %1007 = vst [vmem:[%s309 + $0x60] sm:$0xff] %v981
        %1008 = vst [vmem:[%s309 + $0x68] sm:$0xff] %v984
        %1009 = vst [vmem:[%s309 + $0x70] sm:$0xff] %v989
        %1010 = vst [vmem:[%s309 + $0x78] sm:$0xff] %v992
        %s1011 = sand.u32 %s202, 1
        %s1012 = scalar_lea.sflag [#allocation3], %s1011
        %s1013 = sand.u32 %s202, 1
        %s1014 = smul.addr %s1013, 128
        %s1015 = scalar_lea.vmem [#allocation2], %s1014
        // Predicated region
        $region49: #{transducer_forward.5} parent=47 // pred_check
          %p1016 = pneg %p212
        $region50: #{transducer_forward.5} parent=47 // pred_check_branch
          %1018 = sbr.rel (%p1016) target = $region52
        $region51: #{transducer_forward.5} parent=47 // pred_region
          %s1019 = smul.u32 16, %s26
          %s1021 = ssub.s32 2048, 2048
          %1022 = vsyncadd %s1012, %s1021
          %s1023 = smul.addr %s25, 16
          %s1024 = sadd.s32 %s1019, %s1023
          %s1025 = smul.addr %s1024, 128
          %s1026 = scalar_lea.hbm %s7, %s1025
          %s1027 = sshll.u32 %s1015, 4
          %s1028 = int_to_ptr.vmem [resolvable:$true] %s1027
          %1033 = dma.vmem_to_hbm [thread:$0]  %s1028, 2048, %s1026, %s1012, 128, 128, 8
        $region52: #{transducer_forward.5} parent=47 // pred_fallthru
          _
      $region48: #{transducer_forward.5} parent=5 // pred_fallthru
        _
      %p1034 = scmp.le.s32.totalorder 2, %s16
      // Predicated region
      $region53: #{transducer_forward.5} parent=5 // pred_check
        %p1035 = pneg %p1034
      $region54: #{transducer_forward.5} parent=5 // pred_check_branch
        %1037 = sbr.rel (%p1035) target = $region56
      $region55: #{transducer_forward.5} parent=5 // pred_region
        %s1038 = ssub.s32 %s16, 2
        // Predicated region
        $region57: #{transducer_forward.5} parent=55 // pred_check
          %p1039 = pneg %p218
        $region58: #{transducer_forward.5} parent=55 // pred_check_branch
          %1041 = sbr.rel (%p1039) target = $region60
        $region59: #{transducer_forward.5} parent=55 // pred_region
          %s1042 = sand.u32 %s203, 1
          %s1043 = scalar_lea.sflag [#allocation3], %s1042
          %s1044 = sand.u32 %s203, 1
          %s1045 = smul.addr %s1044, 128
          %s1046 = scalar_lea.vmem [#allocation2], %s1045
          %1047 = dma.done %s1043, 2048
        $region60: #{transducer_forward.5} parent=55 // pred_fallthru
          _
      $region56: #{transducer_forward.5} parent=5 // pred_fallthru
        _
    $region6: #{transducer_forward.5} parent=1 // loop_footer
      %s20 = sadd.s32 1, %s16
    $region7: #{transducer_forward.5} parent=1 // loop_footer_branch
      %15 = sbr.rel target = $region3
    $region8: #{transducer_forward.5} parent=1 // loop_exit
      _
    %1048 = vsyncpa [#allocation3], 1
    %s1049 = scalar_lea.sflag [#allocation3], 1
    %1050 = vsyncpa %s1049, 1

// kernel: transducer_forward.4
$region0: #{transducer_forward.4}
  #allocation0 [shape = 'u32[]', space=smem, size = 0x4, offset = 0x4, fixed_abs, tag = 'smem constant byte address 0x4 - core index']
  #allocation1 [shape = 'u32[144,128]{1,0:T(1,128)}', space=vmem, size = 0x12000, scoped, tag = 'internal scratch']
  #allocation2 [shape = 'f32[8,128]{1,0:T(8,128)}', space=vmem, size = 0x1000, scoped, tag = 'scratch operand']
  #allocation3 [shape = 'f32[8,128]{1,0:T(8,128)}', space=vmem, size = 0x1000, scoped, tag = 'scratch operand']
  %s0 = inlined_call_operand.vmem [shape: bf16[8,8,128], index: 0, kind: input, shape index: {}]
  %s1 = inlined_call_operand.vmem [shape: bf16[128,512], index: 1, kind: input, shape index: {}]
  %s2 = inlined_call_operand.vmem [shape: bf16[128,512], index: 2, kind: input, shape index: {}]
  %s3 = inlined_call_operand.vmem [shape: f32[1,512], index: 3, kind: input, shape index: {}]
  %s4 = inlined_call_operand.vmem [shape: bf16[8,8,128], index: 4, kind: output, shape index: {}]
  %s5 = sld [smem:[#allocation0]]
  $region30: #{transducer_forward.4} parent=0
    _
  %s7 = ssub.s32 1, %s5
  %s8 = scalar_select 0, %s7, %s5
  // Predicated region
  $region2: #{transducer_forward.4} parent=0 // pred_check
    _
  $region3: #{transducer_forward.4} parent=0 // pred_check_branch
    %10 = sbr.rel (0) target = $region5
  $region4: #{transducer_forward.4} parent=0 // pred_region
    _
  $region5: #{transducer_forward.4} parent=0 // pred_fallthru
    _
  // Predicated region
  $region6: #{transducer_forward.4} parent=0 // pred_check
    _
  $region7: #{transducer_forward.4} parent=0 // pred_check_branch
    %12 = sbr.rel (0) target = $region9
  $region8: #{transducer_forward.4} parent=0 // pred_region
    _
  $region9: #{transducer_forward.4} parent=0 // pred_fallthru
    _
  // Predicated region
  $region10: #{transducer_forward.4} parent=0 // pred_check
    _
  $region11: #{transducer_forward.4} parent=0 // pred_check_branch
    %14 = sbr.rel (0) target = $region13
  $region12: #{transducer_forward.4} parent=0 // pred_region
    _
  $region13: #{transducer_forward.4} parent=0 // pred_fallthru
    _
  // Predicated region
  $region14: #{transducer_forward.4} parent=0 // pred_check
    _
  $region15: #{transducer_forward.4} parent=0 // pred_check_branch
    %16 = sbr.rel (0) target = $region17
  $region16: #{transducer_forward.4} parent=0 // pred_region
    _
  $region17: #{transducer_forward.4} parent=0 // pred_fallthru
    _
  %p18 = scmp.eq.s32.totalorder 0, 0
  // Predicated region
  $region18: #{transducer_forward.4} parent=0 // pred_check
    %p19 = pneg %p18
  $region19: #{transducer_forward.4} parent=0 // pred_check_branch
    %21 = sbr.rel (%p19) target = $region21
  $region20: #{transducer_forward.4} parent=0 // pred_region
    %22 = vst [vmem:[#allocation2] sm:$0xff] 0.0
    %23 = vst [vmem:[#allocation3] sm:$0xff] 0.0
  $region21: #{transducer_forward.4} parent=0 // pred_fallthru
    _
  %v24 = vld [vmem:[%s1] sm:$0xff]
  %v25 = vld [vmem:[%s1 + $0x8] sm:$0xff]
  %v26 = vld [vmem:[%s1 + $0x10] sm:$0xff]
  %v27 = vld [vmem:[%s1 + $0x18] sm:$0xff]
  %v28 = vld [vmem:[%s1 + $0x20] sm:$0xff]
  %v29 = vld [vmem:[%s1 + $0x28] sm:$0xff]
  %v30 = vld [vmem:[%s1 + $0x30] sm:$0xff]
  %v31 = vld [vmem:[%s1 + $0x38] sm:$0xff]
  %v32 = vld [vmem:[%s1 + $0x40] sm:$0xff]
  %v33 = vld [vmem:[%s1 + $0x48] sm:$0xff]
  %v34 = vld [vmem:[%s1 + $0x50] sm:$0xff]
  %v35 = vld [vmem:[%s1 + $0x58] sm:$0xff]
  %v36 = vld [vmem:[%s1 + $0x60] sm:$0xff]
  %v37 = vld [vmem:[%s1 + $0x68] sm:$0xff]
  %v38 = vld [vmem:[%s1 + $0x70] sm:$0xff]
  %v39 = vld [vmem:[%s1 + $0x78] sm:$0xff]
  %v40 = vld [vmem:[%s1 + $0x80] sm:$0xff]
  %v41 = vld [vmem:[%s1 + $0x88] sm:$0xff]
  %v42 = vld [vmem:[%s1 + $0x90] sm:$0xff]
  %v43 = vld [vmem:[%s1 + $0x98] sm:$0xff]
  %v44 = vld [vmem:[%s1 + $0xa0] sm:$0xff]
  %v45 = vld [vmem:[%s1 + $0xa8] sm:$0xff]
  %v46 = vld [vmem:[%s1 + $0xb0] sm:$0xff]
  %v47 = vld [vmem:[%s1 + $0xb8] sm:$0xff]
  %v48 = vld [vmem:[%s1 + $0xc0] sm:$0xff]
  %v49 = vld [vmem:[%s1 + $0xc8] sm:$0xff]
  %v50 = vld [vmem:[%s1 + $0xd0] sm:$0xff]
  %v51 = vld [vmem:[%s1 + $0xd8] sm:$0xff]
  %v52 = vld [vmem:[%s1 + $0xe0] sm:$0xff]
  %v53 = vld [vmem:[%s1 + $0xe8] sm:$0xff]
  %v54 = vld [vmem:[%s1 + $0xf0] sm:$0xff]
  %v55 = vld [vmem:[%s1 + $0xf8] sm:$0xff]
  %v56 = vld [vmem:[%s2] sm:$0xff]
  %v57 = vld [vmem:[%s2 + $0x8] sm:$0xff]
  %v58 = vld [vmem:[%s2 + $0x10] sm:$0xff]
  %v59 = vld [vmem:[%s2 + $0x18] sm:$0xff]
  %v60 = vld [vmem:[%s2 + $0x20] sm:$0xff]
  %v61 = vld [vmem:[%s2 + $0x28] sm:$0xff]
  %v62 = vld [vmem:[%s2 + $0x30] sm:$0xff]
  %v63 = vld [vmem:[%s2 + $0x38] sm:$0xff]
  %v64 = vld [vmem:[%s2 + $0x40] sm:$0xff]
  %v65 = vld [vmem:[%s2 + $0x48] sm:$0xff]
  %v66 = vld [vmem:[%s2 + $0x50] sm:$0xff]
  %v67 = vld [vmem:[%s2 + $0x58] sm:$0xff]
  %v68 = vld [vmem:[%s2 + $0x60] sm:$0xff]
  %v69 = vld [vmem:[%s2 + $0x68] sm:$0xff]
  %v70 = vld [vmem:[%s2 + $0x70] sm:$0xff]
  %v71 = vld [vmem:[%s2 + $0x78] sm:$0xff]
  %v72 = vld [vmem:[%s2 + $0x80] sm:$0xff]
  %v73 = vld [vmem:[%s2 + $0x88] sm:$0xff]
  %v74 = vld [vmem:[%s2 + $0x90] sm:$0xff]
  %v75 = vld [vmem:[%s2 + $0x98] sm:$0xff]
  %v76 = vld [vmem:[%s2 + $0xa0] sm:$0xff]
  %v77 = vld [vmem:[%s2 + $0xa8] sm:$0xff]
  %v78 = vld [vmem:[%s2 + $0xb0] sm:$0xff]
  %v79 = vld [vmem:[%s2 + $0xb8] sm:$0xff]
  %v80 = vld [vmem:[%s2 + $0xc0] sm:$0xff]
  %v81 = vld [vmem:[%s2 + $0xc8] sm:$0xff]
  %v82 = vld [vmem:[%s2 + $0xd0] sm:$0xff]
  %v83 = vld [vmem:[%s2 + $0xd8] sm:$0xff]
  %v84 = vld [vmem:[%s2 + $0xe0] sm:$0xff]
  %v85 = vld [vmem:[%s2 + $0xe8] sm:$0xff]
  %v86 = vld [vmem:[%s2 + $0xf0] sm:$0xff]
  %v87 = vld [vmem:[%s2 + $0xf8] sm:$0xff]
  %v88 = vld [vmem:[%s3] sm:$0xf]
  %v89 = vld [vmem:[%s0] sm:$0xf]
  %v90 = vld [vmem:[#allocation2] sm:$0xff]
  %v91 = vld [vmem:[#allocation3] sm:$0xff]
  %v92 = vpack.c.bf16 %v90, %v90
  %v125 = vunpack.c.l.b16 %v56
  %v126 = vunpack.c.h.b16 %v56
  %v127 = vunpack.c.l.b16 %v57
  %v128 = vunpack.c.h.b16 %v57
  %v129 = vunpack.c.l.b16 %v58
  %v130 = vunpack.c.h.b16 %v58
  %v131 = vunpack.c.l.b16 %v59
  %v132 = vunpack.c.h.b16 %v59
  %v133 = vunpack.c.l.b16 %v60
  %v134 = vunpack.c.h.b16 %v60
  %v135 = vunpack.c.l.b16 %v61
  %v136 = vunpack.c.h.b16 %v61
  %v137 = vunpack.c.l.b16 %v62
  %v138 = vunpack.c.h.b16 %v62
  %v139 = vunpack.c.l.b16 %v63
  %v140 = vunpack.c.h.b16 %v63
  %v141 = vunpack.c.l.b16 %v64
  %v142 = vunpack.c.h.b16 %v64
  %v143 = vunpack.c.l.b16 %v65
  %v144 = vunpack.c.h.b16 %v65
  %v145 = vunpack.c.l.b16 %v66
  %v146 = vunpack.c.h.b16 %v66
  %v147 = vunpack.c.l.b16 %v67
  %v148 = vunpack.c.h.b16 %v67
  %v149 = vunpack.c.l.b16 %v68
  %v150 = vunpack.c.h.b16 %v68
  %v151 = vunpack.c.l.b16 %v69
  %v152 = vunpack.c.h.b16 %v69
  %v153 = vunpack.c.l.b16 %v70
  %v154 = vunpack.c.h.b16 %v70
  %v155 = vunpack.c.l.b16 %v71
  %v156 = vunpack.c.h.b16 %v71
  %v157 = vunpack.c.l.b16 %v72
  %v158 = vunpack.c.h.b16 %v72
  %v159 = vunpack.c.l.b16 %v73
  %v160 = vunpack.c.h.b16 %v73
  %v161 = vunpack.c.l.b16 %v74
  %v162 = vunpack.c.h.b16 %v74
  %v163 = vunpack.c.l.b16 %v75
  %v164 = vunpack.c.h.b16 %v75
  %v165 = vunpack.c.l.b16 %v76
  %v166 = vunpack.c.h.b16 %v76
  %v167 = vunpack.c.l.b16 %v77
  %v168 = vunpack.c.h.b16 %v77
  %v169 = vunpack.c.l.b16 %v78
  %v170 = vunpack.c.h.b16 %v78
  %v171 = vunpack.c.l.b16 %v79
  %v172 = vunpack.c.h.b16 %v79
  %v173 = vunpack.c.l.b16 %v80
  %v174 = vunpack.c.h.b16 %v80
  %v175 = vunpack.c.l.b16 %v81
  %v176 = vunpack.c.h.b16 %v81
  %v177 = vunpack.c.l.b16 %v82
  %v178 = vunpack.c.h.b16 %v82
  %v179 = vunpack.c.l.b16 %v83
  %v180 = vunpack.c.h.b16 %v83
  %v181 = vunpack.c.l.b16 %v84
  %v182 = vunpack.c.h.b16 %v84
  %v183 = vunpack.c.l.b16 %v85
  %v184 = vunpack.c.h.b16 %v85
  %v185 = vunpack.c.l.b16 %v86
  %v186 = vunpack.c.h.b16 %v86
  %v187 = vunpack.c.l.b16 %v87
  %v188 = vunpack.c.h.b16 %v87
  %v189 = vpack.c.b16 %v129, %v125
  %v190 = vpack.c.b16 %v130, %v126
  %v191 = vpack.c.b16 %v131, %v127
  %v192 = vpack.c.b16 %v132, %v128
  %v193 = vpack.c.b16 %v137, %v133
  %v194 = vpack.c.b16 %v138, %v134
  %v195 = vpack.c.b16 %v139, %v135
  %v196 = vpack.c.b16 %v140, %v136
  %v197 = vpack.c.b16 %v145, %v141
  %v198 = vpack.c.b16 %v146, %v142
  %v199 = vpack.c.b16 %v147, %v143
  %v200 = vpack.c.b16 %v148, %v144
  %v201 = vpack.c.b16 %v153, %v149
  %v202 = vpack.c.b16 %v154, %v150
  %v203 = vpack.c.b16 %v155, %v151
  %v204 = vpack.c.b16 %v156, %v152
  %v205 = vpack.c.b16 %v161, %v157
  %v206 = vpack.c.b16 %v162, %v158
  %v207 = vpack.c.b16 %v163, %v159
  %v208 = vpack.c.b16 %v164, %v160
  %v209 = vpack.c.b16 %v169, %v165
  %v210 = vpack.c.b16 %v170, %v166
  %v211 = vpack.c.b16 %v171, %v167
  %v212 = vpack.c.b16 %v172, %v168
  %v213 = vpack.c.b16 %v177, %v173
  %v214 = vpack.c.b16 %v178, %v174
  %v215 = vpack.c.b16 %v179, %v175
  %v216 = vpack.c.b16 %v180, %v176
  %v217 = vpack.c.b16 %v185, %v181
  %v218 = vpack.c.b16 %v186, %v182
  %v219 = vpack.c.b16 %v187, %v183
  %v220 = vpack.c.b16 %v188, %v184
  %253 = vmatprep.subr.bf16.mxu0 %v190
  %254 = vmatpush1.bf16.msra.mxu0 %v189
  %255 = vmatprep.subr.bf16.mxu0 %v194
  %256 = vmatpush1.bf16.msra.mxu0 %v193
  %257 = vmatprep.subr.bf16.mxu0 %v198
  %258 = vmatpush1.bf16.msra.mxu0 %v197
  %259 = vmatprep.subr.bf16.mxu0 %v202
  %260 = vmatpush1.bf16.msra.mxu0 %v201
  %261 = vmatprep.subr.bf16.mxu0 %v206
  %262 = vmatpush1.bf16.msra.mxu0 %v205
  %263 = vmatprep.subr.bf16.mxu0 %v210
  %264 = vmatpush1.bf16.msra.mxu0 %v209
  %265 = vmatprep.subr.bf16.mxu0 %v214
  %266 = vmatpush1.bf16.msra.mxu0 %v213
  %267 = vmatprep.subr.bf16.mxu0 %v218
  %268 = vmatpush1.bf16.msra.mxu0 %v217
  %269 = vmatprep.subr.bf16.mxu0 0
  %270 = vmatpush1.bf16.msra.mxu0 0
  %271 = vmatprep.subr.bf16.mxu0 0
  %272 = vmatpush1.bf16.msra.mxu0 0
  %273 = vmatprep.subr.bf16.mxu0 0
  %274 = vmatpush1.bf16.msra.mxu0 0
  %275 = vmatprep.subr.bf16.mxu0 0
  %276 = vmatpush1.bf16.msra.mxu0 0
  %277 = vmatprep.subr.bf16.mxu0 0
  %278 = vmatpush1.bf16.msra.mxu0 0
  %279 = vmatprep.subr.bf16.mxu0 0
  %280 = vmatpush1.bf16.msra.mxu0 0
  %281 = vmatprep.subr.bf16.mxu0 0
  %282 = vmatpush1.bf16.msra.mxu0 0
  %283 = vmatprep.subr.bf16.mxu0 0
  %284 = vmatpush1.bf16.msra.mxu0 0
  %285 = vmatprep.mubr.bf16.mxu0 0
  %286 = vmatmul.mubr.bf16.gmra.mrb[0].mxu0 %v92
  %v287 = vpop.f32.mrb[0].mxu0
  %v288 = vadd.f32 0.0, %v287
  %v289 = vpop.f32.mrb[0].mxu0
  %v290 = vadd.f32 0.0, %v289
  %v291 = vpop.f32.mrb[0].mxu0
  %v292 = vpop.f32.mrb[0].mxu0
  %293 = vdwg.mxu0
  %294 = vmatprep.subr.bf16.mxu0 %v192
  %295 = vmatpush1.bf16.msra.mxu0 %v191
  %296 = vmatprep.subr.bf16.mxu0 %v196
  %297 = vmatpush1.bf16.msra.mxu0 %v195
  %298 = vmatprep.subr.bf16.mxu0 %v200
  %299 = vmatpush1.bf16.msra.mxu0 %v199
  %300 = vmatprep.subr.bf16.mxu0 %v204
  %301 = vmatpush1.bf16.msra.mxu0 %v203
  %302 = vmatprep.subr.bf16.mxu0 %v208
  %303 = vmatpush1.bf16.msra.mxu0 %v207
  %304 = vmatprep.subr.bf16.mxu0 %v212
  %305 = vmatpush1.bf16.msra.mxu0 %v211
  %306 = vmatprep.subr.bf16.mxu0 %v216
  %307 = vmatpush1.bf16.msra.mxu0 %v215
  %308 = vmatprep.subr.bf16.mxu0 %v220
  %309 = vmatpush1.bf16.msra.mxu0 %v219
  %310 = vmatprep.subr.bf16.mxu0 0
  %311 = vmatpush1.bf16.msra.mxu0 0
  %312 = vmatprep.subr.bf16.mxu0 0
  %313 = vmatpush1.bf16.msra.mxu0 0
  %314 = vmatprep.subr.bf16.mxu0 0
  %315 = vmatpush1.bf16.msra.mxu0 0
  %316 = vmatprep.subr.bf16.mxu0 0
  %317 = vmatpush1.bf16.msra.mxu0 0
  %318 = vmatprep.subr.bf16.mxu0 0
  %319 = vmatpush1.bf16.msra.mxu0 0
  %320 = vmatprep.subr.bf16.mxu0 0
  %321 = vmatpush1.bf16.msra.mxu0 0
  %322 = vmatprep.subr.bf16.mxu0 0
  %323 = vmatpush1.bf16.msra.mxu0 0
  %324 = vmatprep.subr.bf16.mxu0 0
  %325 = vmatpush1.bf16.msra.mxu0 0
  %326 = vmatprep.mubr.bf16.mxu0 0
  %327 = vmatmul.mubr.bf16.gmra.mrb[0].mxu0 %v92
  %v328 = vpop.f32.mrb[0].mxu0
  %v329 = vadd.f32 0.0, %v328
  %v330 = vpop.f32.mrb[0].mxu0
  %v331 = vadd.f32 0.0, %v330
  %v332 = vpop.f32.mrb[0].mxu0
  %v333 = vpop.f32.mrb[0].mxu0
  %334 = vdwg.mxu0
  %v367 = vunpack.c.l.b16 %v24
  %v368 = vunpack.c.h.b16 %v24
  %v369 = vunpack.c.l.b16 %v25
  %v370 = vunpack.c.h.b16 %v25
  %v371 = vunpack.c.l.b16 %v26
  %v372 = vunpack.c.h.b16 %v26
  %v373 = vunpack.c.l.b16 %v27
  %v374 = vunpack.c.h.b16 %v27
  %v375 = vunpack.c.l.b16 %v28
  %v376 = vunpack.c.h.b16 %v28
  %v377 = vunpack.c.l.b16 %v29
  %v378 = vunpack.c.h.b16 %v29
  %v379 = vunpack.c.l.b16 %v30
  %v380 = vunpack.c.h.b16 %v30
  %v381 = vunpack.c.l.b16 %v31
  %v382 = vunpack.c.h.b16 %v31
  %v383 = vunpack.c.l.b16 %v32
  %v384 = vunpack.c.h.b16 %v32
  %v385 = vunpack.c.l.b16 %v33
  %v386 = vunpack.c.h.b16 %v33
  %v387 = vunpack.c.l.b16 %v34
  %v388 = vunpack.c.h.b16 %v34
  %v389 = vunpack.c.l.b16 %v35
  %v390 = vunpack.c.h.b16 %v35
  %v391 = vunpack.c.l.b16 %v36
  %v392 = vunpack.c.h.b16 %v36
  %v393 = vunpack.c.l.b16 %v37
  %v394 = vunpack.c.h.b16 %v37
  %v395 = vunpack.c.l.b16 %v38
  %v396 = vunpack.c.h.b16 %v38
  %v397 = vunpack.c.l.b16 %v39
  %v398 = vunpack.c.h.b16 %v39
  %v399 = vunpack.c.l.b16 %v40
  %v400 = vunpack.c.h.b16 %v40
  %v401 = vunpack.c.l.b16 %v41
  %v402 = vunpack.c.h.b16 %v41
  %v403 = vunpack.c.l.b16 %v42
  %v404 = vunpack.c.h.b16 %v42
  %v405 = vunpack.c.l.b16 %v43
  %v406 = vunpack.c.h.b16 %v43
  %v407 = vunpack.c.l.b16 %v44
  %v408 = vunpack.c.h.b16 %v44
  %v409 = vunpack.c.l.b16 %v45
  %v410 = vunpack.c.h.b16 %v45
  %v411 = vunpack.c.l.b16 %v46
  %v412 = vunpack.c.h.b16 %v46
  %v413 = vunpack.c.l.b16 %v47
  %v414 = vunpack.c.h.b16 %v47
  %v415 = vunpack.c.l.b16 %v48
  %v416 = vunpack.c.h.b16 %v48
  %v417 = vunpack.c.l.b16 %v49
  %v418 = vunpack.c.h.b16 %v49
  %v419 = vunpack.c.l.b16 %v50
  %v420 = vunpack.c.h.b16 %v50
  %v421 = vunpack.c.l.b16 %v51
  %v422 = vunpack.c.h.b16 %v51
  %v423 = vunpack.c.l.b16 %v52
  %v424 = vunpack.c.h.b16 %v52
  %v425 = vunpack.c.l.b16 %v53
  %v426 = vunpack.c.h.b16 %v53
  %v427 = vunpack.c.l.b16 %v54
  %v428 = vunpack.c.h.b16 %v54
  %v429 = vunpack.c.l.b16 %v55
  %v430 = vunpack.c.h.b16 %v55
  %v431 = vpack.c.b16 %v371, %v367
  %v432 = vpack.c.b16 %v372, %v368
  %v433 = vpack.c.b16 %v373, %v369
  %v434 = vpack.c.b16 %v374, %v370
  %v435 = vpack.c.b16 %v379, %v375
  %v436 = vpack.c.b16 %v380, %v376
  %v437 = vpack.c.b16 %v381, %v377
  %v438 = vpack.c.b16 %v382, %v378
  %v439 = vpack.c.b16 %v387, %v383
  %v440 = vpack.c.b16 %v388, %v384
  %v441 = vpack.c.b16 %v389, %v385
  %v442 = vpack.c.b16 %v390, %v386
  %v443 = vpack.c.b16 %v395, %v391
  %v444 = vpack.c.b16 %v396, %v392
  %v445 = vpack.c.b16 %v397, %v393
  %v446 = vpack.c.b16 %v398, %v394
  %v447 = vpack.c.b16 %v403, %v399
  %v448 = vpack.c.b16 %v404, %v400
  %v449 = vpack.c.b16 %v405, %v401
  %v450 = vpack.c.b16 %v406, %v402
  %v451 = vpack.c.b16 %v411, %v407
  %v452 = vpack.c.b16 %v412, %v408
  %v453 = vpack.c.b16 %v413, %v409
  %v454 = vpack.c.b16 %v414, %v410
  %v455 = vpack.c.b16 %v419, %v415
  %v456 = vpack.c.b16 %v420, %v416
  %v457 = vpack.c.b16 %v421, %v417
  %v458 = vpack.c.b16 %v422, %v418
  %v459 = vpack.c.b16 %v427, %v423
  %v460 = vpack.c.b16 %v428, %v424
  %v461 = vpack.c.b16 %v429, %v425
  %v462 = vpack.c.b16 %v430, %v426
  %495 = vmatprep.subr.bf16.mxu0 %v432
  %496 = vmatpush1.bf16.msra.mxu0 %v431
  %497 = vmatprep.subr.bf16.mxu0 %v436
  %498 = vmatpush1.bf16.msra.mxu0 %v435
  %499 = vmatprep.subr.bf16.mxu0 %v440
  %500 = vmatpush1.bf16.msra.mxu0 %v439
  %501 = vmatprep.subr.bf16.mxu0 %v444
  %502 = vmatpush1.bf16.msra.mxu0 %v443
  %503 = vmatprep.subr.bf16.mxu0 %v448
  %504 = vmatpush1.bf16.msra.mxu0 %v447
  %505 = vmatprep.subr.bf16.mxu0 %v452
  %506 = vmatpush1.bf16.msra.mxu0 %v451
  %507 = vmatprep.subr.bf16.mxu0 %v456
  %508 = vmatpush1.bf16.msra.mxu0 %v455
  %509 = vmatprep.subr.bf16.mxu0 %v460
  %510 = vmatpush1.bf16.msra.mxu0 %v459
  %511 = vmatprep.subr.bf16.mxu0 0
  %512 = vmatpush1.bf16.msra.mxu0 0
  %513 = vmatprep.subr.bf16.mxu0 0
  %514 = vmatpush1.bf16.msra.mxu0 0
  %515 = vmatprep.subr.bf16.mxu0 0
  %516 = vmatpush1.bf16.msra.mxu0 0
  %517 = vmatprep.subr.bf16.mxu0 0
  %518 = vmatpush1.bf16.msra.mxu0 0
  %519 = vmatprep.subr.bf16.mxu0 0
  %520 = vmatpush1.bf16.msra.mxu0 0
  %521 = vmatprep.subr.bf16.mxu0 0
  %522 = vmatpush1.bf16.msra.mxu0 0
  %523 = vmatprep.subr.bf16.mxu0 0
  %524 = vmatpush1.bf16.msra.mxu0 0
  %525 = vmatprep.subr.bf16.mxu0 0
  %526 = vmatpush1.bf16.msra.mxu0 0
  %527 = vmatprep.mubr.bf16.mxu0 0
  %528 = vmatmul.mubr.bf16.gmra.mrb[0].mxu0 %v89
  %v529 = vpop.f32.mrb[0].mxu0
  %v530 = vadd.f32 %v288, %v529
  %v531 = vpop.f32.mrb[0].mxu0
  %v532 = vadd.f32 %v290, %v531
  %v533 = vpop.f32.mrb[0].mxu0
  %v534 = vpop.f32.mrb[0].mxu0
  %535 = vdwg.mxu0
  %536 = vmatprep.subr.bf16.mxu0 %v434
  %537 = vmatpush1.bf16.msra.mxu0 %v433
  %538 = vmatprep.subr.bf16.mxu0 %v438
  %539 = vmatpush1.bf16.msra.mxu0 %v437
  %540 = vmatprep.subr.bf16.mxu0 %v442
  %541 = vmatpush1.bf16.msra.mxu0 %v441
  %542 = vmatprep.subr.bf16.mxu0 %v446
  %543 = vmatpush1.bf16.msra.mxu0 %v445
  %544 = vmatprep.subr.bf16.mxu0 %v450
  %545 = vmatpush1.bf16.msra.mxu0 %v449
  %546 = vmatprep.subr.bf16.mxu0 %v454
  %547 = vmatpush1.bf16.msra.mxu0 %v453
  %548 = vmatprep.subr.bf16.mxu0 %v458
  %549 = vmatpush1.bf16.msra.mxu0 %v457
  %550 = vmatprep.subr.bf16.mxu0 %v462
  %551 = vmatpush1.bf16.msra.mxu0 %v461
  %552 = vmatprep.subr.bf16.mxu0 0
  %553 = vmatpush1.bf16.msra.mxu0 0
  %554 = vmatprep.subr.bf16.mxu0 0
  %555 = vmatpush1.bf16.msra.mxu0 0
  %556 = vmatprep.subr.bf16.mxu0 0
  %557 = vmatpush1.bf16.msra.mxu0 0
  %558 = vmatprep.subr.bf16.mxu0 0
  %559 = vmatpush1.bf16.msra.mxu0 0
  %560 = vmatprep.subr.bf16.mxu0 0
  %561 = vmatpush1.bf16.msra.mxu0 0
  %562 = vmatprep.subr.bf16.mxu0 0
  %563 = vmatpush1.bf16.msra.mxu0 0
  %564 = vmatprep.subr.bf16.mxu0 0
  %565 = vmatpush1.bf16.msra.mxu0 0
  %566 = vmatprep.subr.bf16.mxu0 0
  %567 = vmatpush1.bf16.msra.mxu0 0
  %568 = vmatprep.mubr.bf16.mxu0 0
  %569 = vmatmul.mubr.bf16.gmra.mrb[0].mxu0 %v89
  %v570 = vpop.f32.mrb[0].mxu0
  %v571 = vadd.f32 %v329, %v570
  %v572 = vpop.f32.mrb[0].mxu0
  %v573 = vadd.f32 %v331, %v572
  %v574 = vpop.f32.mrb[0].mxu0
  %v575 = vpop.f32.mrb[0].mxu0
  %576 = vdwg.mxu0
  %v578 = vlaneseq
  %v579 = vshrl.u32 %v578, 7
  %v580 = vsub.s32 0, %v579
  %v581 = vrot.slane %v88, %v580
  %v582 = vlaneseq
  %v583 = vshrl.u32 %v582, 7
  %v584 = vsub.s32 1, %v583
  %v585 = vrot.slane %v88, %v584
  %v586 = vlaneseq
  %v587 = vshrl.u32 %v586, 7
  %v588 = vsub.s32 2, %v587
  %v589 = vrot.slane %v88, %v588
  %v590 = vlaneseq
  %v591 = vshrl.u32 %v590, 7
  %v592 = vsub.s32 3, %v591
  %v593 = vrot.slane %v88, %v592
  %v598 = vadd.f32 %v530, %v581
  %v599 = vadd.f32 %v532, %v585
  %v600 = vadd.f32 %v571, %v589
  %v601 = vadd.f32 %v573, %v593
  %v602 = vxor.u32 %v598, 2147483648
  %v603 = vmul.f32 %v602, 1.442695
  %v604 = vpow.pop %v603
  %v605 = vadd.f32 %v604, 1.0
  %v606 = vrcp.pop %v605
  %v607 = vmul.f32 1.0, %v606
  %v608 = vxor.u32 %v599, 2147483648
  %v609 = vmul.f32 %v608, 1.442695
  %v610 = vpow.pop %v609
  %v611 = vadd.f32 %v610, 1.0
  %v612 = vrcp.pop %v611
  %v613 = vmul.f32 1.0, %v612
  %v614 = vtanh.pop %v600
  %v615 = vxor.u32 %v601, 2147483648
  %v616 = vmul.f32 %v615, 1.442695
  %v617 = vpow.pop %v616
  %v618 = vadd.f32 %v617, 1.0
  %v619 = vrcp.pop %v618
  %v620 = vmul.f32 1.0, %v619
  %v621 = vmul.f32 %v613, %v91
  %v622 = vmul.f32 %v607, %v614
  %v623 = vadd.f32 %v621, %v622
  %v624 = vtanh.pop %v623
  %v625 = vmul.f32 %v620, %v624
  %626 = vst [vmem:[#allocation3] sm:$0xff] %v623
  %627 = vst [vmem:[#allocation2] sm:$0xff] %v625
  %v628 = vpack.c.bf16 %v625, %v625
  %629 = vst [vmem:[%s4] sm:$0xf] %v628
  %s630 = scalar_lea.vmem %s0, 4
  %v631 = vld [vmem:[%s630] sm:$0xf]
  %v632 = vld [vmem:[#allocation2] sm:$0xff]
  %v633 = vld [vmem:[#allocation3] sm:$0xff]
  %v634 = vpack.c.bf16 %v632, %v632
  %635 = vmatprep.subr.bf16.mxu0 %v190
  %636 = vmatpush1.bf16.msra.mxu0 %v189
  %637 = vmatprep.subr.bf16.mxu0 %v194
  %638 = vmatpush1.bf16.msra.mxu0 %v193
  %639 = vmatprep.subr.bf16.mxu0 %v198
  %640 = vmatpush1.bf16.msra.mxu0 %v197
  %641 = vmatprep.subr.bf16.mxu0 %v202
  %642 = vmatpush1.bf16.msra.mxu0 %v201
  %643 = vmatprep.subr.bf16.mxu0 %v206
  %644 = vmatpush1.bf16.msra.mxu0 %v205
  %645 = vmatprep.subr.bf16.mxu0 %v210
  %646 = vmatpush1.bf16.msra.mxu0 %v209
  %647 = vmatprep.subr.bf16.mxu0 %v214
  %648 = vmatpush1.bf16.msra.mxu0 %v213
  %649 = vmatprep.subr.bf16.mxu0 %v218
  %650 = vmatpush1.bf16.msra.mxu0 %v217
  %651 = vmatprep.subr.bf16.mxu0 0
  %652 = vmatpush1.bf16.msra.mxu0 0
  %653 = vmatprep.subr.bf16.mxu0 0
  %654 = vmatpush1.bf16.msra.mxu0 0
  %655 = vmatprep.subr.bf16.mxu0 0
  %656 = vmatpush1.bf16.msra.mxu0 0
  %657 = vmatprep.subr.bf16.mxu0 0
  %658 = vmatpush1.bf16.msra.mxu0 0
  %659 = vmatprep.subr.bf16.mxu0 0
  %660 = vmatpush1.bf16.msra.mxu0 0
  %661 = vmatprep.subr.bf16.mxu0 0
  %662 = vmatpush1.bf16.msra.mxu0 0
  %663 = vmatprep.subr.bf16.mxu0 0
  %664 = vmatpush1.bf16.msra.mxu0 0
  %665 = vmatprep.subr.bf16.mxu0 0
  %666 = vmatpush1.bf16.msra.mxu0 0
  %667 = vmatprep.mubr.bf16.mxu0 0
  %668 = vmatmul.mubr.bf16.gmra.mrb[0].mxu0 %v634
  %v669 = vpop.f32.mrb[0].mxu0
  %v670 = vadd.f32 0.0, %v669
  %v671 = vpop.f32.mrb[0].mxu0
  %v672 = vadd.f32 0.0, %v671
  %v673 = vpop.f32.mrb[0].mxu0
  %v674 = vpop.f32.mrb[0].mxu0
  %675 = vdwg.mxu0
  %676 = vmatprep.subr.bf16.mxu0 %v192
  %677 = vmatpush1.bf16.msra.mxu0 %v191
  %678 = vmatprep.subr.bf16.mxu0 %v196
  %679 = vmatpush1.bf16.msra.mxu0 %v195
  %680 = vmatprep.subr.bf16.mxu0 %v200
  %681 = vmatpush1.bf16.msra.mxu0 %v199
  %682 = vmatprep.subr.bf16.mxu0 %v204
  %683 = vmatpush1.bf16.msra.mxu0 %v203
  %684 = vmatprep.subr.bf16.mxu0 %v208
  %685 = vmatpush1.bf16.msra.mxu0 %v207
  %686 = vmatprep.subr.bf16.mxu0 %v212
  %687 = vmatpush1.bf16.msra.mxu0 %v211
  %688 = vmatprep.subr.bf16.mxu0 %v216
  %689 = vmatpush1.bf16.msra.mxu0 %v215
  %690 = vmatprep.subr.bf16.mxu0 %v220
  %691 = vmatpush1.bf16.msra.mxu0 %v219
  %692 = vmatprep.subr.bf16.mxu0 0
  %693 = vmatpush1.bf16.msra.mxu0 0
  %694 = vmatprep.subr.bf16.mxu0 0
  %695 = vmatpush1.bf16.msra.mxu0 0
  %696 = vmatprep.subr.bf16.mxu0 0
  %697 = vmatpush1.bf16.msra.mxu0 0
  %698 = vmatprep.subr.bf16.mxu0 0
  %699 = vmatpush1.bf16.msra.mxu0 0
  %700 = vmatprep.subr.bf16.mxu0 0
  %701 = vmatpush1.bf16.msra.mxu0 0
  %702 = vmatprep.subr.bf16.mxu0 0
  %703 = vmatpush1.bf16.msra.mxu0 0
  %704 = vmatprep.subr.bf16.mxu0 0
  %705 = vmatpush1.bf16.msra.mxu0 0
  %706 = vmatprep.subr.bf16.mxu0 0
  %707 = vmatpush1.bf16.msra.mxu0 0
  %708 = vmatprep.mubr.bf16.mxu0 0
  %709 = vmatmul.mubr.bf16.gmra.mrb[0].mxu0 %v634
  %v710 = vpop.f32.mrb[0].mxu0
  %v711 = vadd.f32 0.0, %v710
  %v712 = vpop.f32.mrb[0].mxu0
  %v713 = vadd.f32 0.0, %v712
  %v714 = vpop.f32.mrb[0].mxu0
  %v715 = vpop.f32.mrb[0].mxu0
  %716 = vdwg.mxu0
  %717 = vmatprep.subr.bf16.mxu0 %v432
  %718 = vmatpush1.bf16.msra.mxu0 %v431
  %719 = vmatprep.subr.bf16.mxu0 %v436
  %720 = vmatpush1.bf16.msra.mxu0 %v435
  %721 = vmatprep.subr.bf16.mxu0 %v440
  %722 = vmatpush1.bf16.msra.mxu0 %v439
  %723 = vmatprep.subr.bf16.mxu0 %v444
  %724 = vmatpush1.bf16.msra.mxu0 %v443
  %725 = vmatprep.subr.bf16.mxu0 %v448
  %726 = vmatpush1.bf16.msra.mxu0 %v447
  %727 = vmatprep.subr.bf16.mxu0 %v452
  %728 = vmatpush1.bf16.msra.mxu0 %v451
  %729 = vmatprep.subr.bf16.mxu0 %v456
  %730 = vmatpush1.bf16.msra.mxu0 %v455
  %731 = vmatprep.subr.bf16.mxu0 %v460
  %732 = vmatpush1.bf16.msra.mxu0 %v459
  %733 = vmatprep.subr.bf16.mxu0 0
  %734 = vmatpush1.bf16.msra.mxu0 0
  %735 = vmatprep.subr.bf16.mxu0 0
  %736 = vmatpush1.bf16.msra.mxu0 0
  %737 = vmatprep.subr.bf16.mxu0 0
  %738 = vmatpush1.bf16.msra.mxu0 0
  %739 = vmatprep.subr.bf16.mxu0 0
  %740 = vmatpush1.bf16.msra.mxu0 0
  %741 = vmatprep.subr.bf16.mxu0 0
  %742 = vmatpush1.bf16.msra.mxu0 0
  %743 = vmatprep.subr.bf16.mxu0 0
  %744 = vmatpush1.bf16.msra.mxu0 0
  %745 = vmatprep.subr.bf16.mxu0 0
  %746 = vmatpush1.bf16.msra.mxu0 0
  %747 = vmatprep.subr.bf16.mxu0 0
  %748 = vmatpush1.bf16.msra.mxu0 0
  %749 = vmatprep.mubr.bf16.mxu0 0
  %750 = vmatmul.mubr.bf16.gmra.mrb[0].mxu0 %v631
  %v751 = vpop.f32.mrb[0].mxu0
  %v752 = vadd.f32 %v670, %v751
  %v753 = vpop.f32.mrb[0].mxu0
  %v754 = vadd.f32 %v672, %v753
  %v755 = vpop.f32.mrb[0].mxu0
  %v756 = vpop.f32.mrb[0].mxu0
  %757 = vdwg.mxu0
  %758 = vmatprep.subr.bf16.mxu0 %v434
  %759 = vmatpush1.bf16.msra.mxu0 %v433
  %760 = vmatprep.subr.bf16.mxu0 %v438
  %761 = vmatpush1.bf16.msra.mxu0 %v437
  %762 = vmatprep.subr.bf16.mxu0 %v442
  %763 = vmatpush1.bf16.msra.mxu0 %v441
  %764 = vmatprep.subr.bf16.mxu0 %v446
  %765 = vmatpush1.bf16.msra.mxu0 %v445
  %766 = vmatprep.subr.bf16.mxu0 %v450
  %767 = vmatpush1.bf16.msra.mxu0 %v449
  %768 = vmatprep.subr.bf16.mxu0 %v454
  %769 = vmatpush1.bf16.msra.mxu0 %v453
  %770 = vmatprep.subr.bf16.mxu0 %v458
  %771 = vmatpush1.bf16.msra.mxu0 %v457
  %772 = vmatprep.subr.bf16.mxu0 %v462
  %773 = vmatpush1.bf16.msra.mxu0 %v461
  %774 = vmatprep.subr.bf16.mxu0 0
  %775 = vmatpush1.bf16.msra.mxu0 0
  %776 = vmatprep.subr.bf16.mxu0 0
  %777 = vmatpush1.bf16.msra.mxu0 0
  %778 = vmatprep.subr.bf16.mxu0 0
  %779 = vmatpush1.bf16.msra.mxu0 0
  %780 = vmatprep.subr.bf16.mxu0 0
  %781 = vmatpush1.bf16.msra.mxu0 0
  %782 = vmatprep.subr.bf16.mxu0 0
  %783 = vmatpush1.bf16.msra.mxu0 0
  %784 = vmatprep.subr.bf16.mxu0 0
  %785 = vmatpush1.bf16.msra.mxu0 0
  %786 = vmatprep.subr.bf16.mxu0 0
  %787 = vmatpush1.bf16.msra.mxu0 0
  %788 = vmatprep.subr.bf16.mxu0 0
  %789 = vmatpush1.bf16.msra.mxu0 0
  %790 = vmatprep.mubr.bf16.mxu0 0
  %791 = vmatmul.mubr.bf16.gmra.mrb[0].mxu0 %v631
  %v792 = vpop.f32.mrb[0].mxu0
  %v793 = vadd.f32 %v711, %v792
  %v794 = vpop.f32.mrb[0].mxu0
  %v795 = vadd.f32 %v713, %v794
  %v796 = vpop.f32.mrb[0].mxu0
  %v797 = vpop.f32.mrb[0].mxu0
  %798 = vdwg.mxu0
  %v799 = vadd.f32 %v752, %v581
  %v800 = vadd.f32 %v754, %v585
  %v801 = vadd.f32 %v793, %v589
  %v802 = vadd.f32 %v795, %v593
  %v803 = vxor.u32 %v799, 2147483648
  %v804 = vmul.f32 %v803, 1.442695
  %v805 = vpow.pop %v804
  %v806 = vadd.f32 %v805, 1.0
  %v807 = vrcp.pop %v806
  %v808 = vmul.f32 1.0, %v807
  %v809 = vxor.u32 %v800, 2147483648
  %v810 = vmul.f32 %v809, 1.442695
  %v811 = vpow.pop %v810
  %v812 = vadd.f32 %v811, 1.0
  %v813 = vrcp.pop %v812
  %v814 = vmul.f32 1.0, %v813
  %v815 = vtanh.pop %v801
  %v816 = vxor.u32 %v802, 2147483648
  %v817 = vmul.f32 %v816, 1.442695
  %v818 = vpow.pop %v817
  %v819 = vadd.f32 %v818, 1.0
  %v820 = vrcp.pop %v819
  %v821 = vmul.f32 1.0, %v820
  %v822 = vmul.f32 %v814, %v633
  %v823 = vmul.f32 %v808, %v815
  %v824 = vadd.f32 %v822, %v823
  %v825 = vtanh.pop %v824
  %v826 = vmul.f32 %v821, %v825
  %827 = vst [vmem:[#allocation3] sm:$0xff] %v824
  %828 = vst [vmem:[#allocation2] sm:$0xff] %v826
  %v829 = vpack.c.bf16 %v826, %v826
  %s830 = scalar_lea.vmem %s4, 4
  %831 = vst [vmem:[%s830] sm:$0xf] %v829
  %s832 = scalar_lea.vmem %s0, 8
  %v833 = vld [vmem:[%s832] sm:$0xf]
  %v834 = vld [vmem:[#allocation2] sm:$0xff]
  %v835 = vld [vmem:[#allocation3] sm:$0xff]
  %v836 = vpack.c.bf16 %v834, %v834
  %837 = vmatprep.subr.bf16.mxu0 %v190
  %838 = vmatpush1.bf16.msra.mxu0 %v189
  %839 = vmatprep.subr.bf16.mxu0 %v194
  %840 = vmatpush1.bf16.msra.mxu0 %v193
  %841 = vmatprep.subr.bf16.mxu0 %v198
  %842 = vmatpush1.bf16.msra.mxu0 %v197
  %843 = vmatprep.subr.bf16.mxu0 %v202
  %844 = vmatpush1.bf16.msra.mxu0 %v201
  %845 = vmatprep.subr.bf16.mxu0 %v206
  %846 = vmatpush1.bf16.msra.mxu0 %v205
  %847 = vmatprep.subr.bf16.mxu0 %v210
  %848 = vmatpush1.bf16.msra.mxu0 %v209
  %849 = vmatprep.subr.bf16.mxu0 %v214
  %850 = vmatpush1.bf16.msra.mxu0 %v213
  %851 = vmatprep.subr.bf16.mxu0 %v218
  %852 = vmatpush1.bf16.msra.mxu0 %v217
  %853 = vmatprep.subr.bf16.mxu0 0
  %854 = vmatpush1.bf16.msra.mxu0 0
  %855 = vmatprep.subr.bf16.mxu0 0
  %856 = vmatpush1.bf16.msra.mxu0 0
  %857 = vmatprep.subr.bf16.mxu0 0
  %858 = vmatpush1.bf16.msra.mxu0 0
  %859 = vmatprep.subr.bf16.mxu0 0
  %860 = vmatpush1.bf16.msra.mxu0 0
  %861 = vmatprep.subr.bf16.mxu0 0
  %862 = vmatpush1.bf16.msra.mxu0 0
  %863 = vmatprep.subr.bf16.mxu0 0
  %864 = vmatpush1.bf16.msra.mxu0 0
  %865 = vmatprep.subr.bf16.mxu0 0
  %866 = vmatpush1.bf16.msra.mxu0 0
  %867 = vmatprep.subr.bf16.mxu0 0
  %868 = vmatpush1.bf16.msra.mxu0 0
  %869 = vmatprep.mubr.bf16.mxu0 0
  %870 = vmatmul.mubr.bf16.gmra.mrb[0].mxu0 %v836
  %v871 = vpop.f32.mrb[0].mxu0
  %v872 = vadd.f32 0.0, %v871
  %v873 = vpop.f32.mrb[0].mxu0
  %v874 = vadd.f32 0.0, %v873
  %v875 = vpop.f32.mrb[0].mxu0
  %v876 = vpop.f32.mrb[0].mxu0
  %877 = vdwg.mxu0
  %878 = vmatprep.subr.bf16.mxu0 %v192
  %879 = vmatpush1.bf16.msra.mxu0 %v191
  %880 = vmatprep.subr.bf16.mxu0 %v196
  %881 = vmatpush1.bf16.msra.mxu0 %v195
  %882 = vmatprep.subr.bf16.mxu0 %v200
  %883 = vmatpush1.bf16.msra.mxu0 %v199
  %884 = vmatprep.subr.bf16.mxu0 %v204
  %885 = vmatpush1.bf16.msra.mxu0 %v203
  %886 = vmatprep.subr.bf16.mxu0 %v208
  %887 = vmatpush1.bf16.msra.mxu0 %v207
  %888 = vmatprep.subr.bf16.mxu0 %v212
  %889 = vmatpush1.bf16.msra.mxu0 %v211
  %890 = vmatprep.subr.bf16.mxu0 %v216
  %891 = vmatpush1.bf16.msra.mxu0 %v215
  %892 = vmatprep.subr.bf16.mxu0 %v220
  %893 = vmatpush1.bf16.msra.mxu0 %v219
  %894 = vmatprep.subr.bf16.mxu0 0
  %895 = vmatpush1.bf16.msra.mxu0 0
  %896 = vmatprep.subr.bf16.mxu0 0
  %897 = vmatpush1.bf16.msra.mxu0 0
  %898 = vmatprep.subr.bf16.mxu0 0
  %899 = vmatpush1.bf16.msra.mxu0 0
  %900 = vmatprep.subr.bf16.mxu0 0
  %901 = vmatpush1.bf16.msra.mxu0 0
  %902 = vmatprep.subr.bf16.mxu0 0
  %903 = vmatpush1.bf16.msra.mxu0 0
  %904 = vmatprep.subr.bf16.mxu0 0
  %905 = vmatpush1.bf16.msra.mxu0 0
  %906 = vmatprep.subr.bf16.mxu0 0
  %907 = vmatpush1.bf16.msra.mxu0 0
  %908 = vmatprep.subr.bf16.mxu0 0
  %909 = vmatpush1.bf16.msra.mxu0 0
  %910 = vmatprep.mubr.bf16.mxu0 0
  %911 = vmatmul.mubr.bf16.gmra.mrb[0].mxu0 %v836
  %v912 = vpop.f32.mrb[0].mxu0
  %v913 = vadd.f32 0.0, %v912
  %v914 = vpop.f32.mrb[0].mxu0
  %v915 = vadd.f32 0.0, %v914
  %v916 = vpop.f32.mrb[0].mxu0
  %v917 = vpop.f32.mrb[0].mxu0
  %918 = vdwg.mxu0
  %919 = vmatprep.subr.bf16.mxu0 %v432
  %920 = vmatpush1.bf16.msra.mxu0 %v431
  %921 = vmatprep.subr.bf16.mxu0 %v436
  %922 = vmatpush1.bf16.msra.mxu0 %v435
  %923 = vmatprep.subr.bf16.mxu0 %v440
  %924 = vmatpush1.bf16.msra.mxu0 %v439
  %925 = vmatprep.subr.bf16.mxu0 %v444
  %926 = vmatpush1.bf16.msra.mxu0 %v443
  %927 = vmatprep.subr.bf16.mxu0 %v448
  %928 = vmatpush1.bf16.msra.mxu0 %v447
  %929 = vmatprep.subr.bf16.mxu0 %v452
  %930 = vmatpush1.bf16.msra.mxu0 %v451
  %931 = vmatprep.subr.bf16.mxu0 %v456
  %932 = vmatpush1.bf16.msra.mxu0 %v455
  %933 = vmatprep.subr.bf16.mxu0 %v460
  %934 = vmatpush1.bf16.msra.mxu0 %v459
  %935 = vmatprep.subr.bf16.mxu0 0
  %936 = vmatpush1.bf16.msra.mxu0 0
  %937 = vmatprep.subr.bf16.mxu0 0
  %938 = vmatpush1.bf16.msra.mxu0 0
  %939 = vmatprep.subr.bf16.mxu0 0
  %940 = vmatpush1.bf16.msra.mxu0 0
  %941 = vmatprep.subr.bf16.mxu0 0
  %942 = vmatpush1.bf16.msra.mxu0 0
  %943 = vmatprep.subr.bf16.mxu0 0
  %944 = vmatpush1.bf16.msra.mxu0 0
  %945 = vmatprep.subr.bf16.mxu0 0
  %946 = vmatpush1.bf16.msra.mxu0 0
  %947 = vmatprep.subr.bf16.mxu0 0
  %948 = vmatpush1.bf16.msra.mxu0 0
  %949 = vmatprep.subr.bf16.mxu0 0
  %950 = vmatpush1.bf16.msra.mxu0 0
  %951 = vmatprep.mubr.bf16.mxu0 0
  %952 = vmatmul.mubr.bf16.gmra.mrb[0].mxu0 %v833
  %v953 = vpop.f32.mrb[0].mxu0
  %v954 = vadd.f32 %v872, %v953
  %v955 = vpop.f32.mrb[0].mxu0
  %v956 = vadd.f32 %v874, %v955
  %v957 = vpop.f32.mrb[0].mxu0
  %v958 = vpop.f32.mrb[0].mxu0
  %959 = vdwg.mxu0
  %960 = vmatprep.subr.bf16.mxu0 %v434
  %961 = vmatpush1.bf16.msra.mxu0 %v433
  %962 = vmatprep.subr.bf16.mxu0 %v438
  %963 = vmatpush1.bf16.msra.mxu0 %v437
  %964 = vmatprep.subr.bf16.mxu0 %v442
  %965 = vmatpush1.bf16.msra.mxu0 %v441
  %966 = vmatprep.subr.bf16.mxu0 %v446
  %967 = vmatpush1.bf16.msra.mxu0 %v445
  %968 = vmatprep.subr.bf16.mxu0 %v450
  %969 = vmatpush1.bf16.msra.mxu0 %v449
  %970 = vmatprep.subr.bf16.mxu0 %v454
  %971 = vmatpush1.bf16.msra.mxu0 %v453
  %972 = vmatprep.subr.bf16.mxu0 %v458
  %973 = vmatpush1.bf16.msra.mxu0 %v457
  %974 = vmatprep.subr.bf16.mxu0 %v462
  %975 = vmatpush1.bf16.msra.mxu0 %v461
  %976 = vmatprep.subr.bf16.mxu0 0
  %977 = vmatpush1.bf16.msra.mxu0 0
  %978 = vmatprep.subr.bf16.mxu0 0
  %979 = vmatpush1.bf16.msra.mxu0 0
  %980 = vmatprep.subr.bf16.mxu0 0
  %981 = vmatpush1.bf16.msra.mxu0 0
  %982 = vmatprep.subr.bf16.mxu0 0
  %983 = vmatpush1.bf16.msra.mxu0 0
  %984 = vmatprep.subr.bf16.mxu0 0
  %985 = vmatpush1.bf16.msra.mxu0 0
  %986 = vmatprep.subr.bf16.mxu0 0
  %987 = vmatpush1.bf16.msra.mxu0 0
  %988 = vmatprep.subr.bf16.mxu0 0
  %989 = vmatpush1.bf16.msra.mxu0 0
  %990 = vmatprep.subr.bf16.mxu0 0
  %991 = vmatpush1.bf16.msra.mxu0 0
  %992 = vmatprep.mubr.bf16.mxu0 0
  %993 = vmatmul.mubr.bf16.gmra.mrb[0].mxu0 %v833
  %v994 = vpop.f32.mrb[0].mxu0
  %v995 = vadd.f32 %v913, %v994
  %v996 = vpop.f32.mrb[0].mxu0
  %v997 = vadd.f32 %v915, %v996
  %v998 = vpop.f32.mrb[0].mxu0
  %v999 = vpop.f32.mrb[0].mxu0
  %1000 = vdwg.mxu0
  %v1001 = vadd.f32 %v954, %v581
  %v1002 = vadd.f32 %v956, %v585
  %v1003 = vadd.f32 %v995, %v589
  %v1004 = vadd.f32 %v997, %v593
  %v1005 = vxor.u32 %v1001, 2147483648
  %v1006 = vmul.f32 %v1005, 1.442695
  %v1007 = vpow.pop %v1006
  %v1008 = vadd.f32 %v1007, 1.0
  %v1009 = vrcp.pop %v1008
  %v1010 = vmul.f32 1.0, %v1009
  %v1011 = vxor.u32 %v1002, 2147483648
  %v1012 = vmul.f32 %v1011, 1.442695
  %v1013 = vpow.pop %v1012
  %v1014 = vadd.f32 %v1013, 1.0
  %v1015 = vrcp.pop %v1014
  %v1016 = vmul.f32 1.0, %v1015
  %v1017 = vtanh.pop %v1003
  %v1018 = vxor.u32 %v1004, 2147483648
  %v1019 = vmul.f32 %v1018, 1.442695
  %v1020 = vpow.pop %v1019
  %v1021 = vadd.f32 %v1020, 1.0
  %v1022 = vrcp.pop %v1021
  %v1023 = vmul.f32 1.0, %v1022
  %v1024 = vmul.f32 %v1016, %v835
  %v1025 = vmul.f32 %v1010, %v1017
  %v1026 = vadd.f32 %v1024, %v1025
  %v1027 = vtanh.pop %v1026
  %v1028 = vmul.f32 %v1023, %v1027
  %1029 = vst [vmem:[#allocation3] sm:$0xff] %v1026
  %1030 = vst [vmem:[#allocation2] sm:$0xff] %v1028
  %v1031 = vpack.c.bf16 %v1028, %v1028
  %s1032 = scalar_lea.vmem %s4, 8
  %1033 = vst [vmem:[%s1032] sm:$0xf] %v1031
  %s1034 = scalar_lea.vmem %s0, 12
  %v1035 = vld [vmem:[%s1034] sm:$0xf]
  %v1036 = vld [vmem:[#allocation2] sm:$0xff]
  %v1037 = vld [vmem:[#allocation3] sm:$0xff]
  %v1038 = vpack.c.bf16 %v1036, %v1036
  %1039 = vmatprep.subr.bf16.mxu0 %v190
  %1040 = vmatpush1.bf16.msra.mxu0 %v189
  %1041 = vmatprep.subr.bf16.mxu0 %v194
  %1042 = vmatpush1.bf16.msra.mxu0 %v193
  %1043 = vmatprep.subr.bf16.mxu0 %v198
  %1044 = vmatpush1.bf16.msra.mxu0 %v197
  %1045 = vmatprep.subr.bf16.mxu0 %v202
  %1046 = vmatpush1.bf16.msra.mxu0 %v201
  %1047 = vmatprep.subr.bf16.mxu0 %v206
  %1048 = vmatpush1.bf16.msra.mxu0 %v205
  %1049 = vmatprep.subr.bf16.mxu0 %v210
  %1050 = vmatpush1.bf16.msra.mxu0 %v209
  %1051 = vmatprep.subr.bf16.mxu0 %v214
  %1052 = vmatpush1.bf16.msra.mxu0 %v213
  %1053 = vmatprep.subr.bf16.mxu0 %v218
  %1054 = vmatpush1.bf16.msra.mxu0 %v217
  %1055 = vmatprep.subr.bf16.mxu0 0
  %1056 = vmatpush1.bf16.msra.mxu0 0
  %1057 = vmatprep.subr.bf16.mxu0 0
  %1058 = vmatpush1.bf16.msra.mxu0 0
  %1059 = vmatprep.subr.bf16.mxu0 0
  %1060 = vmatpush1.bf16.msra.mxu0 0
  %1061 = vmatprep.subr.bf16.mxu0 0
  %1062 = vmatpush1.bf16.msra.mxu0 0
  %1063 = vmatprep.subr.bf16.mxu0 0
  %1064 = vmatpush1.bf16.msra.mxu0 0
  %1065 = vmatprep.subr.bf16.mxu0 0
  %1066 = vmatpush1.bf16.msra.mxu0 0
  %1067 = vmatprep.subr.bf16.mxu0 0
  %1068 = vmatpush1.bf16.msra.mxu0 0
  %1069 = vmatprep.subr.bf16.mxu0 0
  %1070 = vmatpush1.bf16.msra.mxu0 0
  %1071 = vmatprep.mubr.bf16.mxu0 0
  %1072 = vmatmul.mubr.bf16.gmra.mrb[0].mxu0 %v1038
  %v1073 = vpop.f32.mrb[0].mxu0
  %v1074 = vadd.f32 0.0, %v1073
  %v1075 = vpop.f32.mrb[0].mxu0
  %v1076 = vadd.f32 0.0, %v1075
  %v1077 = vpop.f32.mrb[0].mxu0
  %v1078 = vpop.f32.mrb[0].mxu0
  %1079 = vdwg.mxu0
  %1080 = vmatprep.subr.bf16.mxu0 %v192
  %1081 = vmatpush1.bf16.msra.mxu0 %v191
  %1082 = vmatprep.subr.bf16.mxu0 %v196
  %1083 = vmatpush1.bf16.msra.mxu0 %v195
  %1084 = vmatprep.subr.bf16.mxu0 %v200
  %1085 = vmatpush1.bf16.msra.mxu0 %v199
  %1086 = vmatprep.subr.bf16.mxu0 %v204
  %1087 = vmatpush1.bf16.msra.mxu0 %v203
  %1088 = vmatprep.subr.bf16.mxu0 %v208
  %1089 = vmatpush1.bf16.msra.mxu0 %v207
  %1090 = vmatprep.subr.bf16.mxu0 %v212
  %1091 = vmatpush1.bf16.msra.mxu0 %v211
  %1092 = vmatprep.subr.bf16.mxu0 %v216
  %1093 = vmatpush1.bf16.msra.mxu0 %v215
  %1094 = vmatprep.subr.bf16.mxu0 %v220
  %1095 = vmatpush1.bf16.msra.mxu0 %v219
  %1096 = vmatprep.subr.bf16.mxu0 0
  %1097 = vmatpush1.bf16.msra.mxu0 0
  %1098 = vmatprep.subr.bf16.mxu0 0
  %1099 = vmatpush1.bf16.msra.mxu0 0
  %1100 = vmatprep.subr.bf16.mxu0 0
  %1101 = vmatpush1.bf16.msra.mxu0 0
  %1102 = vmatprep.subr.bf16.mxu0 0
  %1103 = vmatpush1.bf16.msra.mxu0 0
  %1104 = vmatprep.subr.bf16.mxu0 0
  %1105 = vmatpush1.bf16.msra.mxu0 0
  %1106 = vmatprep.subr.bf16.mxu0 0
  %1107 = vmatpush1.bf16.msra.mxu0 0
  %1108 = vmatprep.subr.bf16.mxu0 0
  %1109 = vmatpush1.bf16.msra.mxu0 0
  %1110 = vmatprep.subr.bf16.mxu0 0
  %1111 = vmatpush1.bf16.msra.mxu0 0
  %1112 = vmatprep.mubr.bf16.mxu0 0
  %1113 = vmatmul.mubr.bf16.gmra.mrb[0].mxu0 %v1038
  %v1114 = vpop.f32.mrb[0].mxu0
  %v1115 = vadd.f32 0.0, %v1114
  %v1116 = vpop.f32.mrb[0].mxu0
  %v1117 = vadd.f32 0.0, %v1116
  %v1118 = vpop.f32.mrb[0].mxu0
  %v1119 = vpop.f32.mrb[0].mxu0
  %1120 = vdwg.mxu0
  %1121 = vmatprep.subr.bf16.mxu0 %v432
  %1122 = vmatpush1.bf16.msra.mxu0 %v431
  %1123 = vmatprep.subr.bf16.mxu0 %v436
  %1124 = vmatpush1.bf16.msra.mxu0 %v435
  %1125 = vmatprep.subr.bf16.mxu0 %v440
  %1126 = vmatpush1.bf16.msra.mxu0 %v439
  %1127 = vmatprep.subr.bf16.mxu0 %v444
  %1128 = vmatpush1.bf16.msra.mxu0 %v443
  %1129 = vmatprep.subr.bf16.mxu0 %v448
  %1130 = vmatpush1.bf16.msra.mxu0 %v447
  %1131 = vmatprep.subr.bf16.mxu0 %v452
  %1132 = vmatpush1.bf16.msra.mxu0 %v451
  %1133 = vmatprep.subr.bf16.mxu0 %v456
  %1134 = vmatpush1.bf16.msra.mxu0 %v455
  %1135 = vmatprep.subr.bf16.mxu0 %v460
  %1136 = vmatpush1.bf16.msra.mxu0 %v459
  %1137 = vmatprep.subr.bf16.mxu0 0
  %1138 = vmatpush1.bf16.msra.mxu0 0
  %1139 = vmatprep.subr.bf16.mxu0 0
  %1140 = vmatpush1.bf16.msra.mxu0 0
  %1141 = vmatprep.subr.bf16.mxu0 0
  %1142 = vmatpush1.bf16.msra.mxu0 0
  %1143 = vmatprep.subr.bf16.mxu0 0
  %1144 = vmatpush1.bf16.msra.mxu0 0
  %1145 = vmatprep.subr.bf16.mxu0 0
  %1146 = vmatpush1.bf16.msra.mxu0 0
  %1147 = vmatprep.subr.bf16.mxu0 0
  %1148 = vmatpush1.bf16.msra.mxu0 0
  %1149 = vmatprep.subr.bf16.mxu0 0
  %1150 = vmatpush1.bf16.msra.mxu0 0
  %1151 = vmatprep.subr.bf16.mxu0 0
  %1152 = vmatpush1.bf16.msra.mxu0 0
  %1153 = vmatprep.mubr.bf16.mxu0 0
  %1154 = vmatmul.mubr.bf16.gmra.mrb[0].mxu0 %v1035
  %v1155 = vpop.f32.mrb[0].mxu0
  %v1156 = vadd.f32 %v1074, %v1155
  %v1157 = vpop.f32.mrb[0].mxu0
  %v1158 = vadd.f32 %v1076, %v1157
  %v1159 = vpop.f32.mrb[0].mxu0
  %v1160 = vpop.f32.mrb[0].mxu0
  %1161 = vdwg.mxu0
  %1162 = vmatprep.subr.bf16.mxu0 %v434
  %1163 = vmatpush1.bf16.msra.mxu0 %v433
  %1164 = vmatprep.subr.bf16.mxu0 %v438
  %1165 = vmatpush1.bf16.msra.mxu0 %v437
  %1166 = vmatprep.subr.bf16.mxu0 %v442
  %1167 = vmatpush1.bf16.msra.mxu0 %v441
  %1168 = vmatprep.subr.bf16.mxu0 %v446
  %1169 = vmatpush1.bf16.msra.mxu0 %v445
  %1170 = vmatprep.subr.bf16.mxu0 %v450
  %1171 = vmatpush1.bf16.msra.mxu0 %v449
  %1172 = vmatprep.subr.bf16.mxu0 %v454
  %1173 = vmatpush1.bf16.msra.mxu0 %v453
  %1174 = vmatprep.subr.bf16.mxu0 %v458
  %1175 = vmatpush1.bf16.msra.mxu0 %v457
  %1176 = vmatprep.subr.bf16.mxu0 %v462
  %1177 = vmatpush1.bf16.msra.mxu0 %v461
  %1178 = vmatprep.subr.bf16.mxu0 0
  %1179 = vmatpush1.bf16.msra.mxu0 0
  %1180 = vmatprep.subr.bf16.mxu0 0
  %1181 = vmatpush1.bf16.msra.mxu0 0
  %1182 = vmatprep.subr.bf16.mxu0 0
  %1183 = vmatpush1.bf16.msra.mxu0 0
  %1184 = vmatprep.subr.bf16.mxu0 0
  %1185 = vmatpush1.bf16.msra.mxu0 0
  %1186 = vmatprep.subr.bf16.mxu0 0
  %1187 = vmatpush1.bf16.msra.mxu0 0
  %1188 = vmatprep.subr.bf16.mxu0 0
  %1189 = vmatpush1.bf16.msra.mxu0 0
  %1190 = vmatprep.subr.bf16.mxu0 0
  %1191 = vmatpush1.bf16.msra.mxu0 0
  %1192 = vmatprep.subr.bf16.mxu0 0
  %1193 = vmatpush1.bf16.msra.mxu0 0
  %1194 = vmatprep.mubr.bf16.mxu0 0
  %1195 = vmatmul.mubr.bf16.gmra.mrb[0].mxu0 %v1035
  %v1196 = vpop.f32.mrb[0].mxu0
  %v1197 = vadd.f32 %v1115, %v1196
  %v1198 = vpop.f32.mrb[0].mxu0
  %v1199 = vadd.f32 %v1117, %v1198
  %v1200 = vpop.f32.mrb[0].mxu0
  %v1201 = vpop.f32.mrb[0].mxu0
  %1202 = vdwg.mxu0
  %v1203 = vadd.f32 %v1156, %v581
  %v1204 = vadd.f32 %v1158, %v585
  %v1205 = vadd.f32 %v1197, %v589
  %v1206 = vadd.f32 %v1199, %v593
  %v1207 = vxor.u32 %v1203, 2147483648
  %v1208 = vmul.f32 %v1207, 1.442695
  %v1209 = vpow.pop %v1208
  %v1210 = vadd.f32 %v1209, 1.0
  %v1211 = vrcp.pop %v1210
  %v1212 = vmul.f32 1.0, %v1211
  %v1213 = vxor.u32 %v1204, 2147483648
  %v1214 = vmul.f32 %v1213, 1.442695
  %v1215 = vpow.pop %v1214
  %v1216 = vadd.f32 %v1215, 1.0
  %v1217 = vrcp.pop %v1216
  %v1218 = vmul.f32 1.0, %v1217
  %v1219 = vtanh.pop %v1205
  %v1220 = vxor.u32 %v1206, 2147483648
  %v1221 = vmul.f32 %v1220, 1.442695
  %v1222 = vpow.pop %v1221
  %v1223 = vadd.f32 %v1222, 1.0
  %v1224 = vrcp.pop %v1223
  %v1225 = vmul.f32 1.0, %v1224
  %v1226 = vmul.f32 %v1218, %v1037
  %v1227 = vmul.f32 %v1212, %v1219
  %v1228 = vadd.f32 %v1226, %v1227
  %v1229 = vtanh.pop %v1228
  %v1230 = vmul.f32 %v1225, %v1229
  %1231 = vst [vmem:[#allocation3] sm:$0xff] %v1228
  %1232 = vst [vmem:[#allocation2] sm:$0xff] %v1230
  %v1233 = vpack.c.bf16 %v1230, %v1230
  %s1234 = scalar_lea.vmem %s4, 12
  %1235 = vst [vmem:[%s1234] sm:$0xf] %v1233
  %s1236 = scalar_lea.vmem %s0, 16
  %v1237 = vld [vmem:[%s1236] sm:$0xf]
  %v1238 = vld [vmem:[#allocation2] sm:$0xff]
  %v1239 = vld [vmem:[#allocation3] sm:$0xff]
  %v1240 = vpack.c.bf16 %v1238, %v1238
  %1241 = vmatprep.subr.bf16.mxu0 %v190
  %1242 = vmatpush1.bf16.msra.mxu0 %v189
  %1243 = vmatprep.subr.bf16.mxu0 %v194
  %1244 = vmatpush1.bf16.msra.mxu0 %v193
  %1245 = vmatprep.subr.bf16.mxu0 %v198
  %1246 = vmatpush1.bf16.msra.mxu0 %v197
  %1247 = vmatprep.subr.bf16.mxu0 %v202
  %1248 = vmatpush1.bf16.msra.mxu0 %v201
  %1249 = vmatprep.subr.bf16.mxu0 %v206
  %1250 = vmatpush1.bf16.msra.mxu0 %v205
  %1251 = vmatprep.subr.bf16.mxu0 %v210
  %1252 = vmatpush1.bf16.msra.mxu0 %v209
  %1253 = vmatprep.subr.bf16.mxu0 %v214
  %1254 = vmatpush1.bf16.msra.mxu0 %v213
  %1255 = vmatprep.subr.bf16.mxu0 %v218
  %1256 = vmatpush1.bf16.msra.mxu0 %v217
  %1257 = vmatprep.subr.bf16.mxu0 0
  %1258 = vmatpush1.bf16.msra.mxu0 0
  %1259 = vmatprep.subr.bf16.mxu0 0
  %1260 = vmatpush1.bf16.msra.mxu0 0
  %1261 = vmatprep.subr.bf16.mxu0 0
  %1262 = vmatpush1.bf16.msra.mxu0 0
  %1263 = vmatprep.subr.bf16.mxu0 0
  %1264 = vmatpush1.bf16.msra.mxu0 0
  %1265 = vmatprep.subr.bf16.mxu0 0
  %1266 = vmatpush1.bf16.msra.mxu0 0
  %1267 = vmatprep.subr.bf16.mxu0 0
  %1268 = vmatpush1.bf16.msra.mxu0 0
  %1269 = vmatprep.subr.bf16.mxu0 0
  %1270 = vmatpush1.bf16.msra.mxu0 0
  %1271 = vmatprep.subr.bf16.mxu0 0
  %1272 = vmatpush1.bf16.msra.mxu0 0
  %1273 = vmatprep.mubr.bf16.mxu0 0
  %1274 = vmatmul.mubr.bf16.gmra.mrb[0].mxu0 %v1240
  %v1275 = vpop.f32.mrb[0].mxu0
  %v1276 = vadd.f32 0.0, %v1275
  %v1277 = vpop.f32.mrb[0].mxu0
  %v1278 = vadd.f32 0.0, %v1277
  %v1279 = vpop.f32.mrb[0].mxu0
  %v1280 = vpop.f32.mrb[0].mxu0
  %1281 = vdwg.mxu0
  %1282 = vmatprep.subr.bf16.mxu0 %v192
  %1283 = vmatpush1.bf16.msra.mxu0 %v191
  %1284 = vmatprep.subr.bf16.mxu0 %v196
  %1285 = vmatpush1.bf16.msra.mxu0 %v195
  %1286 = vmatprep.subr.bf16.mxu0 %v200
  %1287 = vmatpush1.bf16.msra.mxu0 %v199
  %1288 = vmatprep.subr.bf16.mxu0 %v204
  %1289 = vmatpush1.bf16.msra.mxu0 %v203
  %1290 = vmatprep.subr.bf16.mxu0 %v208
  %1291 = vmatpush1.bf16.msra.mxu0 %v207
  %1292 = vmatprep.subr.bf16.mxu0 %v212
  %1293 = vmatpush1.bf16.msra.mxu0 %v211
  %1294 = vmatprep.subr.bf16.mxu0 %v216
  %1295 = vmatpush1.bf16.msra.mxu0 %v215
  %1296 = vmatprep.subr.bf16.mxu0 %v220
  %1297 = vmatpush1.bf16.msra.mxu0 %v219
  %1298 = vmatprep.subr.bf16.mxu0 0
  %1299 = vmatpush1.bf16.msra.mxu0 0
  %1300 = vmatprep.subr.bf16.mxu0 0
  %1301 = vmatpush1.bf16.msra.mxu0 0
  %1302 = vmatprep.subr.bf16.mxu0 0
  %1303 = vmatpush1.bf16.msra.mxu0 0
  %1304 = vmatprep.subr.bf16.mxu0 0
  %1305 = vmatpush1.bf16.msra.mxu0 0
  %1306 = vmatprep.subr.bf16.mxu0 0
  %1307 = vmatpush1.bf16.msra.mxu0 0
  %1308 = vmatprep.subr.bf16.mxu0 0
  %1309 = vmatpush1.bf16.msra.mxu0 0
  %1310 = vmatprep.subr.bf16.mxu0 0
  %1311 = vmatpush1.bf16.msra.mxu0 0
  %1312 = vmatprep.subr.bf16.mxu0 0
  %1313 = vmatpush1.bf16.msra.mxu0 0
  %1314 = vmatprep.mubr.bf16.mxu0 0
  %1315 = vmatmul.mubr.bf16.gmra.mrb[0].mxu0 %v1240
  %v1316 = vpop.f32.mrb[0].mxu0
  %v1317 = vadd.f32 0.0, %v1316
  %v1318 = vpop.f32.mrb[0].mxu0
  %v1319 = vadd.f32 0.0, %v1318
  %v1320 = vpop.f32.mrb[0].mxu0
  %v1321 = vpop.f32.mrb[0].mxu0
  %1322 = vdwg.mxu0
  %1323 = vmatprep.subr.bf16.mxu0 %v432
  %1324 = vmatpush1.bf16.msra.mxu0 %v431
  %1325 = vmatprep.subr.bf16.mxu0 %v436
  %1326 = vmatpush1.bf16.msra.mxu0 %v435
  %1327 = vmatprep.subr.bf16.mxu0 %v440
  %1328 = vmatpush1.bf16.msra.mxu0 %v439
  %1329 = vmatprep.subr.bf16.mxu0 %v444
  %1330 = vmatpush1.bf16.msra.mxu0 %v443
  %1331 = vmatprep.subr.bf16.mxu0 %v448
  %1332 = vmatpush1.bf16.msra.mxu0 %v447
  %1333 = vmatprep.subr.bf16.mxu0 %v452
  %1334 = vmatpush1.bf16.msra.mxu0 %v451
  %1335 = vmatprep.subr.bf16.mxu0 %v456
  %1336 = vmatpush1.bf16.msra.mxu0 %v455
  %1337 = vmatprep.subr.bf16.mxu0 %v460
  %1338 = vmatpush1.bf16.msra.mxu0 %v459
  %1339 = vmatprep.subr.bf16.mxu0 0
  %1340 = vmatpush1.bf16.msra.mxu0 0
  %1341 = vmatprep.subr.bf16.mxu0 0
  %1342 = vmatpush1.bf16.msra.mxu0 0
  %1343 = vmatprep.subr.bf16.mxu0 0
  %1344 = vmatpush1.bf16.msra.mxu0 0
  %1345 = vmatprep.subr.bf16.mxu0 0
  %1346 = vmatpush1.bf16.msra.mxu0 0
  %1347 = vmatprep.subr.bf16.mxu0 0
  %1348 = vmatpush1.bf16.msra.mxu0 0
  %1349 = vmatprep.subr.bf16.mxu0 0
  %1350 = vmatpush1.bf16.msra.mxu0 0
  %1351 = vmatprep.subr.bf16.mxu0 0
  %1352 = vmatpush1.bf16.msra.mxu0 0
  %1353 = vmatprep.subr.bf16.mxu0 0
  %1354 = vmatpush1.bf16.msra.mxu0 0
  %1355 = vmatprep.mubr.bf16.mxu0 0
  %1356 = vmatmul.mubr.bf16.gmra.mrb[0].mxu0 %v1237
  %v1357 = vpop.f32.mrb[0].mxu0
  %v1358 = vadd.f32 %v1276, %v1357
  %v1359 = vpop.f32.mrb[0].mxu0
  %v1360 = vadd.f32 %v1278, %v1359
  %v1361 = vpop.f32.mrb[0].mxu0
  %v1362 = vpop.f32.mrb[0].mxu0
  %1363 = vdwg.mxu0
  %1364 = vmatprep.subr.bf16.mxu0 %v434
  %1365 = vmatpush1.bf16.msra.mxu0 %v433
  %1366 = vmatprep.subr.bf16.mxu0 %v438
  %1367 = vmatpush1.bf16.msra.mxu0 %v437
  %1368 = vmatprep.subr.bf16.mxu0 %v442
  %1369 = vmatpush1.bf16.msra.mxu0 %v441
  %1370 = vmatprep.subr.bf16.mxu0 %v446
  %1371 = vmatpush1.bf16.msra.mxu0 %v445
  %1372 = vmatprep.subr.bf16.mxu0 %v450
  %1373 = vmatpush1.bf16.msra.mxu0 %v449
  %1374 = vmatprep.subr.bf16.mxu0 %v454
  %1375 = vmatpush1.bf16.msra.mxu0 %v453
  %1376 = vmatprep.subr.bf16.mxu0 %v458
  %1377 = vmatpush1.bf16.msra.mxu0 %v457
  %1378 = vmatprep.subr.bf16.mxu0 %v462
  %1379 = vmatpush1.bf16.msra.mxu0 %v461
  %1380 = vmatprep.subr.bf16.mxu0 0
  %1381 = vmatpush1.bf16.msra.mxu0 0
  %1382 = vmatprep.subr.bf16.mxu0 0
  %1383 = vmatpush1.bf16.msra.mxu0 0
  %1384 = vmatprep.subr.bf16.mxu0 0
  %1385 = vmatpush1.bf16.msra.mxu0 0
  %1386 = vmatprep.subr.bf16.mxu0 0
  %1387 = vmatpush1.bf16.msra.mxu0 0
  %1388 = vmatprep.subr.bf16.mxu0 0
  %1389 = vmatpush1.bf16.msra.mxu0 0
  %1390 = vmatprep.subr.bf16.mxu0 0
  %1391 = vmatpush1.bf16.msra.mxu0 0
  %1392 = vmatprep.subr.bf16.mxu0 0
  %1393 = vmatpush1.bf16.msra.mxu0 0
  %1394 = vmatprep.subr.bf16.mxu0 0
  %1395 = vmatpush1.bf16.msra.mxu0 0
  %1396 = vmatprep.mubr.bf16.mxu0 0
  %1397 = vmatmul.mubr.bf16.gmra.mrb[0].mxu0 %v1237
  %v1398 = vpop.f32.mrb[0].mxu0
  %v1399 = vadd.f32 %v1317, %v1398
  %v1400 = vpop.f32.mrb[0].mxu0
  %v1401 = vadd.f32 %v1319, %v1400
  %v1402 = vpop.f32.mrb[0].mxu0
  %v1403 = vpop.f32.mrb[0].mxu0
  %1404 = vdwg.mxu0
  %v1405 = vadd.f32 %v1358, %v581
  %v1406 = vadd.f32 %v1360, %v585
  %v1407 = vadd.f32 %v1399, %v589
  %v1408 = vadd.f32 %v1401, %v593
  %v1409 = vxor.u32 %v1405, 2147483648
  %v1410 = vmul.f32 %v1409, 1.442695
  %v1411 = vpow.pop %v1410
  %v1412 = vadd.f32 %v1411, 1.0
  %v1413 = vrcp.pop %v1412
  %v1414 = vmul.f32 1.0, %v1413
  %v1415 = vxor.u32 %v1406, 2147483648
  %v1416 = vmul.f32 %v1415, 1.442695
  %v1417 = vpow.pop %v1416
  %v1418 = vadd.f32 %v1417, 1.0
  %v1419 = vrcp.pop %v1418
  %v1420 = vmul.f32 1.0, %v1419
  %v1421 = vtanh.pop %v1407
  %v1422 = vxor.u32 %v1408, 2147483648
  %v1423 = vmul.f32 %v1422, 1.442695
  %v1424 = vpow.pop %v1423
  %v1425 = vadd.f32 %v1424, 1.0
  %v1426 = vrcp.pop %v1425
  %v1427 = vmul.f32 1.0, %v1426
  %v1428 = vmul.f32 %v1420, %v1239
  %v1429 = vmul.f32 %v1414, %v1421
  %v1430 = vadd.f32 %v1428, %v1429
  %v1431 = vtanh.pop %v1430
  %v1432 = vmul.f32 %v1427, %v1431
  %1433 = vst [vmem:[#allocation3] sm:$0xff] %v1430
  %1434 = vst [vmem:[#allocation2] sm:$0xff] %v1432
  %v1435 = vpack.c.bf16 %v1432, %v1432
  %s1436 = scalar_lea.vmem %s4, 16
  %1437 = vst [vmem:[%s1436] sm:$0xf] %v1435
  %s1438 = scalar_lea.vmem %s0, 20
  %v1439 = vld [vmem:[%s1438] sm:$0xf]
  %v1440 = vld [vmem:[#allocation2] sm:$0xff]
  %v1441 = vld [vmem:[#allocation3] sm:$0xff]
  %v1442 = vpack.c.bf16 %v1440, %v1440
  %1443 = vmatprep.subr.bf16.mxu0 %v190
  %1444 = vmatpush1.bf16.msra.mxu0 %v189
  %1445 = vmatprep.subr.bf16.mxu0 %v194
  %1446 = vmatpush1.bf16.msra.mxu0 %v193
  %1447 = vmatprep.subr.bf16.mxu0 %v198
  %1448 = vmatpush1.bf16.msra.mxu0 %v197
  %1449 = vmatprep.subr.bf16.mxu0 %v202
  %1450 = vmatpush1.bf16.msra.mxu0 %v201
  %1451 = vmatprep.subr.bf16.mxu0 %v206
  %1452 = vmatpush1.bf16.msra.mxu0 %v205
  %1453 = vmatprep.subr.bf16.mxu0 %v210
  %1454 = vmatpush1.bf16.msra.mxu0 %v209
  %1455 = vmatprep.subr.bf16.mxu0 %v214
  %1456 = vmatpush1.bf16.msra.mxu0 %v213
  %1457 = vmatprep.subr.bf16.mxu0 %v218
  %1458 = vmatpush1.bf16.msra.mxu0 %v217
  %1459 = vmatprep.subr.bf16.mxu0 0
  %1460 = vmatpush1.bf16.msra.mxu0 0
  %1461 = vmatprep.subr.bf16.mxu0 0
  %1462 = vmatpush1.bf16.msra.mxu0 0
  %1463 = vmatprep.subr.bf16.mxu0 0
  %1464 = vmatpush1.bf16.msra.mxu0 0
  %1465 = vmatprep.subr.bf16.mxu0 0
  %1466 = vmatpush1.bf16.msra.mxu0 0
  %1467 = vmatprep.subr.bf16.mxu0 0
  %1468 = vmatpush1.bf16.msra.mxu0 0
  %1469 = vmatprep.subr.bf16.mxu0 0
  %1470 = vmatpush1.bf16.msra.mxu0 0
  %1471 = vmatprep.subr.bf16.mxu0 0
  %1472 = vmatpush1.bf16.msra.mxu0 0
  %1473 = vmatprep.subr.bf16.mxu0 0
  %1474 = vmatpush1.bf16.msra.mxu0 0
  %1475 = vmatprep.mubr.bf16.mxu0 0
  %1476 = vmatmul.mubr.bf16.gmra.mrb[0].mxu0 %v1442
  %v1477 = vpop.f32.mrb[0].mxu0
  %v1478 = vadd.f32 0.0, %v1477
  %v1479 = vpop.f32.mrb[0].mxu0
  %v1480 = vadd.f32 0.0, %v1479
  %v1481 = vpop.f32.mrb[0].mxu0
  %v1482 = vpop.f32.mrb[0].mxu0
  %1483 = vdwg.mxu0
  %1484 = vmatprep.subr.bf16.mxu0 %v192
  %1485 = vmatpush1.bf16.msra.mxu0 %v191
  %1486 = vmatprep.subr.bf16.mxu0 %v196
  %1487 = vmatpush1.bf16.msra.mxu0 %v195
  %1488 = vmatprep.subr.bf16.mxu0 %v200
  %1489 = vmatpush1.bf16.msra.mxu0 %v199
  %1490 = vmatprep.subr.bf16.mxu0 %v204
  %1491 = vmatpush1.bf16.msra.mxu0 %v203
  %1492 = vmatprep.subr.bf16.mxu0 %v208
  %1493 = vmatpush1.bf16.msra.mxu0 %v207
  %1494 = vmatprep.subr.bf16.mxu0 %v212
  %1495 = vmatpush1.bf16.msra.mxu0 %v211
  %1496 = vmatprep.subr.bf16.mxu0 %v216
  %1497 = vmatpush1.bf16.msra.mxu0 %v215
  %1498 = vmatprep.subr.bf16.mxu0 %v220
  %1499 = vmatpush1.bf16.msra.mxu0 %v219
  %1500 = vmatprep.subr.bf16.mxu0 0
  %1501 = vmatpush1.bf16.msra.mxu0 0
  %1502 = vmatprep.subr.bf16.mxu0 0
  %1503 = vmatpush1.bf16.msra.mxu0 0
  %1504 = vmatprep.subr.bf16.mxu0 0
  %1505 = vmatpush1.bf16.msra.mxu0 0
  %1506 = vmatprep.subr.bf16.mxu0 0
  %1507 = vmatpush1.bf16.msra.mxu0 0
  %1508 = vmatprep.subr.bf16.mxu0 0
  %1509 = vmatpush1.bf16.msra.mxu0 0
  %1510 = vmatprep.subr.bf16.mxu0 0
  %1511 = vmatpush1.bf16.msra.mxu0 0
  %1512 = vmatprep.subr.bf16.mxu0 0
  %1513 = vmatpush1.bf16.msra.mxu0 0
  %1514 = vmatprep.subr.bf16.mxu0 0
  %1515 = vmatpush1.bf16.msra.mxu0 0
  %1516 = vmatprep.mubr.bf16.mxu0 0
  %1517 = vmatmul.mubr.bf16.gmra.mrb[0].mxu0 %v1442
  %v1518 = vpop.f32.mrb[0].mxu0
  %v1519 = vadd.f32 0.0, %v1518
  %v1520 = vpop.f32.mrb[0].mxu0
  %v1521 = vadd.f32 0.0, %v1520
  %v1522 = vpop.f32.mrb[0].mxu0
  %v1523 = vpop.f32.mrb[0].mxu0
  %1524 = vdwg.mxu0
  %1525 = vmatprep.subr.bf16.mxu0 %v432
  %1526 = vmatpush1.bf16.msra.mxu0 %v431
  %1527 = vmatprep.subr.bf16.mxu0 %v436
  %1528 = vmatpush1.bf16.msra.mxu0 %v435
  %1529 = vmatprep.subr.bf16.mxu0 %v440
  %1530 = vmatpush1.bf16.msra.mxu0 %v439
  %1531 = vmatprep.subr.bf16.mxu0 %v444
  %1532 = vmatpush1.bf16.msra.mxu0 %v443
  %1533 = vmatprep.subr.bf16.mxu0 %v448
  %1534 = vmatpush1.bf16.msra.mxu0 %v447
  %1535 = vmatprep.subr.bf16.mxu0 %v452
  %1536 = vmatpush1.bf16.msra.mxu0 %v451
  %1537 = vmatprep.subr.bf16.mxu0 %v456
  %1538 = vmatpush1.bf16.msra.mxu0 %v455
  %1539 = vmatprep.subr.bf16.mxu0 %v460
  %1540 = vmatpush1.bf16.msra.mxu0 %v459
  %1541 = vmatprep.subr.bf16.mxu0 0
  %1542 = vmatpush1.bf16.msra.mxu0 0
  %1543 = vmatprep.subr.bf16.mxu0 0
  %1544 = vmatpush1.bf16.msra.mxu0 0
  %1545 = vmatprep.subr.bf16.mxu0 0
  %1546 = vmatpush1.bf16.msra.mxu0 0
  %1547 = vmatprep.subr.bf16.mxu0 0
  %1548 = vmatpush1.bf16.msra.mxu0 0
  %1549 = vmatprep.subr.bf16.mxu0 0
  %1550 = vmatpush1.bf16.msra.mxu0 0
  %1551 = vmatprep.subr.bf16.mxu0 0
  %1552 = vmatpush1.bf16.msra.mxu0 0
  %1553 = vmatprep.subr.bf16.mxu0 0
  %1554 = vmatpush1.bf16.msra.mxu0 0
  %1555 = vmatprep.subr.bf16.mxu0 0
  %1556 = vmatpush1.bf16.msra.mxu0 0
  %1557 = vmatprep.mubr.bf16.mxu0 0
  %1558 = vmatmul.mubr.bf16.gmra.mrb[0].mxu0 %v1439
  %v1559 = vpop.f32.mrb[0].mxu0
  %v1560 = vadd.f32 %v1478, %v1559
  %v1561 = vpop.f32.mrb[0].mxu0
  %v1562 = vadd.f32 %v1480, %v1561
  %v1563 = vpop.f32.mrb[0].mxu0
  %v1564 = vpop.f32.mrb[0].mxu0
  %1565 = vdwg.mxu0
  %1566 = vmatprep.subr.bf16.mxu0 %v434
  %1567 = vmatpush1.bf16.msra.mxu0 %v433
  %1568 = vmatprep.subr.bf16.mxu0 %v438
  %1569 = vmatpush1.bf16.msra.mxu0 %v437
  %1570 = vmatprep.subr.bf16.mxu0 %v442
  %1571 = vmatpush1.bf16.msra.mxu0 %v441
  %1572 = vmatprep.subr.bf16.mxu0 %v446
  %1573 = vmatpush1.bf16.msra.mxu0 %v445
  %1574 = vmatprep.subr.bf16.mxu0 %v450
  %1575 = vmatpush1.bf16.msra.mxu0 %v449
  %1576 = vmatprep.subr.bf16.mxu0 %v454
  %1577 = vmatpush1.bf16.msra.mxu0 %v453
  %1578 = vmatprep.subr.bf16.mxu0 %v458
  %1579 = vmatpush1.bf16.msra.mxu0 %v457
  %1580 = vmatprep.subr.bf16.mxu0 %v462
  %1581 = vmatpush1.bf16.msra.mxu0 %v461
  %1582 = vmatprep.subr.bf16.mxu0 0
  %1583 = vmatpush1.bf16.msra.mxu0 0
  %1584 = vmatprep.subr.bf16.mxu0 0
  %1585 = vmatpush1.bf16.msra.mxu0 0
  %1586 = vmatprep.subr.bf16.mxu0 0
  %1587 = vmatpush1.bf16.msra.mxu0 0
  %1588 = vmatprep.subr.bf16.mxu0 0
  %1589 = vmatpush1.bf16.msra.mxu0 0
  %1590 = vmatprep.subr.bf16.mxu0 0
  %1591 = vmatpush1.bf16.msra.mxu0 0
  %1592 = vmatprep.subr.bf16.mxu0 0
  %1593 = vmatpush1.bf16.msra.mxu0 0
  %1594 = vmatprep.subr.bf16.mxu0 0
  %1595 = vmatpush1.bf16.msra.mxu0 0
  %1596 = vmatprep.subr.bf16.mxu0 0
  %1597 = vmatpush1.bf16.msra.mxu0 0
  %1598 = vmatprep.mubr.bf16.mxu0 0
  %1599 = vmatmul.mubr.bf16.gmra.mrb[0].mxu0 %v1439
  %v1600 = vpop.f32.mrb[0].mxu0
  %v1601 = vadd.f32 %v1519, %v1600
  %v1602 = vpop.f32.mrb[0].mxu0
  %v1603 = vadd.f32 %v1521, %v1602
  %v1604 = vpop.f32.mrb[0].mxu0
  %v1605 = vpop.f32.mrb[0].mxu0
  %1606 = vdwg.mxu0
  %v1607 = vadd.f32 %v1560, %v581
  %v1608 = vadd.f32 %v1562, %v585
  %v1609 = vadd.f32 %v1601, %v589
  %v1610 = vadd.f32 %v1603, %v593
  %v1611 = vxor.u32 %v1607, 2147483648
  %v1612 = vmul.f32 %v1611, 1.442695
  %v1613 = vpow.pop %v1612
  %v1614 = vadd.f32 %v1613, 1.0
  %v1615 = vrcp.pop %v1614
  %v1616 = vmul.f32 1.0, %v1615
  %v1617 = vxor.u32 %v1608, 2147483648
  %v1618 = vmul.f32 %v1617, 1.442695
  %v1619 = vpow.pop %v1618
  %v1620 = vadd.f32 %v1619, 1.0
  %v1621 = vrcp.pop %v1620
  %v1622 = vmul.f32 1.0, %v1621
  %v1623 = vtanh.pop %v1609
  %v1624 = vxor.u32 %v1610, 2147483648
  %v1625 = vmul.f32 %v1624, 1.442695
  %v1626 = vpow.pop %v1625
  %v1627 = vadd.f32 %v1626, 1.0
  %v1628 = vrcp.pop %v1627
  %v1629 = vmul.f32 1.0, %v1628
  %v1630 = vmul.f32 %v1622, %v1441
  %v1631 = vmul.f32 %v1616, %v1623
  %v1632 = vadd.f32 %v1630, %v1631
  %v1633 = vtanh.pop %v1632
  %v1634 = vmul.f32 %v1629, %v1633
  %1635 = vst [vmem:[#allocation3] sm:$0xff] %v1632
  %1636 = vst [vmem:[#allocation2] sm:$0xff] %v1634
  %v1637 = vpack.c.bf16 %v1634, %v1634
  %s1638 = scalar_lea.vmem %s4, 20
  %1639 = vst [vmem:[%s1638] sm:$0xf] %v1637
  %s1640 = scalar_lea.vmem %s0, 24
  %v1641 = vld [vmem:[%s1640] sm:$0xf]
  %v1642 = vld [vmem:[#allocation2] sm:$0xff]
  %v1643 = vld [vmem:[#allocation3] sm:$0xff]
  %v1644 = vpack.c.bf16 %v1642, %v1642
  %1645 = vmatprep.subr.bf16.mxu0 %v190
  %1646 = vmatpush1.bf16.msra.mxu0 %v189
  %1647 = vmatprep.subr.bf16.mxu0 %v194
  %1648 = vmatpush1.bf16.msra.mxu0 %v193
  %1649 = vmatprep.subr.bf16.mxu0 %v198
  %1650 = vmatpush1.bf16.msra.mxu0 %v197
  %1651 = vmatprep.subr.bf16.mxu0 %v202
  %1652 = vmatpush1.bf16.msra.mxu0 %v201
  %1653 = vmatprep.subr.bf16.mxu0 %v206
  %1654 = vmatpush1.bf16.msra.mxu0 %v205
  %1655 = vmatprep.subr.bf16.mxu0 %v210
  %1656 = vmatpush1.bf16.msra.mxu0 %v209
  %1657 = vmatprep.subr.bf16.mxu0 %v214
  %1658 = vmatpush1.bf16.msra.mxu0 %v213
  %1659 = vmatprep.subr.bf16.mxu0 %v218
  %1660 = vmatpush1.bf16.msra.mxu0 %v217
  %1661 = vmatprep.subr.bf16.mxu0 0
  %1662 = vmatpush1.bf16.msra.mxu0 0
  %1663 = vmatprep.subr.bf16.mxu0 0
  %1664 = vmatpush1.bf16.msra.mxu0 0
  %1665 = vmatprep.subr.bf16.mxu0 0
  %1666 = vmatpush1.bf16.msra.mxu0 0
  %1667 = vmatprep.subr.bf16.mxu0 0
  %1668 = vmatpush1.bf16.msra.mxu0 0
  %1669 = vmatprep.subr.bf16.mxu0 0
  %1670 = vmatpush1.bf16.msra.mxu0 0
  %1671 = vmatprep.subr.bf16.mxu0 0
  %1672 = vmatpush1.bf16.msra.mxu0 0
  %1673 = vmatprep.subr.bf16.mxu0 0
  %1674 = vmatpush1.bf16.msra.mxu0 0
  %1675 = vmatprep.subr.bf16.mxu0 0
  %1676 = vmatpush1.bf16.msra.mxu0 0
  %1677 = vmatprep.mubr.bf16.mxu0 0
  %1678 = vmatmul.mubr.bf16.gmra.mrb[0].mxu0 %v1644
  %v1679 = vpop.f32.mrb[0].mxu0
  %v1680 = vadd.f32 0.0, %v1679
  %v1681 = vpop.f32.mrb[0].mxu0
  %v1682 = vadd.f32 0.0, %v1681
  %v1683 = vpop.f32.mrb[0].mxu0
  %v1684 = vpop.f32.mrb[0].mxu0
  %1685 = vdwg.mxu0
  %1686 = vmatprep.subr.bf16.mxu0 %v192
  %1687 = vmatpush1.bf16.msra.mxu0 %v191
  %1688 = vmatprep.subr.bf16.mxu0 %v196
  %1689 = vmatpush1.bf16.msra.mxu0 %v195
  %1690 = vmatprep.subr.bf16.mxu0 %v200
  %1691 = vmatpush1.bf16.msra.mxu0 %v199
  %1692 = vmatprep.subr.bf16.mxu0 %v204
  %1693 = vmatpush1.bf16.msra.mxu0 %v203
  %1694 = vmatprep.subr.bf16.mxu0 %v208
  %1695 = vmatpush1.bf16.msra.mxu0 %v207
  %1696 = vmatprep.subr.bf16.mxu0 %v212
  %1697 = vmatpush1.bf16.msra.mxu0 %v211
  %1698 = vmatprep.subr.bf16.mxu0 %v216
  %1699 = vmatpush1.bf16.msra.mxu0 %v215
  %1700 = vmatprep.subr.bf16.mxu0 %v220
  %1701 = vmatpush1.bf16.msra.mxu0 %v219
  %1702 = vmatprep.subr.bf16.mxu0 0
  %1703 = vmatpush1.bf16.msra.mxu0 0
  %1704 = vmatprep.subr.bf16.mxu0 0
  %1705 = vmatpush1.bf16.msra.mxu0 0
  %1706 = vmatprep.subr.bf16.mxu0 0
  %1707 = vmatpush1.bf16.msra.mxu0 0
  %1708 = vmatprep.subr.bf16.mxu0 0
  %1709 = vmatpush1.bf16.msra.mxu0 0
  %1710 = vmatprep.subr.bf16.mxu0 0
  %1711 = vmatpush1.bf16.msra.mxu0 0
  %1712 = vmatprep.subr.bf16.mxu0 0
  %1713 = vmatpush1.bf16.msra.mxu0 0
  %1714 = vmatprep.subr.bf16.mxu0 0
  %1715 = vmatpush1.bf16.msra.mxu0 0
  %1716 = vmatprep.subr.bf16.mxu0 0
  %1717 = vmatpush1.bf16.msra.mxu0 0
  %1718 = vmatprep.mubr.bf16.mxu0 0
  %1719 = vmatmul.mubr.bf16.gmra.mrb[0].mxu0 %v1644
  %v1720 = vpop.f32.mrb[0].mxu0
  %v1721 = vadd.f32 0.0, %v1720
  %v1722 = vpop.f32.mrb[0].mxu0
  %v1723 = vadd.f32 0.0, %v1722
  %v1724 = vpop.f32.mrb[0].mxu0
  %v1725 = vpop.f32.mrb[0].mxu0
  %1726 = vdwg.mxu0
  %1727 = vmatprep.subr.bf16.mxu0 %v432
  %1728 = vmatpush1.bf16.msra.mxu0 %v431
  %1729 = vmatprep.subr.bf16.mxu0 %v436
  %1730 = vmatpush1.bf16.msra.mxu0 %v435
  %1731 = vmatprep.subr.bf16.mxu0 %v440
  %1732 = vmatpush1.bf16.msra.mxu0 %v439
  %1733 = vmatprep.subr.bf16.mxu0 %v444
  %1734 = vmatpush1.bf16.msra.mxu0 %v443
  %1735 = vmatprep.subr.bf16.mxu0 %v448
  %1736 = vmatpush1.bf16.msra.mxu0 %v447
  %1737 = vmatprep.subr.bf16.mxu0 %v452
  %1738 = vmatpush1.bf16.msra.mxu0 %v451
  %1739 = vmatprep.subr.bf16.mxu0 %v456
  %1740 = vmatpush1.bf16.msra.mxu0 %v455
  %1741 = vmatprep.subr.bf16.mxu0 %v460
  %1742 = vmatpush1.bf16.msra.mxu0 %v459
  %1743 = vmatprep.subr.bf16.mxu0 0
  %1744 = vmatpush1.bf16.msra.mxu0 0
  %1745 = vmatprep.subr.bf16.mxu0 0
  %1746 = vmatpush1.bf16.msra.mxu0 0
  %1747 = vmatprep.subr.bf16.mxu0 0
  %1748 = vmatpush1.bf16.msra.mxu0 0
  %1749 = vmatprep.subr.bf16.mxu0 0
  %1750 = vmatpush1.bf16.msra.mxu0 0
  %1751 = vmatprep.subr.bf16.mxu0 0
  %1752 = vmatpush1.bf16.msra.mxu0 0
  %1753 = vmatprep.subr.bf16.mxu0 0
  %1754 = vmatpush1.bf16.msra.mxu0 0
  %1755 = vmatprep.subr.bf16.mxu0 0
  %1756 = vmatpush1.bf16.msra.mxu0 0
  %1757 = vmatprep.subr.bf16.mxu0 0
  %1758 = vmatpush1.bf16.msra.mxu0 0
  %1759 = vmatprep.mubr.bf16.mxu0 0
  %1760 = vmatmul.mubr.bf16.gmra.mrb[0].mxu0 %v1641
  %v1761 = vpop.f32.mrb[0].mxu0
  %v1762 = vadd.f32 %v1680, %v1761
  %v1763 = vpop.f32.mrb[0].mxu0
  %v1764 = vadd.f32 %v1682, %v1763
  %v1765 = vpop.f32.mrb[0].mxu0
  %v1766 = vpop.f32.mrb[0].mxu0
  %1767 = vdwg.mxu0
  %1768 = vmatprep.subr.bf16.mxu0 %v434
  %1769 = vmatpush1.bf16.msra.mxu0 %v433
  %1770 = vmatprep.subr.bf16.mxu0 %v438
  %1771 = vmatpush1.bf16.msra.mxu0 %v437
  %1772 = vmatprep.subr.bf16.mxu0 %v442
  %1773 = vmatpush1.bf16.msra.mxu0 %v441
  %1774 = vmatprep.subr.bf16.mxu0 %v446
  %1775 = vmatpush1.bf16.msra.mxu0 %v445
  %1776 = vmatprep.subr.bf16.mxu0 %v450
  %1777 = vmatpush1.bf16.msra.mxu0 %v449
  %1778 = vmatprep.subr.bf16.mxu0 %v454
  %1779 = vmatpush1.bf16.msra.mxu0 %v453
  %1780 = vmatprep.subr.bf16.mxu0 %v458
  %1781 = vmatpush1.bf16.msra.mxu0 %v457
  %1782 = vmatprep.subr.bf16.mxu0 %v462
  %1783 = vmatpush1.bf16.msra.mxu0 %v461
  %1784 = vmatprep.subr.bf16.mxu0 0
  %1785 = vmatpush1.bf16.msra.mxu0 0
  %1786 = vmatprep.subr.bf16.mxu0 0
  %1787 = vmatpush1.bf16.msra.mxu0 0
  %1788 = vmatprep.subr.bf16.mxu0 0
  %1789 = vmatpush1.bf16.msra.mxu0 0
  %1790 = vmatprep.subr.bf16.mxu0 0
  %1791 = vmatpush1.bf16.msra.mxu0 0
  %1792 = vmatprep.subr.bf16.mxu0 0
  %1793 = vmatpush1.bf16.msra.mxu0 0
  %1794 = vmatprep.subr.bf16.mxu0 0
  %1795 = vmatpush1.bf16.msra.mxu0 0
  %1796 = vmatprep.subr.bf16.mxu0 0
  %1797 = vmatpush1.bf16.msra.mxu0 0
  %1798 = vmatprep.subr.bf16.mxu0 0
  %1799 = vmatpush1.bf16.msra.mxu0 0
  %1800 = vmatprep.mubr.bf16.mxu0 0
  %1801 = vmatmul.mubr.bf16.gmra.mrb[0].mxu0 %v1641
  %v1802 = vpop.f32.mrb[0].mxu0
  %v1803 = vadd.f32 %v1721, %v1802
  %v1804 = vpop.f32.mrb[0].mxu0
  %v1805 = vadd.f32 %v1723, %v1804
  %v1806 = vpop.f32.mrb[0].mxu0
  %v1807 = vpop.f32.mrb[0].mxu0
  %1808 = vdwg.mxu0
  %v1809 = vadd.f32 %v1762, %v581
  %v1810 = vadd.f32 %v1764, %v585
  %v1811 = vadd.f32 %v1803, %v589
  %v1812 = vadd.f32 %v1805, %v593
  %v1813 = vxor.u32 %v1809, 2147483648
  %v1814 = vmul.f32 %v1813, 1.442695
  %v1815 = vpow.pop %v1814
  %v1816 = vadd.f32 %v1815, 1.0
  %v1817 = vrcp.pop %v1816
  %v1818 = vmul.f32 1.0, %v1817
  %v1819 = vxor.u32 %v1810, 2147483648
  %v1820 = vmul.f32 %v1819, 1.442695
  %v1821 = vpow.pop %v1820
  %v1822 = vadd.f32 %v1821, 1.0
  %v1823 = vrcp.pop %v1822
  %v1824 = vmul.f32 1.0, %v1823
  %v1825 = vtanh.pop %v1811
  %v1826 = vxor.u32 %v1812, 2147483648
  %v1827 = vmul.f32 %v1826, 1.442695
  %v1828 = vpow.pop %v1827
  %v1829 = vadd.f32 %v1828, 1.0
  %v1830 = vrcp.pop %v1829
  %v1831 = vmul.f32 1.0, %v1830
  %v1832 = vmul.f32 %v1824, %v1643
  %v1833 = vmul.f32 %v1818, %v1825
  %v1834 = vadd.f32 %v1832, %v1833
  %v1835 = vtanh.pop %v1834
  %v1836 = vmul.f32 %v1831, %v1835
  %1837 = vst [vmem:[#allocation3] sm:$0xff] %v1834
  %1838 = vst [vmem:[#allocation2] sm:$0xff] %v1836
  %v1839 = vpack.c.bf16 %v1836, %v1836
  %s1840 = scalar_lea.vmem %s4, 24
  %1841 = vst [vmem:[%s1840] sm:$0xf] %v1839
  %s1842 = scalar_lea.vmem %s0, 28
  %v1843 = vld [vmem:[%s1842] sm:$0xf]
  %v1844 = vld [vmem:[#allocation2] sm:$0xff]
  %v1845 = vld [vmem:[#allocation3] sm:$0xff]
  %v1846 = vpack.c.bf16 %v1844, %v1844
  %1847 = vmatprep.subr.bf16.mxu0 %v190
  %1848 = vmatpush1.bf16.msra.mxu0 %v189
  %1849 = vmatprep.subr.bf16.mxu0 %v194
  %1850 = vmatpush1.bf16.msra.mxu0 %v193
  %1851 = vmatprep.subr.bf16.mxu0 %v198
  %1852 = vmatpush1.bf16.msra.mxu0 %v197
  %1853 = vmatprep.subr.bf16.mxu0 %v202
  %1854 = vmatpush1.bf16.msra.mxu0 %v201
  %1855 = vmatprep.subr.bf16.mxu0 %v206
  %1856 = vmatpush1.bf16.msra.mxu0 %v205
  %1857 = vmatprep.subr.bf16.mxu0 %v210
  %1858 = vmatpush1.bf16.msra.mxu0 %v209
  %1859 = vmatprep.subr.bf16.mxu0 %v214
  %1860 = vmatpush1.bf16.msra.mxu0 %v213
  %1861 = vmatprep.subr.bf16.mxu0 %v218
  %1862 = vmatpush1.bf16.msra.mxu0 %v217
  %1863 = vmatprep.subr.bf16.mxu0 0
  %1864 = vmatpush1.bf16.msra.mxu0 0
  %1865 = vmatprep.subr.bf16.mxu0 0
  %1866 = vmatpush1.bf16.msra.mxu0 0
  %1867 = vmatprep.subr.bf16.mxu0 0
  %1868 = vmatpush1.bf16.msra.mxu0 0
  %1869 = vmatprep.subr.bf16.mxu0 0
  %1870 = vmatpush1.bf16.msra.mxu0 0
  %1871 = vmatprep.subr.bf16.mxu0 0
  %1872 = vmatpush1.bf16.msra.mxu0 0
  %1873 = vmatprep.subr.bf16.mxu0 0
  %1874 = vmatpush1.bf16.msra.mxu0 0
  %1875 = vmatprep.subr.bf16.mxu0 0
  %1876 = vmatpush1.bf16.msra.mxu0 0
  %1877 = vmatprep.subr.bf16.mxu0 0
  %1878 = vmatpush1.bf16.msra.mxu0 0
  %1879 = vmatprep.mubr.bf16.mxu0 0
  %1880 = vmatmul.mubr.bf16.gmra.mrb[0].mxu0 %v1846
  %v1881 = vpop.f32.mrb[0].mxu0
  %v1882 = vadd.f32 0.0, %v1881
  %v1883 = vpop.f32.mrb[0].mxu0
  %v1884 = vadd.f32 0.0, %v1883
  %v1885 = vpop.f32.mrb[0].mxu0
  %v1886 = vpop.f32.mrb[0].mxu0
  %1887 = vdwg.mxu0
  %1888 = vmatprep.subr.bf16.mxu0 %v192
  %1889 = vmatpush1.bf16.msra.mxu0 %v191
  %1890 = vmatprep.subr.bf16.mxu0 %v196
  %1891 = vmatpush1.bf16.msra.mxu0 %v195
  %1892 = vmatprep.subr.bf16.mxu0 %v200
  %1893 = vmatpush1.bf16.msra.mxu0 %v199
  %1894 = vmatprep.subr.bf16.mxu0 %v204
  %1895 = vmatpush1.bf16.msra.mxu0 %v203
  %1896 = vmatprep.subr.bf16.mxu0 %v208
  %1897 = vmatpush1.bf16.msra.mxu0 %v207
  %1898 = vmatprep.subr.bf16.mxu0 %v212
  %1899 = vmatpush1.bf16.msra.mxu0 %v211
  %1900 = vmatprep.subr.bf16.mxu0 %v216
  %1901 = vmatpush1.bf16.msra.mxu0 %v215
  %1902 = vmatprep.subr.bf16.mxu0 %v220
  %1903 = vmatpush1.bf16.msra.mxu0 %v219
  %1904 = vmatprep.subr.bf16.mxu0 0
  %1905 = vmatpush1.bf16.msra.mxu0 0
  %1906 = vmatprep.subr.bf16.mxu0 0
  %1907 = vmatpush1.bf16.msra.mxu0 0
  %1908 = vmatprep.subr.bf16.mxu0 0
  %1909 = vmatpush1.bf16.msra.mxu0 0
  %1910 = vmatprep.subr.bf16.mxu0 0
  %1911 = vmatpush1.bf16.msra.mxu0 0
  %1912 = vmatprep.subr.bf16.mxu0 0
  %1913 = vmatpush1.bf16.msra.mxu0 0
  %1914 = vmatprep.subr.bf16.mxu0 0
  %1915 = vmatpush1.bf16.msra.mxu0 0
  %1916 = vmatprep.subr.bf16.mxu0 0
  %1917 = vmatpush1.bf16.msra.mxu0 0
  %1918 = vmatprep.subr.bf16.mxu0 0
  %1919 = vmatpush1.bf16.msra.mxu0 0
  %1920 = vmatprep.mubr.bf16.mxu0 0
  %1921 = vmatmul.mubr.bf16.gmra.mrb[0].mxu0 %v1846
  %v1922 = vpop.f32.mrb[0].mxu0
  %v1923 = vadd.f32 0.0, %v1922
  %v1924 = vpop.f32.mrb[0].mxu0
  %v1925 = vadd.f32 0.0, %v1924
  %v1926 = vpop.f32.mrb[0].mxu0
  %v1927 = vpop.f32.mrb[0].mxu0
  %1928 = vdwg.mxu0
  %1929 = vmatprep.subr.bf16.mxu0 %v432
  %1930 = vmatpush1.bf16.msra.mxu0 %v431
  %1931 = vmatprep.subr.bf16.mxu0 %v436
  %1932 = vmatpush1.bf16.msra.mxu0 %v435
  %1933 = vmatprep.subr.bf16.mxu0 %v440
  %1934 = vmatpush1.bf16.msra.mxu0 %v439
  %1935 = vmatprep.subr.bf16.mxu0 %v444
  %1936 = vmatpush1.bf16.msra.mxu0 %v443
  %1937 = vmatprep.subr.bf16.mxu0 %v448
  %1938 = vmatpush1.bf16.msra.mxu0 %v447
  %1939 = vmatprep.subr.bf16.mxu0 %v452
  %1940 = vmatpush1.bf16.msra.mxu0 %v451
  %1941 = vmatprep.subr.bf16.mxu0 %v456
  %1942 = vmatpush1.bf16.msra.mxu0 %v455
  %1943 = vmatprep.subr.bf16.mxu0 %v460
  %1944 = vmatpush1.bf16.msra.mxu0 %v459
  %1945 = vmatprep.subr.bf16.mxu0 0
  %1946 = vmatpush1.bf16.msra.mxu0 0
  %1947 = vmatprep.subr.bf16.mxu0 0
  %1948 = vmatpush1.bf16.msra.mxu0 0
  %1949 = vmatprep.subr.bf16.mxu0 0
  %1950 = vmatpush1.bf16.msra.mxu0 0
  %1951 = vmatprep.subr.bf16.mxu0 0
  %1952 = vmatpush1.bf16.msra.mxu0 0
  %1953 = vmatprep.subr.bf16.mxu0 0
  %1954 = vmatpush1.bf16.msra.mxu0 0
  %1955 = vmatprep.subr.bf16.mxu0 0
  %1956 = vmatpush1.bf16.msra.mxu0 0
  %1957 = vmatprep.subr.bf16.mxu0 0
  %1958 = vmatpush1.bf16.msra.mxu0 0
  %1959 = vmatprep.subr.bf16.mxu0 0
  %1960 = vmatpush1.bf16.msra.mxu0 0
  %1961 = vmatprep.mubr.bf16.mxu0 0
  %1962 = vmatmul.mubr.bf16.gmra.mrb[0].mxu0 %v1843
  %v1963 = vpop.f32.mrb[0].mxu0
  %v1964 = vadd.f32 %v1882, %v1963
  %v1965 = vpop.f32.mrb[0].mxu0
  %v1966 = vadd.f32 %v1884, %v1965
  %v1967 = vpop.f32.mrb[0].mxu0
  %v1968 = vpop.f32.mrb[0].mxu0
  %1969 = vdwg.mxu0
  %1970 = vmatprep.subr.bf16.mxu0 %v434
  %1971 = vmatpush1.bf16.msra.mxu0 %v433
  %1972 = vmatprep.subr.bf16.mxu0 %v438
  %1973 = vmatpush1.bf16.msra.mxu0 %v437
  %1974 = vmatprep.subr.bf16.mxu0 %v442
  %1975 = vmatpush1.bf16.msra.mxu0 %v441
  %1976 = vmatprep.subr.bf16.mxu0 %v446
  %1977 = vmatpush1.bf16.msra.mxu0 %v445
  %1978 = vmatprep.subr.bf16.mxu0 %v450
  %1979 = vmatpush1.bf16.msra.mxu0 %v449
  %1980 = vmatprep.subr.bf16.mxu0 %v454
  %1981 = vmatpush1.bf16.msra.mxu0 %v453
  %1982 = vmatprep.subr.bf16.mxu0 %v458
  %1983 = vmatpush1.bf16.msra.mxu0 %v457
  %1984 = vmatprep.subr.bf16.mxu0 %v462
  %1985 = vmatpush1.bf16.msra.mxu0 %v461
  %1986 = vmatprep.subr.bf16.mxu0 0
  %1987 = vmatpush1.bf16.msra.mxu0 0
  %1988 = vmatprep.subr.bf16.mxu0 0
  %1989 = vmatpush1.bf16.msra.mxu0 0
  %1990 = vmatprep.subr.bf16.mxu0 0
  %1991 = vmatpush1.bf16.msra.mxu0 0
  %1992 = vmatprep.subr.bf16.mxu0 0
  %1993 = vmatpush1.bf16.msra.mxu0 0
  %1994 = vmatprep.subr.bf16.mxu0 0
  %1995 = vmatpush1.bf16.msra.mxu0 0
  %1996 = vmatprep.subr.bf16.mxu0 0
  %1997 = vmatpush1.bf16.msra.mxu0 0
  %1998 = vmatprep.subr.bf16.mxu0 0
  %1999 = vmatpush1.bf16.msra.mxu0 0
  %2000 = vmatprep.subr.bf16.mxu0 0
  %2001 = vmatpush1.bf16.msra.mxu0 0
  %2002 = vmatprep.mubr.bf16.mxu0 0
  %2003 = vmatmul.mubr.bf16.gmra.mrb[0].mxu0 %v1843
  %v2004 = vpop.f32.mrb[0].mxu0
  %v2005 = vadd.f32 %v1923, %v2004
  %v2006 = vpop.f32.mrb[0].mxu0
  %v2007 = vadd.f32 %v1925, %v2006
  %v2008 = vpop.f32.mrb[0].mxu0
  %v2009 = vpop.f32.mrb[0].mxu0
  %2010 = vdwg.mxu0
  %v2011 = vadd.f32 %v1964, %v581
  %v2012 = vadd.f32 %v1966, %v585
  %v2013 = vadd.f32 %v2005, %v589
  %v2014 = vadd.f32 %v2007, %v593
  %v2015 = vxor.u32 %v2011, 2147483648
  %v2016 = vmul.f32 %v2015, 1.442695
  %v2017 = vpow.pop %v2016
  %v2018 = vadd.f32 %v2017, 1.0
  %v2019 = vrcp.pop %v2018
  %v2020 = vmul.f32 1.0, %v2019
  %v2021 = vxor.u32 %v2012, 2147483648
  %v2022 = vmul.f32 %v2021, 1.442695
  %v2023 = vpow.pop %v2022
  %v2024 = vadd.f32 %v2023, 1.0
  %v2025 = vrcp.pop %v2024
  %v2026 = vmul.f32 1.0, %v2025
  %v2027 = vtanh.pop %v2013
  %v2028 = vxor.u32 %v2014, 2147483648
  %v2029 = vmul.f32 %v2028, 1.442695
  %v2030 = vpow.pop %v2029
  %v2031 = vadd.f32 %v2030, 1.0
  %v2032 = vrcp.pop %v2031
  %v2033 = vmul.f32 1.0, %v2032
  %v2034 = vmul.f32 %v2026, %v1845
  %v2035 = vmul.f32 %v2020, %v2027
  %v2036 = vadd.f32 %v2034, %v2035
  %v2037 = vtanh.pop %v2036
  %v2038 = vmul.f32 %v2033, %v2037
  %2039 = vst [vmem:[#allocation3] sm:$0xff] %v2036
  %2040 = vst [vmem:[#allocation2] sm:$0xff] %v2038
  %v2041 = vpack.c.bf16 %v2038, %v2038
  %s2042 = scalar_lea.vmem %s4, 28
  %2043 = vst [vmem:[%s2042] sm:$0xf] %v2041
  // Predicated region
  $region22: #{transducer_forward.4} parent=0 // pred_check
    _
  $region23: #{transducer_forward.4} parent=0 // pred_check_branch
    %2045 = sbr.rel (0) target = $region25
  $region24: #{transducer_forward.4} parent=0 // pred_region
    _
  $region25: #{transducer_forward.4} parent=0 // pred_fallthru
    _
  // Predicated region
  $region26: #{transducer_forward.4} parent=0 // pred_check
    _
  $region27: #{transducer_forward.4} parent=0 // pred_check_branch
    %2047 = sbr.rel (0) target = $region29
  $region28: #{transducer_forward.4} parent=0 // pred_region
    _
  $region29: #{transducer_forward.4} parent=0 // pred_fallthru
    _

// kernel: transducer_forward.3
$region0: #{transducer_forward.3}
  #allocation0 [shape = 'u32[]', space=smem, size = 0x4, offset = 0x4, fixed_abs, tag = 'smem constant byte address 0x4 - core index']
  #allocation1 [shape = 'u32[144,128]{1,0:T(1,128)}', space=vmem, size = 0x12000, scoped, tag = 'internal scratch']
  #allocation2 [shape = 'f32[8,128]{1,0:T(8,128)}', space=vmem, size = 0x1000, scoped, tag = 'scratch operand']
  #allocation3 [shape = 'f32[8,128]{1,0:T(8,128)}', space=vmem, size = 0x1000, scoped, tag = 'scratch operand']
  %s0 = inlined_call_operand.vmem [shape: bf16[16,8,64], index: 0, kind: input, shape index: {}]
  %s1 = inlined_call_operand.vmem [shape: bf16[64,512], index: 1, kind: input, shape index: {}]
  %s2 = inlined_call_operand.vmem [shape: bf16[128,512], index: 2, kind: input, shape index: {}]
  %s3 = inlined_call_operand.vmem [shape: f32[1,512], index: 3, kind: input, shape index: {}]
  %s4 = inlined_call_operand.vmem [shape: bf16[16,8,128], index: 4, kind: output, shape index: {}]
  %s5 = sld [smem:[#allocation0]]
  $region30: #{transducer_forward.3} parent=0
    _
  %s7 = ssub.s32 1, %s5
  %s8 = scalar_select 0, %s7, %s5
  // Predicated region
  $region2: #{transducer_forward.3} parent=0 // pred_check
    _
  $region3: #{transducer_forward.3} parent=0 // pred_check_branch
    %10 = sbr.rel (0) target = $region5
  $region4: #{transducer_forward.3} parent=0 // pred_region
    _
  $region5: #{transducer_forward.3} parent=0 // pred_fallthru
    _
  // Predicated region
  $region6: #{transducer_forward.3} parent=0 // pred_check
    _
  $region7: #{transducer_forward.3} parent=0 // pred_check_branch
    %12 = sbr.rel (0) target = $region9
  $region8: #{transducer_forward.3} parent=0 // pred_region
    _
  $region9: #{transducer_forward.3} parent=0 // pred_fallthru
    _
  // Predicated region
  $region10: #{transducer_forward.3} parent=0 // pred_check
    _
  $region11: #{transducer_forward.3} parent=0 // pred_check_branch
    %14 = sbr.rel (0) target = $region13
  $region12: #{transducer_forward.3} parent=0 // pred_region
    _
  $region13: #{transducer_forward.3} parent=0 // pred_fallthru
    _
  // Predicated region
  $region14: #{transducer_forward.3} parent=0 // pred_check
    _
  $region15: #{transducer_forward.3} parent=0 // pred_check_branch
    %16 = sbr.rel (0) target = $region17
  $region16: #{transducer_forward.3} parent=0 // pred_region
    _
  $region17: #{transducer_forward.3} parent=0 // pred_fallthru
    _
  %p18 = scmp.eq.s32.totalorder 0, 0
  // Predicated region
  $region18: #{transducer_forward.3} parent=0 // pred_check
    %p19 = pneg %p18
  $region19: #{transducer_forward.3} parent=0 // pred_check_branch
    %21 = sbr.rel (%p19) target = $region21
  $region20: #{transducer_forward.3} parent=0 // pred_region
    %22 = vst [vmem:[#allocation2] sm:$0xff] 0.0
    %23 = vst [vmem:[#allocation3] sm:$0xff] 0.0
  $region21: #{transducer_forward.3} parent=0 // pred_fallthru
    _
  %v24 = vld [vmem:[%s1] sm:$0xff]
  %v25 = vld [vmem:[%s1 + $0x8] sm:$0xff]
  %v26 = vld [vmem:[%s1 + $0x10] sm:$0xff]
  %v27 = vld [vmem:[%s1 + $0x18] sm:$0xff]
  %v28 = vld [vmem:[%s1 + $0x20] sm:$0xff]
  %v29 = vld [vmem:[%s1 + $0x28] sm:$0xff]
  %v30 = vld [vmem:[%s1 + $0x30] sm:$0xff]
  %v31 = vld [vmem:[%s1 + $0x38] sm:$0xff]
  %v32 = vld [vmem:[%s1 + $0x40] sm:$0xff]
  %v33 = vld [vmem:[%s1 + $0x48] sm:$0xff]
  %v34 = vld [vmem:[%s1 + $0x50] sm:$0xff]
  %v35 = vld [vmem:[%s1 + $0x58] sm:$0xff]
  %v36 = vld [vmem:[%s1 + $0x60] sm:$0xff]
  %v37 = vld [vmem:[%s1 + $0x68] sm:$0xff]
  %v38 = vld [vmem:[%s1 + $0x70] sm:$0xff]
  %v39 = vld [vmem:[%s1 + $0x78] sm:$0xff]
  %v40 = vld [vmem:[%s2] sm:$0xff]
  %v41 = vld [vmem:[%s2 + $0x8] sm:$0xff]
  %v42 = vld [vmem:[%s2 + $0x10] sm:$0xff]
  %v43 = vld [vmem:[%s2 + $0x18] sm:$0xff]
  %v44 = vld [vmem:[%s2 + $0x20] sm:$0xff]
  %v45 = vld [vmem:[%s2 + $0x28] sm:$0xff]
  %v46 = vld [vmem:[%s2 + $0x30] sm:$0xff]
  %v47 = vld [vmem:[%s2 + $0x38] sm:$0xff]
  %v48 = vld [vmem:[%s2 + $0x40] sm:$0xff]
  %v49 = vld [vmem:[%s2 + $0x48] sm:$0xff]
  %v50 = vld [vmem:[%s2 + $0x50] sm:$0xff]
  %v51 = vld [vmem:[%s2 + $0x58] sm:$0xff]
  %v52 = vld [vmem:[%s2 + $0x60] sm:$0xff]
  %v53 = vld [vmem:[%s2 + $0x68] sm:$0xff]
  %v54 = vld [vmem:[%s2 + $0x70] sm:$0xff]
  %v55 = vld [vmem:[%s2 + $0x78] sm:$0xff]
  %v56 = vld [vmem:[%s2 + $0x80] sm:$0xff]
  %v57 = vld [vmem:[%s2 + $0x88] sm:$0xff]
  %v58 = vld [vmem:[%s2 + $0x90] sm:$0xff]
  %v59 = vld [vmem:[%s2 + $0x98] sm:$0xff]
  %v60 = vld [vmem:[%s2 + $0xa0] sm:$0xff]
  %v61 = vld [vmem:[%s2 + $0xa8] sm:$0xff]
  %v62 = vld [vmem:[%s2 + $0xb0] sm:$0xff]
  %v63 = vld [vmem:[%s2 + $0xb8] sm:$0xff]
  %v64 = vld [vmem:[%s2 + $0xc0] sm:$0xff]
  %v65 = vld [vmem:[%s2 + $0xc8] sm:$0xff]
  %v66 = vld [vmem:[%s2 + $0xd0] sm:$0xff]
  %v67 = vld [vmem:[%s2 + $0xd8] sm:$0xff]
  %v68 = vld [vmem:[%s2 + $0xe0] sm:$0xff]
  %v69 = vld [vmem:[%s2 + $0xe8] sm:$0xff]
  %v70 = vld [vmem:[%s2 + $0xf0] sm:$0xff]
  %v71 = vld [vmem:[%s2 + $0xf8] sm:$0xff]
  %v72 = vld [vmem:[%s3] sm:$0xf]
  %v73 = vld [vmem:[%s0] sm:$0xf]
  %v74 = vld [vmem:[#allocation2] sm:$0xff]
  %v75 = vld [vmem:[#allocation3] sm:$0xff]
  %v76 = vpack.c.bf16 %v74, %v74
  %v109 = vunpack.c.l.b16 %v40
  %v110 = vunpack.c.h.b16 %v40
  %v111 = vunpack.c.l.b16 %v41
  %v112 = vunpack.c.h.b16 %v41
  %v113 = vunpack.c.l.b16 %v42
  %v114 = vunpack.c.h.b16 %v42
  %v115 = vunpack.c.l.b16 %v43
  %v116 = vunpack.c.h.b16 %v43
  %v117 = vunpack.c.l.b16 %v44
  %v118 = vunpack.c.h.b16 %v44
  %v119 = vunpack.c.l.b16 %v45
  %v120 = vunpack.c.h.b16 %v45
  %v121 = vunpack.c.l.b16 %v46
  %v122 = vunpack.c.h.b16 %v46
  %v123 = vunpack.c.l.b16 %v47
  %v124 = vunpack.c.h.b16 %v47
  %v125 = vunpack.c.l.b16 %v48
  %v126 = vunpack.c.h.b16 %v48
  %v127 = vunpack.c.l.b16 %v49
  %v128 = vunpack.c.h.b16 %v49
  %v129 = vunpack.c.l.b16 %v50
  %v130 = vunpack.c.h.b16 %v50
  %v131 = vunpack.c.l.b16 %v51
  %v132 = vunpack.c.h.b16 %v51
  %v133 = vunpack.c.l.b16 %v52
  %v134 = vunpack.c.h.b16 %v52
  %v135 = vunpack.c.l.b16 %v53
  %v136 = vunpack.c.h.b16 %v53
  %v137 = vunpack.c.l.b16 %v54
  %v138 = vunpack.c.h.b16 %v54
  %v139 = vunpack.c.l.b16 %v55
  %v140 = vunpack.c.h.b16 %v55
  %v141 = vunpack.c.l.b16 %v56
  %v142 = vunpack.c.h.b16 %v56
  %v143 = vunpack.c.l.b16 %v57
  %v144 = vunpack.c.h.b16 %v57
  %v145 = vunpack.c.l.b16 %v58
  %v146 = vunpack.c.h.b16 %v58
  %v147 = vunpack.c.l.b16 %v59
  %v148 = vunpack.c.h.b16 %v59
  %v149 = vunpack.c.l.b16 %v60
  %v150 = vunpack.c.h.b16 %v60
  %v151 = vunpack.c.l.b16 %v61
  %v152 = vunpack.c.h.b16 %v61
  %v153 = vunpack.c.l.b16 %v62
  %v154 = vunpack.c.h.b16 %v62
  %v155 = vunpack.c.l.b16 %v63
  %v156 = vunpack.c.h.b16 %v63
  %v157 = vunpack.c.l.b16 %v64
  %v158 = vunpack.c.h.b16 %v64
  %v159 = vunpack.c.l.b16 %v65
  %v160 = vunpack.c.h.b16 %v65
  %v161 = vunpack.c.l.b16 %v66
  %v162 = vunpack.c.h.b16 %v66
  %v163 = vunpack.c.l.b16 %v67
  %v164 = vunpack.c.h.b16 %v67
  %v165 = vunpack.c.l.b16 %v68
  %v166 = vunpack.c.h.b16 %v68
  %v167 = vunpack.c.l.b16 %v69
  %v168 = vunpack.c.h.b16 %v69
  %v169 = vunpack.c.l.b16 %v70
  %v170 = vunpack.c.h.b16 %v70
  %v171 = vunpack.c.l.b16 %v71
  %v172 = vunpack.c.h.b16 %v71
  %v173 = vpack.c.b16 %v113, %v109
  %v174 = vpack.c.b16 %v114, %v110
  %v175 = vpack.c.b16 %v115, %v111
  %v176 = vpack.c.b16 %v116, %v112
  %v177 = vpack.c.b16 %v121, %v117
  %v178 = vpack.c.b16 %v122, %v118
  %v179 = vpack.c.b16 %v123, %v119
  %v180 = vpack.c.b16 %v124, %v120
  %v181 = vpack.c.b16 %v129, %v125
  %v182 = vpack.c.b16 %v130, %v126
  %v183 = vpack.c.b16 %v131, %v127
  %v184 = vpack.c.b16 %v132, %v128
  %v185 = vpack.c.b16 %v137, %v133
  %v186 = vpack.c.b16 %v138, %v134
  %v187 = vpack.c.b16 %v139, %v135
  %v188 = vpack.c.b16 %v140, %v136
  %v189 = vpack.c.b16 %v145, %v141
  %v190 = vpack.c.b16 %v146, %v142
  %v191 = vpack.c.b16 %v147, %v143
  %v192 = vpack.c.b16 %v148, %v144
  %v193 = vpack.c.b16 %v153, %v149
  %v194 = vpack.c.b16 %v154, %v150
  %v195 = vpack.c.b16 %v155, %v151
  %v196 = vpack.c.b16 %v156, %v152
  %v197 = vpack.c.b16 %v161, %v157
  %v198 = vpack.c.b16 %v162, %v158
  %v199 = vpack.c.b16 %v163, %v159
  %v200 = vpack.c.b16 %v164, %v160
  %v201 = vpack.c.b16 %v169, %v165
  %v202 = vpack.c.b16 %v170, %v166
  %v203 = vpack.c.b16 %v171, %v167
  %v204 = vpack.c.b16 %v172, %v168
  %237 = vmatprep.subr.bf16.mxu0 %v174
  %238 = vmatpush1.bf16.msra.mxu0 %v173
  %239 = vmatprep.subr.bf16.mxu0 %v178
  %240 = vmatpush1.bf16.msra.mxu0 %v177
  %241 = vmatprep.subr.bf16.mxu0 %v182
  %242 = vmatpush1.bf16.msra.mxu0 %v181
  %243 = vmatprep.subr.bf16.mxu0 %v186
  %244 = vmatpush1.bf16.msra.mxu0 %v185
  %245 = vmatprep.subr.bf16.mxu0 %v190
  %246 = vmatpush1.bf16.msra.mxu0 %v189
  %247 = vmatprep.subr.bf16.mxu0 %v194
  %248 = vmatpush1.bf16.msra.mxu0 %v193
  %249 = vmatprep.subr.bf16.mxu0 %v198
  %250 = vmatpush1.bf16.msra.mxu0 %v197
  %251 = vmatprep.subr.bf16.mxu0 %v202
  %252 = vmatpush1.bf16.msra.mxu0 %v201
  %253 = vmatprep.subr.bf16.mxu0 0
  %254 = vmatpush1.bf16.msra.mxu0 0
  %255 = vmatprep.subr.bf16.mxu0 0
  %256 = vmatpush1.bf16.msra.mxu0 0
  %257 = vmatprep.subr.bf16.mxu0 0
  %258 = vmatpush1.bf16.msra.mxu0 0
  %259 = vmatprep.subr.bf16.mxu0 0
  %260 = vmatpush1.bf16.msra.mxu0 0
  %261 = vmatprep.subr.bf16.mxu0 0
  %262 = vmatpush1.bf16.msra.mxu0 0
  %263 = vmatprep.subr.bf16.mxu0 0
  %264 = vmatpush1.bf16.msra.mxu0 0
  %265 = vmatprep.subr.bf16.mxu0 0
  %266 = vmatpush1.bf16.msra.mxu0 0
  %267 = vmatprep.subr.bf16.mxu0 0
  %268 = vmatpush1.bf16.msra.mxu0 0
  %269 = vmatprep.mubr.bf16.mxu0 0
  %270 = vmatmul.mubr.bf16.gmra.mrb[0].mxu0 %v76
  %v271 = vpop.f32.mrb[0].mxu0
  %v272 = vadd.f32 0.0, %v271
  %v273 = vpop.f32.mrb[0].mxu0
  %v274 = vadd.f32 0.0, %v273
  %v275 = vpop.f32.mrb[0].mxu0
  %v276 = vpop.f32.mrb[0].mxu0
  %277 = vdwg.mxu0
  %278 = vmatprep.subr.bf16.mxu0 %v176
  %279 = vmatpush1.bf16.msra.mxu0 %v175
  %280 = vmatprep.subr.bf16.mxu0 %v180
  %281 = vmatpush1.bf16.msra.mxu0 %v179
  %282 = vmatprep.subr.bf16.mxu0 %v184
  %283 = vmatpush1.bf16.msra.mxu0 %v183
  %284 = vmatprep.subr.bf16.mxu0 %v188
  %285 = vmatpush1.bf16.msra.mxu0 %v187
  %286 = vmatprep.subr.bf16.mxu0 %v192
  %287 = vmatpush1.bf16.msra.mxu0 %v191
  %288 = vmatprep.subr.bf16.mxu0 %v196
  %289 = vmatpush1.bf16.msra.mxu0 %v195
  %290 = vmatprep.subr.bf16.mxu0 %v200
  %291 = vmatpush1.bf16.msra.mxu0 %v199
  %292 = vmatprep.subr.bf16.mxu0 %v204
  %293 = vmatpush1.bf16.msra.mxu0 %v203
  %294 = vmatprep.subr.bf16.mxu0 0
  %295 = vmatpush1.bf16.msra.mxu0 0
  %296 = vmatprep.subr.bf16.mxu0 0
  %297 = vmatpush1.bf16.msra.mxu0 0
  %298 = vmatprep.subr.bf16.mxu0 0
  %299 = vmatpush1.bf16.msra.mxu0 0
  %300 = vmatprep.subr.bf16.mxu0 0
  %301 = vmatpush1.bf16.msra.mxu0 0
  %302 = vmatprep.subr.bf16.mxu0 0
  %303 = vmatpush1.bf16.msra.mxu0 0
  %304 = vmatprep.subr.bf16.mxu0 0
  %305 = vmatpush1.bf16.msra.mxu0 0
  %306 = vmatprep.subr.bf16.mxu0 0
  %307 = vmatpush1.bf16.msra.mxu0 0
  %308 = vmatprep.subr.bf16.mxu0 0
  %309 = vmatpush1.bf16.msra.mxu0 0
  %310 = vmatprep.mubr.bf16.mxu0 0
  %311 = vmatmul.mubr.bf16.gmra.mrb[0].mxu0 %v76
  %v312 = vpop.f32.mrb[0].mxu0
  %v313 = vadd.f32 0.0, %v312
  %v314 = vpop.f32.mrb[0].mxu0
  %v315 = vadd.f32 0.0, %v314
  %v316 = vpop.f32.mrb[0].mxu0
  %v317 = vpop.f32.mrb[0].mxu0
  %318 = vdwg.mxu0
  %v335 = vunpack.c.l.b16 %v24
  %v336 = vunpack.c.h.b16 %v24
  %v337 = vunpack.c.l.b16 %v25
  %v338 = vunpack.c.h.b16 %v25
  %v339 = vunpack.c.l.b16 %v26
  %v340 = vunpack.c.h.b16 %v26
  %v341 = vunpack.c.l.b16 %v27
  %v342 = vunpack.c.h.b16 %v27
  %v343 = vunpack.c.l.b16 %v28
  %v344 = vunpack.c.h.b16 %v28
  %v345 = vunpack.c.l.b16 %v29
  %v346 = vunpack.c.h.b16 %v29
  %v347 = vunpack.c.l.b16 %v30
  %v348 = vunpack.c.h.b16 %v30
  %v349 = vunpack.c.l.b16 %v31
  %v350 = vunpack.c.h.b16 %v31
  %v351 = vunpack.c.l.b16 %v32
  %v352 = vunpack.c.h.b16 %v32
  %v353 = vunpack.c.l.b16 %v33
  %v354 = vunpack.c.h.b16 %v33
  %v355 = vunpack.c.l.b16 %v34
  %v356 = vunpack.c.h.b16 %v34
  %v357 = vunpack.c.l.b16 %v35
  %v358 = vunpack.c.h.b16 %v35
  %v359 = vunpack.c.l.b16 %v36
  %v360 = vunpack.c.h.b16 %v36
  %v361 = vunpack.c.l.b16 %v37
  %v362 = vunpack.c.h.b16 %v37
  %v363 = vunpack.c.l.b16 %v38
  %v364 = vunpack.c.h.b16 %v38
  %v365 = vunpack.c.l.b16 %v39
  %v366 = vunpack.c.h.b16 %v39
  %v367 = vpack.c.b16 %v339, %v335
  %v368 = vpack.c.b16 %v340, %v336
  %v369 = vpack.c.b16 %v341, %v337
  %v370 = vpack.c.b16 %v342, %v338
  %v371 = vpack.c.b16 %v347, %v343
  %v372 = vpack.c.b16 %v348, %v344
  %v373 = vpack.c.b16 %v349, %v345
  %v374 = vpack.c.b16 %v350, %v346
  %v375 = vpack.c.b16 %v355, %v351
  %v376 = vpack.c.b16 %v356, %v352
  %v377 = vpack.c.b16 %v357, %v353
  %v378 = vpack.c.b16 %v358, %v354
  %v379 = vpack.c.b16 %v363, %v359
  %v380 = vpack.c.b16 %v364, %v360
  %v381 = vpack.c.b16 %v365, %v361
  %v382 = vpack.c.b16 %v366, %v362
  %vm399 = vcmask 523264
  %v401 = vsel %vm399, %v73, 0
  %403 = vmatprep.subr.bf16.mxu0 %v368
  %404 = vmatpush1.bf16.msra.mxu0 %v367
  %405 = vmatprep.subr.bf16.mxu0 %v372
  %406 = vmatpush1.bf16.msra.mxu0 %v371
  %407 = vmatprep.subr.bf16.mxu0 %v376
  %408 = vmatpush1.bf16.msra.mxu0 %v375
  %409 = vmatprep.subr.bf16.mxu0 %v380
  %410 = vmatpush1.bf16.msra.mxu0 %v379
  %411 = vmatprep.subr.bf16.mxu0 0
  %412 = vmatpush1.bf16.msra.mxu0 0
  %413 = vmatprep.subr.bf16.mxu0 0
  %414 = vmatpush1.bf16.msra.mxu0 0
  %415 = vmatprep.subr.bf16.mxu0 0
  %416 = vmatpush1.bf16.msra.mxu0 0
  %417 = vmatprep.subr.bf16.mxu0 0
  %418 = vmatpush1.bf16.msra.mxu0 0
  %419 = vmatprep.subr.bf16.mxu0 0
  %420 = vmatpush1.bf16.msra.mxu0 0
  %421 = vmatprep.subr.bf16.mxu0 0
  %422 = vmatpush1.bf16.msra.mxu0 0
  %423 = vmatprep.subr.bf16.mxu0 0
  %424 = vmatpush1.bf16.msra.mxu0 0
  %425 = vmatprep.subr.bf16.mxu0 0
  %426 = vmatpush1.bf16.msra.mxu0 0
  %427 = vmatprep.subr.bf16.mxu0 0
  %428 = vmatpush1.bf16.msra.mxu0 0
  %429 = vmatprep.subr.bf16.mxu0 0
  %430 = vmatpush1.bf16.msra.mxu0 0
  %431 = vmatprep.subr.bf16.mxu0 0
  %432 = vmatpush1.bf16.msra.mxu0 0
  %433 = vmatprep.subr.bf16.mxu0 0
  %434 = vmatpush1.bf16.msra.mxu0 0
  %435 = vmatprep.mubr.bf16.mxu0 0
  %436 = vmatmul.mubr.bf16.gmra.mrb[0].mxu0 %v401
  %v437 = vpop.f32.mrb[0].mxu0
  %v438 = vadd.f32 %v272, %v437
  %v439 = vpop.f32.mrb[0].mxu0
  %v440 = vadd.f32 %v274, %v439
  %v441 = vpop.f32.mrb[0].mxu0
  %v442 = vpop.f32.mrb[0].mxu0
  %443 = vdwg.mxu0
  %444 = vmatprep.subr.bf16.mxu0 %v370
  %445 = vmatpush1.bf16.msra.mxu0 %v369
  %446 = vmatprep.subr.bf16.mxu0 %v374
  %447 = vmatpush1.bf16.msra.mxu0 %v373
  %448 = vmatprep.subr.bf16.mxu0 %v378
  %449 = vmatpush1.bf16.msra.mxu0 %v377
  %450 = vmatprep.subr.bf16.mxu0 %v382
  %451 = vmatpush1.bf16.msra.mxu0 %v381
  %452 = vmatprep.subr.bf16.mxu0 0
  %453 = vmatpush1.bf16.msra.mxu0 0
  %454 = vmatprep.subr.bf16.mxu0 0
  %455 = vmatpush1.bf16.msra.mxu0 0
  %456 = vmatprep.subr.bf16.mxu0 0
  %457 = vmatpush1.bf16.msra.mxu0 0
  %458 = vmatprep.subr.bf16.mxu0 0
  %459 = vmatpush1.bf16.msra.mxu0 0
  %460 = vmatprep.subr.bf16.mxu0 0
  %461 = vmatpush1.bf16.msra.mxu0 0
  %462 = vmatprep.subr.bf16.mxu0 0
  %463 = vmatpush1.bf16.msra.mxu0 0
  %464 = vmatprep.subr.bf16.mxu0 0
  %465 = vmatpush1.bf16.msra.mxu0 0
  %466 = vmatprep.subr.bf16.mxu0 0
  %467 = vmatpush1.bf16.msra.mxu0 0
  %468 = vmatprep.subr.bf16.mxu0 0
  %469 = vmatpush1.bf16.msra.mxu0 0
  %470 = vmatprep.subr.bf16.mxu0 0
  %471 = vmatpush1.bf16.msra.mxu0 0
  %472 = vmatprep.subr.bf16.mxu0 0
  %473 = vmatpush1.bf16.msra.mxu0 0
  %474 = vmatprep.subr.bf16.mxu0 0
  %475 = vmatpush1.bf16.msra.mxu0 0
  %476 = vmatprep.mubr.bf16.mxu0 0
  %477 = vmatmul.mubr.bf16.gmra.mrb[0].mxu0 %v401
  %v478 = vpop.f32.mrb[0].mxu0
  %v479 = vadd.f32 %v313, %v478
  %v480 = vpop.f32.mrb[0].mxu0
  %v481 = vadd.f32 %v315, %v480
  %v482 = vpop.f32.mrb[0].mxu0
  %v483 = vpop.f32.mrb[0].mxu0
  %484 = vdwg.mxu0
  %v486 = vlaneseq
  %v487 = vshrl.u32 %v486, 7
  %v488 = vsub.s32 0, %v487
  %v489 = vrot.slane %v72, %v488
  %v490 = vlaneseq
  %v491 = vshrl.u32 %v490, 7
  %v492 = vsub.s32 1, %v491
  %v493 = vrot.slane %v72, %v492
  %v494 = vlaneseq
  %v495 = vshrl.u32 %v494, 7
  %v496 = vsub.s32 2, %v495
  %v497 = vrot.slane %v72, %v496
  %v498 = vlaneseq
  %v499 = vshrl.u32 %v498, 7
  %v500 = vsub.s32 3, %v499
  %v501 = vrot.slane %v72, %v500
  %v506 = vadd.f32 %v438, %v489
  %v507 = vadd.f32 %v440, %v493
  %v508 = vadd.f32 %v479, %v497
  %v509 = vadd.f32 %v481, %v501
  %v510 = vxor.u32 %v506, 2147483648
  %v511 = vmul.f32 %v510, 1.442695
  %v512 = vpow.pop %v511
  %v513 = vadd.f32 %v512, 1.0
  %v514 = vrcp.pop %v513
  %v515 = vmul.f32 1.0, %v514
  %v516 = vxor.u32 %v507, 2147483648
  %v517 = vmul.f32 %v516, 1.442695
  %v518 = vpow.pop %v517
  %v519 = vadd.f32 %v518, 1.0
  %v520 = vrcp.pop %v519
  %v521 = vmul.f32 1.0, %v520
  %v522 = vtanh.pop %v508
  %v523 = vxor.u32 %v509, 2147483648
  %v524 = vmul.f32 %v523, 1.442695
  %v525 = vpow.pop %v524
  %v526 = vadd.f32 %v525, 1.0
  %v527 = vrcp.pop %v526
  %v528 = vmul.f32 1.0, %v527
  %v529 = vmul.f32 %v521, %v75
  %v530 = vmul.f32 %v515, %v522
  %v531 = vadd.f32 %v529, %v530
  %v532 = vtanh.pop %v531
  %v533 = vmul.f32 %v528, %v532
  %534 = vst [vmem:[#allocation3] sm:$0xff] %v531
  %535 = vst [vmem:[#allocation2] sm:$0xff] %v533
  %v536 = vpack.c.bf16 %v533, %v533
  %537 = vst [vmem:[%s4] sm:$0xf] %v536
  %s538 = scalar_lea.vmem %s0, 4
  %v539 = vld [vmem:[%s538] sm:$0xf]
  %v540 = vld [vmem:[#allocation2] sm:$0xff]
  %v541 = vld [vmem:[#allocation3] sm:$0xff]
  %v542 = vpack.c.bf16 %v540, %v540
  %543 = vmatprep.subr.bf16.mxu0 %v174
  %544 = vmatpush1.bf16.msra.mxu0 %v173
  %545 = vmatprep.subr.bf16.mxu0 %v178
  %546 = vmatpush1.bf16.msra.mxu0 %v177
  %547 = vmatprep.subr.bf16.mxu0 %v182
  %548 = vmatpush1.bf16.msra.mxu0 %v181
  %549 = vmatprep.subr.bf16.mxu0 %v186
  %550 = vmatpush1.bf16.msra.mxu0 %v185
  %551 = vmatprep.subr.bf16.mxu0 %v190
  %552 = vmatpush1.bf16.msra.mxu0 %v189
  %553 = vmatprep.subr.bf16.mxu0 %v194
  %554 = vmatpush1.bf16.msra.mxu0 %v193
  %555 = vmatprep.subr.bf16.mxu0 %v198
  %556 = vmatpush1.bf16.msra.mxu0 %v197
  %557 = vmatprep.subr.bf16.mxu0 %v202
  %558 = vmatpush1.bf16.msra.mxu0 %v201
  %559 = vmatprep.subr.bf16.mxu0 0
  %560 = vmatpush1.bf16.msra.mxu0 0
  %561 = vmatprep.subr.bf16.mxu0 0
  %562 = vmatpush1.bf16.msra.mxu0 0
  %563 = vmatprep.subr.bf16.mxu0 0
  %564 = vmatpush1.bf16.msra.mxu0 0
  %565 = vmatprep.subr.bf16.mxu0 0
  %566 = vmatpush1.bf16.msra.mxu0 0
  %567 = vmatprep.subr.bf16.mxu0 0
  %568 = vmatpush1.bf16.msra.mxu0 0
  %569 = vmatprep.subr.bf16.mxu0 0
  %570 = vmatpush1.bf16.msra.mxu0 0
  %571 = vmatprep.subr.bf16.mxu0 0
  %572 = vmatpush1.bf16.msra.mxu0 0
  %573 = vmatprep.subr.bf16.mxu0 0
  %574 = vmatpush1.bf16.msra.mxu0 0
  %575 = vmatprep.mubr.bf16.mxu0 0
  %576 = vmatmul.mubr.bf16.gmra.mrb[0].mxu0 %v542
  %v577 = vpop.f32.mrb[0].mxu0
  %v578 = vadd.f32 0.0, %v577
  %v579 = vpop.f32.mrb[0].mxu0
  %v580 = vadd.f32 0.0, %v579
  %v581 = vpop.f32.mrb[0].mxu0
  %v582 = vpop.f32.mrb[0].mxu0
  %583 = vdwg.mxu0
  %584 = vmatprep.subr.bf16.mxu0 %v176
  %585 = vmatpush1.bf16.msra.mxu0 %v175
  %586 = vmatprep.subr.bf16.mxu0 %v180
  %587 = vmatpush1.bf16.msra.mxu0 %v179
  %588 = vmatprep.subr.bf16.mxu0 %v184
  %589 = vmatpush1.bf16.msra.mxu0 %v183
  %590 = vmatprep.subr.bf16.mxu0 %v188
  %591 = vmatpush1.bf16.msra.mxu0 %v187
  %592 = vmatprep.subr.bf16.mxu0 %v192
  %593 = vmatpush1.bf16.msra.mxu0 %v191
  %594 = vmatprep.subr.bf16.mxu0 %v196
  %595 = vmatpush1.bf16.msra.mxu0 %v195
  %596 = vmatprep.subr.bf16.mxu0 %v200
  %597 = vmatpush1.bf16.msra.mxu0 %v199
  %598 = vmatprep.subr.bf16.mxu0 %v204
  %599 = vmatpush1.bf16.msra.mxu0 %v203
  %600 = vmatprep.subr.bf16.mxu0 0
  %601 = vmatpush1.bf16.msra.mxu0 0
  %602 = vmatprep.subr.bf16.mxu0 0
  %603 = vmatpush1.bf16.msra.mxu0 0
  %604 = vmatprep.subr.bf16.mxu0 0
  %605 = vmatpush1.bf16.msra.mxu0 0
  %606 = vmatprep.subr.bf16.mxu0 0
  %607 = vmatpush1.bf16.msra.mxu0 0
  %608 = vmatprep.subr.bf16.mxu0 0
  %609 = vmatpush1.bf16.msra.mxu0 0
  %610 = vmatprep.subr.bf16.mxu0 0
  %611 = vmatpush1.bf16.msra.mxu0 0
  %612 = vmatprep.subr.bf16.mxu0 0
  %613 = vmatpush1.bf16.msra.mxu0 0
  %614 = vmatprep.subr.bf16.mxu0 0
  %615 = vmatpush1.bf16.msra.mxu0 0
  %616 = vmatprep.mubr.bf16.mxu0 0
  %617 = vmatmul.mubr.bf16.gmra.mrb[0].mxu0 %v542
  %v618 = vpop.f32.mrb[0].mxu0
  %v619 = vadd.f32 0.0, %v618
  %v620 = vpop.f32.mrb[0].mxu0
  %v621 = vadd.f32 0.0, %v620
  %v622 = vpop.f32.mrb[0].mxu0
  %v623 = vpop.f32.mrb[0].mxu0
  %624 = vdwg.mxu0
  %v626 = vsel %vm399, %v539, 0
  %628 = vmatprep.subr.bf16.mxu0 %v368
  %629 = vmatpush1.bf16.msra.mxu0 %v367
  %630 = vmatprep.subr.bf16.mxu0 %v372
  %631 = vmatpush1.bf16.msra.mxu0 %v371
  %632 = vmatprep.subr.bf16.mxu0 %v376
  %633 = vmatpush1.bf16.msra.mxu0 %v375
  %634 = vmatprep.subr.bf16.mxu0 %v380
  %635 = vmatpush1.bf16.msra.mxu0 %v379
  %636 = vmatprep.subr.bf16.mxu0 0
  %637 = vmatpush1.bf16.msra.mxu0 0
  %638 = vmatprep.subr.bf16.mxu0 0
  %639 = vmatpush1.bf16.msra.mxu0 0
  %640 = vmatprep.subr.bf16.mxu0 0
  %641 = vmatpush1.bf16.msra.mxu0 0
  %642 = vmatprep.subr.bf16.mxu0 0
  %643 = vmatpush1.bf16.msra.mxu0 0
  %644 = vmatprep.subr.bf16.mxu0 0
  %645 = vmatpush1.bf16.msra.mxu0 0
  %646 = vmatprep.subr.bf16.mxu0 0
  %647 = vmatpush1.bf16.msra.mxu0 0
  %648 = vmatprep.subr.bf16.mxu0 0
  %649 = vmatpush1.bf16.msra.mxu0 0
  %650 = vmatprep.subr.bf16.mxu0 0
  %651 = vmatpush1.bf16.msra.mxu0 0
  %652 = vmatprep.subr.bf16.mxu0 0
  %653 = vmatpush1.bf16.msra.mxu0 0
  %654 = vmatprep.subr.bf16.mxu0 0
  %655 = vmatpush1.bf16.msra.mxu0 0
  %656 = vmatprep.subr.bf16.mxu0 0
  %657 = vmatpush1.bf16.msra.mxu0 0
  %658 = vmatprep.subr.bf16.mxu0 0
  %659 = vmatpush1.bf16.msra.mxu0 0
  %660 = vmatprep.mubr.bf16.mxu0 0
  %661 = vmatmul.mubr.bf16.gmra.mrb[0].mxu0 %v626
  %v662 = vpop.f32.mrb[0].mxu0
  %v663 = vadd.f32 %v578, %v662
  %v664 = vpop.f32.mrb[0].mxu0
  %v665 = vadd.f32 %v580, %v664
  %v666 = vpop.f32.mrb[0].mxu0
  %v667 = vpop.f32.mrb[0].mxu0
  %668 = vdwg.mxu0
  %669 = vmatprep.subr.bf16.mxu0 %v370
  %670 = vmatpush1.bf16.msra.mxu0 %v369
  %671 = vmatprep.subr.bf16.mxu0 %v374
  %672 = vmatpush1.bf16.msra.mxu0 %v373
  %673 = vmatprep.subr.bf16.mxu0 %v378
  %674 = vmatpush1.bf16.msra.mxu0 %v377
  %675 = vmatprep.subr.bf16.mxu0 %v382
  %676 = vmatpush1.bf16.msra.mxu0 %v381
  %677 = vmatprep.subr.bf16.mxu0 0
  %678 = vmatpush1.bf16.msra.mxu0 0
  %679 = vmatprep.subr.bf16.mxu0 0
  %680 = vmatpush1.bf16.msra.mxu0 0
  %681 = vmatprep.subr.bf16.mxu0 0
  %682 = vmatpush1.bf16.msra.mxu0 0
  %683 = vmatprep.subr.bf16.mxu0 0
  %684 = vmatpush1.bf16.msra.mxu0 0
  %685 = vmatprep.subr.bf16.mxu0 0
  %686 = vmatpush1.bf16.msra.mxu0 0
  %687 = vmatprep.subr.bf16.mxu0 0
  %688 = vmatpush1.bf16.msra.mxu0 0
  %689 = vmatprep.subr.bf16.mxu0 0
  %690 = vmatpush1.bf16.msra.mxu0 0
  %691 = vmatprep.subr.bf16.mxu0 0
  %692 = vmatpush1.bf16.msra.mxu0 0
  %693 = vmatprep.subr.bf16.mxu0 0
  %694 = vmatpush1.bf16.msra.mxu0 0
  %695 = vmatprep.subr.bf16.mxu0 0
  %696 = vmatpush1.bf16.msra.mxu0 0
  %697 = vmatprep.subr.bf16.mxu0 0
  %698 = vmatpush1.bf16.msra.mxu0 0
  %699 = vmatprep.subr.bf16.mxu0 0
  %700 = vmatpush1.bf16.msra.mxu0 0
  %701 = vmatprep.mubr.bf16.mxu0 0
  %702 = vmatmul.mubr.bf16.gmra.mrb[0].mxu0 %v626
  %v703 = vpop.f32.mrb[0].mxu0
  %v704 = vadd.f32 %v619, %v703
  %v705 = vpop.f32.mrb[0].mxu0
  %v706 = vadd.f32 %v621, %v705
  %v707 = vpop.f32.mrb[0].mxu0
  %v708 = vpop.f32.mrb[0].mxu0
  %709 = vdwg.mxu0
  %v710 = vadd.f32 %v663, %v489
  %v711 = vadd.f32 %v665, %v493
  %v712 = vadd.f32 %v704, %v497
  %v713 = vadd.f32 %v706, %v501
  %v714 = vxor.u32 %v710, 2147483648
  %v715 = vmul.f32 %v714, 1.442695
  %v716 = vpow.pop %v715
  %v717 = vadd.f32 %v716, 1.0
  %v718 = vrcp.pop %v717
  %v719 = vmul.f32 1.0, %v718
  %v720 = vxor.u32 %v711, 2147483648
  %v721 = vmul.f32 %v720, 1.442695
  %v722 = vpow.pop %v721
  %v723 = vadd.f32 %v722, 1.0
  %v724 = vrcp.pop %v723
  %v725 = vmul.f32 1.0, %v724
  %v726 = vtanh.pop %v712
  %v727 = vxor.u32 %v713, 2147483648
  %v728 = vmul.f32 %v727, 1.442695
  %v729 = vpow.pop %v728
  %v730 = vadd.f32 %v729, 1.0
  %v731 = vrcp.pop %v730
  %v732 = vmul.f32 1.0, %v731
  %v733 = vmul.f32 %v725, %v541
  %v734 = vmul.f32 %v719, %v726
  %v735 = vadd.f32 %v733, %v734
  %v736 = vtanh.pop %v735
  %v737 = vmul.f32 %v732, %v736
  %738 = vst [vmem:[#allocation3] sm:$0xff] %v735
  %739 = vst [vmem:[#allocation2] sm:$0xff] %v737
  %v740 = vpack.c.bf16 %v737, %v737
  %s741 = scalar_lea.vmem %s4, 4
  %742 = vst [vmem:[%s741] sm:$0xf] %v740
  %s743 = scalar_lea.vmem %s0, 8
  %v744 = vld [vmem:[%s743] sm:$0xf]
  %v745 = vld [vmem:[#allocation2] sm:$0xff]
  %v746 = vld [vmem:[#allocation3] sm:$0xff]
  %v747 = vpack.c.bf16 %v745, %v745
  %748 = vmatprep.subr.bf16.mxu0 %v174
  %749 = vmatpush1.bf16.msra.mxu0 %v173
  %750 = vmatprep.subr.bf16.mxu0 %v178
  %751 = vmatpush1.bf16.msra.mxu0 %v177
  %752 = vmatprep.subr.bf16.mxu0 %v182
  %753 = vmatpush1.bf16.msra.mxu0 %v181
  %754 = vmatprep.subr.bf16.mxu0 %v186
  %755 = vmatpush1.bf16.msra.mxu0 %v185
  %756 = vmatprep.subr.bf16.mxu0 %v190
  %757 = vmatpush1.bf16.msra.mxu0 %v189
  %758 = vmatprep.subr.bf16.mxu0 %v194
  %759 = vmatpush1.bf16.msra.mxu0 %v193
  %760 = vmatprep.subr.bf16.mxu0 %v198
  %761 = vmatpush1.bf16.msra.mxu0 %v197
  %762 = vmatprep.subr.bf16.mxu0 %v202
  %763 = vmatpush1.bf16.msra.mxu0 %v201
  %764 = vmatprep.subr.bf16.mxu0 0
  %765 = vmatpush1.bf16.msra.mxu0 0
  %766 = vmatprep.subr.bf16.mxu0 0
  %767 = vmatpush1.bf16.msra.mxu0 0
  %768 = vmatprep.subr.bf16.mxu0 0
  %769 = vmatpush1.bf16.msra.mxu0 0
  %770 = vmatprep.subr.bf16.mxu0 0
  %771 = vmatpush1.bf16.msra.mxu0 0
  %772 = vmatprep.subr.bf16.mxu0 0
  %773 = vmatpush1.bf16.msra.mxu0 0
  %774 = vmatprep.subr.bf16.mxu0 0
  %775 = vmatpush1.bf16.msra.mxu0 0
  %776 = vmatprep.subr.bf16.mxu0 0
  %777 = vmatpush1.bf16.msra.mxu0 0
  %778 = vmatprep.subr.bf16.mxu0 0
  %779 = vmatpush1.bf16.msra.mxu0 0
  %780 = vmatprep.mubr.bf16.mxu0 0
  %781 = vmatmul.mubr.bf16.gmra.mrb[0].mxu0 %v747
  %v782 = vpop.f32.mrb[0].mxu0
  %v783 = vadd.f32 0.0, %v782
  %v784 = vpop.f32.mrb[0].mxu0
  %v785 = vadd.f32 0.0, %v784
  %v786 = vpop.f32.mrb[0].mxu0
  %v787 = vpop.f32.mrb[0].mxu0
  %788 = vdwg.mxu0
  %789 = vmatprep.subr.bf16.mxu0 %v176
  %790 = vmatpush1.bf16.msra.mxu0 %v175
  %791 = vmatprep.subr.bf16.mxu0 %v180
  %792 = vmatpush1.bf16.msra.mxu0 %v179
  %793 = vmatprep.subr.bf16.mxu0 %v184
  %794 = vmatpush1.bf16.msra.mxu0 %v183
  %795 = vmatprep.subr.bf16.mxu0 %v188
  %796 = vmatpush1.bf16.msra.mxu0 %v187
  %797 = vmatprep.subr.bf16.mxu0 %v192
  %798 = vmatpush1.bf16.msra.mxu0 %v191
  %799 = vmatprep.subr.bf16.mxu0 %v196
  %800 = vmatpush1.bf16.msra.mxu0 %v195
  %801 = vmatprep.subr.bf16.mxu0 %v200
  %802 = vmatpush1.bf16.msra.mxu0 %v199
  %803 = vmatprep.subr.bf16.mxu0 %v204
  %804 = vmatpush1.bf16.msra.mxu0 %v203
  %805 = vmatprep.subr.bf16.mxu0 0
  %806 = vmatpush1.bf16.msra.mxu0 0
  %807 = vmatprep.subr.bf16.mxu0 0
  %808 = vmatpush1.bf16.msra.mxu0 0
  %809 = vmatprep.subr.bf16.mxu0 0
  %810 = vmatpush1.bf16.msra.mxu0 0
  %811 = vmatprep.subr.bf16.mxu0 0
  %812 = vmatpush1.bf16.msra.mxu0 0
  %813 = vmatprep.subr.bf16.mxu0 0
  %814 = vmatpush1.bf16.msra.mxu0 0
  %815 = vmatprep.subr.bf16.mxu0 0
  %816 = vmatpush1.bf16.msra.mxu0 0
  %817 = vmatprep.subr.bf16.mxu0 0
  %818 = vmatpush1.bf16.msra.mxu0 0
  %819 = vmatprep.subr.bf16.mxu0 0
  %820 = vmatpush1.bf16.msra.mxu0 0
  %821 = vmatprep.mubr.bf16.mxu0 0
  %822 = vmatmul.mubr.bf16.gmra.mrb[0].mxu0 %v747
  %v823 = vpop.f32.mrb[0].mxu0
  %v824 = vadd.f32 0.0, %v823
  %v825 = vpop.f32.mrb[0].mxu0
  %v826 = vadd.f32 0.0, %v825
  %v827 = vpop.f32.mrb[0].mxu0
  %v828 = vpop.f32.mrb[0].mxu0
  %829 = vdwg.mxu0
  %v831 = vsel %vm399, %v744, 0
  %833 = vmatprep.subr.bf16.mxu0 %v368
  %834 = vmatpush1.bf16.msra.mxu0 %v367
  %835 = vmatprep.subr.bf16.mxu0 %v372
  %836 = vmatpush1.bf16.msra.mxu0 %v371
  %837 = vmatprep.subr.bf16.mxu0 %v376
  %838 = vmatpush1.bf16.msra.mxu0 %v375
  %839 = vmatprep.subr.bf16.mxu0 %v380
  %840 = vmatpush1.bf16.msra.mxu0 %v379
  %841 = vmatprep.subr.bf16.mxu0 0
  %842 = vmatpush1.bf16.msra.mxu0 0
  %843 = vmatprep.subr.bf16.mxu0 0
  %844 = vmatpush1.bf16.msra.mxu0 0
  %845 = vmatprep.subr.bf16.mxu0 0
  %846 = vmatpush1.bf16.msra.mxu0 0
  %847 = vmatprep.subr.bf16.mxu0 0
  %848 = vmatpush1.bf16.msra.mxu0 0
  %849 = vmatprep.subr.bf16.mxu0 0
  %850 = vmatpush1.bf16.msra.mxu0 0
  %851 = vmatprep.subr.bf16.mxu0 0
  %852 = vmatpush1.bf16.msra.mxu0 0
  %853 = vmatprep.subr.bf16.mxu0 0
  %854 = vmatpush1.bf16.msra.mxu0 0
  %855 = vmatprep.subr.bf16.mxu0 0
  %856 = vmatpush1.bf16.msra.mxu0 0
  %857 = vmatprep.subr.bf16.mxu0 0
  %858 = vmatpush1.bf16.msra.mxu0 0
  %859 = vmatprep.subr.bf16.mxu0 0
  %860 = vmatpush1.bf16.msra.mxu0 0
  %861 = vmatprep.subr.bf16.mxu0 0
  %862 = vmatpush1.bf16.msra.mxu0 0
  %863 = vmatprep.subr.bf16.mxu0 0
  %864 = vmatpush1.bf16.msra.mxu0 0
  %865 = vmatprep.mubr.bf16.mxu0 0
  %866 = vmatmul.mubr.bf16.gmra.mrb[0].mxu0 %v831
  %v867 = vpop.f32.mrb[0].mxu0
  %v868 = vadd.f32 %v783, %v867
  %v869 = vpop.f32.mrb[0].mxu0
  %v870 = vadd.f32 %v785, %v869
  %v871 = vpop.f32.mrb[0].mxu0
  %v872 = vpop.f32.mrb[0].mxu0
  %873 = vdwg.mxu0
  %874 = vmatprep.subr.bf16.mxu0 %v370
  %875 = vmatpush1.bf16.msra.mxu0 %v369
  %876 = vmatprep.subr.bf16.mxu0 %v374
  %877 = vmatpush1.bf16.msra.mxu0 %v373
  %878 = vmatprep.subr.bf16.mxu0 %v378
  %879 = vmatpush1.bf16.msra.mxu0 %v377
  %880 = vmatprep.subr.bf16.mxu0 %v382
  %881 = vmatpush1.bf16.msra.mxu0 %v381
  %882 = vmatprep.subr.bf16.mxu0 0
  %883 = vmatpush1.bf16.msra.mxu0 0
  %884 = vmatprep.subr.bf16.mxu0 0
  %885 = vmatpush1.bf16.msra.mxu0 0
  %886 = vmatprep.subr.bf16.mxu0 0
  %887 = vmatpush1.bf16.msra.mxu0 0
  %888 = vmatprep.subr.bf16.mxu0 0
  %889 = vmatpush1.bf16.msra.mxu0 0
  %890 = vmatprep.subr.bf16.mxu0 0
  %891 = vmatpush1.bf16.msra.mxu0 0
  %892 = vmatprep.subr.bf16.mxu0 0
  %893 = vmatpush1.bf16.msra.mxu0 0
  %894 = vmatprep.subr.bf16.mxu0 0
  %895 = vmatpush1.bf16.msra.mxu0 0
  %896 = vmatprep.subr.bf16.mxu0 0
  %897 = vmatpush1.bf16.msra.mxu0 0
  %898 = vmatprep.subr.bf16.mxu0 0
  %899 = vmatpush1.bf16.msra.mxu0 0
  %900 = vmatprep.subr.bf16.mxu0 0
  %901 = vmatpush1.bf16.msra.mxu0 0
  %902 = vmatprep.subr.bf16.mxu0 0
  %903 = vmatpush1.bf16.msra.mxu0 0
  %904 = vmatprep.subr.bf16.mxu0 0
  %905 = vmatpush1.bf16.msra.mxu0 0
  %906 = vmatprep.mubr.bf16.mxu0 0
  %907 = vmatmul.mubr.bf16.gmra.mrb[0].mxu0 %v831
  %v908 = vpop.f32.mrb[0].mxu0
  %v909 = vadd.f32 %v824, %v908
  %v910 = vpop.f32.mrb[0].mxu0
  %v911 = vadd.f32 %v826, %v910
  %v912 = vpop.f32.mrb[0].mxu0
  %v913 = vpop.f32.mrb[0].mxu0
  %914 = vdwg.mxu0
  %v915 = vadd.f32 %v868, %v489
  %v916 = vadd.f32 %v870, %v493
  %v917 = vadd.f32 %v909, %v497
  %v918 = vadd.f32 %v911, %v501
  %v919 = vxor.u32 %v915, 2147483648
  %v920 = vmul.f32 %v919, 1.442695
  %v921 = vpow.pop %v920
  %v922 = vadd.f32 %v921, 1.0
  %v923 = vrcp.pop %v922
  %v924 = vmul.f32 1.0, %v923
  %v925 = vxor.u32 %v916, 2147483648
  %v926 = vmul.f32 %v925, 1.442695
  %v927 = vpow.pop %v926
  %v928 = vadd.f32 %v927, 1.0
  %v929 = vrcp.pop %v928
  %v930 = vmul.f32 1.0, %v929
  %v931 = vtanh.pop %v917
  %v932 = vxor.u32 %v918, 2147483648
  %v933 = vmul.f32 %v932, 1.442695
  %v934 = vpow.pop %v933
  %v935 = vadd.f32 %v934, 1.0
  %v936 = vrcp.pop %v935
  %v937 = vmul.f32 1.0, %v936
  %v938 = vmul.f32 %v930, %v746
  %v939 = vmul.f32 %v924, %v931
  %v940 = vadd.f32 %v938, %v939
  %v941 = vtanh.pop %v940
  %v942 = vmul.f32 %v937, %v941
  %943 = vst [vmem:[#allocation3] sm:$0xff] %v940
  %944 = vst [vmem:[#allocation2] sm:$0xff] %v942
  %v945 = vpack.c.bf16 %v942, %v942
  %s946 = scalar_lea.vmem %s4, 8
  %947 = vst [vmem:[%s946] sm:$0xf] %v945
  %s948 = scalar_lea.vmem %s0, 12
  %v949 = vld [vmem:[%s948] sm:$0xf]
  %v950 = vld [vmem:[#allocation2] sm:$0xff]
  %v951 = vld [vmem:[#allocation3] sm:$0xff]
  %v952 = vpack.c.bf16 %v950, %v950
  %953 = vmatprep.subr.bf16.mxu0 %v174
  %954 = vmatpush1.bf16.msra.mxu0 %v173
  %955 = vmatprep.subr.bf16.mxu0 %v178
  %956 = vmatpush1.bf16.msra.mxu0 %v177
  %957 = vmatprep.subr.bf16.mxu0 %v182
  %958 = vmatpush1.bf16.msra.mxu0 %v181
  %959 = vmatprep.subr.bf16.mxu0 %v186
  %960 = vmatpush1.bf16.msra.mxu0 %v185
  %961 = vmatprep.subr.bf16.mxu0 %v190
  %962 = vmatpush1.bf16.msra.mxu0 %v189
  %963 = vmatprep.subr.bf16.mxu0 %v194
  %964 = vmatpush1.bf16.msra.mxu0 %v193
  %965 = vmatprep.subr.bf16.mxu0 %v198
  %966 = vmatpush1.bf16.msra.mxu0 %v197
  %967 = vmatprep.subr.bf16.mxu0 %v202
  %968 = vmatpush1.bf16.msra.mxu0 %v201
  %969 = vmatprep.subr.bf16.mxu0 0
  %970 = vmatpush1.bf16.msra.mxu0 0
  %971 = vmatprep.subr.bf16.mxu0 0
  %972 = vmatpush1.bf16.msra.mxu0 0
  %973 = vmatprep.subr.bf16.mxu0 0
  %974 = vmatpush1.bf16.msra.mxu0 0
  %975 = vmatprep.subr.bf16.mxu0 0
  %976 = vmatpush1.bf16.msra.mxu0 0
  %977 = vmatprep.subr.bf16.mxu0 0
  %978 = vmatpush1.bf16.msra.mxu0 0
  %979 = vmatprep.subr.bf16.mxu0 0
  %980 = vmatpush1.bf16.msra.mxu0 0
  %981 = vmatprep.subr.bf16.mxu0 0
  %982 = vmatpush1.bf16.msra.mxu0 0
  %983 = vmatprep.subr.bf16.mxu0 0
  %984 = vmatpush1.bf16.msra.mxu0 0
  %985 = vmatprep.mubr.bf16.mxu0 0
  %986 = vmatmul.mubr.bf16.gmra.mrb[0].mxu0 %v952
  %v987 = vpop.f32.mrb[0].mxu0
  %v988 = vadd.f32 0.0, %v987
  %v989 = vpop.f32.mrb[0].mxu0
  %v990 = vadd.f32 0.0, %v989
  %v991 = vpop.f32.mrb[0].mxu0
  %v992 = vpop.f32.mrb[0].mxu0
  %993 = vdwg.mxu0
  %994 = vmatprep.subr.bf16.mxu0 %v176
  %995 = vmatpush1.bf16.msra.mxu0 %v175
  %996 = vmatprep.subr.bf16.mxu0 %v180
  %997 = vmatpush1.bf16.msra.mxu0 %v179
  %998 = vmatprep.subr.bf16.mxu0 %v184
  %999 = vmatpush1.bf16.msra.mxu0 %v183
  %1000 = vmatprep.subr.bf16.mxu0 %v188
  %1001 = vmatpush1.bf16.msra.mxu0 %v187
  %1002 = vmatprep.subr.bf16.mxu0 %v192
  %1003 = vmatpush1.bf16.msra.mxu0 %v191
  %1004 = vmatprep.subr.bf16.mxu0 %v196
  %1005 = vmatpush1.bf16.msra.mxu0 %v195
  %1006 = vmatprep.subr.bf16.mxu0 %v200
  %1007 = vmatpush1.bf16.msra.mxu0 %v199
  %1008 = vmatprep.subr.bf16.mxu0 %v204
  %1009 = vmatpush1.bf16.msra.mxu0 %v203
  %1010 = vmatprep.subr.bf16.mxu0 0
  %1011 = vmatpush1.bf16.msra.mxu0 0
  %1012 = vmatprep.subr.bf16.mxu0 0
  %1013 = vmatpush1.bf16.msra.mxu0 0
  %1014 = vmatprep.subr.bf16.mxu0 0
  %1015 = vmatpush1.bf16.msra.mxu0 0
  %1016 = vmatprep.subr.bf16.mxu0 0
  %1017 = vmatpush1.bf16.msra.mxu0 0
  %1018 = vmatprep.subr.bf16.mxu0 0
  %1019 = vmatpush1.bf16.msra.mxu0 0
  %1020 = vmatprep.subr.bf16.mxu0 0
  %1021 = vmatpush1.bf16.msra.mxu0 0
  %1022 = vmatprep.subr.bf16.mxu0 0
  %1023 = vmatpush1.bf16.msra.mxu0 0
  %1024 = vmatprep.subr.bf16.mxu0 0
  %1025 = vmatpush1.bf16.msra.mxu0 0
  %1026 = vmatprep.mubr.bf16.mxu0 0
  %1027 = vmatmul.mubr.bf16.gmra.mrb[0].mxu0 %v952
  %v1028 = vpop.f32.mrb[0].mxu0
  %v1029 = vadd.f32 0.0, %v1028
  %v1030 = vpop.f32.mrb[0].mxu0
  %v1031 = vadd.f32 0.0, %v1030
  %v1032 = vpop.f32.mrb[0].mxu0
  %v1033 = vpop.f32.mrb[0].mxu0
  %1034 = vdwg.mxu0
  %v1036 = vsel %vm399, %v949, 0
  %1038 = vmatprep.subr.bf16.mxu0 %v368
  %1039 = vmatpush1.bf16.msra.mxu0 %v367
  %1040 = vmatprep.subr.bf16.mxu0 %v372
  %1041 = vmatpush1.bf16.msra.mxu0 %v371
  %1042 = vmatprep.subr.bf16.mxu0 %v376
  %1043 = vmatpush1.bf16.msra.mxu0 %v375
  %1044 = vmatprep.subr.bf16.mxu0 %v380
  %1045 = vmatpush1.bf16.msra.mxu0 %v379
  %1046 = vmatprep.subr.bf16.mxu0 0
  %1047 = vmatpush1.bf16.msra.mxu0 0
  %1048 = vmatprep.subr.bf16.mxu0 0
  %1049 = vmatpush1.bf16.msra.mxu0 0
  %1050 = vmatprep.subr.bf16.mxu0 0
  %1051 = vmatpush1.bf16.msra.mxu0 0
  %1052 = vmatprep.subr.bf16.mxu0 0
  %1053 = vmatpush1.bf16.msra.mxu0 0
  %1054 = vmatprep.subr.bf16.mxu0 0
  %1055 = vmatpush1.bf16.msra.mxu0 0
  %1056 = vmatprep.subr.bf16.mxu0 0
  %1057 = vmatpush1.bf16.msra.mxu0 0
  %1058 = vmatprep.subr.bf16.mxu0 0
  %1059 = vmatpush1.bf16.msra.mxu0 0
  %1060 = vmatprep.subr.bf16.mxu0 0
  %1061 = vmatpush1.bf16.msra.mxu0 0
  %1062 = vmatprep.subr.bf16.mxu0 0
  %1063 = vmatpush1.bf16.msra.mxu0 0
  %1064 = vmatprep.subr.bf16.mxu0 0
  %1065 = vmatpush1.bf16.msra.mxu0 0
  %1066 = vmatprep.subr.bf16.mxu0 0
  %1067 = vmatpush1.bf16.msra.mxu0 0
  %1068 = vmatprep.subr.bf16.mxu0 0
  %1069 = vmatpush1.bf16.msra.mxu0 0
  %1070 = vmatprep.mubr.bf16.mxu0 0
  %1071 = vmatmul.mubr.bf16.gmra.mrb[0].mxu0 %v1036
  %v1072 = vpop.f32.mrb[0].mxu0
  %v1073 = vadd.f32 %v988, %v1072
  %v1074 = vpop.f32.mrb[0].mxu0
  %v1075 = vadd.f32 %v990, %v1074
  %v1076 = vpop.f32.mrb[0].mxu0
  %v1077 = vpop.f32.mrb[0].mxu0
  %1078 = vdwg.mxu0
  %1079 = vmatprep.subr.bf16.mxu0 %v370
  %1080 = vmatpush1.bf16.msra.mxu0 %v369
  %1081 = vmatprep.subr.bf16.mxu0 %v374
  %1082 = vmatpush1.bf16.msra.mxu0 %v373
  %1083 = vmatprep.subr.bf16.mxu0 %v378
  %1084 = vmatpush1.bf16.msra.mxu0 %v377
  %1085 = vmatprep.subr.bf16.mxu0 %v382
  %1086 = vmatpush1.bf16.msra.mxu0 %v381
  %1087 = vmatprep.subr.bf16.mxu0 0
  %1088 = vmatpush1.bf16.msra.mxu0 0
  %1089 = vmatprep.subr.bf16.mxu0 0
  %1090 = vmatpush1.bf16.msra.mxu0 0
  %1091 = vmatprep.subr.bf16.mxu0 0
  %1092 = vmatpush1.bf16.msra.mxu0 0
  %1093 = vmatprep.subr.bf16.mxu0 0
  %1094 = vmatpush1.bf16.msra.mxu0 0
  %1095 = vmatprep.subr.bf16.mxu0 0
  %1096 = vmatpush1.bf16.msra.mxu0 0
  %1097 = vmatprep.subr.bf16.mxu0 0
  %1098 = vmatpush1.bf16.msra.mxu0 0
  %1099 = vmatprep.subr.bf16.mxu0 0
  %1100 = vmatpush1.bf16.msra.mxu0 0
  %1101 = vmatprep.subr.bf16.mxu0 0
  %1102 = vmatpush1.bf16.msra.mxu0 0
  %1103 = vmatprep.subr.bf16.mxu0 0
  %1104 = vmatpush1.bf16.msra.mxu0 0
  %1105 = vmatprep.subr.bf16.mxu0 0
  %1106 = vmatpush1.bf16.msra.mxu0 0
  %1107 = vmatprep.subr.bf16.mxu0 0
  %1108 = vmatpush1.bf16.msra.mxu0 0
  %1109 = vmatprep.subr.bf16.mxu0 0
  %1110 = vmatpush1.bf16.msra.mxu0 0
  %1111 = vmatprep.mubr.bf16.mxu0 0
  %1112 = vmatmul.mubr.bf16.gmra.mrb[0].mxu0 %v1036
  %v1113 = vpop.f32.mrb[0].mxu0
  %v1114 = vadd.f32 %v1029, %v1113
  %v1115 = vpop.f32.mrb[0].mxu0
  %v1116 = vadd.f32 %v1031, %v1115
  %v1117 = vpop.f32.mrb[0].mxu0
  %v1118 = vpop.f32.mrb[0].mxu0
  %1119 = vdwg.mxu0
  %v1120 = vadd.f32 %v1073, %v489
  %v1121 = vadd.f32 %v1075, %v493
  %v1122 = vadd.f32 %v1114, %v497
  %v1123 = vadd.f32 %v1116, %v501
  %v1124 = vxor.u32 %v1120, 2147483648
  %v1125 = vmul.f32 %v1124, 1.442695
  %v1126 = vpow.pop %v1125
  %v1127 = vadd.f32 %v1126, 1.0
  %v1128 = vrcp.pop %v1127
  %v1129 = vmul.f32 1.0, %v1128
  %v1130 = vxor.u32 %v1121, 2147483648
  %v1131 = vmul.f32 %v1130, 1.442695
  %v1132 = vpow.pop %v1131
  %v1133 = vadd.f32 %v1132, 1.0
  %v1134 = vrcp.pop %v1133
  %v1135 = vmul.f32 1.0, %v1134
  %v1136 = vtanh.pop %v1122
  %v1137 = vxor.u32 %v1123, 2147483648
  %v1138 = vmul.f32 %v1137, 1.442695
  %v1139 = vpow.pop %v1138
  %v1140 = vadd.f32 %v1139, 1.0
  %v1141 = vrcp.pop %v1140
  %v1142 = vmul.f32 1.0, %v1141
  %v1143 = vmul.f32 %v1135, %v951
  %v1144 = vmul.f32 %v1129, %v1136
  %v1145 = vadd.f32 %v1143, %v1144
  %v1146 = vtanh.pop %v1145
  %v1147 = vmul.f32 %v1142, %v1146
  %1148 = vst [vmem:[#allocation3] sm:$0xff] %v1145
  %1149 = vst [vmem:[#allocation2] sm:$0xff] %v1147
  %v1150 = vpack.c.bf16 %v1147, %v1147
  %s1151 = scalar_lea.vmem %s4, 12
  %1152 = vst [vmem:[%s1151] sm:$0xf] %v1150
  %s1153 = scalar_lea.vmem %s0, 16
  %v1154 = vld [vmem:[%s1153] sm:$0xf]
  %v1155 = vld [vmem:[#allocation2] sm:$0xff]
  %v1156 = vld [vmem:[#allocation3] sm:$0xff]
  %v1157 = vpack.c.bf16 %v1155, %v1155
  %1158 = vmatprep.subr.bf16.mxu0 %v174
  %1159 = vmatpush1.bf16.msra.mxu0 %v173
  %1160 = vmatprep.subr.bf16.mxu0 %v178
  %1161 = vmatpush1.bf16.msra.mxu0 %v177
  %1162 = vmatprep.subr.bf16.mxu0 %v182
  %1163 = vmatpush1.bf16.msra.mxu0 %v181
  %1164 = vmatprep.subr.bf16.mxu0 %v186
  %1165 = vmatpush1.bf16.msra.mxu0 %v185
  %1166 = vmatprep.subr.bf16.mxu0 %v190
  %1167 = vmatpush1.bf16.msra.mxu0 %v189
  %1168 = vmatprep.subr.bf16.mxu0 %v194
  %1169 = vmatpush1.bf16.msra.mxu0 %v193
  %1170 = vmatprep.subr.bf16.mxu0 %v198
  %1171 = vmatpush1.bf16.msra.mxu0 %v197
  %1172 = vmatprep.subr.bf16.mxu0 %v202
  %1173 = vmatpush1.bf16.msra.mxu0 %v201
  %1174 = vmatprep.subr.bf16.mxu0 0
  %1175 = vmatpush1.bf16.msra.mxu0 0
  %1176 = vmatprep.subr.bf16.mxu0 0
  %1177 = vmatpush1.bf16.msra.mxu0 0
  %1178 = vmatprep.subr.bf16.mxu0 0
  %1179 = vmatpush1.bf16.msra.mxu0 0
  %1180 = vmatprep.subr.bf16.mxu0 0
  %1181 = vmatpush1.bf16.msra.mxu0 0
  %1182 = vmatprep.subr.bf16.mxu0 0
  %1183 = vmatpush1.bf16.msra.mxu0 0
  %1184 = vmatprep.subr.bf16.mxu0 0
  %1185 = vmatpush1.bf16.msra.mxu0 0
  %1186 = vmatprep.subr.bf16.mxu0 0
  %1187 = vmatpush1.bf16.msra.mxu0 0
  %1188 = vmatprep.subr.bf16.mxu0 0
  %1189 = vmatpush1.bf16.msra.mxu0 0
  %1190 = vmatprep.mubr.bf16.mxu0 0
  %1191 = vmatmul.mubr.bf16.gmra.mrb[0].mxu0 %v1157
  %v1192 = vpop.f32.mrb[0].mxu0
  %v1193 = vadd.f32 0.0, %v1192
  %v1194 = vpop.f32.mrb[0].mxu0
  %v1195 = vadd.f32 0.0, %v1194
  %v1196 = vpop.f32.mrb[0].mxu0
  %v1197 = vpop.f32.mrb[0].mxu0
  %1198 = vdwg.mxu0
  %1199 = vmatprep.subr.bf16.mxu0 %v176
  %1200 = vmatpush1.bf16.msra.mxu0 %v175
  %1201 = vmatprep.subr.bf16.mxu0 %v180
  %1202 = vmatpush1.bf16.msra.mxu0 %v179
  %1203 = vmatprep.subr.bf16.mxu0 %v184
  %1204 = vmatpush1.bf16.msra.mxu0 %v183
  %1205 = vmatprep.subr.bf16.mxu0 %v188
  %1206 = vmatpush1.bf16.msra.mxu0 %v187
  %1207 = vmatprep.subr.bf16.mxu0 %v192
  %1208 = vmatpush1.bf16.msra.mxu0 %v191
  %1209 = vmatprep.subr.bf16.mxu0 %v196
  %1210 = vmatpush1.bf16.msra.mxu0 %v195
  %1211 = vmatprep.subr.bf16.mxu0 %v200
  %1212 = vmatpush1.bf16.msra.mxu0 %v199
  %1213 = vmatprep.subr.bf16.mxu0 %v204
  %1214 = vmatpush1.bf16.msra.mxu0 %v203
  %1215 = vmatprep.subr.bf16.mxu0 0
  %1216 = vmatpush1.bf16.msra.mxu0 0
  %1217 = vmatprep.subr.bf16.mxu0 0
  %1218 = vmatpush1.bf16.msra.mxu0 0
  %1219 = vmatprep.subr.bf16.mxu0 0
  %1220 = vmatpush1.bf16.msra.mxu0 0
  %1221 = vmatprep.subr.bf16.mxu0 0
  %1222 = vmatpush1.bf16.msra.mxu0 0
  %1223 = vmatprep.subr.bf16.mxu0 0
  %1224 = vmatpush1.bf16.msra.mxu0 0
  %1225 = vmatprep.subr.bf16.mxu0 0
  %1226 = vmatpush1.bf16.msra.mxu0 0
  %1227 = vmatprep.subr.bf16.mxu0 0
  %1228 = vmatpush1.bf16.msra.mxu0 0
  %1229 = vmatprep.subr.bf16.mxu0 0
  %1230 = vmatpush1.bf16.msra.mxu0 0
  %1231 = vmatprep.mubr.bf16.mxu0 0
  %1232 = vmatmul.mubr.bf16.gmra.mrb[0].mxu0 %v1157
  %v1233 = vpop.f32.mrb[0].mxu0
  %v1234 = vadd.f32 0.0, %v1233
  %v1235 = vpop.f32.mrb[0].mxu0
  %v1236 = vadd.f32 0.0, %v1235
  %v1237 = vpop.f32.mrb[0].mxu0
  %v1238 = vpop.f32.mrb[0].mxu0
  %1239 = vdwg.mxu0
  %v1241 = vsel %vm399, %v1154, 0
  %1243 = vmatprep.subr.bf16.mxu0 %v368
  %1244 = vmatpush1.bf16.msra.mxu0 %v367
  %1245 = vmatprep.subr.bf16.mxu0 %v372
  %1246 = vmatpush1.bf16.msra.mxu0 %v371
  %1247 = vmatprep.subr.bf16.mxu0 %v376
  %1248 = vmatpush1.bf16.msra.mxu0 %v375
  %1249 = vmatprep.subr.bf16.mxu0 %v380
  %1250 = vmatpush1.bf16.msra.mxu0 %v379
  %1251 = vmatprep.subr.bf16.mxu0 0
  %1252 = vmatpush1.bf16.msra.mxu0 0
  %1253 = vmatprep.subr.bf16.mxu0 0
  %1254 = vmatpush1.bf16.msra.mxu0 0
  %1255 = vmatprep.subr.bf16.mxu0 0
  %1256 = vmatpush1.bf16.msra.mxu0 0
  %1257 = vmatprep.subr.bf16.mxu0 0
  %1258 = vmatpush1.bf16.msra.mxu0 0
  %1259 = vmatprep.subr.bf16.mxu0 0
  %1260 = vmatpush1.bf16.msra.mxu0 0
  %1261 = vmatprep.subr.bf16.mxu0 0
  %1262 = vmatpush1.bf16.msra.mxu0 0
  %1263 = vmatprep.subr.bf16.mxu0 0
  %1264 = vmatpush1.bf16.msra.mxu0 0
  %1265 = vmatprep.subr.bf16.mxu0 0
  %1266 = vmatpush1.bf16.msra.mxu0 0
  %1267 = vmatprep.subr.bf16.mxu0 0
  %1268 = vmatpush1.bf16.msra.mxu0 0
  %1269 = vmatprep.subr.bf16.mxu0 0
  %1270 = vmatpush1.bf16.msra.mxu0 0
  %1271 = vmatprep.subr.bf16.mxu0 0
  %1272 = vmatpush1.bf16.msra.mxu0 0
  %1273 = vmatprep.subr.bf16.mxu0 0
  %1274 = vmatpush1.bf16.msra.mxu0 0
  %1275 = vmatprep.mubr.bf16.mxu0 0
  %1276 = vmatmul.mubr.bf16.gmra.mrb[0].mxu0 %v1241
  %v1277 = vpop.f32.mrb[0].mxu0
  %v1278 = vadd.f32 %v1193, %v1277
  %v1279 = vpop.f32.mrb[0].mxu0
  %v1280 = vadd.f32 %v1195, %v1279
  %v1281 = vpop.f32.mrb[0].mxu0
  %v1282 = vpop.f32.mrb[0].mxu0
  %1283 = vdwg.mxu0
  %1284 = vmatprep.subr.bf16.mxu0 %v370
  %1285 = vmatpush1.bf16.msra.mxu0 %v369
  %1286 = vmatprep.subr.bf16.mxu0 %v374
  %1287 = vmatpush1.bf16.msra.mxu0 %v373
  %1288 = vmatprep.subr.bf16.mxu0 %v378
  %1289 = vmatpush1.bf16.msra.mxu0 %v377
  %1290 = vmatprep.subr.bf16.mxu0 %v382
  %1291 = vmatpush1.bf16.msra.mxu0 %v381
  %1292 = vmatprep.subr.bf16.mxu0 0
  %1293 = vmatpush1.bf16.msra.mxu0 0
  %1294 = vmatprep.subr.bf16.mxu0 0
  %1295 = vmatpush1.bf16.msra.mxu0 0
  %1296 = vmatprep.subr.bf16.mxu0 0
  %1297 = vmatpush1.bf16.msra.mxu0 0
  %1298 = vmatprep.subr.bf16.mxu0 0
  %1299 = vmatpush1.bf16.msra.mxu0 0
  %1300 = vmatprep.subr.bf16.mxu0 0
  %1301 = vmatpush1.bf16.msra.mxu0 0
  %1302 = vmatprep.subr.bf16.mxu0 0
  %1303 = vmatpush1.bf16.msra.mxu0 0
  %1304 = vmatprep.subr.bf16.mxu0 0
  %1305 = vmatpush1.bf16.msra.mxu0 0
  %1306 = vmatprep.subr.bf16.mxu0 0
  %1307 = vmatpush1.bf16.msra.mxu0 0
  %1308 = vmatprep.subr.bf16.mxu0 0
  %1309 = vmatpush1.bf16.msra.mxu0 0
  %1310 = vmatprep.subr.bf16.mxu0 0
  %1311 = vmatpush1.bf16.msra.mxu0 0
  %1312 = vmatprep.subr.bf16.mxu0 0
  %1313 = vmatpush1.bf16.msra.mxu0 0
  %1314 = vmatprep.subr.bf16.mxu0 0
  %1315 = vmatpush1.bf16.msra.mxu0 0
  %1316 = vmatprep.mubr.bf16.mxu0 0
  %1317 = vmatmul.mubr.bf16.gmra.mrb[0].mxu0 %v1241
  %v1318 = vpop.f32.mrb[0].mxu0
  %v1319 = vadd.f32 %v1234, %v1318
  %v1320 = vpop.f32.mrb[0].mxu0
  %v1321 = vadd.f32 %v1236, %v1320
  %v1322 = vpop.f32.mrb[0].mxu0
  %v1323 = vpop.f32.mrb[0].mxu0
  %1324 = vdwg.mxu0
  %v1325 = vadd.f32 %v1278, %v489
  %v1326 = vadd.f32 %v1280, %v493
  %v1327 = vadd.f32 %v1319, %v497
  %v1328 = vadd.f32 %v1321, %v501
  %v1329 = vxor.u32 %v1325, 2147483648
  %v1330 = vmul.f32 %v1329, 1.442695
  %v1331 = vpow.pop %v1330
  %v1332 = vadd.f32 %v1331, 1.0
  %v1333 = vrcp.pop %v1332
  %v1334 = vmul.f32 1.0, %v1333
  %v1335 = vxor.u32 %v1326, 2147483648
  %v1336 = vmul.f32 %v1335, 1.442695
  %v1337 = vpow.pop %v1336
  %v1338 = vadd.f32 %v1337, 1.0
  %v1339 = vrcp.pop %v1338
  %v1340 = vmul.f32 1.0, %v1339
  %v1341 = vtanh.pop %v1327
  %v1342 = vxor.u32 %v1328, 2147483648
  %v1343 = vmul.f32 %v1342, 1.442695
  %v1344 = vpow.pop %v1343
  %v1345 = vadd.f32 %v1344, 1.0
  %v1346 = vrcp.pop %v1345
  %v1347 = vmul.f32 1.0, %v1346
  %v1348 = vmul.f32 %v1340, %v1156
  %v1349 = vmul.f32 %v1334, %v1341
  %v1350 = vadd.f32 %v1348, %v1349
  %v1351 = vtanh.pop %v1350
  %v1352 = vmul.f32 %v1347, %v1351
  %1353 = vst [vmem:[#allocation3] sm:$0xff] %v1350
  %1354 = vst [vmem:[#allocation2] sm:$0xff] %v1352
  %v1355 = vpack.c.bf16 %v1352, %v1352
  %s1356 = scalar_lea.vmem %s4, 16
  %1357 = vst [vmem:[%s1356] sm:$0xf] %v1355
  %s1358 = scalar_lea.vmem %s0, 20
  %v1359 = vld [vmem:[%s1358] sm:$0xf]
  %v1360 = vld [vmem:[#allocation2] sm:$0xff]
  %v1361 = vld [vmem:[#allocation3] sm:$0xff]
  %v1362 = vpack.c.bf16 %v1360, %v1360
  %1363 = vmatprep.subr.bf16.mxu0 %v174
  %1364 = vmatpush1.bf16.msra.mxu0 %v173
  %1365 = vmatprep.subr.bf16.mxu0 %v178
  %1366 = vmatpush1.bf16.msra.mxu0 %v177
  %1367 = vmatprep.subr.bf16.mxu0 %v182
  %1368 = vmatpush1.bf16.msra.mxu0 %v181
  %1369 = vmatprep.subr.bf16.mxu0 %v186
  %1370 = vmatpush1.bf16.msra.mxu0 %v185
  %1371 = vmatprep.subr.bf16.mxu0 %v190
  %1372 = vmatpush1.bf16.msra.mxu0 %v189
  %1373 = vmatprep.subr.bf16.mxu0 %v194
  %1374 = vmatpush1.bf16.msra.mxu0 %v193
  %1375 = vmatprep.subr.bf16.mxu0 %v198
  %1376 = vmatpush1.bf16.msra.mxu0 %v197
  %1377 = vmatprep.subr.bf16.mxu0 %v202
  %1378 = vmatpush1.bf16.msra.mxu0 %v201
  %1379 = vmatprep.subr.bf16.mxu0 0
  %1380 = vmatpush1.bf16.msra.mxu0 0
  %1381 = vmatprep.subr.bf16.mxu0 0
  %1382 = vmatpush1.bf16.msra.mxu0 0
  %1383 = vmatprep.subr.bf16.mxu0 0
  %1384 = vmatpush1.bf16.msra.mxu0 0
  %1385 = vmatprep.subr.bf16.mxu0 0
  %1386 = vmatpush1.bf16.msra.mxu0 0
  %1387 = vmatprep.subr.bf16.mxu0 0
  %1388 = vmatpush1.bf16.msra.mxu0 0
  %1389 = vmatprep.subr.bf16.mxu0 0
  %1390 = vmatpush1.bf16.msra.mxu0 0
  %1391 = vmatprep.subr.bf16.mxu0 0
  %1392 = vmatpush1.bf16.msra.mxu0 0
  %1393 = vmatprep.subr.bf16.mxu0 0
  %1394 = vmatpush1.bf16.msra.mxu0 0
  %1395 = vmatprep.mubr.bf16.mxu0 0
  %1396 = vmatmul.mubr.bf16.gmra.mrb[0].mxu0 %v1362
  %v1397 = vpop.f32.mrb[0].mxu0
  %v1398 = vadd.f32 0.0, %v1397
  %v1399 = vpop.f32.mrb[0].mxu0
  %v1400 = vadd.f32 0.0, %v1399
  %v1401 = vpop.f32.mrb[0].mxu0
  %v1402 = vpop.f32.mrb[0].mxu0
  %1403 = vdwg.mxu0
  %1404 = vmatprep.subr.bf16.mxu0 %v176
  %1405 = vmatpush1.bf16.msra.mxu0 %v175
  %1406 = vmatprep.subr.bf16.mxu0 %v180
  %1407 = vmatpush1.bf16.msra.mxu0 %v179
  %1408 = vmatprep.subr.bf16.mxu0 %v184
  %1409 = vmatpush1.bf16.msra.mxu0 %v183
  %1410 = vmatprep.subr.bf16.mxu0 %v188
  %1411 = vmatpush1.bf16.msra.mxu0 %v187
  %1412 = vmatprep.subr.bf16.mxu0 %v192
  %1413 = vmatpush1.bf16.msra.mxu0 %v191
  %1414 = vmatprep.subr.bf16.mxu0 %v196
  %1415 = vmatpush1.bf16.msra.mxu0 %v195
  %1416 = vmatprep.subr.bf16.mxu0 %v200
  %1417 = vmatpush1.bf16.msra.mxu0 %v199
  %1418 = vmatprep.subr.bf16.mxu0 %v204
  %1419 = vmatpush1.bf16.msra.mxu0 %v203
  %1420 = vmatprep.subr.bf16.mxu0 0
  %1421 = vmatpush1.bf16.msra.mxu0 0
  %1422 = vmatprep.subr.bf16.mxu0 0
  %1423 = vmatpush1.bf16.msra.mxu0 0
  %1424 = vmatprep.subr.bf16.mxu0 0
  %1425 = vmatpush1.bf16.msra.mxu0 0
  %1426 = vmatprep.subr.bf16.mxu0 0
  %1427 = vmatpush1.bf16.msra.mxu0 0
  %1428 = vmatprep.subr.bf16.mxu0 0
  %1429 = vmatpush1.bf16.msra.mxu0 0
  %1430 = vmatprep.subr.bf16.mxu0 0
  %1431 = vmatpush1.bf16.msra.mxu0 0
  %1432 = vmatprep.subr.bf16.mxu0 0
  %1433 = vmatpush1.bf16.msra.mxu0 0
  %1434 = vmatprep.subr.bf16.mxu0 0
  %1435 = vmatpush1.bf16.msra.mxu0 0
  %1436 = vmatprep.mubr.bf16.mxu0 0
  %1437 = vmatmul.mubr.bf16.gmra.mrb[0].mxu0 %v1362
  %v1438 = vpop.f32.mrb[0].mxu0
  %v1439 = vadd.f32 0.0, %v1438
  %v1440 = vpop.f32.mrb[0].mxu0
  %v1441 = vadd.f32 0.0, %v1440
  %v1442 = vpop.f32.mrb[0].mxu0
  %v1443 = vpop.f32.mrb[0].mxu0
  %1444 = vdwg.mxu0
  %v1446 = vsel %vm399, %v1359, 0
  %1448 = vmatprep.subr.bf16.mxu0 %v368
  %1449 = vmatpush1.bf16.msra.mxu0 %v367
  %1450 = vmatprep.subr.bf16.mxu0 %v372
  %1451 = vmatpush1.bf16.msra.mxu0 %v371
  %1452 = vmatprep.subr.bf16.mxu0 %v376
  %1453 = vmatpush1.bf16.msra.mxu0 %v375
  %1454 = vmatprep.subr.bf16.mxu0 %v380
  %1455 = vmatpush1.bf16.msra.mxu0 %v379
  %1456 = vmatprep.subr.bf16.mxu0 0
  %1457 = vmatpush1.bf16.msra.mxu0 0
  %1458 = vmatprep.subr.bf16.mxu0 0
  %1459 = vmatpush1.bf16.msra.mxu0 0
  %1460 = vmatprep.subr.bf16.mxu0 0
  %1461 = vmatpush1.bf16.msra.mxu0 0
  %1462 = vmatprep.subr.bf16.mxu0 0
  %1463 = vmatpush1.bf16.msra.mxu0 0
  %1464 = vmatprep.subr.bf16.mxu0 0
  %1465 = vmatpush1.bf16.msra.mxu0 0
  %1466 = vmatprep.subr.bf16.mxu0 0
  %1467 = vmatpush1.bf16.msra.mxu0 0
  %1468 = vmatprep.subr.bf16.mxu0 0
  %1469 = vmatpush1.bf16.msra.mxu0 0
  %1470 = vmatprep.subr.bf16.mxu0 0
  %1471 = vmatpush1.bf16.msra.mxu0 0
  %1472 = vmatprep.subr.bf16.mxu0 0
  %1473 = vmatpush1.bf16.msra.mxu0 0
  %1474 = vmatprep.subr.bf16.mxu0 0
  %1475 = vmatpush1.bf16.msra.mxu0 0
  %1476 = vmatprep.subr.bf16.mxu0 0
  %1477 = vmatpush1.bf16.msra.mxu0 0
  %1478 = vmatprep.subr.bf16.mxu0 0
  %1479 = vmatpush1.bf16.msra.mxu0 0
  %1480 = vmatprep.mubr.bf16.mxu0 0
  %1481 = vmatmul.mubr.bf16.gmra.mrb[0].mxu0 %v1446
  %v1482 = vpop.f32.mrb[0].mxu0
  %v1483 = vadd.f32 %v1398, %v1482
  %v1484 = vpop.f32.mrb[0].mxu0
  %v1485 = vadd.f32 %v1400, %v1484
  %v1486 = vpop.f32.mrb[0].mxu0
  %v1487 = vpop.f32.mrb[0].mxu0
  %1488 = vdwg.mxu0
  %1489 = vmatprep.subr.bf16.mxu0 %v370
  %1490 = vmatpush1.bf16.msra.mxu0 %v369
  %1491 = vmatprep.subr.bf16.mxu0 %v374
  %1492 = vmatpush1.bf16.msra.mxu0 %v373
  %1493 = vmatprep.subr.bf16.mxu0 %v378
  %1494 = vmatpush1.bf16.msra.mxu0 %v377
  %1495 = vmatprep.subr.bf16.mxu0 %v382
  %1496 = vmatpush1.bf16.msra.mxu0 %v381
  %1497 = vmatprep.subr.bf16.mxu0 0
  %1498 = vmatpush1.bf16.msra.mxu0 0
  %1499 = vmatprep.subr.bf16.mxu0 0
  %1500 = vmatpush1.bf16.msra.mxu0 0
  %1501 = vmatprep.subr.bf16.mxu0 0
  %1502 = vmatpush1.bf16.msra.mxu0 0
  %1503 = vmatprep.subr.bf16.mxu0 0
  %1504 = vmatpush1.bf16.msra.mxu0 0
  %1505 = vmatprep.subr.bf16.mxu0 0
  %1506 = vmatpush1.bf16.msra.mxu0 0
  %1507 = vmatprep.subr.bf16.mxu0 0
  %1508 = vmatpush1.bf16.msra.mxu0 0
  %1509 = vmatprep.subr.bf16.mxu0 0
  %1510 = vmatpush1.bf16.msra.mxu0 0
  %1511 = vmatprep.subr.bf16.mxu0 0
  %1512 = vmatpush1.bf16.msra.mxu0 0
  %1513 = vmatprep.subr.bf16.mxu0 0
  %1514 = vmatpush1.bf16.msra.mxu0 0
  %1515 = vmatprep.subr.bf16.mxu0 0
  %1516 = vmatpush1.bf16.msra.mxu0 0
  %1517 = vmatprep.subr.bf16.mxu0 0
  %1518 = vmatpush1.bf16.msra.mxu0 0
  %1519 = vmatprep.subr.bf16.mxu0 0
  %1520 = vmatpush1.bf16.msra.mxu0 0
  %1521 = vmatprep.mubr.bf16.mxu0 0
  %1522 = vmatmul.mubr.bf16.gmra.mrb[0].mxu0 %v1446
  %v1523 = vpop.f32.mrb[0].mxu0
  %v1524 = vadd.f32 %v1439, %v1523
  %v1525 = vpop.f32.mrb[0].mxu0
  %v1526 = vadd.f32 %v1441, %v1525
  %v1527 = vpop.f32.mrb[0].mxu0
  %v1528 = vpop.f32.mrb[0].mxu0
  %1529 = vdwg.mxu0
  %v1530 = vadd.f32 %v1483, %v489
  %v1531 = vadd.f32 %v1485, %v493
  %v1532 = vadd.f32 %v1524, %v497
  %v1533 = vadd.f32 %v1526, %v501
  %v1534 = vxor.u32 %v1530, 2147483648
  %v1535 = vmul.f32 %v1534, 1.442695
  %v1536 = vpow.pop %v1535
  %v1537 = vadd.f32 %v1536, 1.0
  %v1538 = vrcp.pop %v1537
  %v1539 = vmul.f32 1.0, %v1538
  %v1540 = vxor.u32 %v1531, 2147483648
  %v1541 = vmul.f32 %v1540, 1.442695
  %v1542 = vpow.pop %v1541
  %v1543 = vadd.f32 %v1542, 1.0
  %v1544 = vrcp.pop %v1543
  %v1545 = vmul.f32 1.0, %v1544
  %v1546 = vtanh.pop %v1532
  %v1547 = vxor.u32 %v1533, 2147483648
  %v1548 = vmul.f32 %v1547, 1.442695
  %v1549 = vpow.pop %v1548
  %v1550 = vadd.f32 %v1549, 1.0
  %v1551 = vrcp.pop %v1550
  %v1552 = vmul.f32 1.0, %v1551
  %v1553 = vmul.f32 %v1545, %v1361
  %v1554 = vmul.f32 %v1539, %v1546
  %v1555 = vadd.f32 %v1553, %v1554
  %v1556 = vtanh.pop %v1555
  %v1557 = vmul.f32 %v1552, %v1556
  %1558 = vst [vmem:[#allocation3] sm:$0xff] %v1555
  %1559 = vst [vmem:[#allocation2] sm:$0xff] %v1557
  %v1560 = vpack.c.bf16 %v1557, %v1557
  %s1561 = scalar_lea.vmem %s4, 20
  %1562 = vst [vmem:[%s1561] sm:$0xf] %v1560
  %s1563 = scalar_lea.vmem %s0, 24
  %v1564 = vld [vmem:[%s1563] sm:$0xf]
  %v1565 = vld [vmem:[#allocation2] sm:$0xff]
  %v1566 = vld [vmem:[#allocation3] sm:$0xff]
  %v1567 = vpack.c.bf16 %v1565, %v1565
  %1568 = vmatprep.subr.bf16.mxu0 %v174
  %1569 = vmatpush1.bf16.msra.mxu0 %v173
  %1570 = vmatprep.subr.bf16.mxu0 %v178
  %1571 = vmatpush1.bf16.msra.mxu0 %v177
  %1572 = vmatprep.subr.bf16.mxu0 %v182
  %1573 = vmatpush1.bf16.msra.mxu0 %v181
  %1574 = vmatprep.subr.bf16.mxu0 %v186
  %1575 = vmatpush1.bf16.msra.mxu0 %v185
  %1576 = vmatprep.subr.bf16.mxu0 %v190
  %1577 = vmatpush1.bf16.msra.mxu0 %v189
  %1578 = vmatprep.subr.bf16.mxu0 %v194
  %1579 = vmatpush1.bf16.msra.mxu0 %v193
  %1580 = vmatprep.subr.bf16.mxu0 %v198
  %1581 = vmatpush1.bf16.msra.mxu0 %v197
  %1582 = vmatprep.subr.bf16.mxu0 %v202
  %1583 = vmatpush1.bf16.msra.mxu0 %v201
  %1584 = vmatprep.subr.bf16.mxu0 0
  %1585 = vmatpush1.bf16.msra.mxu0 0
  %1586 = vmatprep.subr.bf16.mxu0 0
  %1587 = vmatpush1.bf16.msra.mxu0 0
  %1588 = vmatprep.subr.bf16.mxu0 0
  %1589 = vmatpush1.bf16.msra.mxu0 0
  %1590 = vmatprep.subr.bf16.mxu0 0
  %1591 = vmatpush1.bf16.msra.mxu0 0
  %1592 = vmatprep.subr.bf16.mxu0 0
  %1593 = vmatpush1.bf16.msra.mxu0 0
  %1594 = vmatprep.subr.bf16.mxu0 0
  %1595 = vmatpush1.bf16.msra.mxu0 0
  %1596 = vmatprep.subr.bf16.mxu0 0
  %1597 = vmatpush1.bf16.msra.mxu0 0
  %1598 = vmatprep.subr.bf16.mxu0 0
  %1599 = vmatpush1.bf16.msra.mxu0 0
  %1600 = vmatprep.mubr.bf16.mxu0 0
  %1601 = vmatmul.mubr.bf16.gmra.mrb[0].mxu0 %v1567
  %v1602 = vpop.f32.mrb[0].mxu0
  %v1603 = vadd.f32 0.0, %v1602
  %v1604 = vpop.f32.mrb[0].mxu0
  %v1605 = vadd.f32 0.0, %v1604
  %v1606 = vpop.f32.mrb[0].mxu0
  %v1607 = vpop.f32.mrb[0].mxu0
  %1608 = vdwg.mxu0
  %1609 = vmatprep.subr.bf16.mxu0 %v176
  %1610 = vmatpush1.bf16.msra.mxu0 %v175
  %1611 = vmatprep.subr.bf16.mxu0 %v180
  %1612 = vmatpush1.bf16.msra.mxu0 %v179
  %1613 = vmatprep.subr.bf16.mxu0 %v184
  %1614 = vmatpush1.bf16.msra.mxu0 %v183
  %1615 = vmatprep.subr.bf16.mxu0 %v188
  %1616 = vmatpush1.bf16.msra.mxu0 %v187
  %1617 = vmatprep.subr.bf16.mxu0 %v192
  %1618 = vmatpush1.bf16.msra.mxu0 %v191
  %1619 = vmatprep.subr.bf16.mxu0 %v196
  %1620 = vmatpush1.bf16.msra.mxu0 %v195
  %1621 = vmatprep.subr.bf16.mxu0 %v200
  %1622 = vmatpush1.bf16.msra.mxu0 %v199
  %1623 = vmatprep.subr.bf16.mxu0 %v204
  %1624 = vmatpush1.bf16.msra.mxu0 %v203
  %1625 = vmatprep.subr.bf16.mxu0 0
  %1626 = vmatpush1.bf16.msra.mxu0 0
  %1627 = vmatprep.subr.bf16.mxu0 0
  %1628 = vmatpush1.bf16.msra.mxu0 0
  %1629 = vmatprep.subr.bf16.mxu0 0
  %1630 = vmatpush1.bf16.msra.mxu0 0
  %1631 = vmatprep.subr.bf16.mxu0 0
  %1632 = vmatpush1.bf16.msra.mxu0 0
  %1633 = vmatprep.subr.bf16.mxu0 0
  %1634 = vmatpush1.bf16.msra.mxu0 0
  %1635 = vmatprep.subr.bf16.mxu0 0
  %1636 = vmatpush1.bf16.msra.mxu0 0
  %1637 = vmatprep.subr.bf16.mxu0 0
  %1638 = vmatpush1.bf16.msra.mxu0 0
  %1639 = vmatprep.subr.bf16.mxu0 0
  %1640 = vmatpush1.bf16.msra.mxu0 0
  %1641 = vmatprep.mubr.bf16.mxu0 0
  %1642 = vmatmul.mubr.bf16.gmra.mrb[0].mxu0 %v1567
  %v1643 = vpop.f32.mrb[0].mxu0
  %v1644 = vadd.f32 0.0, %v1643
  %v1645 = vpop.f32.mrb[0].mxu0
  %v1646 = vadd.f32 0.0, %v1645
  %v1647 = vpop.f32.mrb[0].mxu0
  %v1648 = vpop.f32.mrb[0].mxu0
  %1649 = vdwg.mxu0
  %v1651 = vsel %vm399, %v1564, 0
  %1653 = vmatprep.subr.bf16.mxu0 %v368
  %1654 = vmatpush1.bf16.msra.mxu0 %v367
  %1655 = vmatprep.subr.bf16.mxu0 %v372
  %1656 = vmatpush1.bf16.msra.mxu0 %v371
  %1657 = vmatprep.subr.bf16.mxu0 %v376
  %1658 = vmatpush1.bf16.msra.mxu0 %v375
  %1659 = vmatprep.subr.bf16.mxu0 %v380
  %1660 = vmatpush1.bf16.msra.mxu0 %v379
  %1661 = vmatprep.subr.bf16.mxu0 0
  %1662 = vmatpush1.bf16.msra.mxu0 0
  %1663 = vmatprep.subr.bf16.mxu0 0
  %1664 = vmatpush1.bf16.msra.mxu0 0
  %1665 = vmatprep.subr.bf16.mxu0 0
  %1666 = vmatpush1.bf16.msra.mxu0 0
  %1667 = vmatprep.subr.bf16.mxu0 0
  %1668 = vmatpush1.bf16.msra.mxu0 0
  %1669 = vmatprep.subr.bf16.mxu0 0
  %1670 = vmatpush1.bf16.msra.mxu0 0
  %1671 = vmatprep.subr.bf16.mxu0 0
  %1672 = vmatpush1.bf16.msra.mxu0 0
  %1673 = vmatprep.subr.bf16.mxu0 0
  %1674 = vmatpush1.bf16.msra.mxu0 0
  %1675 = vmatprep.subr.bf16.mxu0 0
  %1676 = vmatpush1.bf16.msra.mxu0 0
  %1677 = vmatprep.subr.bf16.mxu0 0
  %1678 = vmatpush1.bf16.msra.mxu0 0
  %1679 = vmatprep.subr.bf16.mxu0 0
  %1680 = vmatpush1.bf16.msra.mxu0 0
  %1681 = vmatprep.subr.bf16.mxu0 0
  %1682 = vmatpush1.bf16.msra.mxu0 0
  %1683 = vmatprep.subr.bf16.mxu0 0
  %1684 = vmatpush1.bf16.msra.mxu0 0
  %1685 = vmatprep.mubr.bf16.mxu0 0
  %1686 = vmatmul.mubr.bf16.gmra.mrb[0].mxu0 %v1651
  %v1687 = vpop.f32.mrb[0].mxu0
  %v1688 = vadd.f32 %v1603, %v1687
  %v1689 = vpop.f32.mrb[0].mxu0
  %v1690 = vadd.f32 %v1605, %v1689
  %v1691 = vpop.f32.mrb[0].mxu0
  %v1692 = vpop.f32.mrb[0].mxu0
  %1693 = vdwg.mxu0
  %1694 = vmatprep.subr.bf16.mxu0 %v370
  %1695 = vmatpush1.bf16.msra.mxu0 %v369
  %1696 = vmatprep.subr.bf16.mxu0 %v374
  %1697 = vmatpush1.bf16.msra.mxu0 %v373
  %1698 = vmatprep.subr.bf16.mxu0 %v378
  %1699 = vmatpush1.bf16.msra.mxu0 %v377
  %1700 = vmatprep.subr.bf16.mxu0 %v382
  %1701 = vmatpush1.bf16.msra.mxu0 %v381
  %1702 = vmatprep.subr.bf16.mxu0 0
  %1703 = vmatpush1.bf16.msra.mxu0 0
  %1704 = vmatprep.subr.bf16.mxu0 0
  %1705 = vmatpush1.bf16.msra.mxu0 0
  %1706 = vmatprep.subr.bf16.mxu0 0
  %1707 = vmatpush1.bf16.msra.mxu0 0
  %1708 = vmatprep.subr.bf16.mxu0 0
  %1709 = vmatpush1.bf16.msra.mxu0 0
  %1710 = vmatprep.subr.bf16.mxu0 0
  %1711 = vmatpush1.bf16.msra.mxu0 0
  %1712 = vmatprep.subr.bf16.mxu0 0
  %1713 = vmatpush1.bf16.msra.mxu0 0
  %1714 = vmatprep.subr.bf16.mxu0 0
  %1715 = vmatpush1.bf16.msra.mxu0 0
  %1716 = vmatprep.subr.bf16.mxu0 0
  %1717 = vmatpush1.bf16.msra.mxu0 0
  %1718 = vmatprep.subr.bf16.mxu0 0
  %1719 = vmatpush1.bf16.msra.mxu0 0
  %1720 = vmatprep.subr.bf16.mxu0 0
  %1721 = vmatpush1.bf16.msra.mxu0 0
  %1722 = vmatprep.subr.bf16.mxu0 0
  %1723 = vmatpush1.bf16.msra.mxu0 0
  %1724 = vmatprep.subr.bf16.mxu0 0
  %1725 = vmatpush1.bf16.msra.mxu0 0
  %1726 = vmatprep.mubr.bf16.mxu0 0
  %1727 = vmatmul.mubr.bf16.gmra.mrb[0].mxu0 %v1651
  %v1728 = vpop.f32.mrb[0].mxu0
  %v1729 = vadd.f32 %v1644, %v1728
  %v1730 = vpop.f32.mrb[0].mxu0
  %v1731 = vadd.f32 %v1646, %v1730
  %v1732 = vpop.f32.mrb[0].mxu0
  %v1733 = vpop.f32.mrb[0].mxu0
  %1734 = vdwg.mxu0
  %v1735 = vadd.f32 %v1688, %v489
  %v1736 = vadd.f32 %v1690, %v493
  %v1737 = vadd.f32 %v1729, %v497
  %v1738 = vadd.f32 %v1731, %v501
  %v1739 = vxor.u32 %v1735, 2147483648
  %v1740 = vmul.f32 %v1739, 1.442695
  %v1741 = vpow.pop %v1740
  %v1742 = vadd.f32 %v1741, 1.0
  %v1743 = vrcp.pop %v1742
  %v1744 = vmul.f32 1.0, %v1743
  %v1745 = vxor.u32 %v1736, 2147483648
  %v1746 = vmul.f32 %v1745, 1.442695
  %v1747 = vpow.pop %v1746
  %v1748 = vadd.f32 %v1747, 1.0
  %v1749 = vrcp.pop %v1748
  %v1750 = vmul.f32 1.0, %v1749
  %v1751 = vtanh.pop %v1737
  %v1752 = vxor.u32 %v1738, 2147483648
  %v1753 = vmul.f32 %v1752, 1.442695
  %v1754 = vpow.pop %v1753
  %v1755 = vadd.f32 %v1754, 1.0
  %v1756 = vrcp.pop %v1755
  %v1757 = vmul.f32 1.0, %v1756
  %v1758 = vmul.f32 %v1750, %v1566
  %v1759 = vmul.f32 %v1744, %v1751
  %v1760 = vadd.f32 %v1758, %v1759
  %v1761 = vtanh.pop %v1760
  %v1762 = vmul.f32 %v1757, %v1761
  %1763 = vst [vmem:[#allocation3] sm:$0xff] %v1760
  %1764 = vst [vmem:[#allocation2] sm:$0xff] %v1762
  %v1765 = vpack.c.bf16 %v1762, %v1762
  %s1766 = scalar_lea.vmem %s4, 24
  %1767 = vst [vmem:[%s1766] sm:$0xf] %v1765
  %s1768 = scalar_lea.vmem %s0, 28
  %v1769 = vld [vmem:[%s1768] sm:$0xf]
  %v1770 = vld [vmem:[#allocation2] sm:$0xff]
  %v1771 = vld [vmem:[#allocation3] sm:$0xff]
  %v1772 = vpack.c.bf16 %v1770, %v1770
  %1773 = vmatprep.subr.bf16.mxu0 %v174
  %1774 = vmatpush1.bf16.msra.mxu0 %v173
  %1775 = vmatprep.subr.bf16.mxu0 %v178
  %1776 = vmatpush1.bf16.msra.mxu0 %v177
  %1777 = vmatprep.subr.bf16.mxu0 %v182
  %1778 = vmatpush1.bf16.msra.mxu0 %v181
  %1779 = vmatprep.subr.bf16.mxu0 %v186
  %1780 = vmatpush1.bf16.msra.mxu0 %v185
  %1781 = vmatprep.subr.bf16.mxu0 %v190
  %1782 = vmatpush1.bf16.msra.mxu0 %v189
  %1783 = vmatprep.subr.bf16.mxu0 %v194
  %1784 = vmatpush1.bf16.msra.mxu0 %v193
  %1785 = vmatprep.subr.bf16.mxu0 %v198
  %1786 = vmatpush1.bf16.msra.mxu0 %v197
  %1787 = vmatprep.subr.bf16.mxu0 %v202
  %1788 = vmatpush1.bf16.msra.mxu0 %v201
  %1789 = vmatprep.subr.bf16.mxu0 0
  %1790 = vmatpush1.bf16.msra.mxu0 0
  %1791 = vmatprep.subr.bf16.mxu0 0
  %1792 = vmatpush1.bf16.msra.mxu0 0
  %1793 = vmatprep.subr.bf16.mxu0 0
  %1794 = vmatpush1.bf16.msra.mxu0 0
  %1795 = vmatprep.subr.bf16.mxu0 0
  %1796 = vmatpush1.bf16.msra.mxu0 0
  %1797 = vmatprep.subr.bf16.mxu0 0
  %1798 = vmatpush1.bf16.msra.mxu0 0
  %1799 = vmatprep.subr.bf16.mxu0 0
  %1800 = vmatpush1.bf16.msra.mxu0 0
  %1801 = vmatprep.subr.bf16.mxu0 0
  %1802 = vmatpush1.bf16.msra.mxu0 0
  %1803 = vmatprep.subr.bf16.mxu0 0
  %1804 = vmatpush1.bf16.msra.mxu0 0
  %1805 = vmatprep.mubr.bf16.mxu0 0
  %1806 = vmatmul.mubr.bf16.gmra.mrb[0].mxu0 %v1772
  %v1807 = vpop.f32.mrb[0].mxu0
  %v1808 = vadd.f32 0.0, %v1807
  %v1809 = vpop.f32.mrb[0].mxu0
  %v1810 = vadd.f32 0.0, %v1809
  %v1811 = vpop.f32.mrb[0].mxu0
  %v1812 = vpop.f32.mrb[0].mxu0
  %1813 = vdwg.mxu0
  %1814 = vmatprep.subr.bf16.mxu0 %v176
  %1815 = vmatpush1.bf16.msra.mxu0 %v175
  %1816 = vmatprep.subr.bf16.mxu0 %v180
  %1817 = vmatpush1.bf16.msra.mxu0 %v179
  %1818 = vmatprep.subr.bf16.mxu0 %v184
  %1819 = vmatpush1.bf16.msra.mxu0 %v183
  %1820 = vmatprep.subr.bf16.mxu0 %v188
  %1821 = vmatpush1.bf16.msra.mxu0 %v187
  %1822 = vmatprep.subr.bf16.mxu0 %v192
  %1823 = vmatpush1.bf16.msra.mxu0 %v191
  %1824 = vmatprep.subr.bf16.mxu0 %v196
  %1825 = vmatpush1.bf16.msra.mxu0 %v195
  %1826 = vmatprep.subr.bf16.mxu0 %v200
  %1827 = vmatpush1.bf16.msra.mxu0 %v199
  %1828 = vmatprep.subr.bf16.mxu0 %v204
  %1829 = vmatpush1.bf16.msra.mxu0 %v203
  %1830 = vmatprep.subr.bf16.mxu0 0
  %1831 = vmatpush1.bf16.msra.mxu0 0
  %1832 = vmatprep.subr.bf16.mxu0 0
  %1833 = vmatpush1.bf16.msra.mxu0 0
  %1834 = vmatprep.subr.bf16.mxu0 0
  %1835 = vmatpush1.bf16.msra.mxu0 0
  %1836 = vmatprep.subr.bf16.mxu0 0
  %1837 = vmatpush1.bf16.msra.mxu0 0
  %1838 = vmatprep.subr.bf16.mxu0 0
  %1839 = vmatpush1.bf16.msra.mxu0 0
  %1840 = vmatprep.subr.bf16.mxu0 0
  %1841 = vmatpush1.bf16.msra.mxu0 0
  %1842 = vmatprep.subr.bf16.mxu0 0
  %1843 = vmatpush1.bf16.msra.mxu0 0
  %1844 = vmatprep.subr.bf16.mxu0 0
  %1845 = vmatpush1.bf16.msra.mxu0 0
  %1846 = vmatprep.mubr.bf16.mxu0 0
  %1847 = vmatmul.mubr.bf16.gmra.mrb[0].mxu0 %v1772
  %v1848 = vpop.f32.mrb[0].mxu0
  %v1849 = vadd.f32 0.0, %v1848
  %v1850 = vpop.f32.mrb[0].mxu0
  %v1851 = vadd.f32 0.0, %v1850
  %v1852 = vpop.f32.mrb[0].mxu0
  %v1853 = vpop.f32.mrb[0].mxu0
  %1854 = vdwg.mxu0
  %v1856 = vsel %vm399, %v1769, 0
  %1858 = vmatprep.subr.bf16.mxu0 %v368
  %1859 = vmatpush1.bf16.msra.mxu0 %v367
  %1860 = vmatprep.subr.bf16.mxu0 %v372
  %1861 = vmatpush1.bf16.msra.mxu0 %v371
  %1862 = vmatprep.subr.bf16.mxu0 %v376
  %1863 = vmatpush1.bf16.msra.mxu0 %v375
  %1864 = vmatprep.subr.bf16.mxu0 %v380
  %1865 = vmatpush1.bf16.msra.mxu0 %v379
  %1866 = vmatprep.subr.bf16.mxu0 0
  %1867 = vmatpush1.bf16.msra.mxu0 0
  %1868 = vmatprep.subr.bf16.mxu0 0
  %1869 = vmatpush1.bf16.msra.mxu0 0
  %1870 = vmatprep.subr.bf16.mxu0 0
  %1871 = vmatpush1.bf16.msra.mxu0 0
  %1872 = vmatprep.subr.bf16.mxu0 0
  %1873 = vmatpush1.bf16.msra.mxu0 0
  %1874 = vmatprep.subr.bf16.mxu0 0
  %1875 = vmatpush1.bf16.msra.mxu0 0
  %1876 = vmatprep.subr.bf16.mxu0 0
  %1877 = vmatpush1.bf16.msra.mxu0 0
  %1878 = vmatprep.subr.bf16.mxu0 0
  %1879 = vmatpush1.bf16.msra.mxu0 0
  %1880 = vmatprep.subr.bf16.mxu0 0
  %1881 = vmatpush1.bf16.msra.mxu0 0
  %1882 = vmatprep.subr.bf16.mxu0 0
  %1883 = vmatpush1.bf16.msra.mxu0 0
  %1884 = vmatprep.subr.bf16.mxu0 0
  %1885 = vmatpush1.bf16.msra.mxu0 0
  %1886 = vmatprep.subr.bf16.mxu0 0
  %1887 = vmatpush1.bf16.msra.mxu0 0
  %1888 = vmatprep.subr.bf16.mxu0 0
  %1889 = vmatpush1.bf16.msra.mxu0 0
  %1890 = vmatprep.mubr.bf16.mxu0 0
  %1891 = vmatmul.mubr.bf16.gmra.mrb[0].mxu0 %v1856
  %v1892 = vpop.f32.mrb[0].mxu0
  %v1893 = vadd.f32 %v1808, %v1892
  %v1894 = vpop.f32.mrb[0].mxu0
  %v1895 = vadd.f32 %v1810, %v1894
  %v1896 = vpop.f32.mrb[0].mxu0
  %v1897 = vpop.f32.mrb[0].mxu0
  %1898 = vdwg.mxu0
  %1899 = vmatprep.subr.bf16.mxu0 %v370
  %1900 = vmatpush1.bf16.msra.mxu0 %v369
  %1901 = vmatprep.subr.bf16.mxu0 %v374
  %1902 = vmatpush1.bf16.msra.mxu0 %v373
  %1903 = vmatprep.subr.bf16.mxu0 %v378
  %1904 = vmatpush1.bf16.msra.mxu0 %v377
  %1905 = vmatprep.subr.bf16.mxu0 %v382
  %1906 = vmatpush1.bf16.msra.mxu0 %v381
  %1907 = vmatprep.subr.bf16.mxu0 0
  %1908 = vmatpush1.bf16.msra.mxu0 0
  %1909 = vmatprep.subr.bf16.mxu0 0
  %1910 = vmatpush1.bf16.msra.mxu0 0
  %1911 = vmatprep.subr.bf16.mxu0 0
  %1912 = vmatpush1.bf16.msra.mxu0 0
  %1913 = vmatprep.subr.bf16.mxu0 0
  %1914 = vmatpush1.bf16.msra.mxu0 0
  %1915 = vmatprep.subr.bf16.mxu0 0
  %1916 = vmatpush1.bf16.msra.mxu0 0
  %1917 = vmatprep.subr.bf16.mxu0 0
  %1918 = vmatpush1.bf16.msra.mxu0 0
  %1919 = vmatprep.subr.bf16.mxu0 0
  %1920 = vmatpush1.bf16.msra.mxu0 0
  %1921 = vmatprep.subr.bf16.mxu0 0
  %1922 = vmatpush1.bf16.msra.mxu0 0
  %1923 = vmatprep.subr.bf16.mxu0 0
  %1924 = vmatpush1.bf16.msra.mxu0 0
  %1925 = vmatprep.subr.bf16.mxu0 0
  %1926 = vmatpush1.bf16.msra.mxu0 0
  %1927 = vmatprep.subr.bf16.mxu0 0
  %1928 = vmatpush1.bf16.msra.mxu0 0
  %1929 = vmatprep.subr.bf16.mxu0 0
  %1930 = vmatpush1.bf16.msra.mxu0 0
  %1931 = vmatprep.mubr.bf16.mxu0 0
  %1932 = vmatmul.mubr.bf16.gmra.mrb[0].mxu0 %v1856
  %v1933 = vpop.f32.mrb[0].mxu0
  %v1934 = vadd.f32 %v1849, %v1933
  %v1935 = vpop.f32.mrb[0].mxu0
  %v1936 = vadd.f32 %v1851, %v1935
  %v1937 = vpop.f32.mrb[0].mxu0
  %v1938 = vpop.f32.mrb[0].mxu0
  %1939 = vdwg.mxu0
  %v1940 = vadd.f32 %v1893, %v489
  %v1941 = vadd.f32 %v1895, %v493
  %v1942 = vadd.f32 %v1934, %v497
  %v1943 = vadd.f32 %v1936, %v501
  %v1944 = vxor.u32 %v1940, 2147483648
  %v1945 = vmul.f32 %v1944, 1.442695
  %v1946 = vpow.pop %v1945
  %v1947 = vadd.f32 %v1946, 1.0
  %v1948 = vrcp.pop %v1947
  %v1949 = vmul.f32 1.0, %v1948
  %v1950 = vxor.u32 %v1941, 2147483648
  %v1951 = vmul.f32 %v1950, 1.442695
  %v1952 = vpow.pop %v1951
  %v1953 = vadd.f32 %v1952, 1.0
  %v1954 = vrcp.pop %v1953
  %v1955 = vmul.f32 1.0, %v1954
  %v1956 = vtanh.pop %v1942
  %v1957 = vxor.u32 %v1943, 2147483648
  %v1958 = vmul.f32 %v1957, 1.442695
  %v1959 = vpow.pop %v1958
  %v1960 = vadd.f32 %v1959, 1.0
  %v1961 = vrcp.pop %v1960
  %v1962 = vmul.f32 1.0, %v1961
  %v1963 = vmul.f32 %v1955, %v1771
  %v1964 = vmul.f32 %v1949, %v1956
  %v1965 = vadd.f32 %v1963, %v1964
  %v1966 = vtanh.pop %v1965
  %v1967 = vmul.f32 %v1962, %v1966
  %1968 = vst [vmem:[#allocation3] sm:$0xff] %v1965
  %1969 = vst [vmem:[#allocation2] sm:$0xff] %v1967
  %v1970 = vpack.c.bf16 %v1967, %v1967
  %s1971 = scalar_lea.vmem %s4, 28
  %1972 = vst [vmem:[%s1971] sm:$0xf] %v1970
  %s1973 = scalar_lea.vmem %s0, 32
  %v1974 = vld [vmem:[%s1973] sm:$0xf]
  %v1975 = vld [vmem:[#allocation2] sm:$0xff]
  %v1976 = vld [vmem:[#allocation3] sm:$0xff]
  %v1977 = vpack.c.bf16 %v1975, %v1975
  %1978 = vmatprep.subr.bf16.mxu0 %v174
  %1979 = vmatpush1.bf16.msra.mxu0 %v173
  %1980 = vmatprep.subr.bf16.mxu0 %v178
  %1981 = vmatpush1.bf16.msra.mxu0 %v177
  %1982 = vmatprep.subr.bf16.mxu0 %v182
  %1983 = vmatpush1.bf16.msra.mxu0 %v181
  %1984 = vmatprep.subr.bf16.mxu0 %v186
  %1985 = vmatpush1.bf16.msra.mxu0 %v185
  %1986 = vmatprep.subr.bf16.mxu0 %v190
  %1987 = vmatpush1.bf16.msra.mxu0 %v189
  %1988 = vmatprep.subr.bf16.mxu0 %v194
  %1989 = vmatpush1.bf16.msra.mxu0 %v193
  %1990 = vmatprep.subr.bf16.mxu0 %v198
  %1991 = vmatpush1.bf16.msra.mxu0 %v197
  %1992 = vmatprep.subr.bf16.mxu0 %v202
  %1993 = vmatpush1.bf16.msra.mxu0 %v201
  %1994 = vmatprep.subr.bf16.mxu0 0
  %1995 = vmatpush1.bf16.msra.mxu0 0
  %1996 = vmatprep.subr.bf16.mxu0 0
  %1997 = vmatpush1.bf16.msra.mxu0 0
  %1998 = vmatprep.subr.bf16.mxu0 0
  %1999 = vmatpush1.bf16.msra.mxu0 0
  %2000 = vmatprep.subr.bf16.mxu0 0
  %2001 = vmatpush1.bf16.msra.mxu0 0
  %2002 = vmatprep.subr.bf16.mxu0 0
  %2003 = vmatpush1.bf16.msra.mxu0 0
  %2004 = vmatprep.subr.bf16.mxu0 0
  %2005 = vmatpush1.bf16.msra.mxu0 0
  %2006 = vmatprep.subr.bf16.mxu0 0
  %2007 = vmatpush1.bf16.msra.mxu0 0
  %2008 = vmatprep.subr.bf16.mxu0 0
  %2009 = vmatpush1.bf16.msra.mxu0 0
  %2010 = vmatprep.mubr.bf16.mxu0 0
  %2011 = vmatmul.mubr.bf16.gmra.mrb[0].mxu0 %v1977
  %v2012 = vpop.f32.mrb[0].mxu0
  %v2013 = vadd.f32 0.0, %v2012
  %v2014 = vpop.f32.mrb[0].mxu0
  %v2015 = vadd.f32 0.0, %v2014
  %v2016 = vpop.f32.mrb[0].mxu0
  %v2017 = vpop.f32.mrb[0].mxu0
  %2018 = vdwg.mxu0
  %2019 = vmatprep.subr.bf16.mxu0 %v176
  %2020 = vmatpush1.bf16.msra.mxu0 %v175
  %2021 = vmatprep.subr.bf16.mxu0 %v180
  %2022 = vmatpush1.bf16.msra.mxu0 %v179
  %2023 = vmatprep.subr.bf16.mxu0 %v184
  %2024 = vmatpush1.bf16.msra.mxu0 %v183
  %2025 = vmatprep.subr.bf16.mxu0 %v188
  %2026 = vmatpush1.bf16.msra.mxu0 %v187
  %2027 = vmatprep.subr.bf16.mxu0 %v192
  %2028 = vmatpush1.bf16.msra.mxu0 %v191
  %2029 = vmatprep.subr.bf16.mxu0 %v196
  %2030 = vmatpush1.bf16.msra.mxu0 %v195
  %2031 = vmatprep.subr.bf16.mxu0 %v200
  %2032 = vmatpush1.bf16.msra.mxu0 %v199
  %2033 = vmatprep.subr.bf16.mxu0 %v204
  %2034 = vmatpush1.bf16.msra.mxu0 %v203
  %2035 = vmatprep.subr.bf16.mxu0 0
  %2036 = vmatpush1.bf16.msra.mxu0 0
  %2037 = vmatprep.subr.bf16.mxu0 0
  %2038 = vmatpush1.bf16.msra.mxu0 0
  %2039 = vmatprep.subr.bf16.mxu0 0
  %2040 = vmatpush1.bf16.msra.mxu0 0
  %2041 = vmatprep.subr.bf16.mxu0 0
  %2042 = vmatpush1.bf16.msra.mxu0 0
  %2043 = vmatprep.subr.bf16.mxu0 0
  %2044 = vmatpush1.bf16.msra.mxu0 0
  %2045 = vmatprep.subr.bf16.mxu0 0
  %2046 = vmatpush1.bf16.msra.mxu0 0
  %2047 = vmatprep.subr.bf16.mxu0 0
  %2048 = vmatpush1.bf16.msra.mxu0 0
  %2049 = vmatprep.subr.bf16.mxu0 0
  %2050 = vmatpush1.bf16.msra.mxu0 0
  %2051 = vmatprep.mubr.bf16.mxu0 0
  %2052 = vmatmul.mubr.bf16.gmra.mrb[0].mxu0 %v1977
  %v2053 = vpop.f32.mrb[0].mxu0
  %v2054 = vadd.f32 0.0, %v2053
  %v2055 = vpop.f32.mrb[0].mxu0
  %v2056 = vadd.f32 0.0, %v2055
  %v2057 = vpop.f32.mrb[0].mxu0
  %v2058 = vpop.f32.mrb[0].mxu0
  %2059 = vdwg.mxu0
  %v2061 = vsel %vm399, %v1974, 0
  %2063 = vmatprep.subr.bf16.mxu0 %v368
  %2064 = vmatpush1.bf16.msra.mxu0 %v367
  %2065 = vmatprep.subr.bf16.mxu0 %v372
  %2066 = vmatpush1.bf16.msra.mxu0 %v371
  %2067 = vmatprep.subr.bf16.mxu0 %v376
  %2068 = vmatpush1.bf16.msra.mxu0 %v375
  %2069 = vmatprep.subr.bf16.mxu0 %v380
  %2070 = vmatpush1.bf16.msra.mxu0 %v379
  %2071 = vmatprep.subr.bf16.mxu0 0
  %2072 = vmatpush1.bf16.msra.mxu0 0
  %2073 = vmatprep.subr.bf16.mxu0 0
  %2074 = vmatpush1.bf16.msra.mxu0 0
  %2075 = vmatprep.subr.bf16.mxu0 0
  %2076 = vmatpush1.bf16.msra.mxu0 0
  %2077 = vmatprep.subr.bf16.mxu0 0
  %2078 = vmatpush1.bf16.msra.mxu0 0
  %2079 = vmatprep.subr.bf16.mxu0 0
  %2080 = vmatpush1.bf16.msra.mxu0 0
  %2081 = vmatprep.subr.bf16.mxu0 0
  %2082 = vmatpush1.bf16.msra.mxu0 0
  %2083 = vmatprep.subr.bf16.mxu0 0
  %2084 = vmatpush1.bf16.msra.mxu0 0
  %2085 = vmatprep.subr.bf16.mxu0 0
  %2086 = vmatpush1.bf16.msra.mxu0 0
  %2087 = vmatprep.subr.bf16.mxu0 0
  %2088 = vmatpush1.bf16.msra.mxu0 0
  %2089 = vmatprep.subr.bf16.mxu0 0
  %2090 = vmatpush1.bf16.msra.mxu0 0
  %2091 = vmatprep.subr.bf16.mxu0 0
  %2092 = vmatpush1.bf16.msra.mxu0 0
  %2093 = vmatprep.subr.bf16.mxu0 0
  %2094 = vmatpush1.bf16.msra.mxu0 0
  %2095 = vmatprep.mubr.bf16.mxu0 0
  %2096 = vmatmul.mubr.bf16.gmra.mrb[0].mxu0 %v2061
  %v2097 = vpop.f32.mrb[0].mxu0
  %v2098 = vadd.f32 %v2013, %v2097
  %v2099 = vpop.f32.mrb[0].mxu0
  %v2100 = vadd.f32 %v2015, %v2099
  %v2101 = vpop.f32.mrb[0].mxu0
  %v2102 = vpop.f32.mrb[0].mxu0
  %2103 = vdwg.mxu0
  %2104 = vmatprep.subr.bf16.mxu0 %v370
  %2105 = vmatpush1.bf16.msra.mxu0 %v369
  %2106 = vmatprep.subr.bf16.mxu0 %v374
  %2107 = vmatpush1.bf16.msra.mxu0 %v373
  %2108 = vmatprep.subr.bf16.mxu0 %v378
  %2109 = vmatpush1.bf16.msra.mxu0 %v377
  %2110 = vmatprep.subr.bf16.mxu0 %v382
  %2111 = vmatpush1.bf16.msra.mxu0 %v381
  %2112 = vmatprep.subr.bf16.mxu0 0
  %2113 = vmatpush1.bf16.msra.mxu0 0
  %2114 = vmatprep.subr.bf16.mxu0 0
  %2115 = vmatpush1.bf16.msra.mxu0 0
  %2116 = vmatprep.subr.bf16.mxu0 0
  %2117 = vmatpush1.bf16.msra.mxu0 0
  %2118 = vmatprep.subr.bf16.mxu0 0
  %2119 = vmatpush1.bf16.msra.mxu0 0
  %2120 = vmatprep.subr.bf16.mxu0 0
  %2121 = vmatpush1.bf16.msra.mxu0 0
  %2122 = vmatprep.subr.bf16.mxu0 0
  %2123 = vmatpush1.bf16.msra.mxu0 0
  %2124 = vmatprep.subr.bf16.mxu0 0
  %2125 = vmatpush1.bf16.msra.mxu0 0
  %2126 = vmatprep.subr.bf16.mxu0 0
  %2127 = vmatpush1.bf16.msra.mxu0 0
  %2128 = vmatprep.subr.bf16.mxu0 0
  %2129 = vmatpush1.bf16.msra.mxu0 0
  %2130 = vmatprep.subr.bf16.mxu0 0
  %2131 = vmatpush1.bf16.msra.mxu0 0
  %2132 = vmatprep.subr.bf16.mxu0 0
  %2133 = vmatpush1.bf16.msra.mxu0 0
  %2134 = vmatprep.subr.bf16.mxu0 0
  %2135 = vmatpush1.bf16.msra.mxu0 0
  %2136 = vmatprep.mubr.bf16.mxu0 0
  %2137 = vmatmul.mubr.bf16.gmra.mrb[0].mxu0 %v2061
  %v2138 = vpop.f32.mrb[0].mxu0
  %v2139 = vadd.f32 %v2054, %v2138
  %v2140 = vpop.f32.mrb[0].mxu0
  %v2141 = vadd.f32 %v2056, %v2140
  %v2142 = vpop.f32.mrb[0].mxu0
  %v2143 = vpop.f32.mrb[0].mxu0
  %2144 = vdwg.mxu0
  %v2145 = vadd.f32 %v2098, %v489
  %v2146 = vadd.f32 %v2100, %v493
  %v2147 = vadd.f32 %v2139, %v497
  %v2148 = vadd.f32 %v2141, %v501
  %v2149 = vxor.u32 %v2145, 2147483648
  %v2150 = vmul.f32 %v2149, 1.442695
  %v2151 = vpow.pop %v2150
  %v2152 = vadd.f32 %v2151, 1.0
  %v2153 = vrcp.pop %v2152
  %v2154 = vmul.f32 1.0, %v2153
  %v2155 = vxor.u32 %v2146, 2147483648
  %v2156 = vmul.f32 %v2155, 1.442695
  %v2157 = vpow.pop %v2156
  %v2158 = vadd.f32 %v2157, 1.0
  %v2159 = vrcp.pop %v2158
  %v2160 = vmul.f32 1.0, %v2159
  %v2161 = vtanh.pop %v2147
  %v2162 = vxor.u32 %v2148, 2147483648
  %v2163 = vmul.f32 %v2162, 1.442695
  %v2164 = vpow.pop %v2163
  %v2165 = vadd.f32 %v2164, 1.0
  %v2166 = vrcp.pop %v2165
  %v2167 = vmul.f32 1.0, %v2166
  %v2168 = vmul.f32 %v2160, %v1976
  %v2169 = vmul.f32 %v2154, %v2161
  %v2170 = vadd.f32 %v2168, %v2169
  %v2171 = vtanh.pop %v2170
  %v2172 = vmul.f32 %v2167, %v2171
  %2173 = vst [vmem:[#allocation3] sm:$0xff] %v2170
  %2174 = vst [vmem:[#allocation2] sm:$0xff] %v2172
  %v2175 = vpack.c.bf16 %v2172, %v2172
  %s2176 = scalar_lea.vmem %s4, 32
  %2177 = vst [vmem:[%s2176] sm:$0xf] %v2175
  %s2178 = scalar_lea.vmem %s0, 36
  %v2179 = vld [vmem:[%s2178] sm:$0xf]
  %v2180 = vld [vmem:[#allocation2] sm:$0xff]
  %v2181 = vld [vmem:[#allocation3] sm:$0xff]
  %v2182 = vpack.c.bf16 %v2180, %v2180
  %2183 = vmatprep.subr.bf16.mxu0 %v174
  %2184 = vmatpush1.bf16.msra.mxu0 %v173
  %2185 = vmatprep.subr.bf16.mxu0 %v178
  %2186 = vmatpush1.bf16.msra.mxu0 %v177
  %2187 = vmatprep.subr.bf16.mxu0 %v182
  %2188 = vmatpush1.bf16.msra.mxu0 %v181
  %2189 = vmatprep.subr.bf16.mxu0 %v186
  %2190 = vmatpush1.bf16.msra.mxu0 %v185
  %2191 = vmatprep.subr.bf16.mxu0 %v190
  %2192 = vmatpush1.bf16.msra.mxu0 %v189
  %2193 = vmatprep.subr.bf16.mxu0 %v194
  %2194 = vmatpush1.bf16.msra.mxu0 %v193
  %2195 = vmatprep.subr.bf16.mxu0 %v198
  %2196 = vmatpush1.bf16.msra.mxu0 %v197
  %2197 = vmatprep.subr.bf16.mxu0 %v202
  %2198 = vmatpush1.bf16.msra.mxu0 %v201
  %2199 = vmatprep.subr.bf16.mxu0 0
  %2200 = vmatpush1.bf16.msra.mxu0 0
  %2201 = vmatprep.subr.bf16.mxu0 0
  %2202 = vmatpush1.bf16.msra.mxu0 0
  %2203 = vmatprep.subr.bf16.mxu0 0
  %2204 = vmatpush1.bf16.msra.mxu0 0
  %2205 = vmatprep.subr.bf16.mxu0 0
  %2206 = vmatpush1.bf16.msra.mxu0 0
  %2207 = vmatprep.subr.bf16.mxu0 0
  %2208 = vmatpush1.bf16.msra.mxu0 0
  %2209 = vmatprep.subr.bf16.mxu0 0
  %2210 = vmatpush1.bf16.msra.mxu0 0
  %2211 = vmatprep.subr.bf16.mxu0 0
  %2212 = vmatpush1.bf16.msra.mxu0 0
  %2213 = vmatprep.subr.bf16.mxu0 0
  %2214 = vmatpush1.bf16.msra.mxu0 0
  %2215 = vmatprep.mubr.bf16.mxu0 0
  %2216 = vmatmul.mubr.bf16.gmra.mrb[0].mxu0 %v2182
  %v2217 = vpop.f32.mrb[0].mxu0
  %v2218 = vadd.f32 0.0, %v2217
  %v2219 = vpop.f32.mrb[0].mxu0
  %v2220 = vadd.f32 0.0, %v2219
  %v2221 = vpop.f32.mrb[0].mxu0
  %v2222 = vpop.f32.mrb[0].mxu0
  %2223 = vdwg.mxu0
  %2224 = vmatprep.subr.bf16.mxu0 %v176
  %2225 = vmatpush1.bf16.msra.mxu0 %v175
  %2226 = vmatprep.subr.bf16.mxu0 %v180
  %2227 = vmatpush1.bf16.msra.mxu0 %v179
  %2228 = vmatprep.subr.bf16.mxu0 %v184
  %2229 = vmatpush1.bf16.msra.mxu0 %v183
  %2230 = vmatprep.subr.bf16.mxu0 %v188
  %2231 = vmatpush1.bf16.msra.mxu0 %v187
  %2232 = vmatprep.subr.bf16.mxu0 %v192
  %2233 = vmatpush1.bf16.msra.mxu0 %v191
  %2234 = vmatprep.subr.bf16.mxu0 %v196
  %2235 = vmatpush1.bf16.msra.mxu0 %v195
  %2236 = vmatprep.subr.bf16.mxu0 %v200
  %2237 = vmatpush1.bf16.msra.mxu0 %v199
  %2238 = vmatprep.subr.bf16.mxu0 %v204
  %2239 = vmatpush1.bf16.msra.mxu0 %v203
  %2240 = vmatprep.subr.bf16.mxu0 0
  %2241 = vmatpush1.bf16.msra.mxu0 0
  %2242 = vmatprep.subr.bf16.mxu0 0
  %2243 = vmatpush1.bf16.msra.mxu0 0
  %2244 = vmatprep.subr.bf16.mxu0 0
  %2245 = vmatpush1.bf16.msra.mxu0 0
  %2246 = vmatprep.subr.bf16.mxu0 0
  %2247 = vmatpush1.bf16.msra.mxu0 0
  %2248 = vmatprep.subr.bf16.mxu0 0
  %2249 = vmatpush1.bf16.msra.mxu0 0
  %2250 = vmatprep.subr.bf16.mxu0 0
  %2251 = vmatpush1.bf16.msra.mxu0 0
  %2252 = vmatprep.subr.bf16.mxu0 0
  %2253 = vmatpush1.bf16.msra.mxu0 0
  %2254 = vmatprep.subr.bf16.mxu0 0
  %2255 = vmatpush1.bf16.msra.mxu0 0
  %2256 = vmatprep.mubr.bf16.mxu0 0
  %2257 = vmatmul.mubr.bf16.gmra.mrb[0].mxu0 %v2182
  %v2258 = vpop.f32.mrb[0].mxu0
  %v2259 = vadd.f32 0.0, %v2258
  %v2260 = vpop.f32.mrb[0].mxu0
  %v2261 = vadd.f32 0.0, %v2260
  %v2262 = vpop.f32.mrb[0].mxu0
  %v2263 = vpop.f32.mrb[0].mxu0
  %2264 = vdwg.mxu0
  %v2266 = vsel %vm399, %v2179, 0
  %2268 = vmatprep.subr.bf16.mxu0 %v368
  %2269 = vmatpush1.bf16.msra.mxu0 %v367
  %2270 = vmatprep.subr.bf16.mxu0 %v372
  %2271 = vmatpush1.bf16.msra.mxu0 %v371
  %2272 = vmatprep.subr.bf16.mxu0 %v376
  %2273 = vmatpush1.bf16.msra.mxu0 %v375
  %2274 = vmatprep.subr.bf16.mxu0 %v380
  %2275 = vmatpush1.bf16.msra.mxu0 %v379
  %2276 = vmatprep.subr.bf16.mxu0 0
  %2277 = vmatpush1.bf16.msra.mxu0 0
  %2278 = vmatprep.subr.bf16.mxu0 0
  %2279 = vmatpush1.bf16.msra.mxu0 0
  %2280 = vmatprep.subr.bf16.mxu0 0
  %2281 = vmatpush1.bf16.msra.mxu0 0
  %2282 = vmatprep.subr.bf16.mxu0 0
  %2283 = vmatpush1.bf16.msra.mxu0 0
  %2284 = vmatprep.subr.bf16.mxu0 0
  %2285 = vmatpush1.bf16.msra.mxu0 0
  %2286 = vmatprep.subr.bf16.mxu0 0
  %2287 = vmatpush1.bf16.msra.mxu0 0
  %2288 = vmatprep.subr.bf16.mxu0 0
  %2289 = vmatpush1.bf16.msra.mxu0 0
  %2290 = vmatprep.subr.bf16.mxu0 0
  %2291 = vmatpush1.bf16.msra.mxu0 0
  %2292 = vmatprep.subr.bf16.mxu0 0
  %2293 = vmatpush1.bf16.msra.mxu0 0
  %2294 = vmatprep.subr.bf16.mxu0 0
  %2295 = vmatpush1.bf16.msra.mxu0 0
  %2296 = vmatprep.subr.bf16.mxu0 0
  %2297 = vmatpush1.bf16.msra.mxu0 0
  %2298 = vmatprep.subr.bf16.mxu0 0
  %2299 = vmatpush1.bf16.msra.mxu0 0
  %2300 = vmatprep.mubr.bf16.mxu0 0
  %2301 = vmatmul.mubr.bf16.gmra.mrb[0].mxu0 %v2266
  %v2302 = vpop.f32.mrb[0].mxu0
  %v2303 = vadd.f32 %v2218, %v2302
  %v2304 = vpop.f32.mrb[0].mxu0
  %v2305 = vadd.f32 %v2220, %v2304
  %v2306 = vpop.f32.mrb[0].mxu0
  %v2307 = vpop.f32.mrb[0].mxu0
  %2308 = vdwg.mxu0
  %2309 = vmatprep.subr.bf16.mxu0 %v370
  %2310 = vmatpush1.bf16.msra.mxu0 %v369
  %2311 = vmatprep.subr.bf16.mxu0 %v374
  %2312 = vmatpush1.bf16.msra.mxu0 %v373
  %2313 = vmatprep.subr.bf16.mxu0 %v378
  %2314 = vmatpush1.bf16.msra.mxu0 %v377
  %2315 = vmatprep.subr.bf16.mxu0 %v382
  %2316 = vmatpush1.bf16.msra.mxu0 %v381
  %2317 = vmatprep.subr.bf16.mxu0 0
  %2318 = vmatpush1.bf16.msra.mxu0 0
  %2319 = vmatprep.subr.bf16.mxu0 0
  %2320 = vmatpush1.bf16.msra.mxu0 0
  %2321 = vmatprep.subr.bf16.mxu0 0
  %2322 = vmatpush1.bf16.msra.mxu0 0
  %2323 = vmatprep.subr.bf16.mxu0 0
  %2324 = vmatpush1.bf16.msra.mxu0 0
  %2325 = vmatprep.subr.bf16.mxu0 0
  %2326 = vmatpush1.bf16.msra.mxu0 0
  %2327 = vmatprep.subr.bf16.mxu0 0
  %2328 = vmatpush1.bf16.msra.mxu0 0
  %2329 = vmatprep.subr.bf16.mxu0 0
  %2330 = vmatpush1.bf16.msra.mxu0 0
  %2331 = vmatprep.subr.bf16.mxu0 0
  %2332 = vmatpush1.bf16.msra.mxu0 0
  %2333 = vmatprep.subr.bf16.mxu0 0
  %2334 = vmatpush1.bf16.msra.mxu0 0
  %2335 = vmatprep.subr.bf16.mxu0 0
  %2336 = vmatpush1.bf16.msra.mxu0 0
  %2337 = vmatprep.subr.bf16.mxu0 0
  %2338 = vmatpush1.bf16.msra.mxu0 0
  %2339 = vmatprep.subr.bf16.mxu0 0
  %2340 = vmatpush1.bf16.msra.mxu0 0
  %2341 = vmatprep.mubr.bf16.mxu0 0
  %2342 = vmatmul.mubr.bf16.gmra.mrb[0].mxu0 %v2266
  %v2343 = vpop.f32.mrb[0].mxu0
  %v2344 = vadd.f32 %v2259, %v2343
  %v2345 = vpop.f32.mrb[0].mxu0
  %v2346 = vadd.f32 %v2261, %v2345
  %v2347 = vpop.f32.mrb[0].mxu0
  %v2348 = vpop.f32.mrb[0].mxu0
  %2349 = vdwg.mxu0
  %v2350 = vadd.f32 %v2303, %v489
  %v2351 = vadd.f32 %v2305, %v493
  %v2352 = vadd.f32 %v2344, %v497
  %v2353 = vadd.f32 %v2346, %v501
  %v2354 = vxor.u32 %v2350, 2147483648
  %v2355 = vmul.f32 %v2354, 1.442695
  %v2356 = vpow.pop %v2355
  %v2357 = vadd.f32 %v2356, 1.0
  %v2358 = vrcp.pop %v2357
  %v2359 = vmul.f32 1.0, %v2358
  %v2360 = vxor.u32 %v2351, 2147483648
  %v2361 = vmul.f32 %v2360, 1.442695
  %v2362 = vpow.pop %v2361
  %v2363 = vadd.f32 %v2362, 1.0
  %v2364 = vrcp.pop %v2363
  %v2365 = vmul.f32 1.0, %v2364
  %v2366 = vtanh.pop %v2352
  %v2367 = vxor.u32 %v2353, 2147483648
  %v2368 = vmul.f32 %v2367, 1.442695
  %v2369 = vpow.pop %v2368
  %v2370 = vadd.f32 %v2369, 1.0
  %v2371 = vrcp.pop %v2370
  %v2372 = vmul.f32 1.0, %v2371
  %v2373 = vmul.f32 %v2365, %v2181
  %v2374 = vmul.f32 %v2359, %v2366
  %v2375 = vadd.f32 %v2373, %v2374
  %v2376 = vtanh.pop %v2375
  %v2377 = vmul.f32 %v2372, %v2376
  %2378 = vst [vmem:[#allocation3] sm:$0xff] %v2375
  %2379 = vst [vmem:[#allocation2] sm:$0xff] %v2377
  %v2380 = vpack.c.bf16 %v2377, %v2377
  %s2381 = scalar_lea.vmem %s4, 36
  %2382 = vst [vmem:[%s2381] sm:$0xf] %v2380
  %s2383 = scalar_lea.vmem %s0, 40
  %v2384 = vld [vmem:[%s2383] sm:$0xf]
  %v2385 = vld [vmem:[#allocation2] sm:$0xff]
  %v2386 = vld [vmem:[#allocation3] sm:$0xff]
  %v2387 = vpack.c.bf16 %v2385, %v2385
  %2388 = vmatprep.subr.bf16.mxu0 %v174
  %2389 = vmatpush1.bf16.msra.mxu0 %v173
  %2390 = vmatprep.subr.bf16.mxu0 %v178
  %2391 = vmatpush1.bf16.msra.mxu0 %v177
  %2392 = vmatprep.subr.bf16.mxu0 %v182
  %2393 = vmatpush1.bf16.msra.mxu0 %v181
  %2394 = vmatprep.subr.bf16.mxu0 %v186
  %2395 = vmatpush1.bf16.msra.mxu0 %v185
  %2396 = vmatprep.subr.bf16.mxu0 %v190
  %2397 = vmatpush1.bf16.msra.mxu0 %v189
  %2398 = vmatprep.subr.bf16.mxu0 %v194
  %2399 = vmatpush1.bf16.msra.mxu0 %v193
  %2400 = vmatprep.subr.bf16.mxu0 %v198
  %2401 = vmatpush1.bf16.msra.mxu0 %v197
  %2402 = vmatprep.subr.bf16.mxu0 %v202
  %2403 = vmatpush1.bf16.msra.mxu0 %v201
  %2404 = vmatprep.subr.bf16.mxu0 0
  %2405 = vmatpush1.bf16.msra.mxu0 0
  %2406 = vmatprep.subr.bf16.mxu0 0
  %2407 = vmatpush1.bf16.msra.mxu0 0
  %2408 = vmatprep.subr.bf16.mxu0 0
  %2409 = vmatpush1.bf16.msra.mxu0 0
  %2410 = vmatprep.subr.bf16.mxu0 0
  %2411 = vmatpush1.bf16.msra.mxu0 0
  %2412 = vmatprep.subr.bf16.mxu0 0
  %2413 = vmatpush1.bf16.msra.mxu0 0
  %2414 = vmatprep.subr.bf16.mxu0 0
  %2415 = vmatpush1.bf16.msra.mxu0 0
  %2416 = vmatprep.subr.bf16.mxu0 0
  %2417 = vmatpush1.bf16.msra.mxu0 0
  %2418 = vmatprep.subr.bf16.mxu0 0
  %2419 = vmatpush1.bf16.msra.mxu0 0
  %2420 = vmatprep.mubr.bf16.mxu0 0
  %2421 = vmatmul.mubr.bf16.gmra.mrb[0].mxu0 %v2387
  %v2422 = vpop.f32.mrb[0].mxu0
  %v2423 = vadd.f32 0.0, %v2422
  %v2424 = vpop.f32.mrb[0].mxu0
  %v2425 = vadd.f32 0.0, %v2424
  %v2426 = vpop.f32.mrb[0].mxu0
  %v2427 = vpop.f32.mrb[0].mxu0
  %2428 = vdwg.mxu0
  %2429 = vmatprep.subr.bf16.mxu0 %v176
  %2430 = vmatpush1.bf16.msra.mxu0 %v175
  %2431 = vmatprep.subr.bf16.mxu0 %v180
  %2432 = vmatpush1.bf16.msra.mxu0 %v179
  %2433 = vmatprep.subr.bf16.mxu0 %v184
  %2434 = vmatpush1.bf16.msra.mxu0 %v183
  %2435 = vmatprep.subr.bf16.mxu0 %v188
  %2436 = vmatpush1.bf16.msra.mxu0 %v187
  %2437 = vmatprep.subr.bf16.mxu0 %v192
  %2438 = vmatpush1.bf16.msra.mxu0 %v191
  %2439 = vmatprep.subr.bf16.mxu0 %v196
  %2440 = vmatpush1.bf16.msra.mxu0 %v195
  %2441 = vmatprep.subr.bf16.mxu0 %v200
  %2442 = vmatpush1.bf16.msra.mxu0 %v199
  %2443 = vmatprep.subr.bf16.mxu0 %v204
  %2444 = vmatpush1.bf16.msra.mxu0 %v203
  %2445 = vmatprep.subr.bf16.mxu0 0
  %2446 = vmatpush1.bf16.msra.mxu0 0
  %2447 = vmatprep.subr.bf16.mxu0 0
  %2448 = vmatpush1.bf16.msra.mxu0 0
  %2449 = vmatprep.subr.bf16.mxu0 0
  %2450 = vmatpush1.bf16.msra.mxu0 0
  %2451 = vmatprep.subr.bf16.mxu0 0
  %2452 = vmatpush1.bf16.msra.mxu0 0
  %2453 = vmatprep.subr.bf16.mxu0 0
  %2454 = vmatpush1.bf16.msra.mxu0 0
  %2455 = vmatprep.subr.bf16.mxu0 0
  %2456 = vmatpush1.bf16.msra.mxu0 0
  %2457 = vmatprep.subr.bf16.mxu0 0
  %2458 = vmatpush1.bf16.msra.mxu0 0
  %2459 = vmatprep.subr.bf16.mxu0 0
  %2460 = vmatpush1.bf16.msra.mxu0 0
  %2461 = vmatprep.mubr.bf16.mxu0 0
  %2462 = vmatmul.mubr.bf16.gmra.mrb[0].mxu0 %v2387
  %v2463 = vpop.f32.mrb[0].mxu0
  %v2464 = vadd.f32 0.0, %v2463
  %v2465 = vpop.f32.mrb[0].mxu0
  %v2466 = vadd.f32 0.0, %v2465
  %v2467 = vpop.f32.mrb[0].mxu0
  %v2468 = vpop.f32.mrb[0].mxu0
  %2469 = vdwg.mxu0
  %v2471 = vsel %vm399, %v2384, 0
  %2473 = vmatprep.subr.bf16.mxu0 %v368
  %2474 = vmatpush1.bf16.msra.mxu0 %v367
  %2475 = vmatprep.subr.bf16.mxu0 %v372
  %2476 = vmatpush1.bf16.msra.mxu0 %v371
  %2477 = vmatprep.subr.bf16.mxu0 %v376
  %2478 = vmatpush1.bf16.msra.mxu0 %v375
  %2479 = vmatprep.subr.bf16.mxu0 %v380
  %2480 = vmatpush1.bf16.msra.mxu0 %v379
  %2481 = vmatprep.subr.bf16.mxu0 0
  %2482 = vmatpush1.bf16.msra.mxu0 0
  %2483 = vmatprep.subr.bf16.mxu0 0
  %2484 = vmatpush1.bf16.msra.mxu0 0
  %2485 = vmatprep.subr.bf16.mxu0 0
  %2486 = vmatpush1.bf16.msra.mxu0 0
  %2487 = vmatprep.subr.bf16.mxu0 0
  %2488 = vmatpush1.bf16.msra.mxu0 0
  %2489 = vmatprep.subr.bf16.mxu0 0
  %2490 = vmatpush1.bf16.msra.mxu0 0
  %2491 = vmatprep.subr.bf16.mxu0 0
  %2492 = vmatpush1.bf16.msra.mxu0 0
  %2493 = vmatprep.subr.bf16.mxu0 0
  %2494 = vmatpush1.bf16.msra.mxu0 0
  %2495 = vmatprep.subr.bf16.mxu0 0
  %2496 = vmatpush1.bf16.msra.mxu0 0
  %2497 = vmatprep.subr.bf16.mxu0 0
  %2498 = vmatpush1.bf16.msra.mxu0 0
  %2499 = vmatprep.subr.bf16.mxu0 0
  %2500 = vmatpush1.bf16.msra.mxu0 0
  %2501 = vmatprep.subr.bf16.mxu0 0
  %2502 = vmatpush1.bf16.msra.mxu0 0
  %2503 = vmatprep.subr.bf16.mxu0 0
  %2504 = vmatpush1.bf16.msra.mxu0 0
  %2505 = vmatprep.mubr.bf16.mxu0 0
  %2506 = vmatmul.mubr.bf16.gmra.mrb[0].mxu0 %v2471
  %v2507 = vpop.f32.mrb[0].mxu0
  %v2508 = vadd.f32 %v2423, %v2507
  %v2509 = vpop.f32.mrb[0].mxu0
  %v2510 = vadd.f32 %v2425, %v2509
  %v2511 = vpop.f32.mrb[0].mxu0
  %v2512 = vpop.f32.mrb[0].mxu0
  %2513 = vdwg.mxu0
  %2514 = vmatprep.subr.bf16.mxu0 %v370
  %2515 = vmatpush1.bf16.msra.mxu0 %v369
  %2516 = vmatprep.subr.bf16.mxu0 %v374
  %2517 = vmatpush1.bf16.msra.mxu0 %v373
  %2518 = vmatprep.subr.bf16.mxu0 %v378
  %2519 = vmatpush1.bf16.msra.mxu0 %v377
  %2520 = vmatprep.subr.bf16.mxu0 %v382
  %2521 = vmatpush1.bf16.msra.mxu0 %v381
  %2522 = vmatprep.subr.bf16.mxu0 0
  %2523 = vmatpush1.bf16.msra.mxu0 0
  %2524 = vmatprep.subr.bf16.mxu0 0
  %2525 = vmatpush1.bf16.msra.mxu0 0
  %2526 = vmatprep.subr.bf16.mxu0 0
  %2527 = vmatpush1.bf16.msra.mxu0 0
  %2528 = vmatprep.subr.bf16.mxu0 0
  %2529 = vmatpush1.bf16.msra.mxu0 0
  %2530 = vmatprep.subr.bf16.mxu0 0
  %2531 = vmatpush1.bf16.msra.mxu0 0
  %2532 = vmatprep.subr.bf16.mxu0 0
  %2533 = vmatpush1.bf16.msra.mxu0 0
  %2534 = vmatprep.subr.bf16.mxu0 0
  %2535 = vmatpush1.bf16.msra.mxu0 0
  %2536 = vmatprep.subr.bf16.mxu0 0
  %2537 = vmatpush1.bf16.msra.mxu0 0
  %2538 = vmatprep.subr.bf16.mxu0 0
  %2539 = vmatpush1.bf16.msra.mxu0 0
  %2540 = vmatprep.subr.bf16.mxu0 0
  %2541 = vmatpush1.bf16.msra.mxu0 0
  %2542 = vmatprep.subr.bf16.mxu0 0
  %2543 = vmatpush1.bf16.msra.mxu0 0
  %2544 = vmatprep.subr.bf16.mxu0 0
  %2545 = vmatpush1.bf16.msra.mxu0 0
  %2546 = vmatprep.mubr.bf16.mxu0 0
  %2547 = vmatmul.mubr.bf16.gmra.mrb[0].mxu0 %v2471
  %v2548 = vpop.f32.mrb[0].mxu0
  %v2549 = vadd.f32 %v2464, %v2548
  %v2550 = vpop.f32.mrb[0].mxu0
  %v2551 = vadd.f32 %v2466, %v2550
  %v2552 = vpop.f32.mrb[0].mxu0
  %v2553 = vpop.f32.mrb[0].mxu0
  %2554 = vdwg.mxu0
  %v2555 = vadd.f32 %v2508, %v489
  %v2556 = vadd.f32 %v2510, %v493
  %v2557 = vadd.f32 %v2549, %v497
  %v2558 = vadd.f32 %v2551, %v501
  %v2559 = vxor.u32 %v2555, 2147483648
  %v2560 = vmul.f32 %v2559, 1.442695
  %v2561 = vpow.pop %v2560
  %v2562 = vadd.f32 %v2561, 1.0
  %v2563 = vrcp.pop %v2562
  %v2564 = vmul.f32 1.0, %v2563
  %v2565 = vxor.u32 %v2556, 2147483648
  %v2566 = vmul.f32 %v2565, 1.442695
  %v2567 = vpow.pop %v2566
  %v2568 = vadd.f32 %v2567, 1.0
  %v2569 = vrcp.pop %v2568
  %v2570 = vmul.f32 1.0, %v2569
  %v2571 = vtanh.pop %v2557
  %v2572 = vxor.u32 %v2558, 2147483648
  %v2573 = vmul.f32 %v2572, 1.442695
  %v2574 = vpow.pop %v2573
  %v2575 = vadd.f32 %v2574, 1.0
  %v2576 = vrcp.pop %v2575
  %v2577 = vmul.f32 1.0, %v2576
  %v2578 = vmul.f32 %v2570, %v2386
  %v2579 = vmul.f32 %v2564, %v2571
  %v2580 = vadd.f32 %v2578, %v2579
  %v2581 = vtanh.pop %v2580
  %v2582 = vmul.f32 %v2577, %v2581
  %2583 = vst [vmem:[#allocation3] sm:$0xff] %v2580
  %2584 = vst [vmem:[#allocation2] sm:$0xff] %v2582
  %v2585 = vpack.c.bf16 %v2582, %v2582
  %s2586 = scalar_lea.vmem %s4, 40
  %2587 = vst [vmem:[%s2586] sm:$0xf] %v2585
  %s2588 = scalar_lea.vmem %s0, 44
  %v2589 = vld [vmem:[%s2588] sm:$0xf]
  %v2590 = vld [vmem:[#allocation2] sm:$0xff]
  %v2591 = vld [vmem:[#allocation3] sm:$0xff]
  %v2592 = vpack.c.bf16 %v2590, %v2590
  %2593 = vmatprep.subr.bf16.mxu0 %v174
  %2594 = vmatpush1.bf16.msra.mxu0 %v173
  %2595 = vmatprep.subr.bf16.mxu0 %v178
  %2596 = vmatpush1.bf16.msra.mxu0 %v177
  %2597 = vmatprep.subr.bf16.mxu0 %v182
  %2598 = vmatpush1.bf16.msra.mxu0 %v181
  %2599 = vmatprep.subr.bf16.mxu0 %v186
  %2600 = vmatpush1.bf16.msra.mxu0 %v185
  %2601 = vmatprep.subr.bf16.mxu0 %v190
  %2602 = vmatpush1.bf16.msra.mxu0 %v189
  %2603 = vmatprep.subr.bf16.mxu0 %v194
  %2604 = vmatpush1.bf16.msra.mxu0 %v193
  %2605 = vmatprep.subr.bf16.mxu0 %v198
  %2606 = vmatpush1.bf16.msra.mxu0 %v197
  %2607 = vmatprep.subr.bf16.mxu0 %v202
  %2608 = vmatpush1.bf16.msra.mxu0 %v201
  %2609 = vmatprep.subr.bf16.mxu0 0
  %2610 = vmatpush1.bf16.msra.mxu0 0
  %2611 = vmatprep.subr.bf16.mxu0 0
  %2612 = vmatpush1.bf16.msra.mxu0 0
  %2613 = vmatprep.subr.bf16.mxu0 0
  %2614 = vmatpush1.bf16.msra.mxu0 0
  %2615 = vmatprep.subr.bf16.mxu0 0
  %2616 = vmatpush1.bf16.msra.mxu0 0
  %2617 = vmatprep.subr.bf16.mxu0 0
  %2618 = vmatpush1.bf16.msra.mxu0 0
  %2619 = vmatprep.subr.bf16.mxu0 0
  %2620 = vmatpush1.bf16.msra.mxu0 0
  %2621 = vmatprep.subr.bf16.mxu0 0
  %2622 = vmatpush1.bf16.msra.mxu0 0
  %2623 = vmatprep.subr.bf16.mxu0 0
  %2624 = vmatpush1.bf16.msra.mxu0 0
  %2625 = vmatprep.mubr.bf16.mxu0 0
  %2626 = vmatmul.mubr.bf16.gmra.mrb[0].mxu0 %v2592
  %v2627 = vpop.f32.mrb[0].mxu0
  %v2628 = vadd.f32 0.0, %v2627
  %v2629 = vpop.f32.mrb[0].mxu0
  %v2630 = vadd.f32 0.0, %v2629
  %v2631 = vpop.f32.mrb[0].mxu0
  %v2632 = vpop.f32.mrb[0].mxu0
  %2633 = vdwg.mxu0
  %2634 = vmatprep.subr.bf16.mxu0 %v176
  %2635 = vmatpush1.bf16.msra.mxu0 %v175
  %2636 = vmatprep.subr.bf16.mxu0 %v180
  %2637 = vmatpush1.bf16.msra.mxu0 %v179
  %2638 = vmatprep.subr.bf16.mxu0 %v184
  %2639 = vmatpush1.bf16.msra.mxu0 %v183
  %2640 = vmatprep.subr.bf16.mxu0 %v188
  %2641 = vmatpush1.bf16.msra.mxu0 %v187
  %2642 = vmatprep.subr.bf16.mxu0 %v192
  %2643 = vmatpush1.bf16.msra.mxu0 %v191
  %2644 = vmatprep.subr.bf16.mxu0 %v196
  %2645 = vmatpush1.bf16.msra.mxu0 %v195
  %2646 = vmatprep.subr.bf16.mxu0 %v200
  %2647 = vmatpush1.bf16.msra.mxu0 %v199
  %2648 = vmatprep.subr.bf16.mxu0 %v204
  %2649 = vmatpush1.bf16.msra.mxu0 %v203
  %2650 = vmatprep.subr.bf16.mxu0 0
  %2651 = vmatpush1.bf16.msra.mxu0 0
  %2652 = vmatprep.subr.bf16.mxu0 0
  %2653 = vmatpush1.bf16.msra.mxu0 0
  %2654 = vmatprep.subr.bf16.mxu0 0
  %2655 = vmatpush1.bf16.msra.mxu0 0
  %2656 = vmatprep.subr.bf16.mxu0 0
  %2657 = vmatpush1.bf16.msra.mxu0 0
  %2658 = vmatprep.subr.bf16.mxu0 0
  %2659 = vmatpush1.bf16.msra.mxu0 0
  %2660 = vmatprep.subr.bf16.mxu0 0
  %2661 = vmatpush1.bf16.msra.mxu0 0
  %2662 = vmatprep.subr.bf16.mxu0 0
  %2663 = vmatpush1.bf16.msra.mxu0 0
  %2664 = vmatprep.subr.bf16.mxu0 0
  %2665 = vmatpush1.bf16.msra.mxu0 0
  %2666 = vmatprep.mubr.bf16.mxu0 0
  %2667 = vmatmul.mubr.bf16.gmra.mrb[0].mxu0 %v2592
  %v2668 = vpop.f32.mrb[0].mxu0
  %v2669 = vadd.f32 0.0, %v2668
  %v2670 = vpop.f32.mrb[0].mxu0
  %v2671 = vadd.f32 0.0, %v2670
  %v2672 = vpop.f32.mrb[0].mxu0
  %v2673 = vpop.f32.mrb[0].mxu0
  %2674 = vdwg.mxu0
  %v2676 = vsel %vm399, %v2589, 0
  %2678 = vmatprep.subr.bf16.mxu0 %v368
  %2679 = vmatpush1.bf16.msra.mxu0 %v367
  %2680 = vmatprep.subr.bf16.mxu0 %v372
  %2681 = vmatpush1.bf16.msra.mxu0 %v371
  %2682 = vmatprep.subr.bf16.mxu0 %v376
  %2683 = vmatpush1.bf16.msra.mxu0 %v375
  %2684 = vmatprep.subr.bf16.mxu0 %v380
  %2685 = vmatpush1.bf16.msra.mxu0 %v379
  %2686 = vmatprep.subr.bf16.mxu0 0
  %2687 = vmatpush1.bf16.msra.mxu0 0
  %2688 = vmatprep.subr.bf16.mxu0 0
  %2689 = vmatpush1.bf16.msra.mxu0 0
  %2690 = vmatprep.subr.bf16.mxu0 0
  %2691 = vmatpush1.bf16.msra.mxu0 0
  %2692 = vmatprep.subr.bf16.mxu0 0
  %2693 = vmatpush1.bf16.msra.mxu0 0
  %2694 = vmatprep.subr.bf16.mxu0 0
  %2695 = vmatpush1.bf16.msra.mxu0 0
  %2696 = vmatprep.subr.bf16.mxu0 0
  %2697 = vmatpush1.bf16.msra.mxu0 0
  %2698 = vmatprep.subr.bf16.mxu0 0
  %2699 = vmatpush1.bf16.msra.mxu0 0
  %2700 = vmatprep.subr.bf16.mxu0 0
  %2701 = vmatpush1.bf16.msra.mxu0 0
  %2702 = vmatprep.subr.bf16.mxu0 0
  %2703 = vmatpush1.bf16.msra.mxu0 0
  %2704 = vmatprep.subr.bf16.mxu0 0
  %2705 = vmatpush1.bf16.msra.mxu0 0
  %2706 = vmatprep.subr.bf16.mxu0 0
  %2707 = vmatpush1.bf16.msra.mxu0 0
  %2708 = vmatprep.subr.bf16.mxu0 0
  %2709 = vmatpush1.bf16.msra.mxu0 0
  %2710 = vmatprep.mubr.bf16.mxu0 0
  %2711 = vmatmul.mubr.bf16.gmra.mrb[0].mxu0 %v2676
  %v2712 = vpop.f32.mrb[0].mxu0
  %v2713 = vadd.f32 %v2628, %v2712
  %v2714 = vpop.f32.mrb[0].mxu0
  %v2715 = vadd.f32 %v2630, %v2714
  %v2716 = vpop.f32.mrb[0].mxu0
  %v2717 = vpop.f32.mrb[0].mxu0
  %2718 = vdwg.mxu0
  %2719 = vmatprep.subr.bf16.mxu0 %v370
  %2720 = vmatpush1.bf16.msra.mxu0 %v369
  %2721 = vmatprep.subr.bf16.mxu0 %v374
  %2722 = vmatpush1.bf16.msra.mxu0 %v373
  %2723 = vmatprep.subr.bf16.mxu0 %v378
  %2724 = vmatpush1.bf16.msra.mxu0 %v377
  %2725 = vmatprep.subr.bf16.mxu0 %v382
  %2726 = vmatpush1.bf16.msra.mxu0 %v381
  %2727 = vmatprep.subr.bf16.mxu0 0
  %2728 = vmatpush1.bf16.msra.mxu0 0
  %2729 = vmatprep.subr.bf16.mxu0 0
  %2730 = vmatpush1.bf16.msra.mxu0 0
  %2731 = vmatprep.subr.bf16.mxu0 0
  %2732 = vmatpush1.bf16.msra.mxu0 0
  %2733 = vmatprep.subr.bf16.mxu0 0
  %2734 = vmatpush1.bf16.msra.mxu0 0
  %2735 = vmatprep.subr.bf16.mxu0 0
  %2736 = vmatpush1.bf16.msra.mxu0 0
  %2737 = vmatprep.subr.bf16.mxu0 0
  %2738 = vmatpush1.bf16.msra.mxu0 0
  %2739 = vmatprep.subr.bf16.mxu0 0
  %2740 = vmatpush1.bf16.msra.mxu0 0
  %2741 = vmatprep.subr.bf16.mxu0 0
  %2742 = vmatpush1.bf16.msra.mxu0 0
  %2743 = vmatprep.subr.bf16.mxu0 0
  %2744 = vmatpush1.bf16.msra.mxu0 0
  %2745 = vmatprep.subr.bf16.mxu0 0
  %2746 = vmatpush1.bf16.msra.mxu0 0
  %2747 = vmatprep.subr.bf16.mxu0 0
  %2748 = vmatpush1.bf16.msra.mxu0 0
  %2749 = vmatprep.subr.bf16.mxu0 0
  %2750 = vmatpush1.bf16.msra.mxu0 0
  %2751 = vmatprep.mubr.bf16.mxu0 0
  %2752 = vmatmul.mubr.bf16.gmra.mrb[0].mxu0 %v2676
  %v2753 = vpop.f32.mrb[0].mxu0
  %v2754 = vadd.f32 %v2669, %v2753
  %v2755 = vpop.f32.mrb[0].mxu0
  %v2756 = vadd.f32 %v2671, %v2755
  %v2757 = vpop.f32.mrb[0].mxu0
  %v2758 = vpop.f32.mrb[0].mxu0
  %2759 = vdwg.mxu0
  %v2760 = vadd.f32 %v2713, %v489
  %v2761 = vadd.f32 %v2715, %v493
  %v2762 = vadd.f32 %v2754, %v497
  %v2763 = vadd.f32 %v2756, %v501
  %v2764 = vxor.u32 %v2760, 2147483648
  %v2765 = vmul.f32 %v2764, 1.442695
  %v2766 = vpow.pop %v2765
  %v2767 = vadd.f32 %v2766, 1.0
  %v2768 = vrcp.pop %v2767
  %v2769 = vmul.f32 1.0, %v2768
  %v2770 = vxor.u32 %v2761, 2147483648
  %v2771 = vmul.f32 %v2770, 1.442695
  %v2772 = vpow.pop %v2771
  %v2773 = vadd.f32 %v2772, 1.0
  %v2774 = vrcp.pop %v2773
  %v2775 = vmul.f32 1.0, %v2774
  %v2776 = vtanh.pop %v2762
  %v2777 = vxor.u32 %v2763, 2147483648
  %v2778 = vmul.f32 %v2777, 1.442695
  %v2779 = vpow.pop %v2778
  %v2780 = vadd.f32 %v2779, 1.0
  %v2781 = vrcp.pop %v2780
  %v2782 = vmul.f32 1.0, %v2781
  %v2783 = vmul.f32 %v2775, %v2591
  %v2784 = vmul.f32 %v2769, %v2776
  %v2785 = vadd.f32 %v2783, %v2784
  %v2786 = vtanh.pop %v2785
  %v2787 = vmul.f32 %v2782, %v2786
  %2788 = vst [vmem:[#allocation3] sm:$0xff] %v2785
  %2789 = vst [vmem:[#allocation2] sm:$0xff] %v2787
  %v2790 = vpack.c.bf16 %v2787, %v2787
  %s2791 = scalar_lea.vmem %s4, 44
  %2792 = vst [vmem:[%s2791] sm:$0xf] %v2790
  %s2793 = scalar_lea.vmem %s0, 48
  %v2794 = vld [vmem:[%s2793] sm:$0xf]
  %v2795 = vld [vmem:[#allocation2] sm:$0xff]
  %v2796 = vld [vmem:[#allocation3] sm:$0xff]
  %v2797 = vpack.c.bf16 %v2795, %v2795
  %2798 = vmatprep.subr.bf16.mxu0 %v174
  %2799 = vmatpush1.bf16.msra.mxu0 %v173
  %2800 = vmatprep.subr.bf16.mxu0 %v178
  %2801 = vmatpush1.bf16.msra.mxu0 %v177
  %2802 = vmatprep.subr.bf16.mxu0 %v182
  %2803 = vmatpush1.bf16.msra.mxu0 %v181
  %2804 = vmatprep.subr.bf16.mxu0 %v186
  %2805 = vmatpush1.bf16.msra.mxu0 %v185
  %2806 = vmatprep.subr.bf16.mxu0 %v190
  %2807 = vmatpush1.bf16.msra.mxu0 %v189
  %2808 = vmatprep.subr.bf16.mxu0 %v194
  %2809 = vmatpush1.bf16.msra.mxu0 %v193
  %2810 = vmatprep.subr.bf16.mxu0 %v198
  %2811 = vmatpush1.bf16.msra.mxu0 %v197
  %2812 = vmatprep.subr.bf16.mxu0 %v202
  %2813 = vmatpush1.bf16.msra.mxu0 %v201
  %2814 = vmatprep.subr.bf16.mxu0 0
  %2815 = vmatpush1.bf16.msra.mxu0 0
  %2816 = vmatprep.subr.bf16.mxu0 0
  %2817 = vmatpush1.bf16.msra.mxu0 0
  %2818 = vmatprep.subr.bf16.mxu0 0
  %2819 = vmatpush1.bf16.msra.mxu0 0
  %2820 = vmatprep.subr.bf16.mxu0 0
  %2821 = vmatpush1.bf16.msra.mxu0 0
  %2822 = vmatprep.subr.bf16.mxu0 0
  %2823 = vmatpush1.bf16.msra.mxu0 0
  %2824 = vmatprep.subr.bf16.mxu0 0
  %2825 = vmatpush1.bf16.msra.mxu0 0
  %2826 = vmatprep.subr.bf16.mxu0 0
  %2827 = vmatpush1.bf16.msra.mxu0 0
  %2828 = vmatprep.subr.bf16.mxu0 0
  %2829 = vmatpush1.bf16.msra.mxu0 0
  %2830 = vmatprep.mubr.bf16.mxu0 0
  %2831 = vmatmul.mubr.bf16.gmra.mrb[0].mxu0 %v2797
  %v2832 = vpop.f32.mrb[0].mxu0
  %v2833 = vadd.f32 0.0, %v2832
  %v2834 = vpop.f32.mrb[0].mxu0
  %v2835 = vadd.f32 0.0, %v2834
  %v2836 = vpop.f32.mrb[0].mxu0
  %v2837 = vpop.f32.mrb[0].mxu0
  %2838 = vdwg.mxu0
  %2839 = vmatprep.subr.bf16.mxu0 %v176
  %2840 = vmatpush1.bf16.msra.mxu0 %v175
  %2841 = vmatprep.subr.bf16.mxu0 %v180
  %2842 = vmatpush1.bf16.msra.mxu0 %v179
  %2843 = vmatprep.subr.bf16.mxu0 %v184
  %2844 = vmatpush1.bf16.msra.mxu0 %v183
  %2845 = vmatprep.subr.bf16.mxu0 %v188
  %2846 = vmatpush1.bf16.msra.mxu0 %v187
  %2847 = vmatprep.subr.bf16.mxu0 %v192
  %2848 = vmatpush1.bf16.msra.mxu0 %v191
  %2849 = vmatprep.subr.bf16.mxu0 %v196
  %2850 = vmatpush1.bf16.msra.mxu0 %v195
  %2851 = vmatprep.subr.bf16.mxu0 %v200
  %2852 = vmatpush1.bf16.msra.mxu0 %v199
  %2853 = vmatprep.subr.bf16.mxu0 %v204
  %2854 = vmatpush1.bf16.msra.mxu0 %v203
  %2855 = vmatprep.subr.bf16.mxu0 0
  %2856 = vmatpush1.bf16.msra.mxu0 0
  %2857 = vmatprep.subr.bf16.mxu0 0
  %2858 = vmatpush1.bf16.msra.mxu0 0
  %2859 = vmatprep.subr.bf16.mxu0 0
  %2860 = vmatpush1.bf16.msra.mxu0 0
  %2861 = vmatprep.subr.bf16.mxu0 0
  %2862 = vmatpush1.bf16.msra.mxu0 0
  %2863 = vmatprep.subr.bf16.mxu0 0
  %2864 = vmatpush1.bf16.msra.mxu0 0
  %2865 = vmatprep.subr.bf16.mxu0 0
  %2866 = vmatpush1.bf16.msra.mxu0 0
  %2867 = vmatprep.subr.bf16.mxu0 0
  %2868 = vmatpush1.bf16.msra.mxu0 0
  %2869 = vmatprep.subr.bf16.mxu0 0
  %2870 = vmatpush1.bf16.msra.mxu0 0
  %2871 = vmatprep.mubr.bf16.mxu0 0
  %2872 = vmatmul.mubr.bf16.gmra.mrb[0].mxu0 %v2797
  %v2873 = vpop.f32.mrb[0].mxu0
  %v2874 = vadd.f32 0.0, %v2873
  %v2875 = vpop.f32.mrb[0].mxu0
  %v2876 = vadd.f32 0.0, %v2875
  %v2877 = vpop.f32.mrb[0].mxu0
  %v2878 = vpop.f32.mrb[0].mxu0
  %2879 = vdwg.mxu0
  %v2881 = vsel %vm399, %v2794, 0
  %2883 = vmatprep.subr.bf16.mxu0 %v368
  %2884 = vmatpush1.bf16.msra.mxu0 %v367
  %2885 = vmatprep.subr.bf16.mxu0 %v372
  %2886 = vmatpush1.bf16.msra.mxu0 %v371
  %2887 = vmatprep.subr.bf16.mxu0 %v376
  %2888 = vmatpush1.bf16.msra.mxu0 %v375
  %2889 = vmatprep.subr.bf16.mxu0 %v380
  %2890 = vmatpush1.bf16.msra.mxu0 %v379
  %2891 = vmatprep.subr.bf16.mxu0 0
  %2892 = vmatpush1.bf16.msra.mxu0 0
  %2893 = vmatprep.subr.bf16.mxu0 0
  %2894 = vmatpush1.bf16.msra.mxu0 0
  %2895 = vmatprep.subr.bf16.mxu0 0
  %2896 = vmatpush1.bf16.msra.mxu0 0
  %2897 = vmatprep.subr.bf16.mxu0 0
  %2898 = vmatpush1.bf16.msra.mxu0 0
  %2899 = vmatprep.subr.bf16.mxu0 0
  %2900 = vmatpush1.bf16.msra.mxu0 0
  %2901 = vmatprep.subr.bf16.mxu0 0
  %2902 = vmatpush1.bf16.msra.mxu0 0
  %2903 = vmatprep.subr.bf16.mxu0 0
  %2904 = vmatpush1.bf16.msra.mxu0 0
  %2905 = vmatprep.subr.bf16.mxu0 0
  %2906 = vmatpush1.bf16.msra.mxu0 0
  %2907 = vmatprep.subr.bf16.mxu0 0
  %2908 = vmatpush1.bf16.msra.mxu0 0
  %2909 = vmatprep.subr.bf16.mxu0 0
  %2910 = vmatpush1.bf16.msra.mxu0 0
  %2911 = vmatprep.subr.bf16.mxu0 0
  %2912 = vmatpush1.bf16.msra.mxu0 0
  %2913 = vmatprep.subr.bf16.mxu0 0
  %2914 = vmatpush1.bf16.msra.mxu0 0
  %2915 = vmatprep.mubr.bf16.mxu0 0
  %2916 = vmatmul.mubr.bf16.gmra.mrb[0].mxu0 %v2881
  %v2917 = vpop.f32.mrb[0].mxu0
  %v2918 = vadd.f32 %v2833, %v2917
  %v2919 = vpop.f32.mrb[0].mxu0
  %v2920 = vadd.f32 %v2835, %v2919
  %v2921 = vpop.f32.mrb[0].mxu0
  %v2922 = vpop.f32.mrb[0].mxu0
  %2923 = vdwg.mxu0
  %2924 = vmatprep.subr.bf16.mxu0 %v370
  %2925 = vmatpush1.bf16.msra.mxu0 %v369
  %2926 = vmatprep.subr.bf16.mxu0 %v374
  %2927 = vmatpush1.bf16.msra.mxu0 %v373
  %2928 = vmatprep.subr.bf16.mxu0 %v378
  %2929 = vmatpush1.bf16.msra.mxu0 %v377
  %2930 = vmatprep.subr.bf16.mxu0 %v382
  %2931 = vmatpush1.bf16.msra.mxu0 %v381
  %2932 = vmatprep.subr.bf16.mxu0 0
  %2933 = vmatpush1.bf16.msra.mxu0 0
  %2934 = vmatprep.subr.bf16.mxu0 0
  %2935 = vmatpush1.bf16.msra.mxu0 0
  %2936 = vmatprep.subr.bf16.mxu0 0
  %2937 = vmatpush1.bf16.msra.mxu0 0
  %2938 = vmatprep.subr.bf16.mxu0 0
  %2939 = vmatpush1.bf16.msra.mxu0 0
  %2940 = vmatprep.subr.bf16.mxu0 0
  %2941 = vmatpush1.bf16.msra.mxu0 0
  %2942 = vmatprep.subr.bf16.mxu0 0
  %2943 = vmatpush1.bf16.msra.mxu0 0
  %2944 = vmatprep.subr.bf16.mxu0 0
  %2945 = vmatpush1.bf16.msra.mxu0 0
  %2946 = vmatprep.subr.bf16.mxu0 0
  %2947 = vmatpush1.bf16.msra.mxu0 0
  %2948 = vmatprep.subr.bf16.mxu0 0
  %2949 = vmatpush1.bf16.msra.mxu0 0
  %2950 = vmatprep.subr.bf16.mxu0 0
  %2951 = vmatpush1.bf16.msra.mxu0 0
  %2952 = vmatprep.subr.bf16.mxu0 0
  %2953 = vmatpush1.bf16.msra.mxu0 0
  %2954 = vmatprep.subr.bf16.mxu0 0
  %2955 = vmatpush1.bf16.msra.mxu0 0
  %2956 = vmatprep.mubr.bf16.mxu0 0
  %2957 = vmatmul.mubr.bf16.gmra.mrb[0].mxu0 %v2881
  %v2958 = vpop.f32.mrb[0].mxu0
  %v2959 = vadd.f32 %v2874, %v2958
  %v2960 = vpop.f32.mrb[0].mxu0
  %v2961 = vadd.f32 %v2876, %v2960
  %v2962 = vpop.f32.mrb[0].mxu0
  %v2963 = vpop.f32.mrb[0].mxu0
  %2964 = vdwg.mxu0
  %v2965 = vadd.f32 %v2918, %v489
  %v2966 = vadd.f32 %v2920, %v493
  %v2967 = vadd.f32 %v2959, %v497
  %v2968 = vadd.f32 %v2961, %v501
  %v2969 = vxor.u32 %v2965, 2147483648
  %v2970 = vmul.f32 %v2969, 1.442695
  %v2971 = vpow.pop %v2970
  %v2972 = vadd.f32 %v2971, 1.0
  %v2973 = vrcp.pop %v2972
  %v2974 = vmul.f32 1.0, %v2973
  %v2975 = vxor.u32 %v2966, 2147483648
  %v2976 = vmul.f32 %v2975, 1.442695
  %v2977 = vpow.pop %v2976
  %v2978 = vadd.f32 %v2977, 1.0
  %v2979 = vrcp.pop %v2978
  %v2980 = vmul.f32 1.0, %v2979
  %v2981 = vtanh.pop %v2967
  %v2982 = vxor.u32 %v2968, 2147483648
  %v2983 = vmul.f32 %v2982, 1.442695
  %v2984 = vpow.pop %v2983
  %v2985 = vadd.f32 %v2984, 1.0
  %v2986 = vrcp.pop %v2985
  %v2987 = vmul.f32 1.0, %v2986
  %v2988 = vmul.f32 %v2980, %v2796
  %v2989 = vmul.f32 %v2974, %v2981
  %v2990 = vadd.f32 %v2988, %v2989
  %v2991 = vtanh.pop %v2990
  %v2992 = vmul.f32 %v2987, %v2991
  %2993 = vst [vmem:[#allocation3] sm:$0xff] %v2990
  %2994 = vst [vmem:[#allocation2] sm:$0xff] %v2992
  %v2995 = vpack.c.bf16 %v2992, %v2992
  %s2996 = scalar_lea.vmem %s4, 48
  %2997 = vst [vmem:[%s2996] sm:$0xf] %v2995
  %s2998 = scalar_lea.vmem %s0, 52
  %v2999 = vld [vmem:[%s2998] sm:$0xf]
  %v3000 = vld [vmem:[#allocation2] sm:$0xff]
  %v3001 = vld [vmem:[#allocation3] sm:$0xff]
  %v3002 = vpack.c.bf16 %v3000, %v3000
  %3003 = vmatprep.subr.bf16.mxu0 %v174
  %3004 = vmatpush1.bf16.msra.mxu0 %v173
  %3005 = vmatprep.subr.bf16.mxu0 %v178
  %3006 = vmatpush1.bf16.msra.mxu0 %v177
  %3007 = vmatprep.subr.bf16.mxu0 %v182
  %3008 = vmatpush1.bf16.msra.mxu0 %v181
  %3009 = vmatprep.subr.bf16.mxu0 %v186
  %3010 = vmatpush1.bf16.msra.mxu0 %v185
  %3011 = vmatprep.subr.bf16.mxu0 %v190
  %3012 = vmatpush1.bf16.msra.mxu0 %v189
  %3013 = vmatprep.subr.bf16.mxu0 %v194
  %3014 = vmatpush1.bf16.msra.mxu0 %v193
  %3015 = vmatprep.subr.bf16.mxu0 %v198
  %3016 = vmatpush1.bf16.msra.mxu0 %v197
  %3017 = vmatprep.subr.bf16.mxu0 %v202
  %3018 = vmatpush1.bf16.msra.mxu0 %v201
  %3019 = vmatprep.subr.bf16.mxu0 0
  %3020 = vmatpush1.bf16.msra.mxu0 0
  %3021 = vmatprep.subr.bf16.mxu0 0
  %3022 = vmatpush1.bf16.msra.mxu0 0
  %3023 = vmatprep.subr.bf16.mxu0 0
  %3024 = vmatpush1.bf16.msra.mxu0 0
  %3025 = vmatprep.subr.bf16.mxu0 0
  %3026 = vmatpush1.bf16.msra.mxu0 0
  %3027 = vmatprep.subr.bf16.mxu0 0
  %3028 = vmatpush1.bf16.msra.mxu0 0
  %3029 = vmatprep.subr.bf16.mxu0 0
  %3030 = vmatpush1.bf16.msra.mxu0 0
  %3031 = vmatprep.subr.bf16.mxu0 0
  %3032 = vmatpush1.bf16.msra.mxu0 0
  %3033 = vmatprep.subr.bf16.mxu0 0
  %3034 = vmatpush1.bf16.msra.mxu0 0
  %3035 = vmatprep.mubr.bf16.mxu0 0
  %3036 = vmatmul.mubr.bf16.gmra.mrb[0].mxu0 %v3002
  %v3037 = vpop.f32.mrb[0].mxu0
  %v3038 = vadd.f32 0.0, %v3037
  %v3039 = vpop.f32.mrb[0].mxu0
  %v3040 = vadd.f32 0.0, %v3039
  %v3041 = vpop.f32.mrb[0].mxu0
  %v3042 = vpop.f32.mrb[0].mxu0
  %3043 = vdwg.mxu0
  %3044 = vmatprep.subr.bf16.mxu0 %v176
  %3045 = vmatpush1.bf16.msra.mxu0 %v175
  %3046 = vmatprep.subr.bf16.mxu0 %v180
  %3047 = vmatpush1.bf16.msra.mxu0 %v179
  %3048 = vmatprep.subr.bf16.mxu0 %v184
  %3049 = vmatpush1.bf16.msra.mxu0 %v183
  %3050 = vmatprep.subr.bf16.mxu0 %v188
  %3051 = vmatpush1.bf16.msra.mxu0 %v187
  %3052 = vmatprep.subr.bf16.mxu0 %v192
  %3053 = vmatpush1.bf16.msra.mxu0 %v191
  %3054 = vmatprep.subr.bf16.mxu0 %v196
  %3055 = vmatpush1.bf16.msra.mxu0 %v195
  %3056 = vmatprep.subr.bf16.mxu0 %v200
  %3057 = vmatpush1.bf16.msra.mxu0 %v199
  %3058 = vmatprep.subr.bf16.mxu0 %v204
  %3059 = vmatpush1.bf16.msra.mxu0 %v203
  %3060 = vmatprep.subr.bf16.mxu0 0
  %3061 = vmatpush1.bf16.msra.mxu0 0
  %3062 = vmatprep.subr.bf16.mxu0 0
  %3063 = vmatpush1.bf16.msra.mxu0 0
  %3064 = vmatprep.subr.bf16.mxu0 0
  %3065 = vmatpush1.bf16.msra.mxu0 0
  %3066 = vmatprep.subr.bf16.mxu0 0
  %3067 = vmatpush1.bf16.msra.mxu0 0
  %3068 = vmatprep.subr.bf16.mxu0 0
  %3069 = vmatpush1.bf16.msra.mxu0 0
  %3070 = vmatprep.subr.bf16.mxu0 0
  %3071 = vmatpush1.bf16.msra.mxu0 0
  %3072 = vmatprep.subr.bf16.mxu0 0
  %3073 = vmatpush1.bf16.msra.mxu0 0
  %3074 = vmatprep.subr.bf16.mxu0 0
  %3075 = vmatpush1.bf16.msra.mxu0 0
  %3076 = vmatprep.mubr.bf16.mxu0 0
  %3077 = vmatmul.mubr.bf16.gmra.mrb[0].mxu0 %v3002
  %v3078 = vpop.f32.mrb[0].mxu0
  %v3079 = vadd.f32 0.0, %v3078
  %v3080 = vpop.f32.mrb[0].mxu0
  %v3081 = vadd.f32 0.0, %v3080
  %v3082 = vpop.f32.mrb[0].mxu0
  %v3083 = vpop.f32.mrb[0].mxu0
  %3084 = vdwg.mxu0
  %v3086 = vsel %vm399, %v2999, 0
  %3088 = vmatprep.subr.bf16.mxu0 %v368
  %3089 = vmatpush1.bf16.msra.mxu0 %v367
  %3090 = vmatprep.subr.bf16.mxu0 %v372
  %3091 = vmatpush1.bf16.msra.mxu0 %v371
  %3092 = vmatprep.subr.bf16.mxu0 %v376
  %3093 = vmatpush1.bf16.msra.mxu0 %v375
  %3094 = vmatprep.subr.bf16.mxu0 %v380
  %3095 = vmatpush1.bf16.msra.mxu0 %v379
  %3096 = vmatprep.subr.bf16.mxu0 0
  %3097 = vmatpush1.bf16.msra.mxu0 0
  %3098 = vmatprep.subr.bf16.mxu0 0
  %3099 = vmatpush1.bf16.msra.mxu0 0
  %3100 = vmatprep.subr.bf16.mxu0 0
  %3101 = vmatpush1.bf16.msra.mxu0 0
  %3102 = vmatprep.subr.bf16.mxu0 0
  %3103 = vmatpush1.bf16.msra.mxu0 0
  %3104 = vmatprep.subr.bf16.mxu0 0
  %3105 = vmatpush1.bf16.msra.mxu0 0
  %3106 = vmatprep.subr.bf16.mxu0 0
  %3107 = vmatpush1.bf16.msra.mxu0 0
  %3108 = vmatprep.subr.bf16.mxu0 0
  %3109 = vmatpush1.bf16.msra.mxu0 0
  %3110 = vmatprep.subr.bf16.mxu0 0
  %3111 = vmatpush1.bf16.msra.mxu0 0
  %3112 = vmatprep.subr.bf16.mxu0 0
  %3113 = vmatpush1.bf16.msra.mxu0 0
  %3114 = vmatprep.subr.bf16.mxu0 0
  %3115 = vmatpush1.bf16.msra.mxu0 0
  %3116 = vmatprep.subr.bf16.mxu0 0
  %3117 = vmatpush1.bf16.msra.mxu0 0
  %3118 = vmatprep.subr.bf16.mxu0 0
  %3119 = vmatpush1.bf16.msra.mxu0 0
  %3120 = vmatprep.mubr.bf16.mxu0 0
  %3121 = vmatmul.mubr.bf16.gmra.mrb[0].mxu0 %v3086
  %v3122 = vpop.f32.mrb[0].mxu0
  %v3123 = vadd.f32 %v3038, %v3122
  %v3124 = vpop.f32.mrb[0].mxu0
  %v3125 = vadd.f32 %v3040, %v3124
  %v3126 = vpop.f32.mrb[0].mxu0
  %v3127 = vpop.f32.mrb[0].mxu0
  %3128 = vdwg.mxu0
  %3129 = vmatprep.subr.bf16.mxu0 %v370
  %3130 = vmatpush1.bf16.msra.mxu0 %v369
  %3131 = vmatprep.subr.bf16.mxu0 %v374
  %3132 = vmatpush1.bf16.msra.mxu0 %v373
  %3133 = vmatprep.subr.bf16.mxu0 %v378
  %3134 = vmatpush1.bf16.msra.mxu0 %v377
  %3135 = vmatprep.subr.bf16.mxu0 %v382
  %3136 = vmatpush1.bf16.msra.mxu0 %v381
  %3137 = vmatprep.subr.bf16.mxu0 0
  %3138 = vmatpush1.bf16.msra.mxu0 0
  %3139 = vmatprep.subr.bf16.mxu0 0
  %3140 = vmatpush1.bf16.msra.mxu0 0
  %3141 = vmatprep.subr.bf16.mxu0 0
  %3142 = vmatpush1.bf16.msra.mxu0 0
  %3143 = vmatprep.subr.bf16.mxu0 0
  %3144 = vmatpush1.bf16.msra.mxu0 0
  %3145 = vmatprep.subr.bf16.mxu0 0
  %3146 = vmatpush1.bf16.msra.mxu0 0
  %3147 = vmatprep.subr.bf16.mxu0 0
  %3148 = vmatpush1.bf16.msra.mxu0 0
  %3149 = vmatprep.subr.bf16.mxu0 0
  %3150 = vmatpush1.bf16.msra.mxu0 0
  %3151 = vmatprep.subr.bf16.mxu0 0
  %3152 = vmatpush1.bf16.msra.mxu0 0
  %3153 = vmatprep.subr.bf16.mxu0 0
  %3154 = vmatpush1.bf16.msra.mxu0 0
  %3155 = vmatprep.subr.bf16.mxu0 0
  %3156 = vmatpush1.bf16.msra.mxu0 0
  %3157 = vmatprep.subr.bf16.mxu0 0
  %3158 = vmatpush1.bf16.msra.mxu0 0
  %3159 = vmatprep.subr.bf16.mxu0 0
  %3160 = vmatpush1.bf16.msra.mxu0 0
  %3161 = vmatprep.mubr.bf16.mxu0 0
  %3162 = vmatmul.mubr.bf16.gmra.mrb[0].mxu0 %v3086
  %v3163 = vpop.f32.mrb[0].mxu0
  %v3164 = vadd.f32 %v3079, %v3163
  %v3165 = vpop.f32.mrb[0].mxu0
  %v3166 = vadd.f32 %v3081, %v3165
  %v3167 = vpop.f32.mrb[0].mxu0
  %v3168 = vpop.f32.mrb[0].mxu0
  %3169 = vdwg.mxu0
  %v3170 = vadd.f32 %v3123, %v489
  %v3171 = vadd.f32 %v3125, %v493
  %v3172 = vadd.f32 %v3164, %v497
  %v3173 = vadd.f32 %v3166, %v501
  %v3174 = vxor.u32 %v3170, 2147483648
  %v3175 = vmul.f32 %v3174, 1.442695
  %v3176 = vpow.pop %v3175
  %v3177 = vadd.f32 %v3176, 1.0
  %v3178 = vrcp.pop %v3177
  %v3179 = vmul.f32 1.0, %v3178
  %v3180 = vxor.u32 %v3171, 2147483648
  %v3181 = vmul.f32 %v3180, 1.442695
  %v3182 = vpow.pop %v3181
  %v3183 = vadd.f32 %v3182, 1.0
  %v3184 = vrcp.pop %v3183
  %v3185 = vmul.f32 1.0, %v3184
  %v3186 = vtanh.pop %v3172
  %v3187 = vxor.u32 %v3173, 2147483648
  %v3188 = vmul.f32 %v3187, 1.442695
  %v3189 = vpow.pop %v3188
  %v3190 = vadd.f32 %v3189, 1.0
  %v3191 = vrcp.pop %v3190
  %v3192 = vmul.f32 1.0, %v3191
  %v3193 = vmul.f32 %v3185, %v3001
  %v3194 = vmul.f32 %v3179, %v3186
  %v3195 = vadd.f32 %v3193, %v3194
  %v3196 = vtanh.pop %v3195
  %v3197 = vmul.f32 %v3192, %v3196
  %3198 = vst [vmem:[#allocation3] sm:$0xff] %v3195
  %3199 = vst [vmem:[#allocation2] sm:$0xff] %v3197
  %v3200 = vpack.c.bf16 %v3197, %v3197
  %s3201 = scalar_lea.vmem %s4, 52
  %3202 = vst [vmem:[%s3201] sm:$0xf] %v3200
  %s3203 = scalar_lea.vmem %s0, 56
  %v3204 = vld [vmem:[%s3203] sm:$0xf]
  %v3205 = vld [vmem:[#allocation2] sm:$0xff]
  %v3206 = vld [vmem:[#allocation3] sm:$0xff]
  %v3207 = vpack.c.bf16 %v3205, %v3205
  %3208 = vmatprep.subr.bf16.mxu0 %v174
  %3209 = vmatpush1.bf16.msra.mxu0 %v173
  %3210 = vmatprep.subr.bf16.mxu0 %v178
  %3211 = vmatpush1.bf16.msra.mxu0 %v177
  %3212 = vmatprep.subr.bf16.mxu0 %v182
  %3213 = vmatpush1.bf16.msra.mxu0 %v181
  %3214 = vmatprep.subr.bf16.mxu0 %v186
  %3215 = vmatpush1.bf16.msra.mxu0 %v185
  %3216 = vmatprep.subr.bf16.mxu0 %v190
  %3217 = vmatpush1.bf16.msra.mxu0 %v189
  %3218 = vmatprep.subr.bf16.mxu0 %v194
  %3219 = vmatpush1.bf16.msra.mxu0 %v193
  %3220 = vmatprep.subr.bf16.mxu0 %v198
  %3221 = vmatpush1.bf16.msra.mxu0 %v197
  %3222 = vmatprep.subr.bf16.mxu0 %v202
  %3223 = vmatpush1.bf16.msra.mxu0 %v201
  %3224 = vmatprep.subr.bf16.mxu0 0
  %3225 = vmatpush1.bf16.msra.mxu0 0
  %3226 = vmatprep.subr.bf16.mxu0 0
  %3227 = vmatpush1.bf16.msra.mxu0 0
  %3228 = vmatprep.subr.bf16.mxu0 0
  %3229 = vmatpush1.bf16.msra.mxu0 0
  %3230 = vmatprep.subr.bf16.mxu0 0
  %3231 = vmatpush1.bf16.msra.mxu0 0
  %3232 = vmatprep.subr.bf16.mxu0 0
  %3233 = vmatpush1.bf16.msra.mxu0 0
  %3234 = vmatprep.subr.bf16.mxu0 0
  %3235 = vmatpush1.bf16.msra.mxu0 0
  %3236 = vmatprep.subr.bf16.mxu0 0
  %3237 = vmatpush1.bf16.msra.mxu0 0
  %3238 = vmatprep.subr.bf16.mxu0 0
  %3239 = vmatpush1.bf16.msra.mxu0 0
  %3240 = vmatprep.mubr.bf16.mxu0 0
  %3241 = vmatmul.mubr.bf16.gmra.mrb[0].mxu0 %v3207
  %v3242 = vpop.f32.mrb[0].mxu0
  %v3243 = vadd.f32 0.0, %v3242
  %v3244 = vpop.f32.mrb[0].mxu0
  %v3245 = vadd.f32 0.0, %v3244
  %v3246 = vpop.f32.mrb[0].mxu0
  %v3247 = vpop.f32.mrb[0].mxu0
  %3248 = vdwg.mxu0
  %3249 = vmatprep.subr.bf16.mxu0 %v176
  %3250 = vmatpush1.bf16.msra.mxu0 %v175
  %3251 = vmatprep.subr.bf16.mxu0 %v180
  %3252 = vmatpush1.bf16.msra.mxu0 %v179
  %3253 = vmatprep.subr.bf16.mxu0 %v184
  %3254 = vmatpush1.bf16.msra.mxu0 %v183
  %3255 = vmatprep.subr.bf16.mxu0 %v188
  %3256 = vmatpush1.bf16.msra.mxu0 %v187
  %3257 = vmatprep.subr.bf16.mxu0 %v192
  %3258 = vmatpush1.bf16.msra.mxu0 %v191
  %3259 = vmatprep.subr.bf16.mxu0 %v196
  %3260 = vmatpush1.bf16.msra.mxu0 %v195
  %3261 = vmatprep.subr.bf16.mxu0 %v200
  %3262 = vmatpush1.bf16.msra.mxu0 %v199
  %3263 = vmatprep.subr.bf16.mxu0 %v204
  %3264 = vmatpush1.bf16.msra.mxu0 %v203
  %3265 = vmatprep.subr.bf16.mxu0 0
  %3266 = vmatpush1.bf16.msra.mxu0 0
  %3267 = vmatprep.subr.bf16.mxu0 0
  %3268 = vmatpush1.bf16.msra.mxu0 0
  %3269 = vmatprep.subr.bf16.mxu0 0
  %3270 = vmatpush1.bf16.msra.mxu0 0
  %3271 = vmatprep.subr.bf16.mxu0 0
  %3272 = vmatpush1.bf16.msra.mxu0 0
  %3273 = vmatprep.subr.bf16.mxu0 0
  %3274 = vmatpush1.bf16.msra.mxu0 0
  %3275 = vmatprep.subr.bf16.mxu0 0
  %3276 = vmatpush1.bf16.msra.mxu0 0
  %3277 = vmatprep.subr.bf16.mxu0 0
  %3278 = vmatpush1.bf16.msra.mxu0 0
  %3279 = vmatprep.subr.bf16.mxu0 0
  %3280 = vmatpush1.bf16.msra.mxu0 0
  %3281 = vmatprep.mubr.bf16.mxu0 0
  %3282 = vmatmul.mubr.bf16.gmra.mrb[0].mxu0 %v3207
  %v3283 = vpop.f32.mrb[0].mxu0
  %v3284 = vadd.f32 0.0, %v3283
  %v3285 = vpop.f32.mrb[0].mxu0
  %v3286 = vadd.f32 0.0, %v3285
  %v3287 = vpop.f32.mrb[0].mxu0
  %v3288 = vpop.f32.mrb[0].mxu0
  %3289 = vdwg.mxu0
  %v3291 = vsel %vm399, %v3204, 0
  %3293 = vmatprep.subr.bf16.mxu0 %v368
  %3294 = vmatpush1.bf16.msra.mxu0 %v367
  %3295 = vmatprep.subr.bf16.mxu0 %v372
  %3296 = vmatpush1.bf16.msra.mxu0 %v371
  %3297 = vmatprep.subr.bf16.mxu0 %v376
  %3298 = vmatpush1.bf16.msra.mxu0 %v375
  %3299 = vmatprep.subr.bf16.mxu0 %v380
  %3300 = vmatpush1.bf16.msra.mxu0 %v379
  %3301 = vmatprep.subr.bf16.mxu0 0
  %3302 = vmatpush1.bf16.msra.mxu0 0
  %3303 = vmatprep.subr.bf16.mxu0 0
  %3304 = vmatpush1.bf16.msra.mxu0 0
  %3305 = vmatprep.subr.bf16.mxu0 0
  %3306 = vmatpush1.bf16.msra.mxu0 0
  %3307 = vmatprep.subr.bf16.mxu0 0
  %3308 = vmatpush1.bf16.msra.mxu0 0
  %3309 = vmatprep.subr.bf16.mxu0 0
  %3310 = vmatpush1.bf16.msra.mxu0 0
  %3311 = vmatprep.subr.bf16.mxu0 0
  %3312 = vmatpush1.bf16.msra.mxu0 0
  %3313 = vmatprep.subr.bf16.mxu0 0
  %3314 = vmatpush1.bf16.msra.mxu0 0
  %3315 = vmatprep.subr.bf16.mxu0 0
  %3316 = vmatpush1.bf16.msra.mxu0 0
  %3317 = vmatprep.subr.bf16.mxu0 0
  %3318 = vmatpush1.bf16.msra.mxu0 0
  %3319 = vmatprep.subr.bf16.mxu0 0
  %3320 = vmatpush1.bf16.msra.mxu0 0
  %3321 = vmatprep.subr.bf16.mxu0 0
  %3322 = vmatpush1.bf16.msra.mxu0 0
  %3323 = vmatprep.subr.bf16.mxu0 0
  %3324 = vmatpush1.bf16.msra.mxu0 0
  %3325 = vmatprep.mubr.bf16.mxu0 0
  %3326 = vmatmul.mubr.bf16.gmra.mrb[0].mxu0 %v3291
  %v3327 = vpop.f32.mrb[0].mxu0
  %v3328 = vadd.f32 %v3243, %v3327
  %v3329 = vpop.f32.mrb[0].mxu0
  %v3330 = vadd.f32 %v3245, %v3329
  %v3331 = vpop.f32.mrb[0].mxu0
  %v3332 = vpop.f32.mrb[0].mxu0
  %3333 = vdwg.mxu0
  %3334 = vmatprep.subr.bf16.mxu0 %v370
  %3335 = vmatpush1.bf16.msra.mxu0 %v369
  %3336 = vmatprep.subr.bf16.mxu0 %v374
  %3337 = vmatpush1.bf16.msra.mxu0 %v373
  %3338 = vmatprep.subr.bf16.mxu0 %v378
  %3339 = vmatpush1.bf16.msra.mxu0 %v377
  %3340 = vmatprep.subr.bf16.mxu0 %v382
  %3341 = vmatpush1.bf16.msra.mxu0 %v381
  %3342 = vmatprep.subr.bf16.mxu0 0
  %3343 = vmatpush1.bf16.msra.mxu0 0
  %3344 = vmatprep.subr.bf16.mxu0 0
  %3345 = vmatpush1.bf16.msra.mxu0 0
  %3346 = vmatprep.subr.bf16.mxu0 0
  %3347 = vmatpush1.bf16.msra.mxu0 0
  %3348 = vmatprep.subr.bf16.mxu0 0
  %3349 = vmatpush1.bf16.msra.mxu0 0
  %3350 = vmatprep.subr.bf16.mxu0 0
  %3351 = vmatpush1.bf16.msra.mxu0 0
  %3352 = vmatprep.subr.bf16.mxu0 0
  %3353 = vmatpush1.bf16.msra.mxu0 0
  %3354 = vmatprep.subr.bf16.mxu0 0
  %3355 = vmatpush1.bf16.msra.mxu0 0
  %3356 = vmatprep.subr.bf16.mxu0 0
  %3357 = vmatpush1.bf16.msra.mxu0 0
  %3358 = vmatprep.subr.bf16.mxu0 0
  %3359 = vmatpush1.bf16.msra.mxu0 0
  %3360 = vmatprep.subr.bf16.mxu0 0
  %3361 = vmatpush1.bf16.msra.mxu0 0
  %3362 = vmatprep.subr.bf16.mxu0 0
  %3363 = vmatpush1.bf16.msra.mxu0 0
  %3364 = vmatprep.subr.bf16.mxu0 0
  %3365 = vmatpush1.bf16.msra.mxu0 0
  %3366 = vmatprep.mubr.bf16.mxu0 0
  %3367 = vmatmul.mubr.bf16.gmra.mrb[0].mxu0 %v3291
  %v3368 = vpop.f32.mrb[0].mxu0
  %v3369 = vadd.f32 %v3284, %v3368
  %v3370 = vpop.f32.mrb[0].mxu0
  %v3371 = vadd.f32 %v3286, %v3370
  %v3372 = vpop.f32.mrb[0].mxu0
  %v3373 = vpop.f32.mrb[0].mxu0
  %3374 = vdwg.mxu0
  %v3375 = vadd.f32 %v3328, %v489
  %v3376 = vadd.f32 %v3330, %v493
  %v3377 = vadd.f32 %v3369, %v497
  %v3378 = vadd.f32 %v3371, %v501
  %v3379 = vxor.u32 %v3375, 2147483648
  %v3380 = vmul.f32 %v3379, 1.442695
  %v3381 = vpow.pop %v3380
  %v3382 = vadd.f32 %v3381, 1.0
  %v3383 = vrcp.pop %v3382
  %v3384 = vmul.f32 1.0, %v3383
  %v3385 = vxor.u32 %v3376, 2147483648
  %v3386 = vmul.f32 %v3385, 1.442695
  %v3387 = vpow.pop %v3386
  %v3388 = vadd.f32 %v3387, 1.0
  %v3389 = vrcp.pop %v3388
  %v3390 = vmul.f32 1.0, %v3389
  %v3391 = vtanh.pop %v3377
  %v3392 = vxor.u32 %v3378, 2147483648
  %v3393 = vmul.f32 %v3392, 1.442695
  %v3394 = vpow.pop %v3393
  %v3395 = vadd.f32 %v3394, 1.0
  %v3396 = vrcp.pop %v3395
  %v3397 = vmul.f32 1.0, %v3396
  %v3398 = vmul.f32 %v3390, %v3206
  %v3399 = vmul.f32 %v3384, %v3391
  %v3400 = vadd.f32 %v3398, %v3399
  %v3401 = vtanh.pop %v3400
  %v3402 = vmul.f32 %v3397, %v3401
  %3403 = vst [vmem:[#allocation3] sm:$0xff] %v3400
  %3404 = vst [vmem:[#allocation2] sm:$0xff] %v3402
  %v3405 = vpack.c.bf16 %v3402, %v3402
  %s3406 = scalar_lea.vmem %s4, 56
  %3407 = vst [vmem:[%s3406] sm:$0xf] %v3405
  %s3408 = scalar_lea.vmem %s0, 60
  %v3409 = vld [vmem:[%s3408] sm:$0xf]
  %v3410 = vld [vmem:[#allocation2] sm:$0xff]
  %v3411 = vld [vmem:[#allocation3] sm:$0xff]
  %v3412 = vpack.c.bf16 %v3410, %v3410
  %3413 = vmatprep.subr.bf16.mxu0 %v174
  %3414 = vmatpush1.bf16.msra.mxu0 %v173
  %3415 = vmatprep.subr.bf16.mxu0 %v178
  %3416 = vmatpush1.bf16.msra.mxu0 %v177
  %3417 = vmatprep.subr.bf16.mxu0 %v182
  %3418 = vmatpush1.bf16.msra.mxu0 %v181
  %3419 = vmatprep.subr.bf16.mxu0 %v186
  %3420 = vmatpush1.bf16.msra.mxu0 %v185
  %3421 = vmatprep.subr.bf16.mxu0 %v190
  %3422 = vmatpush1.bf16.msra.mxu0 %v189
  %3423 = vmatprep.subr.bf16.mxu0 %v194
  %3424 = vmatpush1.bf16.msra.mxu0 %v193
  %3425 = vmatprep.subr.bf16.mxu0 %v198
  %3426 = vmatpush1.bf16.msra.mxu0 %v197
  %3427 = vmatprep.subr.bf16.mxu0 %v202
  %3428 = vmatpush1.bf16.msra.mxu0 %v201
  %3429 = vmatprep.subr.bf16.mxu0 0
  %3430 = vmatpush1.bf16.msra.mxu0 0
  %3431 = vmatprep.subr.bf16.mxu0 0
  %3432 = vmatpush1.bf16.msra.mxu0 0
  %3433 = vmatprep.subr.bf16.mxu0 0
  %3434 = vmatpush1.bf16.msra.mxu0 0
  %3435 = vmatprep.subr.bf16.mxu0 0
  %3436 = vmatpush1.bf16.msra.mxu0 0
  %3437 = vmatprep.subr.bf16.mxu0 0
  %3438 = vmatpush1.bf16.msra.mxu0 0
  %3439 = vmatprep.subr.bf16.mxu0 0
  %3440 = vmatpush1.bf16.msra.mxu0 0
  %3441 = vmatprep.subr.bf16.mxu0 0
  %3442 = vmatpush1.bf16.msra.mxu0 0
  %3443 = vmatprep.subr.bf16.mxu0 0
  %3444 = vmatpush1.bf16.msra.mxu0 0
  %3445 = vmatprep.mubr.bf16.mxu0 0
  %3446 = vmatmul.mubr.bf16.gmra.mrb[0].mxu0 %v3412
  %v3447 = vpop.f32.mrb[0].mxu0
  %v3448 = vadd.f32 0.0, %v3447
  %v3449 = vpop.f32.mrb[0].mxu0
  %v3450 = vadd.f32 0.0, %v3449
  %v3451 = vpop.f32.mrb[0].mxu0
  %v3452 = vpop.f32.mrb[0].mxu0
  %3453 = vdwg.mxu0
  %3454 = vmatprep.subr.bf16.mxu0 %v176
  %3455 = vmatpush1.bf16.msra.mxu0 %v175
  %3456 = vmatprep.subr.bf16.mxu0 %v180
  %3457 = vmatpush1.bf16.msra.mxu0 %v179
  %3458 = vmatprep.subr.bf16.mxu0 %v184
  %3459 = vmatpush1.bf16.msra.mxu0 %v183
  %3460 = vmatprep.subr.bf16.mxu0 %v188
  %3461 = vmatpush1.bf16.msra.mxu0 %v187
  %3462 = vmatprep.subr.bf16.mxu0 %v192
  %3463 = vmatpush1.bf16.msra.mxu0 %v191
  %3464 = vmatprep.subr.bf16.mxu0 %v196
  %3465 = vmatpush1.bf16.msra.mxu0 %v195
  %3466 = vmatprep.subr.bf16.mxu0 %v200
  %3467 = vmatpush1.bf16.msra.mxu0 %v199
  %3468 = vmatprep.subr.bf16.mxu0 %v204
  %3469 = vmatpush1.bf16.msra.mxu0 %v203
  %3470 = vmatprep.subr.bf16.mxu0 0
  %3471 = vmatpush1.bf16.msra.mxu0 0
  %3472 = vmatprep.subr.bf16.mxu0 0
  %3473 = vmatpush1.bf16.msra.mxu0 0
  %3474 = vmatprep.subr.bf16.mxu0 0
  %3475 = vmatpush1.bf16.msra.mxu0 0
  %3476 = vmatprep.subr.bf16.mxu0 0
  %3477 = vmatpush1.bf16.msra.mxu0 0
  %3478 = vmatprep.subr.bf16.mxu0 0
  %3479 = vmatpush1.bf16.msra.mxu0 0
  %3480 = vmatprep.subr.bf16.mxu0 0
  %3481 = vmatpush1.bf16.msra.mxu0 0
  %3482 = vmatprep.subr.bf16.mxu0 0
  %3483 = vmatpush1.bf16.msra.mxu0 0
  %3484 = vmatprep.subr.bf16.mxu0 0
  %3485 = vmatpush1.bf16.msra.mxu0 0
  %3486 = vmatprep.mubr.bf16.mxu0 0
  %3487 = vmatmul.mubr.bf16.gmra.mrb[0].mxu0 %v3412
  %v3488 = vpop.f32.mrb[0].mxu0
  %v3489 = vadd.f32 0.0, %v3488
  %v3490 = vpop.f32.mrb[0].mxu0
  %v3491 = vadd.f32 0.0, %v3490
  %v3492 = vpop.f32.mrb[0].mxu0
  %v3493 = vpop.f32.mrb[0].mxu0
  %3494 = vdwg.mxu0
  %v3496 = vsel %vm399, %v3409, 0
  %3498 = vmatprep.subr.bf16.mxu0 %v368
  %3499 = vmatpush1.bf16.msra.mxu0 %v367
  %3500 = vmatprep.subr.bf16.mxu0 %v372
  %3501 = vmatpush1.bf16.msra.mxu0 %v371
  %3502 = vmatprep.subr.bf16.mxu0 %v376
  %3503 = vmatpush1.bf16.msra.mxu0 %v375
  %3504 = vmatprep.subr.bf16.mxu0 %v380
  %3505 = vmatpush1.bf16.msra.mxu0 %v379
  %3506 = vmatprep.subr.bf16.mxu0 0
  %3507 = vmatpush1.bf16.msra.mxu0 0
  %3508 = vmatprep.subr.bf16.mxu0 0
  %3509 = vmatpush1.bf16.msra.mxu0 0
  %3510 = vmatprep.subr.bf16.mxu0 0
  %3511 = vmatpush1.bf16.msra.mxu0 0
  %3512 = vmatprep.subr.bf16.mxu0 0
  %3513 = vmatpush1.bf16.msra.mxu0 0
  %3514 = vmatprep.subr.bf16.mxu0 0
  %3515 = vmatpush1.bf16.msra.mxu0 0
  %3516 = vmatprep.subr.bf16.mxu0 0
  %3517 = vmatpush1.bf16.msra.mxu0 0
  %3518 = vmatprep.subr.bf16.mxu0 0
  %3519 = vmatpush1.bf16.msra.mxu0 0
  %3520 = vmatprep.subr.bf16.mxu0 0
  %3521 = vmatpush1.bf16.msra.mxu0 0
  %3522 = vmatprep.subr.bf16.mxu0 0
  %3523 = vmatpush1.bf16.msra.mxu0 0
  %3524 = vmatprep.subr.bf16.mxu0 0
  %3525 = vmatpush1.bf16.msra.mxu0 0
  %3526 = vmatprep.subr.bf16.mxu0 0
  %3527 = vmatpush1.bf16.msra.mxu0 0
  %3528 = vmatprep.subr.bf16.mxu0 0
  %3529 = vmatpush1.bf16.msra.mxu0 0
  %3530 = vmatprep.mubr.bf16.mxu0 0
  %3531 = vmatmul.mubr.bf16.gmra.mrb[0].mxu0 %v3496
  %v3532 = vpop.f32.mrb[0].mxu0
  %v3533 = vadd.f32 %v3448, %v3532
  %v3534 = vpop.f32.mrb[0].mxu0
  %v3535 = vadd.f32 %v3450, %v3534
  %v3536 = vpop.f32.mrb[0].mxu0
  %v3537 = vpop.f32.mrb[0].mxu0
  %3538 = vdwg.mxu0
  %3539 = vmatprep.subr.bf16.mxu0 %v370
  %3540 = vmatpush1.bf16.msra.mxu0 %v369
  %3541 = vmatprep.subr.bf16.mxu0 %v374
  %3542 = vmatpush1.bf16.msra.mxu0 %v373
  %3543 = vmatprep.subr.bf16.mxu0 %v378
  %3544 = vmatpush1.bf16.msra.mxu0 %v377
  %3545 = vmatprep.subr.bf16.mxu0 %v382
  %3546 = vmatpush1.bf16.msra.mxu0 %v381
  %3547 = vmatprep.subr.bf16.mxu0 0
  %3548 = vmatpush1.bf16.msra.mxu0 0
  %3549 = vmatprep.subr.bf16.mxu0 0
  %3550 = vmatpush1.bf16.msra.mxu0 0
  %3551 = vmatprep.subr.bf16.mxu0 0
  %3552 = vmatpush1.bf16.msra.mxu0 0
  %3553 = vmatprep.subr.bf16.mxu0 0
  %3554 = vmatpush1.bf16.msra.mxu0 0
  %3555 = vmatprep.subr.bf16.mxu0 0
  %3556 = vmatpush1.bf16.msra.mxu0 0
  %3557 = vmatprep.subr.bf16.mxu0 0
  %3558 = vmatpush1.bf16.msra.mxu0 0
  %3559 = vmatprep.subr.bf16.mxu0 0
  %3560 = vmatpush1.bf16.msra.mxu0 0
  %3561 = vmatprep.subr.bf16.mxu0 0
  %3562 = vmatpush1.bf16.msra.mxu0 0
  %3563 = vmatprep.subr.bf16.mxu0 0
  %3564 = vmatpush1.bf16.msra.mxu0 0
  %3565 = vmatprep.subr.bf16.mxu0 0
  %3566 = vmatpush1.bf16.msra.mxu0 0
  %3567 = vmatprep.subr.bf16.mxu0 0
  %3568 = vmatpush1.bf16.msra.mxu0 0
  %3569 = vmatprep.subr.bf16.mxu0 0
  %3570 = vmatpush1.bf16.msra.mxu0 0
  %3571 = vmatprep.mubr.bf16.mxu0 0
  %3572 = vmatmul.mubr.bf16.gmra.mrb[0].mxu0 %v3496
  %v3573 = vpop.f32.mrb[0].mxu0
  %v3574 = vadd.f32 %v3489, %v3573
  %v3575 = vpop.f32.mrb[0].mxu0
  %v3576 = vadd.f32 %v3491, %v3575
  %v3577 = vpop.f32.mrb[0].mxu0
  %v3578 = vpop.f32.mrb[0].mxu0
  %3579 = vdwg.mxu0
  %v3580 = vadd.f32 %v3533, %v489
  %v3581 = vadd.f32 %v3535, %v493
  %v3582 = vadd.f32 %v3574, %v497
  %v3583 = vadd.f32 %v3576, %v501
  %v3584 = vxor.u32 %v3580, 2147483648
  %v3585 = vmul.f32 %v3584, 1.442695
  %v3586 = vpow.pop %v3585
  %v3587 = vadd.f32 %v3586, 1.0
  %v3588 = vrcp.pop %v3587
  %v3589 = vmul.f32 1.0, %v3588
  %v3590 = vxor.u32 %v3581, 2147483648
  %v3591 = vmul.f32 %v3590, 1.442695
  %v3592 = vpow.pop %v3591
  %v3593 = vadd.f32 %v3592, 1.0
  %v3594 = vrcp.pop %v3593
  %v3595 = vmul.f32 1.0, %v3594
  %v3596 = vtanh.pop %v3582
  %v3597 = vxor.u32 %v3583, 2147483648
  %v3598 = vmul.f32 %v3597, 1.442695
  %v3599 = vpow.pop %v3598
  %v3600 = vadd.f32 %v3599, 1.0
  %v3601 = vrcp.pop %v3600
  %v3602 = vmul.f32 1.0, %v3601
  %v3603 = vmul.f32 %v3595, %v3411
  %v3604 = vmul.f32 %v3589, %v3596
  %v3605 = vadd.f32 %v3603, %v3604
  %v3606 = vtanh.pop %v3605
  %v3607 = vmul.f32 %v3602, %v3606
  %3608 = vst [vmem:[#allocation3] sm:$0xff] %v3605
  %3609 = vst [vmem:[#allocation2] sm:$0xff] %v3607
  %v3610 = vpack.c.bf16 %v3607, %v3607
  %s3611 = scalar_lea.vmem %s4, 60
  %3612 = vst [vmem:[%s3611] sm:$0xf] %v3610
  // Predicated region
  $region22: #{transducer_forward.3} parent=0 // pred_check
    _
  $region23: #{transducer_forward.3} parent=0 // pred_check_branch
    %3614 = sbr.rel (0) target = $region25
  $region24: #{transducer_forward.3} parent=0 // pred_region
    _
  $region25: #{transducer_forward.3} parent=0 // pred_fallthru
    _
  // Predicated region
  $region26: #{transducer_forward.3} parent=0 // pred_check
    _
  $region27: #{transducer_forward.3} parent=0 // pred_check_branch
    %3616 = sbr.rel (0) target = $region29
  $region28: #{transducer_forward.3} parent=0 // pred_region
    _
  $region29: #{transducer_forward.3} parent=0 // pred_fallthru
    _

</llo_original>
